<compile_context>
chip_gen: v5e
topology: v5e:2x2
jax: 0.10.0
libtpu: 0.0.40
codegen_flags: <defaults>
</compile_context>

<pallas_src>
import functools
import math

import jax
import jax.numpy as jnp
from jax.experimental import pallas as pl
from jax.experimental.pallas import tpu as pltpu

_BF16 = jnp.bfloat16
_F32 = jnp.float32


# ----------------------------------------------------------------------------
# Helpers
# ----------------------------------------------------------------------------
def _vmem_spec():
    return pl.BlockSpec(memory_space=pltpu.MemorySpace.VMEM)


def _mm(a, b):
    """2-D matmul, bf16 operands, fp32 accumulation (MXU)."""
    return jnp.dot(a.astype(_BF16), b.astype(_BF16), preferred_element_type=_F32)


def _mm_nt(a, b):
    """a @ b.T via dot_general (no explicit transpose), bf16 operands, fp32 acc."""
    return jnp.einsum('qd,kd->qk', a.astype(_BF16), b.astype(_BF16),
                      preferred_element_type=_F32)


def _bmm_tx(x, w):
    """[T,N,F] @ [F,E] -> [T,N,E] — X@W batched over all timesteps in one pass."""
    return jnp.einsum('tnf,fe->tne', x.astype(_BF16), w.astype(_BF16),
                      preferred_element_type=_F32)


# ----------------------------------------------------------------------------
# In-kernel building blocks
# ----------------------------------------------------------------------------
def _tgcn_body(x_ref, a_ref, w_all_ref, b_all_ref,
               lzr_c_ref, lzr_h_ref, lbzr_ref,
               lc_c_ref, lc_h_ref, lbc_ref, *, hidden, steps):
    """TGCN (GRU of GCNConv gates) over `steps`; returns the final hidden state [N, H].

    Per step (weights pre-packed in glue):
        conv   = A_hat @ (X_t @ [Wz|Wr|Wc]) + [bz|br|bc]       (h-independent, hoisted)
        pre_zr = conv @ Lzr_conv + lb_zr                        (h-independent, hoisted)
        pre_c  = conv_c @ Lc_conv + lb_c                        (h-independent, hoisted)
        zr     = sigmoid(pre_zr + H @ Lzr_h);  Z, R = split(zr)
        H~     = tanh(pre_c + (H*R) @ Lc_h)
        H      = Z*H + (1-Z)*H~
    Only the two small h-dependent matmuls sit on the serial critical path.
    """
    n = a_ref.shape[0]
    a = a_ref[...]                                    # bf16 adjacency, VMEM resident
    xw = _bmm_tx(x_ref[...], w_all_ref[...])          # [T, N, 3H]
    b_all = b_all_ref[...]
    lzr_c, lzr_h, lbzr = lzr_c_ref[...], lzr_h_ref[...], lbzr_ref[...]
    lc_c, lc_h, lbc = lc_c_ref[...], lc_h_ref[...], lbc_ref[...]

    pre_zr, pre_c = [], []
    for t in range(steps):                            # h-independent precompute
        conv = _mm(a, xw[t]) + b_all                  # [N, 3H]
        pre_zr.append(_mm(conv, lzr_c) + lbzr)        # [N, 2H]
        pre_c.append(_mm(conv[:, 2 * hidden:], lc_c) + lbc)   # [N, H]

    h = jnp.zeros((n, hidden), _F32)                  # fp32 GRU state (H0 = 0)
    for t in range(steps):                            # serial recurrence
        zr = jax.nn.sigmoid(pre_zr[t] + _mm(h, lzr_h))
        z = zr[:, :hidden]
        r = zr[:, hidden:]
        h_tilde = jnp.tanh(pre_c[t] + _mm(h * r, lc_h))
        h = z * h + (1.0 - z) * h_tilde
    return h


def _layer_norm(y, g, b):
    mu = jnp.mean(y, axis=-1, keepdims=True)
    var = jnp.mean((y - mu) ** 2, axis=-1, keepdims=True)
    return (y - mu) * jax.lax.rsqrt(var + 1e-5) * g + b


def _encoder_layer(x, li, refs, *, batch, seq, hidden, num_heads):
    """Post-LN transformer encoder layer on a flat [B*S, D] activation."""
    (wq_ref, wk_ref, wv_ref, bq_ref, bk_ref, bv_ref, wo_ref, bo_ref,
     g1_ref, be1_ref, w1_ref, b1_ref, w2_ref, b2_ref, g2_ref, be2_ref) = refs
    dh = hidden // num_heads
    scale = 1.0 / math.sqrt(dh)

    # --- multi-head self-attention: per-head weight slabs, no lane slices / concats ---
    attn = jnp.zeros_like(x) + bo_ref[li]
    for hh in range(num_heads):
        qh = _mm(x, wq_ref[li, hh]) + bq_ref[li, hh]        # [B*S, dh]
        kh = _mm(x, wk_ref[li, hh]) + bk_ref[li, hh]
        vh = _mm(x, wv_ref[li, hh]) + bv_ref[li, hh]
        ctx = []
        for b in range(batch):                              # per-graph attention block
            rows = slice(b * seq, (b + 1) * seq)            # 8-row aligned static slice
            s = _mm_nt(qh[rows], kh[rows]) * scale          # [S, S]
            s = s - jnp.max(s, axis=-1, keepdims=True)
            p = jnp.exp(s)                                  # fp32 softmax math
            p = p * pl.reciprocal(jnp.sum(p, axis=-1, keepdims=True), approx=True)
            ctx.append(jnp.dot(p.astype(_BF16), vh[rows].astype(_BF16),
                               preferred_element_type=_F32))
        ctx_h = jnp.concatenate(ctx, axis=0)                # [B*S, dh]
        attn = attn + _mm(ctx_h, wo_ref[li, hh])            # head merge == Wo matmul

    # TODO(synk): dropout(p=0.1) omitted (inference semantics).
    x1 = _layer_norm(x + attn, g1_ref[li], be1_ref[li])
    ff = jnp.maximum(_mm(x1, w1_ref[li]) + b1_ref[li], 0.0)
    ff = _mm(ff, w2_ref[li]) + b2_ref[li]
    return _layer_norm(x1 + ff, g2_ref[li], be2_ref[li])


# ----------------------------------------------------------------------------
# The single fused kernel
# ----------------------------------------------------------------------------
def _local_global_kernel(
        # local TGCN
        xl_ref, al_ref, lw_ref, lb_ref, llzrc_ref, llzrh_ref, llbzr_ref,
        llcc_ref, llch_ref, llbc_ref,
        # global TGCN
        xg_ref, ag_ref, gw_ref, gb_ref, glzrc_ref, glzrh_ref, glbzr_ref,
        glcc_ref, glch_ref, glbc_ref,
        # encoder + decoder
        pos_ref, wq_ref, wk_ref, wv_ref, bq_ref, bk_ref, bv_ref, wo_ref, bo_ref,
        g1_ref, be1_ref, w1_ref, b1_ref, w2_ref, b2_ref, g2_ref, be2_ref,
        decw_ref, decb_ref,
        out_ref,
        *, hidden, batch, n_local, n_global, t_local, t_global,
        num_heads, num_layers):
    total = n_local + n_global

    # ---- TGCNs (weights, adjacency and GRU state stay on-chip) ----
    h_local = _tgcn_body(xl_ref, al_ref, lw_ref, lb_ref, llzrc_ref, llzrh_ref,
                         llbzr_ref, llcc_ref, llch_ref, llbc_ref,
                         hidden=hidden, steps=t_local)              # [B*n_local, H]
    h_global = _tgcn_body(xg_ref, ag_ref, gw_ref, gb_ref, glzrc_ref, glzrh_ref,
                          glbzr_ref, glcc_ref, glch_ref, glbc_ref,
                          hidden=hidden, steps=t_global)            # [B*n_global, H]

    # ---- in-kernel per-batch concat to the flat [B*total, H] layout + pos-emb ----
    parts = []
    for b in range(batch):
        parts.append(h_local[b * n_local:(b + 1) * n_local])
        parts.append(h_global[b * n_global:(b + 1) * n_global])
    x = jnp.concatenate(parts, axis=0) + pos_ref[...]               # [B*total, H]

    # ---- transformer encoder stack (flat 2-D projections) ----
    enc_refs = (wq_ref, wk_ref, wv_ref, bq_ref, bk_ref, bv_ref, wo_ref, bo_ref,
                g1_ref, be1_ref, w1_ref, b1_ref, w2_ref, b2_ref, g2_ref, be2_ref)
    for li in range(num_layers):
        x = _encoder_layer(x, li, enc_refs, batch=batch, seq=total,
                           hidden=hidden, num_heads=num_heads)

    # ---- linear decoder on the flattened per-graph embedding ----
    rowsum = jnp.sum(x * decw_ref[...], axis=-1, keepdims=True)     # [B*total, 1]
    outs = [jnp.sum(rowsum[b * total:(b + 1) * total], axis=0, keepdims=True)
            for b in range(batch)]
    out_ref[...] = jnp.concatenate(outs, axis=0) + decb_ref[...]    # [B, 1]


def local_global_pallas(xl, adj_l, local_p, xg, adj_g, global_p, enc_p, pos_flat,
                        dec_w_flat, dec_b, *, hidden, batch, n_local, n_global,
                        t_local, t_global, num_heads, num_layers):
    operands = (
        xl, adj_l, local_p['w_all'], local_p['b_all'], local_p['l_zr_conv'],
        local_p['l_zr_h'], local_p['lb_zr'], local_p['l_c_conv'], local_p['l_c_h'],
        local_p['lb_c'],
        xg, adj_g, global_p['w_all'], global_p['b_all'], global_p['l_zr_conv'],
        global_p['l_zr_h'], global_p['lb_zr'], global_p['l_c_conv'], global_p['l_c_h'],
        global_p['lb_c'],
        pos_flat, enc_p['wq'], enc_p['wk'], enc_p['wv'], enc_p['bq'], enc_p['bk'],
        enc_p['bv'], enc_p['wo'], enc_p['bo'], enc_p['g1'], enc_p['be1'],
        enc_p['w1'], enc_p['b1'], enc_p['w2'], enc_p['b2'], enc_p['g2'], enc_p['be2'],
        dec_w_flat, dec_b,
    )

    # Rough advisory cost estimate (scheduler hint only).
    total = n_local + n_global
    bs, d, dff, dh = batch * total, hidden, 4 * hidden, hidden // num_heads
    flops = num_layers * (2 * bs * d * 4 * d + 4 * bs * d * dff
                          + 4 * batch * num_heads * total * total * dh)
    flops += 12 * (t_local * batch * n_local + t_global * batch * n_global) * hidden * hidden
    transcendentals = (num_layers * batch * num_heads * total * total
                       + 3 * hidden * (t_local * batch * n_local + t_global * batch * n_global))
    bytes_accessed = int(sum(op.size * op.dtype.itemsize for op in operands)) + 4 * batch

    kern = functools.partial(
        _local_global_kernel, hidden=hidden, batch=batch, n_local=n_local,
        n_global=n_global, t_local=t_local, t_global=t_global,
        num_heads=num_heads, num_layers=num_layers)

    return pl.pallas_call(
        kern,
        out_shape=jax.ShapeDtypeStruct((batch, 1), jnp.float32),
        in_specs=[_vmem_spec()] * len(operands),
        out_specs=_vmem_spec(),
        compiler_params=pltpu.CompilerParams(vmem_limit_bytes=32 * 1024 * 1024),
        cost_estimate=pl.CostEstimate(flops=int(flops),
                                      transcendentals=int(transcendentals),
                                      bytes_accessed=int(bytes_accessed)),
    )(*operands)


# ----------------------------------------------------------------------------
# Glue: adjacency construction, parameter init & packing, model forward
# ----------------------------------------------------------------------------
def build_norm_adj(edge_index, edge_weight, num_nodes):
    """Dense GCN-normalized adjacency: D^{-1/2} (A + I) D^{-1/2}, A[target, source]."""
    src, dst = edge_index[0], edge_index[1]
    a = jnp.zeros((num_nodes, num_nodes), jnp.float32)
    a = a.at[dst, src].add(edge_weight.astype(jnp.float32))
    a = a + jnp.eye(num_nodes, dtype=jnp.float32)
    deg = jnp.sum(a, axis=1)
    d_inv_sqrt = jnp.where(deg > 0, 1.0 / jnp.sqrt(deg), 0.0)
    return a * d_inv_sqrt[:, None] * d_inv_sqrt[None, :]


def _glorot(key, shape):
    fan_in, fan_out = shape[0], shape[-1]
    lim = math.sqrt(6.0 / (fan_in + fan_out))
    return jax.random.uniform(key, shape, jnp.float32, minval=-lim, maxval=lim)


def init_tgcn_params(key, in_feats, hidden):
    # TODO(synk): TGCN2 supports a stack of hidden channels; we instantiate a single
    # GRU/GCN cell with hidden = hidden_channels[-1] (matches H being a single state tensor).
    ks = jax.random.split(key, 9)
    p = {}
    for i, n in enumerate(['z', 'r', 'c']):
        p['w' + n] = _glorot(ks[3 * i + 0], (in_feats, hidden))
        p['b' + n] = jnp.zeros((1, hidden), jnp.float32)
        p['l' + n + '1'] = _glorot(ks[3 * i + 1], (hidden, hidden))
        p['l' + n + '2'] = _glorot(ks[3 * i + 2], (hidden, hidden))
        p['lb' + n] = jnp.zeros((1, hidden), jnp.float32)
    return p


def pack_tgcn_params(p, hidden):
    """Pack the TGCN weights into conv-side / h-side block matrices (bf16 MXU operands)."""
    z = jnp.zeros((hidden, hidden), jnp.float32)
    w_all = jnp.concatenate([p['wz'], p['wr'], p['wc']], axis=1)         # [F, 3H]
    b_all = jnp.concatenate([p['bz'], p['br'], p['bc']], axis=1)         # [1, 3H]
    l_zr_conv = jnp.concatenate([                                         # [3H, 2H]
        jnp.concatenate([p['lz1'], z], axis=1),                          # conv_z rows
        jnp.concatenate([z, p['lr1']], axis=1),                          # conv_r rows
        jnp.zeros((hidden, 2 * hidden), jnp.float32)], axis=0)           # conv_c rows
    l_zr_h = jnp.concatenate([p['lz2'], p['lr2']], axis=1)               # [H, 2H]
    lb_zr = jnp.concatenate([p['lbz'], p['lbr']], axis=1)                # [1, 2H]
    return dict(
        w_all=w_all.astype(_BF16), b_all=b_all,
        l_zr_conv=l_zr_conv.astype(_BF16), l_zr_h=l_zr_h.astype(_BF16), lb_zr=lb_zr,
        l_c_conv=p['lc1'].astype(_BF16), l_c_h=p['lc2'].astype(_BF16), lb_c=p['lbc'])


def init_encoder_layer(key, d_model, d_ff):
    ks = jax.random.split(key, 6)
    return {
        'wq': _glorot(ks[0], (d_model, d_model)), 'bq': jnp.zeros((1, d_model), jnp.float32),
        'wk': _glorot(ks[1], (d_model, d_model)), 'bk': jnp.zeros((1, d_model), jnp.float32),
        'wv': _glorot(ks[2], (d_model, d_model)), 'bv': jnp.zeros((1, d_model), jnp.float32),
        'wo': _glorot(ks[3], (d_model, d_model)), 'bo': jnp.zeros((1, d_model), jnp.float32),
        'g1': jnp.ones((1, d_model), jnp.float32), 'be1': jnp.zeros((1, d_model), jnp.float32),
        'w1': _glorot(ks[4], (d_model, d_ff)), 'b1': jnp.zeros((1, d_ff), jnp.float32),
        'w2': _glorot(ks[5], (d_ff, d_model)), 'b2': jnp.zeros((1, d_model), jnp.float32),
        'g2': jnp.ones((1, d_model), jnp.float32), 'be2': jnp.zeros((1, d_model), jnp.float32),
    }


def pack_encoder_params(layers, num_heads):
    """Stack per-layer params along [L, ...]; split attention weights per head so the head
    dimension is a leading (major) axis, never a lane slice."""
    d = layers[0]['wq'].shape[0]
    dh = d // num_heads

    def head_cols(w):   # [D, D] -> [nH, D, dh]
        return jnp.transpose(w.reshape(d, num_heads, dh), (1, 0, 2))

    def head_rows(w):   # [D, D] -> [nH, dh, D]
        return w.reshape(num_heads, dh, d)

    def head_bias(b):   # [1, D] -> [nH, 1, dh]
        return jnp.transpose(b.reshape(1, num_heads, dh), (1, 0, 2))

    def stack(fn, key):
        return jnp.stack([fn(lp[key]) for lp in layers], axis=0)

    ident = lambda a: a
    return dict(
        wq=stack(head_cols, 'wq').astype(_BF16), wk=stack(head_cols, 'wk').astype(_BF16),
        wv=stack(head_cols, 'wv').astype(_BF16), wo=stack(head_rows, 'wo').astype(_BF16),
        bq=stack(head_bias, 'bq'), bk=stack(head_bias, 'bk'), bv=stack(head_bias, 'bv'),
        bo=stack(ident, 'bo'),
        g1=stack(ident, 'g1'), be1=stack(ident, 'be1'),
        w1=stack(ident, 'w1').astype(_BF16), b1=stack(ident, 'b1'),
        w2=stack(ident, 'w2').astype(_BF16), b2=stack(ident, 'b2'),
        g2=stack(ident, 'g2'), be2=stack(ident, 'be2'))


def init_params(key, *, local_feats, global_feats, hidden, total_nodes,
                num_layers, num_heads):
    k0, k1, k2, k3, k4 = jax.random.split(key, 5)
    # TODO(synk): d_ff = 4*hidden; PyTorch TransformerEncoderLayer default dim_feedforward
    #             is 2048 — hyperparameter choice, not a kernel concern.
    layers = [init_encoder_layer(k, hidden, 4 * hidden)
              for k in jax.random.split(k2, num_layers)]
    dec_w = _glorot(k4, (total_nodes * hidden, 1))
    return {
        'local_tgcn': pack_tgcn_params(init_tgcn_params(k0, local_feats, hidden), hidden),
        'global_tgcn': pack_tgcn_params(init_tgcn_params(k1, global_feats, hidden), hidden),
        'encoder': pack_encoder_params(layers, num_heads),
        'pos_emb': 0.02 * jax.random.normal(k3, (1, total_nodes, hidden), jnp.float32),
        'dec_w2d': dec_w.reshape(total_nodes, hidden),   # row s*H+d -> [s, d]
        'dec_b': jnp.zeros((1, 1), jnp.float32),
    }


@functools.partial(jax.jit, static_argnames=('batch_size', 'local_nodes', 'global_nodes',
                                              'local_timesteps', 'global_timesteps',
                                              'num_heads', 'num_layers'))
def local_global_forward(params, local_x, global_x, local_adj, global_adj, *,
                         batch_size, local_nodes, global_nodes,
                         local_timesteps, global_timesteps, num_heads, num_layers):
    hidden = params['local_tgcn']['l_c_h'].shape[1]
    total = local_nodes + global_nodes

    # Glue: last-T slice + [T, N, F] layout so the kernel can batch X@W over all timesteps.
    lx = jnp.transpose(local_x[:, :, -local_timesteps:], (2, 0, 1))      # [T, B*Nl, F]
    gx = jnp.transpose(global_x[:, :, -global_timesteps:], (2, 0, 1))    # [T, B*Ng, F]

    # Flat-layout positional embedding / decoder weight (tiled over batch in glue).
    pos_flat = jnp.tile(params['pos_emb'].reshape(total, hidden), (batch_size, 1))
    dec_w_flat = jnp.tile(params['dec_w2d'], (batch_size, 1))

    out = local_global_pallas(
        lx, local_adj.astype(_BF16), params['local_tgcn'],
        gx, global_adj.astype(_BF16), params['global_tgcn'],
        params['encoder'], pos_flat, dec_w_flat, params['dec_b'],
        hidden=hidden, batch=batch_size, n_local=local_nodes, n_global=global_nodes,
        t_local=local_timesteps, t_global=global_timesteps,
        num_heads=num_heads, num_layers=num_layers)                      # [B, 1]
    return out[:, 0]                                                      # squeeze(1)


def ring_edges(nodes_per_graph, batch):
    srcs, dsts = [], []
    for b in range(batch):
        off = b * nodes_per_graph
        for i in range(nodes_per_graph):
            j = (i + 1) % nodes_per_graph
            srcs += [off + i, off + j]
            dsts += [off + j, off + i]
    return jnp.array([srcs, dsts], dtype=jnp.int32)


# ----------------------------------------------------------------------------
# Main
# ----------------------------------------------------------------------------
if __name__ == "__main__":
    # Model config (small, consistent with the PyTorch module's constructor)
    batch = 2
    local_nodes, global_nodes = 5, 3
    local_feats, global_feats = 4, 4
    local_hidden = [16]           # local_hidden_channels
    global_hidden = [16]          # global_hidden_channels (last must match local)
    local_timesteps, global_timesteps = 3, 3
    num_heads, num_layers = 4, 3
    total_nodes = local_nodes + global_nodes
    t_total = 6

    key = jax.random.PRNGKey(0)
    k_lx, k_gx, k_lw, k_gw, k_par = jax.random.split(key, 5)

    # Inputs (PyG-style batched graphs)
    local_x = jax.random.normal(k_lx, (batch * local_nodes, local_feats, t_total), jnp.float32)
    global_x = jax.random.normal(k_gx, (batch * global_nodes, global_feats, t_total), jnp.float32)
    local_edge_index = ring_edges(local_nodes, batch)
    global_edge_index = ring_edges(global_nodes, batch)
    local_edge_weight = jnp.abs(jax.random.normal(k_lw, (local_edge_index.shape[1],), jnp.float32)) + 0.5
    global_edge_weight = jnp.abs(jax.random.normal(k_gw, (global_edge_index.shape[1],), jnp.float32)) + 0.5
    readout_batch = jnp.repeat(jnp.arange(batch, dtype=jnp.int32), local_nodes)

    # batch_size = len(unique(readout_batch))  (glue, outside kernels)
    batch_size = int(jnp.unique(readout_batch).shape[0])

    # Dense normalized adjacency (glue) — GCNConv message passing as A_hat @ X @ W in-kernel.
    local_adj = build_norm_adj(local_edge_index, local_edge_weight, batch * local_nodes)
    global_adj = build_norm_adj(global_edge_index, global_edge_weight, batch * global_nodes)

    params = init_params(k_par,
                         local_feats=local_feats, global_feats=global_feats,
                         hidden=local_hidden[-1], total_nodes=total_nodes,
                         num_layers=num_layers, num_heads=num_heads)

    out = local_global_forward(params, local_x, global_x, local_adj, global_adj,
                               batch_size=batch_size,
                               local_nodes=local_nodes, global_nodes=global_nodes,
                               local_timesteps=local_timesteps,
                               global_timesteps=global_timesteps,
                               num_heads=num_heads, num_layers=num_layers)
    out = jax.block_until_ready(out)

    assert out.shape == (batch,), out.shape
    assert bool(jnp.all(jnp.isfinite(out)))
    print("KERNEL_OK")
</pallas_src>

<mosaic_0001>
module attributes {stable_mosaic.version = 11 : i64} {
  func.func @_local_global_kernel(%arg0: memref<3x10x4xf32, #tpu.memory_space<vmem>>, %arg1: memref<10x10xbf16, #tpu.memory_space<vmem>>, %arg2: memref<4x48xbf16, #tpu.memory_space<vmem>>, %arg3: memref<1x48xf32, #tpu.memory_space<vmem>>, %arg4: memref<48x32xbf16, #tpu.memory_space<vmem>>, %arg5: memref<16x32xbf16, #tpu.memory_space<vmem>>, %arg6: memref<1x32xf32, #tpu.memory_space<vmem>>, %arg7: memref<16x16xbf16, #tpu.memory_space<vmem>>, %arg8: memref<16x16xbf16, #tpu.memory_space<vmem>>, %arg9: memref<1x16xf32, #tpu.memory_space<vmem>>, %arg10: memref<3x6x4xf32, #tpu.memory_space<vmem>>, %arg11: memref<6x6xbf16, #tpu.memory_space<vmem>>, %arg12: memref<4x48xbf16, #tpu.memory_space<vmem>>, %arg13: memref<1x48xf32, #tpu.memory_space<vmem>>, %arg14: memref<48x32xbf16, #tpu.memory_space<vmem>>, %arg15: memref<16x32xbf16, #tpu.memory_space<vmem>>, %arg16: memref<1x32xf32, #tpu.memory_space<vmem>>, %arg17: memref<16x16xbf16, #tpu.memory_space<vmem>>, %arg18: memref<16x16xbf16, #tpu.memory_space<vmem>>, %arg19: memref<1x16xf32, #tpu.memory_space<vmem>>, %arg20: memref<16x16xf32, #tpu.memory_space<vmem>>, %arg21: memref<3x4x16x4xbf16, #tpu.memory_space<vmem>>, %arg22: memref<3x4x16x4xbf16, #tpu.memory_space<vmem>>, %arg23: memref<3x4x16x4xbf16, #tpu.memory_space<vmem>>, %arg24: memref<3x4x1x4xf32, #tpu.memory_space<vmem>>, %arg25: memref<3x4x1x4xf32, #tpu.memory_space<vmem>>, %arg26: memref<3x4x1x4xf32, #tpu.memory_space<vmem>>, %arg27: memref<3x4x4x16xbf16, #tpu.memory_space<vmem>>, %arg28: memref<3x1x16xf32, #tpu.memory_space<vmem>>, %arg29: memref<3x1x16xf32, #tpu.memory_space<vmem>>, %arg30: memref<3x1x16xf32, #tpu.memory_space<vmem>>, %arg31: memref<3x16x64xbf16, #tpu.memory_space<vmem>>, %arg32: memref<3x1x64xf32, #tpu.memory_space<vmem>>, %arg33: memref<3x64x16xbf16, #tpu.memory_space<vmem>>, %arg34: memref<3x1x16xf32, #tpu.memory_space<vmem>>, %arg35: memref<3x1x16xf32, #tpu.memory_space<vmem>>, %arg36: memref<3x1x16xf32, #tpu.memory_space<vmem>>, %arg37: memref<16x16xf32, #tpu.memory_space<vmem>>, %arg38: memref<1x1xf32, #tpu.memory_space<vmem>>, %arg39: memref<2x1xf32, #tpu.memory_space<vmem>>) attributes {dimension_semantics = [], scalar_prefetch = 0 : i64, scratch_operands = 0 : i64, tpu.core_type = #tpu.core_type<tc>} {
    %c0 = arith.constant 0 : index
    %c0_0 = arith.constant 0 : index
    %0 = vector.load %arg1[%c0, %c0_0] : memref<10x10xbf16, #tpu.memory_space<vmem>>, vector<10x10xbf16>
    %c0_1 = arith.constant 0 : index
    %c0_2 = arith.constant 0 : index
    %c0_3 = arith.constant 0 : index
    %1 = vector.load %arg0[%c0_1, %c0_2, %c0_3] : memref<3x10x4xf32, #tpu.memory_space<vmem>>, vector<3x10x4xf32>
    %c0_4 = arith.constant 0 : index
    %c0_5 = arith.constant 0 : index
    %2 = vector.load %arg2[%c0_4, %c0_5] : memref<4x48xbf16, #tpu.memory_space<vmem>>, vector<4x48xbf16>
    %3 = arith.truncf %1 : vector<3x10x4xf32> to vector<3x10x4xbf16>
    "tpu.trace_start"() <{level = 10 : i32, message = "tnf,fe->tne"}> : () -> ()
    %cst = arith.constant dense<0.000000e+00> : vector<3x10x48xf32>
    %4 = tpu.matmul %3, %2, %cst {dimension_numbers = #tpu.dot_dimension_numbers<[2], [0], [0, 1], [1], [0, 0, 0, 1, 1, 1], [], []>} : vector<3x10x4xbf16>, vector<4x48xbf16>, vector<3x10x48xf32> -> vector<3x10x48xf32>
    "tpu.trace_stop"() : () -> ()
    %c0_6 = arith.constant 0 : index
    %c0_7 = arith.constant 0 : index
    %5 = vector.load %arg3[%c0_6, %c0_7] : memref<1x48xf32, #tpu.memory_space<vmem>>, vector<1x48xf32>
    %c0_8 = arith.constant 0 : index
    %c0_9 = arith.constant 0 : index
    %6 = vector.load %arg4[%c0_8, %c0_9] : memref<48x32xbf16, #tpu.memory_space<vmem>>, vector<48x32xbf16>
    %c0_10 = arith.constant 0 : index
    %c0_11 = arith.constant 0 : index
    %7 = vector.load %arg5[%c0_10, %c0_11] : memref<16x32xbf16, #tpu.memory_space<vmem>>, vector<16x32xbf16>
    %c0_12 = arith.constant 0 : index
    %c0_13 = arith.constant 0 : index
    %8 = vector.load %arg6[%c0_12, %c0_13] : memref<1x32xf32, #tpu.memory_space<vmem>>, vector<1x32xf32>
    %c0_14 = arith.constant 0 : index
    %c0_15 = arith.constant 0 : index
    %9 = vector.load %arg7[%c0_14, %c0_15] : memref<16x16xbf16, #tpu.memory_space<vmem>>, vector<16x16xbf16>
    %c0_16 = arith.constant 0 : index
    %c0_17 = arith.constant 0 : index
    %10 = vector.load %arg8[%c0_16, %c0_17] : memref<16x16xbf16, #tpu.memory_space<vmem>>, vector<16x16xbf16>
    %c0_18 = arith.constant 0 : index
    %c0_19 = arith.constant 0 : index
    %11 = vector.load %arg9[%c0_18, %c0_19] : memref<1x16xf32, #tpu.memory_space<vmem>>, vector<1x16xf32>
    %12 = vector.extract_strided_slice %4 {offsets = [0, 0, 0], sizes = [1, 10, 48], strides = [1, 1, 1]} : vector<3x10x48xf32> to vector<1x10x48xf32>
    %13 = vector.shape_cast %12 : vector<1x10x48xf32> to vector<10x48xf32>
    %14 = arith.truncf %13 : vector<10x48xf32> to vector<10x48xbf16>
    %cst_20 = arith.constant dense<0.000000e+00> : vector<10x48xf32>
    %15 = tpu.matmul %0, %14, %cst_20 {dimension_numbers = #tpu.dot_dimension_numbers<[1], [0], [0], [1], [0, 0, 1, 1], [], []>} : vector<10x10xbf16>, vector<10x48xbf16>, vector<10x48xf32> -> vector<10x48xf32>
    %16 = vector.broadcast %5 : vector<1x48xf32> to vector<10x48xf32>
    %17 = arith.addf %15, %16 : vector<10x48xf32>
    %18 = arith.truncf %17 : vector<10x48xf32> to vector<10x48xbf16>
    %cst_21 = arith.constant dense<0.000000e+00> : vector<10x32xf32>
    %19 = tpu.matmul %18, %6, %cst_21 {dimension_numbers = #tpu.dot_dimension_numbers<[1], [0], [0], [1], [0, 0, 1, 1], [], []>} : vector<10x48xbf16>, vector<48x32xbf16>, vector<10x32xf32> -> vector<10x32xf32>
    %20 = vector.broadcast %8 : vector<1x32xf32> to vector<10x32xf32>
    %21 = arith.addf %19, %20 : vector<10x32xf32>
    %22 = vector.extract_strided_slice %17 {offsets = [0, 32], sizes = [10, 16], strides = [1, 1]} : vector<10x48xf32> to vector<10x16xf32>
    %23 = arith.truncf %22 : vector<10x16xf32> to vector<10x16xbf16>
    %cst_22 = arith.constant dense<0.000000e+00> : vector<10x16xf32>
    %24 = tpu.matmul %23, %9, %cst_22 {dimension_numbers = #tpu.dot_dimension_numbers<[1], [0], [0], [1], [0, 0, 1, 1], [], []>} : vector<10x16xbf16>, vector<16x16xbf16>, vector<10x16xf32> -> vector<10x16xf32>
    %25 = vector.broadcast %11 : vector<1x16xf32> to vector<10x16xf32>
    %26 = arith.addf %24, %25 : vector<10x16xf32>
    %27 = vector.extract_strided_slice %4 {offsets = [1, 0, 0], sizes = [1, 10, 48], strides = [1, 1, 1]} : vector<3x10x48xf32> to vector<1x10x48xf32>
    %28 = vector.shape_cast %27 : vector<1x10x48xf32> to vector<10x48xf32>
    %29 = arith.truncf %28 : vector<10x48xf32> to vector<10x48xbf16>
    %cst_23 = arith.constant dense<0.000000e+00> : vector<10x48xf32>
    %30 = tpu.matmul %0, %29, %cst_23 {dimension_numbers = #tpu.dot_dimension_numbers<[1], [0], [0], [1], [0, 0, 1, 1], [], []>} : vector<10x10xbf16>, vector<10x48xbf16>, vector<10x48xf32> -> vector<10x48xf32>
    %31 = vector.broadcast %5 : vector<1x48xf32> to vector<10x48xf32>
    %32 = arith.addf %30, %31 : vector<10x48xf32>
    %33 = arith.truncf %32 : vector<10x48xf32> to vector<10x48xbf16>
    %cst_24 = arith.constant dense<0.000000e+00> : vector<10x32xf32>
    %34 = tpu.matmul %33, %6, %cst_24 {dimension_numbers = #tpu.dot_dimension_numbers<[1], [0], [0], [1], [0, 0, 1, 1], [], []>} : vector<10x48xbf16>, vector<48x32xbf16>, vector<10x32xf32> -> vector<10x32xf32>
    %35 = vector.broadcast %8 : vector<1x32xf32> to vector<10x32xf32>
    %36 = arith.addf %34, %35 : vector<10x32xf32>
    %37 = vector.extract_strided_slice %32 {offsets = [0, 32], sizes = [10, 16], strides = [1, 1]} : vector<10x48xf32> to vector<10x16xf32>
    %38 = arith.truncf %37 : vector<10x16xf32> to vector<10x16xbf16>
    %cst_25 = arith.constant dense<0.000000e+00> : vector<10x16xf32>
    %39 = tpu.matmul %38, %9, %cst_25 {dimension_numbers = #tpu.dot_dimension_numbers<[1], [0], [0], [1], [0, 0, 1, 1], [], []>} : vector<10x16xbf16>, vector<16x16xbf16>, vector<10x16xf32> -> vector<10x16xf32>
    %40 = vector.broadcast %11 : vector<1x16xf32> to vector<10x16xf32>
    %41 = arith.addf %39, %40 : vector<10x16xf32>
    %42 = vector.extract_strided_slice %4 {offsets = [2, 0, 0], sizes = [1, 10, 48], strides = [1, 1, 1]} : vector<3x10x48xf32> to vector<1x10x48xf32>
    %43 = vector.shape_cast %42 : vector<1x10x48xf32> to vector<10x48xf32>
    %44 = arith.truncf %43 : vector<10x48xf32> to vector<10x48xbf16>
    %cst_26 = arith.constant dense<0.000000e+00> : vector<10x48xf32>
    %45 = tpu.matmul %0, %44, %cst_26 {dimension_numbers = #tpu.dot_dimension_numbers<[1], [0], [0], [1], [0, 0, 1, 1], [], []>} : vector<10x10xbf16>, vector<10x48xbf16>, vector<10x48xf32> -> vector<10x48xf32>
    %46 = vector.broadcast %5 : vector<1x48xf32> to vector<10x48xf32>
    %47 = arith.addf %45, %46 : vector<10x48xf32>
    %48 = arith.truncf %47 : vector<10x48xf32> to vector<10x48xbf16>
    %cst_27 = arith.constant dense<0.000000e+00> : vector<10x32xf32>
    %49 = tpu.matmul %48, %6, %cst_27 {dimension_numbers = #tpu.dot_dimension_numbers<[1], [0], [0], [1], [0, 0, 1, 1], [], []>} : vector<10x48xbf16>, vector<48x32xbf16>, vector<10x32xf32> -> vector<10x32xf32>
    %50 = vector.broadcast %8 : vector<1x32xf32> to vector<10x32xf32>
    %51 = arith.addf %49, %50 : vector<10x32xf32>
    %52 = vector.extract_strided_slice %47 {offsets = [0, 32], sizes = [10, 16], strides = [1, 1]} : vector<10x48xf32> to vector<10x16xf32>
    %53 = arith.truncf %52 : vector<10x16xf32> to vector<10x16xbf16>
    %cst_28 = arith.constant dense<0.000000e+00> : vector<10x16xf32>
    %54 = tpu.matmul %53, %9, %cst_28 {dimension_numbers = #tpu.dot_dimension_numbers<[1], [0], [0], [1], [0, 0, 1, 1], [], []>} : vector<10x16xbf16>, vector<16x16xbf16>, vector<10x16xf32> -> vector<10x16xf32>
    %55 = vector.broadcast %11 : vector<1x16xf32> to vector<10x16xf32>
    %56 = arith.addf %54, %55 : vector<10x16xf32>
    %cst_29 = arith.constant 0.000000e+00 : f32
    %57 = vector.broadcast %cst_29 : f32 to vector<10x16xf32>
    %58 = arith.truncf %57 : vector<10x16xf32> to vector<10x16xbf16>
    %cst_30 = arith.constant dense<0.000000e+00> : vector<10x32xf32>
    %59 = tpu.matmul %58, %7, %cst_30 {dimension_numbers = #tpu.dot_dimension_numbers<[1], [0], [0], [1], [0, 0, 1, 1], [], []>} : vector<10x16xbf16>, vector<16x32xbf16>, vector<10x32xf32> -> vector<10x32xf32>
    %60 = arith.addf %21, %59 : vector<10x32xf32>
    %61 = arith.negf %60 : vector<10x32xf32>
    %62 = math.exp %61 : vector<10x32xf32>
    %cst_31 = arith.constant 1.000000e+00 : f32
    %63 = vector.broadcast %cst_31 : f32 to vector<10x32xf32>
    %64 = arith.addf %63, %62 : vector<10x32xf32>
    %65 = arith.divf %63, %64 : vector<10x32xf32>
    %66 = vector.extract_strided_slice %65 {offsets = [0, 0], sizes = [10, 16], strides = [1, 1]} : vector<10x32xf32> to vector<10x16xf32>
    %67 = vector.extract_strided_slice %65 {offsets = [0, 16], sizes = [10, 16], strides = [1, 1]} : vector<10x32xf32> to vector<10x16xf32>
    %68 = arith.mulf %57, %67 : vector<10x16xf32>
    %69 = arith.truncf %68 : vector<10x16xf32> to vector<10x16xbf16>
    %cst_32 = arith.constant dense<0.000000e+00> : vector<10x16xf32>
    %70 = tpu.matmul %69, %10, %cst_32 {dimension_numbers = #tpu.dot_dimension_numbers<[1], [0], [0], [1], [0, 0, 1, 1], [], []>} : vector<10x16xbf16>, vector<16x16xbf16>, vector<10x16xf32> -> vector<10x16xf32>
    %71 = arith.addf %26, %70 : vector<10x16xf32>
    %72 = math.tanh %71 : vector<10x16xf32>
    %73 = arith.mulf %66, %57 : vector<10x16xf32>
    %cst_33 = arith.constant 1.000000e+00 : f32
    %74 = vector.broadcast %cst_33 : f32 to vector<10x16xf32>
    %75 = arith.subf %74, %66 : vector<10x16xf32>
    %76 = arith.mulf %75, %72 : vector<10x16xf32>
    %77 = arith.addf %73, %76 : vector<10x16xf32>
    %78 = arith.truncf %77 : vector<10x16xf32> to vector<10x16xbf16>
    %cst_34 = arith.constant dense<0.000000e+00> : vector<10x32xf32>
    %79 = tpu.matmul %78, %7, %cst_34 {dimension_numbers = #tpu.dot_dimension_numbers<[1], [0], [0], [1], [0, 0, 1, 1], [], []>} : vector<10x16xbf16>, vector<16x32xbf16>, vector<10x32xf32> -> vector<10x32xf32>
    %80 = arith.addf %36, %79 : vector<10x32xf32>
    %81 = arith.negf %80 : vector<10x32xf32>
    %82 = math.exp %81 : vector<10x32xf32>
    %cst_35 = arith.constant 1.000000e+00 : f32
    %83 = vector.broadcast %cst_35 : f32 to vector<10x32xf32>
    %84 = arith.addf %83, %82 : vector<10x32xf32>
    %85 = arith.divf %83, %84 : vector<10x32xf32>
    %86 = vector.extract_strided_slice %85 {offsets = [0, 0], sizes = [10, 16], strides = [1, 1]} : vector<10x32xf32> to vector<10x16xf32>
    %87 = vector.extract_strided_slice %85 {offsets = [0, 16], sizes = [10, 16], strides = [1, 1]} : vector<10x32xf32> to vector<10x16xf32>
    %88 = arith.mulf %77, %87 : vector<10x16xf32>
    %89 = arith.truncf %88 : vector<10x16xf32> to vector<10x16xbf16>
    %cst_36 = arith.constant dense<0.000000e+00> : vector<10x16xf32>
    %90 = tpu.matmul %89, %10, %cst_36 {dimension_numbers = #tpu.dot_dimension_numbers<[1], [0], [0], [1], [0, 0, 1, 1], [], []>} : vector<10x16xbf16>, vector<16x16xbf16>, vector<10x16xf32> -> vector<10x16xf32>
    %91 = arith.addf %41, %90 : vector<10x16xf32>
    %92 = math.tanh %91 : vector<10x16xf32>
    %93 = arith.mulf %86, %77 : vector<10x16xf32>
    %cst_37 = arith.constant 1.000000e+00 : f32
    %94 = vector.broadcast %cst_37 : f32 to vector<10x16xf32>
    %95 = arith.subf %94, %86 : vector<10x16xf32>
    %96 = arith.mulf %95, %92 : vector<10x16xf32>
    %97 = arith.addf %93, %96 : vector<10x16xf32>
    %98 = arith.truncf %97 : vector<10x16xf32> to vector<10x16xbf16>
    %cst_38 = arith.constant dense<0.000000e+00> : vector<10x32xf32>
    %99 = tpu.matmul %98, %7, %cst_38 {dimension_numbers = #tpu.dot_dimension_numbers<[1], [0], [0], [1], [0, 0, 1, 1], [], []>} : vector<10x16xbf16>, vector<16x32xbf16>, vector<10x32xf32> -> vector<10x32xf32>
    %100 = arith.addf %51, %99 : vector<10x32xf32>
    %101 = arith.negf %100 : vector<10x32xf32>
    %102 = math.exp %101 : vector<10x32xf32>
    %cst_39 = arith.constant 1.000000e+00 : f32
    %103 = vector.broadcast %cst_39 : f32 to vector<10x32xf32>
    %104 = arith.addf %103, %102 : vector<10x32xf32>
    %105 = arith.divf %103, %104 : vector<10x32xf32>
    %106 = vector.extract_strided_slice %105 {offsets = [0, 0], sizes = [10, 16], strides = [1, 1]} : vector<10x32xf32> to vector<10x16xf32>
    %107 = vector.extract_strided_slice %105 {offsets = [0, 16], sizes = [10, 16], strides = [1, 1]} : vector<10x32xf32> to vector<10x16xf32>
    %108 = arith.mulf %97, %107 : vector<10x16xf32>
    %109 = arith.truncf %108 : vector<10x16xf32> to vector<10x16xbf16>
    %cst_40 = arith.constant dense<0.000000e+00> : vector<10x16xf32>
    %110 = tpu.matmul %109, %10, %cst_40 {dimension_numbers = #tpu.dot_dimension_numbers<[1], [0], [0], [1], [0, 0, 1, 1], [], []>} : vector<10x16xbf16>, vector<16x16xbf16>, vector<10x16xf32> -> vector<10x16xf32>
    %111 = arith.addf %56, %110 : vector<10x16xf32>
    %112 = math.tanh %111 : vector<10x16xf32>
    %113 = arith.mulf %106, %97 : vector<10x16xf32>
    %cst_41 = arith.constant 1.000000e+00 : f32
    %114 = vector.broadcast %cst_41 : f32 to vector<10x16xf32>
    %115 = arith.subf %114, %106 : vector<10x16xf32>
    %116 = arith.mulf %115, %112 : vector<10x16xf32>
    %117 = arith.addf %113, %116 : vector<10x16xf32>
    %c0_42 = arith.constant 0 : index
    %c0_43 = arith.constant 0 : index
    %118 = vector.load %arg11[%c0_42, %c0_43] : memref<6x6xbf16, #tpu.memory_space<vmem>>, vector<6x6xbf16>
    %c0_44 = arith.constant 0 : index
    %c0_45 = arith.constant 0 : index
    %c0_46 = arith.constant 0 : index
    %119 = vector.load %arg10[%c0_44, %c0_45, %c0_46] : memref<3x6x4xf32, #tpu.memory_space<vmem>>, vector<3x6x4xf32>
    %c0_47 = arith.constant 0 : index
    %c0_48 = arith.constant 0 : index
    %120 = vector.load %arg12[%c0_47, %c0_48] : memref<4x48xbf16, #tpu.memory_space<vmem>>, vector<4x48xbf16>
    %121 = arith.truncf %119 : vector<3x6x4xf32> to vector<3x6x4xbf16>
    "tpu.trace_start"() <{level = 10 : i32, message = "tnf,fe->tne"}> : () -> ()
    %cst_49 = arith.constant dense<0.000000e+00> : vector<3x6x48xf32>
    %122 = tpu.matmul %121, %120, %cst_49 {dimension_numbers = #tpu.dot_dimension_numbers<[2], [0], [0, 1], [1], [0, 0, 0, 1, 1, 1], [], []>} : vector<3x6x4xbf16>, vector<4x48xbf16>, vector<3x6x48xf32> -> vector<3x6x48xf32>
    "tpu.trace_stop"() : () -> ()
    %c0_50 = arith.constant 0 : index
    %c0_51 = arith.constant 0 : index
    %123 = vector.load %arg13[%c0_50, %c0_51] : memref<1x48xf32, #tpu.memory_space<vmem>>, vector<1x48xf32>
    %c0_52 = arith.constant 0 : index
    %c0_53 = arith.constant 0 : index
    %124 = vector.load %arg14[%c0_52, %c0_53] : memref<48x32xbf16, #tpu.memory_space<vmem>>, vector<48x32xbf16>
    %c0_54 = arith.constant 0 : index
    %c0_55 = arith.constant 0 : index
    %125 = vector.load %arg15[%c0_54, %c0_55] : memref<16x32xbf16, #tpu.memory_space<vmem>>, vector<16x32xbf16>
    %c0_56 = arith.constant 0 : index
    %c0_57 = arith.constant 0 : index
    %126 = vector.load %arg16[%c0_56, %c0_57] : memref<1x32xf32, #tpu.memory_space<vmem>>, vector<1x32xf32>
    %c0_58 = arith.constant 0 : index
    %c0_59 = arith.constant 0 : index
    %127 = vector.load %arg17[%c0_58, %c0_59] : memref<16x16xbf16, #tpu.memory_space<vmem>>, vector<16x16xbf16>
    %c0_60 = arith.constant 0 : index
    %c0_61 = arith.constant 0 : index
    %128 = vector.load %arg18[%c0_60, %c0_61] : memref<16x16xbf16, #tpu.memory_space<vmem>>, vector<16x16xbf16>
    %c0_62 = arith.constant 0 : index
    %c0_63 = arith.constant 0 : index
    %129 = vector.load %arg19[%c0_62, %c0_63] : memref<1x16xf32, #tpu.memory_space<vmem>>, vector<1x16xf32>
    %130 = vector.extract_strided_slice %122 {offsets = [0, 0, 0], sizes = [1, 6, 48], strides = [1, 1, 1]} : vector<3x6x48xf32> to vector<1x6x48xf32>
    %131 = vector.shape_cast %130 : vector<1x6x48xf32> to vector<6x48xf32>
    %132 = arith.truncf %131 : vector<6x48xf32> to vector<6x48xbf16>
    %cst_64 = arith.constant dense<0.000000e+00> : vector<6x48xf32>
    %133 = tpu.matmul %118, %132, %cst_64 {dimension_numbers = #tpu.dot_dimension_numbers<[1], [0], [0], [1], [0, 0, 1, 1], [], []>} : vector<6x6xbf16>, vector<6x48xbf16>, vector<6x48xf32> -> vector<6x48xf32>
    %134 = vector.broadcast %123 : vector<1x48xf32> to vector<6x48xf32>
    %135 = arith.addf %133, %134 : vector<6x48xf32>
    %136 = arith.truncf %135 : vector<6x48xf32> to vector<6x48xbf16>
    %cst_65 = arith.constant dense<0.000000e+00> : vector<6x32xf32>
    %137 = tpu.matmul %136, %124, %cst_65 {dimension_numbers = #tpu.dot_dimension_numbers<[1], [0], [0], [1], [0, 0, 1, 1], [], []>} : vector<6x48xbf16>, vector<48x32xbf16>, vector<6x32xf32> -> vector<6x32xf32>
    %138 = vector.broadcast %126 : vector<1x32xf32> to vector<6x32xf32>
    %139 = arith.addf %137, %138 : vector<6x32xf32>
    %140 = vector.extract_strided_slice %135 {offsets = [0, 32], sizes = [6, 16], strides = [1, 1]} : vector<6x48xf32> to vector<6x16xf32>
    %141 = arith.truncf %140 : vector<6x16xf32> to vector<6x16xbf16>
    %cst_66 = arith.constant dense<0.000000e+00> : vector<6x16xf32>
    %142 = tpu.matmul %141, %127, %cst_66 {dimension_numbers = #tpu.dot_dimension_numbers<[1], [0], [0], [1], [0, 0, 1, 1], [], []>} : vector<6x16xbf16>, vector<16x16xbf16>, vector<6x16xf32> -> vector<6x16xf32>
    %143 = vector.broadcast %129 : vector<1x16xf32> to vector<6x16xf32>
    %144 = arith.addf %142, %143 : vector<6x16xf32>
    %145 = vector.extract_strided_slice %122 {offsets = [1, 0, 0], sizes = [1, 6, 48], strides = [1, 1, 1]} : vector<3x6x48xf32> to vector<1x6x48xf32>
    %146 = vector.shape_cast %145 : vector<1x6x48xf32> to vector<6x48xf32>
    %147 = arith.truncf %146 : vector<6x48xf32> to vector<6x48xbf16>
    %cst_67 = arith.constant dense<0.000000e+00> : vector<6x48xf32>
    %148 = tpu.matmul %118, %147, %cst_67 {dimension_numbers = #tpu.dot_dimension_numbers<[1], [0], [0], [1], [0, 0, 1, 1], [], []>} : vector<6x6xbf16>, vector<6x48xbf16>, vector<6x48xf32> -> vector<6x48xf32>
    %149 = vector.broadcast %123 : vector<1x48xf32> to vector<6x48xf32>
    %150 = arith.addf %148, %149 : vector<6x48xf32>
    %151 = arith.truncf %150 : vector<6x48xf32> to vector<6x48xbf16>
    %cst_68 = arith.constant dense<0.000000e+00> : vector<6x32xf32>
    %152 = tpu.matmul %151, %124, %cst_68 {dimension_numbers = #tpu.dot_dimension_numbers<[1], [0], [0], [1], [0, 0, 1, 1], [], []>} : vector<6x48xbf16>, vector<48x32xbf16>, vector<6x32xf32> -> vector<6x32xf32>
    %153 = vector.broadcast %126 : vector<1x32xf32> to vector<6x32xf32>
    %154 = arith.addf %152, %153 : vector<6x32xf32>
    %155 = vector.extract_strided_slice %150 {offsets = [0, 32], sizes = [6, 16], strides = [1, 1]} : vector<6x48xf32> to vector<6x16xf32>
    %156 = arith.truncf %155 : vector<6x16xf32> to vector<6x16xbf16>
    %cst_69 = arith.constant dense<0.000000e+00> : vector<6x16xf32>
    %157 = tpu.matmul %156, %127, %cst_69 {dimension_numbers = #tpu.dot_dimension_numbers<[1], [0], [0], [1], [0, 0, 1, 1], [], []>} : vector<6x16xbf16>, vector<16x16xbf16>, vector<6x16xf32> -> vector<6x16xf32>
    %158 = vector.broadcast %129 : vector<1x16xf32> to vector<6x16xf32>
    %159 = arith.addf %157, %158 : vector<6x16xf32>
    %160 = vector.extract_strided_slice %122 {offsets = [2, 0, 0], sizes = [1, 6, 48], strides = [1, 1, 1]} : vector<3x6x48xf32> to vector<1x6x48xf32>
    %161 = vector.shape_cast %160 : vector<1x6x48xf32> to vector<6x48xf32>
    %162 = arith.truncf %161 : vector<6x48xf32> to vector<6x48xbf16>
    %cst_70 = arith.constant dense<0.000000e+00> : vector<6x48xf32>
    %163 = tpu.matmul %118, %162, %cst_70 {dimension_numbers = #tpu.dot_dimension_numbers<[1], [0], [0], [1], [0, 0, 1, 1], [], []>} : vector<6x6xbf16>, vector<6x48xbf16>, vector<6x48xf32> -> vector<6x48xf32>
    %164 = vector.broadcast %123 : vector<1x48xf32> to vector<6x48xf32>
    %165 = arith.addf %163, %164 : vector<6x48xf32>
    %166 = arith.truncf %165 : vector<6x48xf32> to vector<6x48xbf16>
    %cst_71 = arith.constant dense<0.000000e+00> : vector<6x32xf32>
    %167 = tpu.matmul %166, %124, %cst_71 {dimension_numbers = #tpu.dot_dimension_numbers<[1], [0], [0], [1], [0, 0, 1, 1], [], []>} : vector<6x48xbf16>, vector<48x32xbf16>, vector<6x32xf32> -> vector<6x32xf32>
    %168 = vector.broadcast %126 : vector<1x32xf32> to vector<6x32xf32>
    %169 = arith.addf %167, %168 : vector<6x32xf32>
    %170 = vector.extract_strided_slice %165 {offsets = [0, 32], sizes = [6, 16], strides = [1, 1]} : vector<6x48xf32> to vector<6x16xf32>
    %171 = arith.truncf %170 : vector<6x16xf32> to vector<6x16xbf16>
    %cst_72 = arith.constant dense<0.000000e+00> : vector<6x16xf32>
    %172 = tpu.matmul %171, %127, %cst_72 {dimension_numbers = #tpu.dot_dimension_numbers<[1], [0], [0], [1], [0, 0, 1, 1], [], []>} : vector<6x16xbf16>, vector<16x16xbf16>, vector<6x16xf32> -> vector<6x16xf32>
    %173 = vector.broadcast %129 : vector<1x16xf32> to vector<6x16xf32>
    %174 = arith.addf %172, %173 : vector<6x16xf32>
    %cst_73 = arith.constant 0.000000e+00 : f32
    %175 = vector.broadcast %cst_73 : f32 to vector<6x16xf32>
    %176 = arith.truncf %175 : vector<6x16xf32> to vector<6x16xbf16>
    %cst_74 = arith.constant dense<0.000000e+00> : vector<6x32xf32>
    %177 = tpu.matmul %176, %125, %cst_74 {dimension_numbers = #tpu.dot_dimension_numbers<[1], [0], [0], [1], [0, 0, 1, 1], [], []>} : vector<6x16xbf16>, vector<16x32xbf16>, vector<6x32xf32> -> vector<6x32xf32>
    %178 = arith.addf %139, %177 : vector<6x32xf32>
    %179 = arith.negf %178 : vector<6x32xf32>
    %180 = math.exp %179 : vector<6x32xf32>
    %cst_75 = arith.constant 1.000000e+00 : f32
    %181 = vector.broadcast %cst_75 : f32 to vector<6x32xf32>
    %182 = arith.addf %181, %180 : vector<6x32xf32>
    %183 = arith.divf %181, %182 : vector<6x32xf32>
    %184 = vector.extract_strided_slice %183 {offsets = [0, 0], sizes = [6, 16], strides = [1, 1]} : vector<6x32xf32> to vector<6x16xf32>
    %185 = vector.extract_strided_slice %183 {offsets = [0, 16], sizes = [6, 16], strides = [1, 1]} : vector<6x32xf32> to vector<6x16xf32>
    %186 = arith.mulf %175, %185 : vector<6x16xf32>
    %187 = arith.truncf %186 : vector<6x16xf32> to vector<6x16xbf16>
    %cst_76 = arith.constant dense<0.000000e+00> : vector<6x16xf32>
    %188 = tpu.matmul %187, %128, %cst_76 {dimension_numbers = #tpu.dot_dimension_numbers<[1], [0], [0], [1], [0, 0, 1, 1], [], []>} : vector<6x16xbf16>, vector<16x16xbf16>, vector<6x16xf32> -> vector<6x16xf32>
    %189 = arith.addf %144, %188 : vector<6x16xf32>
    %190 = math.tanh %189 : vector<6x16xf32>
    %191 = arith.mulf %184, %175 : vector<6x16xf32>
    %cst_77 = arith.constant 1.000000e+00 : f32
    %192 = vector.broadcast %cst_77 : f32 to vector<6x16xf32>
    %193 = arith.subf %192, %184 : vector<6x16xf32>
    %194 = arith.mulf %193, %190 : vector<6x16xf32>
    %195 = arith.addf %191, %194 : vector<6x16xf32>
    %196 = arith.truncf %195 : vector<6x16xf32> to vector<6x16xbf16>
    %cst_78 = arith.constant dense<0.000000e+00> : vector<6x32xf32>
    %197 = tpu.matmul %196, %125, %cst_78 {dimension_numbers = #tpu.dot_dimension_numbers<[1], [0], [0], [1], [0, 0, 1, 1], [], []>} : vector<6x16xbf16>, vector<16x32xbf16>, vector<6x32xf32> -> vector<6x32xf32>
    %198 = arith.addf %154, %197 : vector<6x32xf32>
    %199 = arith.negf %198 : vector<6x32xf32>
    %200 = math.exp %199 : vector<6x32xf32>
    %cst_79 = arith.constant 1.000000e+00 : f32
    %201 = vector.broadcast %cst_79 : f32 to vector<6x32xf32>
    %202 = arith.addf %201, %200 : vector<6x32xf32>
    %203 = arith.divf %201, %202 : vector<6x32xf32>
    %204 = vector.extract_strided_slice %203 {offsets = [0, 0], sizes = [6, 16], strides = [1, 1]} : vector<6x32xf32> to vector<6x16xf32>
    %205 = vector.extract_strided_slice %203 {offsets = [0, 16], sizes = [6, 16], strides = [1, 1]} : vector<6x32xf32> to vector<6x16xf32>
    %206 = arith.mulf %195, %205 : vector<6x16xf32>
    %207 = arith.truncf %206 : vector<6x16xf32> to vector<6x16xbf16>
    %cst_80 = arith.constant dense<0.000000e+00> : vector<6x16xf32>
    %208 = tpu.matmul %207, %128, %cst_80 {dimension_numbers = #tpu.dot_dimension_numbers<[1], [0], [0], [1], [0, 0, 1, 1], [], []>} : vector<6x16xbf16>, vector<16x16xbf16>, vector<6x16xf32> -> vector<6x16xf32>
    %209 = arith.addf %159, %208 : vector<6x16xf32>
    %210 = math.tanh %209 : vector<6x16xf32>
    %211 = arith.mulf %204, %195 : vector<6x16xf32>
    %cst_81 = arith.constant 1.000000e+00 : f32
    %212 = vector.broadcast %cst_81 : f32 to vector<6x16xf32>
    %213 = arith.subf %212, %204 : vector<6x16xf32>
    %214 = arith.mulf %213, %210 : vector<6x16xf32>
    %215 = arith.addf %211, %214 : vector<6x16xf32>
    %216 = arith.truncf %215 : vector<6x16xf32> to vector<6x16xbf16>
    %cst_82 = arith.constant dense<0.000000e+00> : vector<6x32xf32>
    %217 = tpu.matmul %216, %125, %cst_82 {dimension_numbers = #tpu.dot_dimension_numbers<[1], [0], [0], [1], [0, 0, 1, 1], [], []>} : vector<6x16xbf16>, vector<16x32xbf16>, vector<6x32xf32> -> vector<6x32xf32>
    %218 = arith.addf %169, %217 : vector<6x32xf32>
    %219 = arith.negf %218 : vector<6x32xf32>
    %220 = math.exp %219 : vector<6x32xf32>
    %cst_83 = arith.constant 1.000000e+00 : f32
    %221 = vector.broadcast %cst_83 : f32 to vector<6x32xf32>
    %222 = arith.addf %221, %220 : vector<6x32xf32>
    %223 = arith.divf %221, %222 : vector<6x32xf32>
    %224 = vector.extract_strided_slice %223 {offsets = [0, 0], sizes = [6, 16], strides = [1, 1]} : vector<6x32xf32> to vector<6x16xf32>
    %225 = vector.extract_strided_slice %223 {offsets = [0, 16], sizes = [6, 16], strides = [1, 1]} : vector<6x32xf32> to vector<6x16xf32>
    %226 = arith.mulf %215, %225 : vector<6x16xf32>
    %227 = arith.truncf %226 : vector<6x16xf32> to vector<6x16xbf16>
    %cst_84 = arith.constant dense<0.000000e+00> : vector<6x16xf32>
    %228 = tpu.matmul %227, %128, %cst_84 {dimension_numbers = #tpu.dot_dimension_numbers<[1], [0], [0], [1], [0, 0, 1, 1], [], []>} : vector<6x16xbf16>, vector<16x16xbf16>, vector<6x16xf32> -> vector<6x16xf32>
    %229 = arith.addf %174, %228 : vector<6x16xf32>
    %230 = math.tanh %229 : vector<6x16xf32>
    %231 = arith.mulf %224, %215 : vector<6x16xf32>
    %cst_85 = arith.constant 1.000000e+00 : f32
    %232 = vector.broadcast %cst_85 : f32 to vector<6x16xf32>
    %233 = arith.subf %232, %224 : vector<6x16xf32>
    %234 = arith.mulf %233, %230 : vector<6x16xf32>
    %235 = arith.addf %231, %234 : vector<6x16xf32>
    %236 = vector.extract_strided_slice %117 {offsets = [0, 0], sizes = [5, 16], strides = [1, 1]} : vector<10x16xf32> to vector<5x16xf32>
    %237 = vector.extract_strided_slice %235 {offsets = [0, 0], sizes = [3, 16], strides = [1, 1]} : vector<6x16xf32> to vector<3x16xf32>
    %238 = vector.extract_strided_slice %117 {offsets = [5, 0], sizes = [5, 16], strides = [1, 1]} : vector<10x16xf32> to vector<5x16xf32>
    %239 = vector.extract_strided_slice %235 {offsets = [3, 0], sizes = [3, 16], strides = [1, 1]} : vector<6x16xf32> to vector<3x16xf32>
    %240 = tpu.concatenate %236, %237, %238, %239 in 0 : vector<5x16xf32>, vector<3x16xf32>, vector<5x16xf32>, vector<3x16xf32> -> vector<16x16xf32>
    %c0_86 = arith.constant 0 : index
    %c0_87 = arith.constant 0 : index
    %241 = vector.load %arg20[%c0_86, %c0_87] : memref<16x16xf32, #tpu.memory_space<vmem>>, vector<16x16xf32>
    %242 = arith.addf %240, %241 : vector<16x16xf32>
    %cst_88 = arith.constant 0.000000e+00 : f32
    %243 = vector.broadcast %cst_88 : f32 to vector<16x16xf32>
    %c0_89 = arith.constant 0 : index
    %c0_90 = arith.constant 0 : index
    %c0_91 = arith.constant 0 : index
    %244 = vector.load %arg28[%c0_89, %c0_90, %c0_91] : memref<3x1x16xf32, #tpu.memory_space<vmem>>, vector<1x1x16xf32>
    %245 = vector.shape_cast %244 : vector<1x1x16xf32> to vector<1x16xf32>
    %246 = vector.broadcast %245 : vector<1x16xf32> to vector<16x16xf32>
    %247 = arith.addf %243, %246 : vector<16x16xf32>
    %c0_92 = arith.constant 0 : index
    %c0_93 = arith.constant 0 : index
    %c0_94 = arith.constant 0 : index
    %c0_95 = arith.constant 0 : index
    %248 = vector.load %arg21[%c0_92, %c0_93, %c0_94, %c0_95] : memref<3x4x16x4xbf16, #tpu.memory_space<vmem>>, vector<1x1x16x4xbf16>
    %249 = vector.shape_cast %248 : vector<1x1x16x4xbf16> to vector<16x4xbf16>
    %250 = arith.truncf %242 : vector<16x16xf32> to vector<16x16xbf16>
    %cst_96 = arith.constant dense<0.000000e+00> : vector<16x4xf32>
    %251 = tpu.matmul %250, %249, %cst_96 {dimension_numbers = #tpu.dot_dimension_numbers<[1], [0], [0], [1], [0, 0, 1, 1], [], []>} : vector<16x16xbf16>, vector<16x4xbf16>, vector<16x4xf32> -> vector<16x4xf32>
    %c0_97 = arith.constant 0 : index
    %c0_98 = arith.constant 0 : index
    %c0_99 = arith.constant 0 : index
    %c0_100 = arith.constant 0 : index
    %252 = vector.load %arg24[%c0_97, %c0_98, %c0_99, %c0_100] : memref<3x4x1x4xf32, #tpu.memory_space<vmem>>, vector<1x1x1x4xf32>
    %253 = vector.shape_cast %252 : vector<1x1x1x4xf32> to vector<1x4xf32>
    %254 = vector.broadcast %253 : vector<1x4xf32> to vector<16x4xf32>
    %255 = arith.addf %251, %254 : vector<16x4xf32>
    %c0_101 = arith.constant 0 : index
    %c0_102 = arith.constant 0 : index
    %c0_103 = arith.constant 0 : index
    %c0_104 = arith.constant 0 : index
    %256 = vector.load %arg22[%c0_101, %c0_102, %c0_103, %c0_104] : memref<3x4x16x4xbf16, #tpu.memory_space<vmem>>, vector<1x1x16x4xbf16>
    %257 = vector.shape_cast %256 : vector<1x1x16x4xbf16> to vector<16x4xbf16>
    %258 = arith.truncf %242 : vector<16x16xf32> to vector<16x16xbf16>
    %cst_105 = arith.constant dense<0.000000e+00> : vector<16x4xf32>
    %259 = tpu.matmul %258, %257, %cst_105 {dimension_numbers = #tpu.dot_dimension_numbers<[1], [0], [0], [1], [0, 0, 1, 1], [], []>} : vector<16x16xbf16>, vector<16x4xbf16>, vector<16x4xf32> -> vector<16x4xf32>
    %c0_106 = arith.constant 0 : index
    %c0_107 = arith.constant 0 : index
    %c0_108 = arith.constant 0 : index
    %c0_109 = arith.constant 0 : index
    %260 = vector.load %arg25[%c0_106, %c0_107, %c0_108, %c0_109] : memref<3x4x1x4xf32, #tpu.memory_space<vmem>>, vector<1x1x1x4xf32>
    %261 = vector.shape_cast %260 : vector<1x1x1x4xf32> to vector<1x4xf32>
    %262 = vector.broadcast %261 : vector<1x4xf32> to vector<16x4xf32>
    %263 = arith.addf %259, %262 : vector<16x4xf32>
    %c0_110 = arith.constant 0 : index
    %c0_111 = arith.constant 0 : index
    %c0_112 = arith.constant 0 : index
    %c0_113 = arith.constant 0 : index
    %264 = vector.load %arg23[%c0_110, %c0_111, %c0_112, %c0_113] : memref<3x4x16x4xbf16, #tpu.memory_space<vmem>>, vector<1x1x16x4xbf16>
    %265 = vector.shape_cast %264 : vector<1x1x16x4xbf16> to vector<16x4xbf16>
    %266 = arith.truncf %242 : vector<16x16xf32> to vector<16x16xbf16>
    %cst_114 = arith.constant dense<0.000000e+00> : vector<16x4xf32>
    %267 = tpu.matmul %266, %265, %cst_114 {dimension_numbers = #tpu.dot_dimension_numbers<[1], [0], [0], [1], [0, 0, 1, 1], [], []>} : vector<16x16xbf16>, vector<16x4xbf16>, vector<16x4xf32> -> vector<16x4xf32>
    %c0_115 = arith.constant 0 : index
    %c0_116 = arith.constant 0 : index
    %c0_117 = arith.constant 0 : index
    %c0_118 = arith.constant 0 : index
    %268 = vector.load %arg26[%c0_115, %c0_116, %c0_117, %c0_118] : memref<3x4x1x4xf32, #tpu.memory_space<vmem>>, vector<1x1x1x4xf32>
    %269 = vector.shape_cast %268 : vector<1x1x1x4xf32> to vector<1x4xf32>
    %270 = vector.broadcast %269 : vector<1x4xf32> to vector<16x4xf32>
    %271 = arith.addf %267, %270 : vector<16x4xf32>
    %272 = vector.extract_strided_slice %255 {offsets = [0, 0], sizes = [8, 4], strides = [1, 1]} : vector<16x4xf32> to vector<8x4xf32>
    %273 = vector.extract_strided_slice %263 {offsets = [0, 0], sizes = [8, 4], strides = [1, 1]} : vector<16x4xf32> to vector<8x4xf32>
    %274 = arith.truncf %272 : vector<8x4xf32> to vector<8x4xbf16>
    %275 = arith.truncf %273 : vector<8x4xf32> to vector<8x4xbf16>
    "tpu.trace_start"() <{level = 10 : i32, message = "qd,kd->qk"}> : () -> ()
    %cst_119 = arith.constant dense<0.000000e+00> : vector<8x8xf32>
    %276 = tpu.matmul %274, %275, %cst_119 {dimension_numbers = #tpu.dot_dimension_numbers<[1], [1], [0], [0], [0, 0, 1, 0], [], []>} : vector<8x4xbf16>, vector<8x4xbf16>, vector<8x8xf32> -> vector<8x8xf32>
    "tpu.trace_stop"() : () -> ()
    %cst_120 = arith.constant 5.000000e-01 : f32
    %277 = vector.broadcast %cst_120 : f32 to vector<8x8xf32>
    %278 = arith.mulf %276, %277 : vector<8x8xf32>
    %cst_121 = arith.constant dense<0xFF800000> : vector<8xf32>
    %279 = vector.multi_reduction <maximumf>, %278, %cst_121 [1] : vector<8x8xf32> to vector<8xf32>
    %280 = vector.shape_cast %279 : vector<8xf32> to vector<8x1xf32>
    %281 = vector.broadcast %280 : vector<8x1xf32> to vector<8x8xf32>
    %282 = arith.subf %278, %281 : vector<8x8xf32>
    %283 = math.exp %282 : vector<8x8xf32>
    %cst_122 = arith.constant dense<0.000000e+00> : vector<8xf32>
    %284 = vector.multi_reduction <add>, %283, %cst_122 [1] : vector<8x8xf32> to vector<8xf32>
    %285 = vector.shape_cast %284 : vector<8xf32> to vector<8x1xf32>
    %286 = tpu.reciprocal %285 {approx = true} : vector<8x1xf32> -> vector<8x1xf32>
    %287 = vector.broadcast %286 : vector<8x1xf32> to vector<8x8xf32>
    %288 = arith.mulf %283, %287 : vector<8x8xf32>
    %289 = arith.truncf %288 : vector<8x8xf32> to vector<8x8xbf16>
    %290 = vector.extract_strided_slice %271 {offsets = [0, 0], sizes = [8, 4], strides = [1, 1]} : vector<16x4xf32> to vector<8x4xf32>
    %291 = arith.truncf %290 : vector<8x4xf32> to vector<8x4xbf16>
    %cst_123 = arith.constant dense<0.000000e+00> : vector<8x4xf32>
    %292 = tpu.matmul %289, %291, %cst_123 {dimension_numbers = #tpu.dot_dimension_numbers<[1], [0], [0], [1], [0, 0, 1, 1], [], []>} : vector<8x8xbf16>, vector<8x4xbf16>, vector<8x4xf32> -> vector<8x4xf32>
    %293 = vector.extract_strided_slice %255 {offsets = [8, 0], sizes = [8, 4], strides = [1, 1]} : vector<16x4xf32> to vector<8x4xf32>
    %294 = vector.extract_strided_slice %263 {offsets = [8, 0], sizes = [8, 4], strides = [1, 1]} : vector<16x4xf32> to vector<8x4xf32>
    %295 = arith.truncf %293 : vector<8x4xf32> to vector<8x4xbf16>
    %296 = arith.truncf %294 : vector<8x4xf32> to vector<8x4xbf16>
    "tpu.trace_start"() <{level = 10 : i32, message = "qd,kd->qk"}> : () -> ()
    %cst_124 = arith.constant dense<0.000000e+00> : vector<8x8xf32>
    %297 = tpu.matmul %295, %296, %cst_124 {dimension_numbers = #tpu.dot_dimension_numbers<[1], [1], [0], [0], [0, 0, 1, 0], [], []>} : vector<8x4xbf16>, vector<8x4xbf16>, vector<8x8xf32> -> vector<8x8xf32>
    "tpu.trace_stop"() : () -> ()
    %cst_125 = arith.constant 5.000000e-01 : f32
    %298 = vector.broadcast %cst_125 : f32 to vector<8x8xf32>
    %299 = arith.mulf %297, %298 : vector<8x8xf32>
    %cst_126 = arith.constant dense<0xFF800000> : vector<8xf32>
    %300 = vector.multi_reduction <maximumf>, %299, %cst_126 [1] : vector<8x8xf32> to vector<8xf32>
    %301 = vector.shape_cast %300 : vector<8xf32> to vector<8x1xf32>
    %302 = vector.broadcast %301 : vector<8x1xf32> to vector<8x8xf32>
    %303 = arith.subf %299, %302 : vector<8x8xf32>
    %304 = math.exp %303 : vector<8x8xf32>
    %cst_127 = arith.constant dense<0.000000e+00> : vector<8xf32>
    %305 = vector.multi_reduction <add>, %304, %cst_127 [1] : vector<8x8xf32> to vector<8xf32>
    %306 = vector.shape_cast %305 : vector<8xf32> to vector<8x1xf32>
    %307 = tpu.reciprocal %306 {approx = true} : vector<8x1xf32> -> vector<8x1xf32>
    %308 = vector.broadcast %307 : vector<8x1xf32> to vector<8x8xf32>
    %309 = arith.mulf %304, %308 : vector<8x8xf32>
    %310 = arith.truncf %309 : vector<8x8xf32> to vector<8x8xbf16>
    %311 = vector.extract_strided_slice %271 {offsets = [8, 0], sizes = [8, 4], strides = [1, 1]} : vector<16x4xf32> to vector<8x4xf32>
    %312 = arith.truncf %311 : vector<8x4xf32> to vector<8x4xbf16>
    %cst_128 = arith.constant dense<0.000000e+00> : vector<8x4xf32>
    %313 = tpu.matmul %310, %312, %cst_128 {dimension_numbers = #tpu.dot_dimension_numbers<[1], [0], [0], [1], [0, 0, 1, 1], [], []>} : vector<8x8xbf16>, vector<8x4xbf16>, vector<8x4xf32> -> vector<8x4xf32>
    %314 = tpu.concatenate %292, %313 in 0 : vector<8x4xf32>, vector<8x4xf32> -> vector<16x4xf32>
    %c0_129 = arith.constant 0 : index
    %c0_130 = arith.constant 0 : index
    %c0_131 = arith.constant 0 : index
    %c0_132 = arith.constant 0 : index
    %315 = vector.load %arg27[%c0_129, %c0_130, %c0_131, %c0_132] : memref<3x4x4x16xbf16, #tpu.memory_space<vmem>>, vector<1x1x4x16xbf16>
    %316 = vector.shape_cast %315 : vector<1x1x4x16xbf16> to vector<4x16xbf16>
    %317 = arith.truncf %314 : vector<16x4xf32> to vector<16x4xbf16>
    %cst_133 = arith.constant dense<0.000000e+00> : vector<16x16xf32>
    %318 = tpu.matmul %317, %316, %cst_133 {dimension_numbers = #tpu.dot_dimension_numbers<[1], [0], [0], [1], [0, 0, 1, 1], [], []>} : vector<16x4xbf16>, vector<4x16xbf16>, vector<16x16xf32> -> vector<16x16xf32>
    %319 = arith.addf %247, %318 : vector<16x16xf32>
    %c0_134 = arith.constant 0 : index
    %c1 = arith.constant 1 : index
    %c0_135 = arith.constant 0 : index
    %c0_136 = arith.constant 0 : index
    %320 = vector.load %arg21[%c0_134, %c1, %c0_135, %c0_136] : memref<3x4x16x4xbf16, #tpu.memory_space<vmem>>, vector<1x1x16x4xbf16>
    %321 = vector.shape_cast %320 : vector<1x1x16x4xbf16> to vector<16x4xbf16>
    %322 = arith.truncf %242 : vector<16x16xf32> to vector<16x16xbf16>
    %cst_137 = arith.constant dense<0.000000e+00> : vector<16x4xf32>
    %323 = tpu.matmul %322, %321, %cst_137 {dimension_numbers = #tpu.dot_dimension_numbers<[1], [0], [0], [1], [0, 0, 1, 1], [], []>} : vector<16x16xbf16>, vector<16x4xbf16>, vector<16x4xf32> -> vector<16x4xf32>
    %c0_138 = arith.constant 0 : index
    %c1_139 = arith.constant 1 : index
    %c0_140 = arith.constant 0 : index
    %c0_141 = arith.constant 0 : index
    %324 = vector.load %arg24[%c0_138, %c1_139, %c0_140, %c0_141] : memref<3x4x1x4xf32, #tpu.memory_space<vmem>>, vector<1x1x1x4xf32>
    %325 = vector.shape_cast %324 : vector<1x1x1x4xf32> to vector<1x4xf32>
    %326 = vector.broadcast %325 : vector<1x4xf32> to vector<16x4xf32>
    %327 = arith.addf %323, %326 : vector<16x4xf32>
    %c0_142 = arith.constant 0 : index
    %c1_143 = arith.constant 1 : index
    %c0_144 = arith.constant 0 : index
    %c0_145 = arith.constant 0 : index
    %328 = vector.load %arg22[%c0_142, %c1_143, %c0_144, %c0_145] : memref<3x4x16x4xbf16, #tpu.memory_space<vmem>>, vector<1x1x16x4xbf16>
    %329 = vector.shape_cast %328 : vector<1x1x16x4xbf16> to vector<16x4xbf16>
    %330 = arith.truncf %242 : vector<16x16xf32> to vector<16x16xbf16>
    %cst_146 = arith.constant dense<0.000000e+00> : vector<16x4xf32>
    %331 = tpu.matmul %330, %329, %cst_146 {dimension_numbers = #tpu.dot_dimension_numbers<[1], [0], [0], [1], [0, 0, 1, 1], [], []>} : vector<16x16xbf16>, vector<16x4xbf16>, vector<16x4xf32> -> vector<16x4xf32>
    %c0_147 = arith.constant 0 : index
    %c1_148 = arith.constant 1 : index
    %c0_149 = arith.constant 0 : index
    %c0_150 = arith.constant 0 : index
    %332 = vector.load %arg25[%c0_147, %c1_148, %c0_149, %c0_150] : memref<3x4x1x4xf32, #tpu.memory_space<vmem>>, vector<1x1x1x4xf32>
    %333 = vector.shape_cast %332 : vector<1x1x1x4xf32> to vector<1x4xf32>
    %334 = vector.broadcast %333 : vector<1x4xf32> to vector<16x4xf32>
    %335 = arith.addf %331, %334 : vector<16x4xf32>
    %c0_151 = arith.constant 0 : index
    %c1_152 = arith.constant 1 : index
    %c0_153 = arith.constant 0 : index
    %c0_154 = arith.constant 0 : index
    %336 = vector.load %arg23[%c0_151, %c1_152, %c0_153, %c0_154] : memref<3x4x16x4xbf16, #tpu.memory_space<vmem>>, vector<1x1x16x4xbf16>
    %337 = vector.shape_cast %336 : vector<1x1x16x4xbf16> to vector<16x4xbf16>
    %338 = arith.truncf %242 : vector<16x16xf32> to vector<16x16xbf16>
    %cst_155 = arith.constant dense<0.000000e+00> : vector<16x4xf32>
    %339 = tpu.matmul %338, %337, %cst_155 {dimension_numbers = #tpu.dot_dimension_numbers<[1], [0], [0], [1], [0, 0, 1, 1], [], []>} : vector<16x16xbf16>, vector<16x4xbf16>, vector<16x4xf32> -> vector<16x4xf32>
    %c0_156 = arith.constant 0 : index
    %c1_157 = arith.constant 1 : index
    %c0_158 = arith.constant 0 : index
    %c0_159 = arith.constant 0 : index
    %340 = vector.load %arg26[%c0_156, %c1_157, %c0_158, %c0_159] : memref<3x4x1x4xf32, #tpu.memory_space<vmem>>, vector<1x1x1x4xf32>
    %341 = vector.shape_cast %340 : vector<1x1x1x4xf32> to vector<1x4xf32>
    %342 = vector.broadcast %341 : vector<1x4xf32> to vector<16x4xf32>
    %343 = arith.addf %339, %342 : vector<16x4xf32>
    %344 = vector.extract_strided_slice %327 {offsets = [0, 0], sizes = [8, 4], strides = [1, 1]} : vector<16x4xf32> to vector<8x4xf32>
    %345 = vector.extract_strided_slice %335 {offsets = [0, 0], sizes = [8, 4], strides = [1, 1]} : vector<16x4xf32> to vector<8x4xf32>
    %346 = arith.truncf %344 : vector<8x4xf32> to vector<8x4xbf16>
    %347 = arith.truncf %345 : vector<8x4xf32> to vector<8x4xbf16>
    "tpu.trace_start"() <{level = 10 : i32, message = "qd,kd->qk"}> : () -> ()
    %cst_160 = arith.constant dense<0.000000e+00> : vector<8x8xf32>
    %348 = tpu.matmul %346, %347, %cst_160 {dimension_numbers = #tpu.dot_dimension_numbers<[1], [1], [0], [0], [0, 0, 1, 0], [], []>} : vector<8x4xbf16>, vector<8x4xbf16>, vector<8x8xf32> -> vector<8x8xf32>
    "tpu.trace_stop"() : () -> ()
    %cst_161 = arith.constant 5.000000e-01 : f32
    %349 = vector.broadcast %cst_161 : f32 to vector<8x8xf32>
    %350 = arith.mulf %348, %349 : vector<8x8xf32>
    %cst_162 = arith.constant dense<0xFF800000> : vector<8xf32>
    %351 = vector.multi_reduction <maximumf>, %350, %cst_162 [1] : vector<8x8xf32> to vector<8xf32>
    %352 = vector.shape_cast %351 : vector<8xf32> to vector<8x1xf32>
    %353 = vector.broadcast %352 : vector<8x1xf32> to vector<8x8xf32>
    %354 = arith.subf %350, %353 : vector<8x8xf32>
    %355 = math.exp %354 : vector<8x8xf32>
    %cst_163 = arith.constant dense<0.000000e+00> : vector<8xf32>
    %356 = vector.multi_reduction <add>, %355, %cst_163 [1] : vector<8x8xf32> to vector<8xf32>
    %357 = vector.shape_cast %356 : vector<8xf32> to vector<8x1xf32>
    %358 = tpu.reciprocal %357 {approx = true} : vector<8x1xf32> -> vector<8x1xf32>
    %359 = vector.broadcast %358 : vector<8x1xf32> to vector<8x8xf32>
    %360 = arith.mulf %355, %359 : vector<8x8xf32>
    %361 = arith.truncf %360 : vector<8x8xf32> to vector<8x8xbf16>
    %362 = vector.extract_strided_slice %343 {offsets = [0, 0], sizes = [8, 4], strides = [1, 1]} : vector<16x4xf32> to vector<8x4xf32>
    %363 = arith.truncf %362 : vector<8x4xf32> to vector<8x4xbf16>
    %cst_164 = arith.constant dense<0.000000e+00> : vector<8x4xf32>
    %364 = tpu.matmul %361, %363, %cst_164 {dimension_numbers = #tpu.dot_dimension_numbers<[1], [0], [0], [1], [0, 0, 1, 1], [], []>} : vector<8x8xbf16>, vector<8x4xbf16>, vector<8x4xf32> -> vector<8x4xf32>
    %365 = vector.extract_strided_slice %327 {offsets = [8, 0], sizes = [8, 4], strides = [1, 1]} : vector<16x4xf32> to vector<8x4xf32>
    %366 = vector.extract_strided_slice %335 {offsets = [8, 0], sizes = [8, 4], strides = [1, 1]} : vector<16x4xf32> to vector<8x4xf32>
    %367 = arith.truncf %365 : vector<8x4xf32> to vector<8x4xbf16>
    %368 = arith.truncf %366 : vector<8x4xf32> to vector<8x4xbf16>
    "tpu.trace_start"() <{level = 10 : i32, message = "qd,kd->qk"}> : () -> ()
    %cst_165 = arith.constant dense<0.000000e+00> : vector<8x8xf32>
    %369 = tpu.matmul %367, %368, %cst_165 {dimension_numbers = #tpu.dot_dimension_numbers<[1], [1], [0], [0], [0, 0, 1, 0], [], []>} : vector<8x4xbf16>, vector<8x4xbf16>, vector<8x8xf32> -> vector<8x8xf32>
    "tpu.trace_stop"() : () -> ()
    %cst_166 = arith.constant 5.000000e-01 : f32
    %370 = vector.broadcast %cst_166 : f32 to vector<8x8xf32>
    %371 = arith.mulf %369, %370 : vector<8x8xf32>
    %cst_167 = arith.constant dense<0xFF800000> : vector<8xf32>
    %372 = vector.multi_reduction <maximumf>, %371, %cst_167 [1] : vector<8x8xf32> to vector<8xf32>
    %373 = vector.shape_cast %372 : vector<8xf32> to vector<8x1xf32>
    %374 = vector.broadcast %373 : vector<8x1xf32> to vector<8x8xf32>
    %375 = arith.subf %371, %374 : vector<8x8xf32>
    %376 = math.exp %375 : vector<8x8xf32>
    %cst_168 = arith.constant dense<0.000000e+00> : vector<8xf32>
    %377 = vector.multi_reduction <add>, %376, %cst_168 [1] : vector<8x8xf32> to vector<8xf32>
    %378 = vector.shape_cast %377 : vector<8xf32> to vector<8x1xf32>
    %379 = tpu.reciprocal %378 {approx = true} : vector<8x1xf32> -> vector<8x1xf32>
    %380 = vector.broadcast %379 : vector<8x1xf32> to vector<8x8xf32>
    %381 = arith.mulf %376, %380 : vector<8x8xf32>
    %382 = arith.truncf %381 : vector<8x8xf32> to vector<8x8xbf16>
    %383 = vector.extract_strided_slice %343 {offsets = [8, 0], sizes = [8, 4], strides = [1, 1]} : vector<16x4xf32> to vector<8x4xf32>
    %384 = arith.truncf %383 : vector<8x4xf32> to vector<8x4xbf16>
    %cst_169 = arith.constant dense<0.000000e+00> : vector<8x4xf32>
    %385 = tpu.matmul %382, %384, %cst_169 {dimension_numbers = #tpu.dot_dimension_numbers<[1], [0], [0], [1], [0, 0, 1, 1], [], []>} : vector<8x8xbf16>, vector<8x4xbf16>, vector<8x4xf32> -> vector<8x4xf32>
    %386 = tpu.concatenate %364, %385 in 0 : vector<8x4xf32>, vector<8x4xf32> -> vector<16x4xf32>
    %c0_170 = arith.constant 0 : index
    %c1_171 = arith.constant 1 : index
    %c0_172 = arith.constant 0 : index
    %c0_173 = arith.constant 0 : index
    %387 = vector.load %arg27[%c0_170, %c1_171, %c0_172, %c0_173] : memref<3x4x4x16xbf16, #tpu.memory_space<vmem>>, vector<1x1x4x16xbf16>
    %388 = vector.shape_cast %387 : vector<1x1x4x16xbf16> to vector<4x16xbf16>
    %389 = arith.truncf %386 : vector<16x4xf32> to vector<16x4xbf16>
    %cst_174 = arith.constant dense<0.000000e+00> : vector<16x16xf32>
    %390 = tpu.matmul %389, %388, %cst_174 {dimension_numbers = #tpu.dot_dimension_numbers<[1], [0], [0], [1], [0, 0, 1, 1], [], []>} : vector<16x4xbf16>, vector<4x16xbf16>, vector<16x16xf32> -> vector<16x16xf32>
    %391 = arith.addf %319, %390 : vector<16x16xf32>
    %c0_175 = arith.constant 0 : index
    %c2 = arith.constant 2 : index
    %c0_176 = arith.constant 0 : index
    %c0_177 = arith.constant 0 : index
    %392 = vector.load %arg21[%c0_175, %c2, %c0_176, %c0_177] : memref<3x4x16x4xbf16, #tpu.memory_space<vmem>>, vector<1x1x16x4xbf16>
    %393 = vector.shape_cast %392 : vector<1x1x16x4xbf16> to vector<16x4xbf16>
    %394 = arith.truncf %242 : vector<16x16xf32> to vector<16x16xbf16>
    %cst_178 = arith.constant dense<0.000000e+00> : vector<16x4xf32>
    %395 = tpu.matmul %394, %393, %cst_178 {dimension_numbers = #tpu.dot_dimension_numbers<[1], [0], [0], [1], [0, 0, 1, 1], [], []>} : vector<16x16xbf16>, vector<16x4xbf16>, vector<16x4xf32> -> vector<16x4xf32>
    %c0_179 = arith.constant 0 : index
    %c2_180 = arith.constant 2 : index
    %c0_181 = arith.constant 0 : index
    %c0_182 = arith.constant 0 : index
    %396 = vector.load %arg24[%c0_179, %c2_180, %c0_181, %c0_182] : memref<3x4x1x4xf32, #tpu.memory_space<vmem>>, vector<1x1x1x4xf32>
    %397 = vector.shape_cast %396 : vector<1x1x1x4xf32> to vector<1x4xf32>
    %398 = vector.broadcast %397 : vector<1x4xf32> to vector<16x4xf32>
    %399 = arith.addf %395, %398 : vector<16x4xf32>
    %c0_183 = arith.constant 0 : index
    %c2_184 = arith.constant 2 : index
    %c0_185 = arith.constant 0 : index
    %c0_186 = arith.constant 0 : index
    %400 = vector.load %arg22[%c0_183, %c2_184, %c0_185, %c0_186] : memref<3x4x16x4xbf16, #tpu.memory_space<vmem>>, vector<1x1x16x4xbf16>
    %401 = vector.shape_cast %400 : vector<1x1x16x4xbf16> to vector<16x4xbf16>
    %402 = arith.truncf %242 : vector<16x16xf32> to vector<16x16xbf16>
    %cst_187 = arith.constant dense<0.000000e+00> : vector<16x4xf32>
    %403 = tpu.matmul %402, %401, %cst_187 {dimension_numbers = #tpu.dot_dimension_numbers<[1], [0], [0], [1], [0, 0, 1, 1], [], []>} : vector<16x16xbf16>, vector<16x4xbf16>, vector<16x4xf32> -> vector<16x4xf32>
    %c0_188 = arith.constant 0 : index
    %c2_189 = arith.constant 2 : index
    %c0_190 = arith.constant 0 : index
    %c0_191 = arith.constant 0 : index
    %404 = vector.load %arg25[%c0_188, %c2_189, %c0_190, %c0_191] : memref<3x4x1x4xf32, #tpu.memory_space<vmem>>, vector<1x1x1x4xf32>
    %405 = vector.shape_cast %404 : vector<1x1x1x4xf32> to vector<1x4xf32>
    %406 = vector.broadcast %405 : vector<1x4xf32> to vector<16x4xf32>
    %407 = arith.addf %403, %406 : vector<16x4xf32>
    %c0_192 = arith.constant 0 : index
    %c2_193 = arith.constant 2 : index
    %c0_194 = arith.constant 0 : index
    %c0_195 = arith.constant 0 : index
    %408 = vector.load %arg23[%c0_192, %c2_193, %c0_194, %c0_195] : memref<3x4x16x4xbf16, #tpu.memory_space<vmem>>, vector<1x1x16x4xbf16>
    %409 = vector.shape_cast %408 : vector<1x1x16x4xbf16> to vector<16x4xbf16>
    %410 = arith.truncf %242 : vector<16x16xf32> to vector<16x16xbf16>
    %cst_196 = arith.constant dense<0.000000e+00> : vector<16x4xf32>
    %411 = tpu.matmul %410, %409, %cst_196 {dimension_numbers = #tpu.dot_dimension_numbers<[1], [0], [0], [1], [0, 0, 1, 1], [], []>} : vector<16x16xbf16>, vector<16x4xbf16>, vector<16x4xf32> -> vector<16x4xf32>
    %c0_197 = arith.constant 0 : index
    %c2_198 = arith.constant 2 : index
    %c0_199 = arith.constant 0 : index
    %c0_200 = arith.constant 0 : index
    %412 = vector.load %arg26[%c0_197, %c2_198, %c0_199, %c0_200] : memref<3x4x1x4xf32, #tpu.memory_space<vmem>>, vector<1x1x1x4xf32>
    %413 = vector.shape_cast %412 : vector<1x1x1x4xf32> to vector<1x4xf32>
    %414 = vector.broadcast %413 : vector<1x4xf32> to vector<16x4xf32>
    %415 = arith.addf %411, %414 : vector<16x4xf32>
    %416 = vector.extract_strided_slice %399 {offsets = [0, 0], sizes = [8, 4], strides = [1, 1]} : vector<16x4xf32> to vector<8x4xf32>
    %417 = vector.extract_strided_slice %407 {offsets = [0, 0], sizes = [8, 4], strides = [1, 1]} : vector<16x4xf32> to vector<8x4xf32>
    %418 = arith.truncf %416 : vector<8x4xf32> to vector<8x4xbf16>
    %419 = arith.truncf %417 : vector<8x4xf32> to vector<8x4xbf16>
    "tpu.trace_start"() <{level = 10 : i32, message = "qd,kd->qk"}> : () -> ()
    %cst_201 = arith.constant dense<0.000000e+00> : vector<8x8xf32>
    %420 = tpu.matmul %418, %419, %cst_201 {dimension_numbers = #tpu.dot_dimension_numbers<[1], [1], [0], [0], [0, 0, 1, 0], [], []>} : vector<8x4xbf16>, vector<8x4xbf16>, vector<8x8xf32> -> vector<8x8xf32>
    "tpu.trace_stop"() : () -> ()
    %cst_202 = arith.constant 5.000000e-01 : f32
    %421 = vector.broadcast %cst_202 : f32 to vector<8x8xf32>
    %422 = arith.mulf %420, %421 : vector<8x8xf32>
    %cst_203 = arith.constant dense<0xFF800000> : vector<8xf32>
    %423 = vector.multi_reduction <maximumf>, %422, %cst_203 [1] : vector<8x8xf32> to vector<8xf32>
    %424 = vector.shape_cast %423 : vector<8xf32> to vector<8x1xf32>
    %425 = vector.broadcast %424 : vector<8x1xf32> to vector<8x8xf32>
    %426 = arith.subf %422, %425 : vector<8x8xf32>
    %427 = math.exp %426 : vector<8x8xf32>
    %cst_204 = arith.constant dense<0.000000e+00> : vector<8xf32>
    %428 = vector.multi_reduction <add>, %427, %cst_204 [1] : vector<8x8xf32> to vector<8xf32>
    %429 = vector.shape_cast %428 : vector<8xf32> to vector<8x1xf32>
    %430 = tpu.reciprocal %429 {approx = true} : vector<8x1xf32> -> vector<8x1xf32>
    %431 = vector.broadcast %430 : vector<8x1xf32> to vector<8x8xf32>
    %432 = arith.mulf %427, %431 : vector<8x8xf32>
    %433 = arith.truncf %432 : vector<8x8xf32> to vector<8x8xbf16>
    %434 = vector.extract_strided_slice %415 {offsets = [0, 0], sizes = [8, 4], strides = [1, 1]} : vector<16x4xf32> to vector<8x4xf32>
    %435 = arith.truncf %434 : vector<8x4xf32> to vector<8x4xbf16>
    %cst_205 = arith.constant dense<0.000000e+00> : vector<8x4xf32>
    %436 = tpu.matmul %433, %435, %cst_205 {dimension_numbers = #tpu.dot_dimension_numbers<[1], [0], [0], [1], [0, 0, 1, 1], [], []>} : vector<8x8xbf16>, vector<8x4xbf16>, vector<8x4xf32> -> vector<8x4xf32>
    %437 = vector.extract_strided_slice %399 {offsets = [8, 0], sizes = [8, 4], strides = [1, 1]} : vector<16x4xf32> to vector<8x4xf32>
    %438 = vector.extract_strided_slice %407 {offsets = [8, 0], sizes = [8, 4], strides = [1, 1]} : vector<16x4xf32> to vector<8x4xf32>
    %439 = arith.truncf %437 : vector<8x4xf32> to vector<8x4xbf16>
    %440 = arith.truncf %438 : vector<8x4xf32> to vector<8x4xbf16>
    "tpu.trace_start"() <{level = 10 : i32, message = "qd,kd->qk"}> : () -> ()
    %cst_206 = arith.constant dense<0.000000e+00> : vector<8x8xf32>
    %441 = tpu.matmul %439, %440, %cst_206 {dimension_numbers = #tpu.dot_dimension_numbers<[1], [1], [0], [0], [0, 0, 1, 0], [], []>} : vector<8x4xbf16>, vector<8x4xbf16>, vector<8x8xf32> -> vector<8x8xf32>
    "tpu.trace_stop"() : () -> ()
    %cst_207 = arith.constant 5.000000e-01 : f32
    %442 = vector.broadcast %cst_207 : f32 to vector<8x8xf32>
    %443 = arith.mulf %441, %442 : vector<8x8xf32>
    %cst_208 = arith.constant dense<0xFF800000> : vector<8xf32>
    %444 = vector.multi_reduction <maximumf>, %443, %cst_208 [1] : vector<8x8xf32> to vector<8xf32>
    %445 = vector.shape_cast %444 : vector<8xf32> to vector<8x1xf32>
    %446 = vector.broadcast %445 : vector<8x1xf32> to vector<8x8xf32>
    %447 = arith.subf %443, %446 : vector<8x8xf32>
    %448 = math.exp %447 : vector<8x8xf32>
    %cst_209 = arith.constant dense<0.000000e+00> : vector<8xf32>
    %449 = vector.multi_reduction <add>, %448, %cst_209 [1] : vector<8x8xf32> to vector<8xf32>
    %450 = vector.shape_cast %449 : vector<8xf32> to vector<8x1xf32>
    %451 = tpu.reciprocal %450 {approx = true} : vector<8x1xf32> -> vector<8x1xf32>
    %452 = vector.broadcast %451 : vector<8x1xf32> to vector<8x8xf32>
    %453 = arith.mulf %448, %452 : vector<8x8xf32>
    %454 = arith.truncf %453 : vector<8x8xf32> to vector<8x8xbf16>
    %455 = vector.extract_strided_slice %415 {offsets = [8, 0], sizes = [8, 4], strides = [1, 1]} : vector<16x4xf32> to vector<8x4xf32>
    %456 = arith.truncf %455 : vector<8x4xf32> to vector<8x4xbf16>
    %cst_210 = arith.constant dense<0.000000e+00> : vector<8x4xf32>
    %457 = tpu.matmul %454, %456, %cst_210 {dimension_numbers = #tpu.dot_dimension_numbers<[1], [0], [0], [1], [0, 0, 1, 1], [], []>} : vector<8x8xbf16>, vector<8x4xbf16>, vector<8x4xf32> -> vector<8x4xf32>
    %458 = tpu.concatenate %436, %457 in 0 : vector<8x4xf32>, vector<8x4xf32> -> vector<16x4xf32>
    %c0_211 = arith.constant 0 : index
    %c2_212 = arith.constant 2 : index
    %c0_213 = arith.constant 0 : index
    %c0_214 = arith.constant 0 : index
    %459 = vector.load %arg27[%c0_211, %c2_212, %c0_213, %c0_214] : memref<3x4x4x16xbf16, #tpu.memory_space<vmem>>, vector<1x1x4x16xbf16>
    %460 = vector.shape_cast %459 : vector<1x1x4x16xbf16> to vector<4x16xbf16>
    %461 = arith.truncf %458 : vector<16x4xf32> to vector<16x4xbf16>
    %cst_215 = arith.constant dense<0.000000e+00> : vector<16x16xf32>
    %462 = tpu.matmul %461, %460, %cst_215 {dimension_numbers = #tpu.dot_dimension_numbers<[1], [0], [0], [1], [0, 0, 1, 1], [], []>} : vector<16x4xbf16>, vector<4x16xbf16>, vector<16x16xf32> -> vector<16x16xf32>
    %463 = arith.addf %391, %462 : vector<16x16xf32>
    %c0_216 = arith.constant 0 : index
    %c3 = arith.constant 3 : index
    %c0_217 = arith.constant 0 : index
    %c0_218 = arith.constant 0 : index
    %464 = vector.load %arg21[%c0_216, %c3, %c0_217, %c0_218] : memref<3x4x16x4xbf16, #tpu.memory_space<vmem>>, vector<1x1x16x4xbf16>
    %465 = vector.shape_cast %464 : vector<1x1x16x4xbf16> to vector<16x4xbf16>
    %466 = arith.truncf %242 : vector<16x16xf32> to vector<16x16xbf16>
    %cst_219 = arith.constant dense<0.000000e+00> : vector<16x4xf32>
    %467 = tpu.matmul %466, %465, %cst_219 {dimension_numbers = #tpu.dot_dimension_numbers<[1], [0], [0], [1], [0, 0, 1, 1], [], []>} : vector<16x16xbf16>, vector<16x4xbf16>, vector<16x4xf32> -> vector<16x4xf32>
    %c0_220 = arith.constant 0 : index
    %c3_221 = arith.constant 3 : index
    %c0_222 = arith.constant 0 : index
    %c0_223 = arith.constant 0 : index
    %468 = vector.load %arg24[%c0_220, %c3_221, %c0_222, %c0_223] : memref<3x4x1x4xf32, #tpu.memory_space<vmem>>, vector<1x1x1x4xf32>
    %469 = vector.shape_cast %468 : vector<1x1x1x4xf32> to vector<1x4xf32>
    %470 = vector.broadcast %469 : vector<1x4xf32> to vector<16x4xf32>
    %471 = arith.addf %467, %470 : vector<16x4xf32>
    %c0_224 = arith.constant 0 : index
    %c3_225 = arith.constant 3 : index
    %c0_226 = arith.constant 0 : index
    %c0_227 = arith.constant 0 : index
    %472 = vector.load %arg22[%c0_224, %c3_225, %c0_226, %c0_227] : memref<3x4x16x4xbf16, #tpu.memory_space<vmem>>, vector<1x1x16x4xbf16>
    %473 = vector.shape_cast %472 : vector<1x1x16x4xbf16> to vector<16x4xbf16>
    %474 = arith.truncf %242 : vector<16x16xf32> to vector<16x16xbf16>
    %cst_228 = arith.constant dense<0.000000e+00> : vector<16x4xf32>
    %475 = tpu.matmul %474, %473, %cst_228 {dimension_numbers = #tpu.dot_dimension_numbers<[1], [0], [0], [1], [0, 0, 1, 1], [], []>} : vector<16x16xbf16>, vector<16x4xbf16>, vector<16x4xf32> -> vector<16x4xf32>
    %c0_229 = arith.constant 0 : index
    %c3_230 = arith.constant 3 : index
    %c0_231 = arith.constant 0 : index
    %c0_232 = arith.constant 0 : index
    %476 = vector.load %arg25[%c0_229, %c3_230, %c0_231, %c0_232] : memref<3x4x1x4xf32, #tpu.memory_space<vmem>>, vector<1x1x1x4xf32>
    %477 = vector.shape_cast %476 : vector<1x1x1x4xf32> to vector<1x4xf32>
    %478 = vector.broadcast %477 : vector<1x4xf32> to vector<16x4xf32>
    %479 = arith.addf %475, %478 : vector<16x4xf32>
    %c0_233 = arith.constant 0 : index
    %c3_234 = arith.constant 3 : index
    %c0_235 = arith.constant 0 : index
    %c0_236 = arith.constant 0 : index
    %480 = vector.load %arg23[%c0_233, %c3_234, %c0_235, %c0_236] : memref<3x4x16x4xbf16, #tpu.memory_space<vmem>>, vector<1x1x16x4xbf16>
    %481 = vector.shape_cast %480 : vector<1x1x16x4xbf16> to vector<16x4xbf16>
    %482 = arith.truncf %242 : vector<16x16xf32> to vector<16x16xbf16>
    %cst_237 = arith.constant dense<0.000000e+00> : vector<16x4xf32>
    %483 = tpu.matmul %482, %481, %cst_237 {dimension_numbers = #tpu.dot_dimension_numbers<[1], [0], [0], [1], [0, 0, 1, 1], [], []>} : vector<16x16xbf16>, vector<16x4xbf16>, vector<16x4xf32> -> vector<16x4xf32>
    %c0_238 = arith.constant 0 : index
    %c3_239 = arith.constant 3 : index
    %c0_240 = arith.constant 0 : index
    %c0_241 = arith.constant 0 : index
    %484 = vector.load %arg26[%c0_238, %c3_239, %c0_240, %c0_241] : memref<3x4x1x4xf32, #tpu.memory_space<vmem>>, vector<1x1x1x4xf32>
    %485 = vector.shape_cast %484 : vector<1x1x1x4xf32> to vector<1x4xf32>
    %486 = vector.broadcast %485 : vector<1x4xf32> to vector<16x4xf32>
    %487 = arith.addf %483, %486 : vector<16x4xf32>
    %488 = vector.extract_strided_slice %471 {offsets = [0, 0], sizes = [8, 4], strides = [1, 1]} : vector<16x4xf32> to vector<8x4xf32>
    %489 = vector.extract_strided_slice %479 {offsets = [0, 0], sizes = [8, 4], strides = [1, 1]} : vector<16x4xf32> to vector<8x4xf32>
    %490 = arith.truncf %488 : vector<8x4xf32> to vector<8x4xbf16>
    %491 = arith.truncf %489 : vector<8x4xf32> to vector<8x4xbf16>
    "tpu.trace_start"() <{level = 10 : i32, message = "qd,kd->qk"}> : () -> ()
    %cst_242 = arith.constant dense<0.000000e+00> : vector<8x8xf32>
    %492 = tpu.matmul %490, %491, %cst_242 {dimension_numbers = #tpu.dot_dimension_numbers<[1], [1], [0], [0], [0, 0, 1, 0], [], []>} : vector<8x4xbf16>, vector<8x4xbf16>, vector<8x8xf32> -> vector<8x8xf32>
    "tpu.trace_stop"() : () -> ()
    %cst_243 = arith.constant 5.000000e-01 : f32
    %493 = vector.broadcast %cst_243 : f32 to vector<8x8xf32>
    %494 = arith.mulf %492, %493 : vector<8x8xf32>
    %cst_244 = arith.constant dense<0xFF800000> : vector<8xf32>
    %495 = vector.multi_reduction <maximumf>, %494, %cst_244 [1] : vector<8x8xf32> to vector<8xf32>
    %496 = vector.shape_cast %495 : vector<8xf32> to vector<8x1xf32>
    %497 = vector.broadcast %496 : vector<8x1xf32> to vector<8x8xf32>
    %498 = arith.subf %494, %497 : vector<8x8xf32>
    %499 = math.exp %498 : vector<8x8xf32>
    %cst_245 = arith.constant dense<0.000000e+00> : vector<8xf32>
    %500 = vector.multi_reduction <add>, %499, %cst_245 [1] : vector<8x8xf32> to vector<8xf32>
    %501 = vector.shape_cast %500 : vector<8xf32> to vector<8x1xf32>
    %502 = tpu.reciprocal %501 {approx = true} : vector<8x1xf32> -> vector<8x1xf32>
    %503 = vector.broadcast %502 : vector<8x1xf32> to vector<8x8xf32>
    %504 = arith.mulf %499, %503 : vector<8x8xf32>
    %505 = arith.truncf %504 : vector<8x8xf32> to vector<8x8xbf16>
    %506 = vector.extract_strided_slice %487 {offsets = [0, 0], sizes = [8, 4], strides = [1, 1]} : vector<16x4xf32> to vector<8x4xf32>
    %507 = arith.truncf %506 : vector<8x4xf32> to vector<8x4xbf16>
    %cst_246 = arith.constant dense<0.000000e+00> : vector<8x4xf32>
    %508 = tpu.matmul %505, %507, %cst_246 {dimension_numbers = #tpu.dot_dimension_numbers<[1], [0], [0], [1], [0, 0, 1, 1], [], []>} : vector<8x8xbf16>, vector<8x4xbf16>, vector<8x4xf32> -> vector<8x4xf32>
    %509 = vector.extract_strided_slice %471 {offsets = [8, 0], sizes = [8, 4], strides = [1, 1]} : vector<16x4xf32> to vector<8x4xf32>
    %510 = vector.extract_strided_slice %479 {offsets = [8, 0], sizes = [8, 4], strides = [1, 1]} : vector<16x4xf32> to vector<8x4xf32>
    %511 = arith.truncf %509 : vector<8x4xf32> to vector<8x4xbf16>
    %512 = arith.truncf %510 : vector<8x4xf32> to vector<8x4xbf16>
    "tpu.trace_start"() <{level = 10 : i32, message = "qd,kd->qk"}> : () -> ()
    %cst_247 = arith.constant dense<0.000000e+00> : vector<8x8xf32>
    %513 = tpu.matmul %511, %512, %cst_247 {dimension_numbers = #tpu.dot_dimension_numbers<[1], [1], [0], [0], [0, 0, 1, 0], [], []>} : vector<8x4xbf16>, vector<8x4xbf16>, vector<8x8xf32> -> vector<8x8xf32>
    "tpu.trace_stop"() : () -> ()
    %cst_248 = arith.constant 5.000000e-01 : f32
    %514 = vector.broadcast %cst_248 : f32 to vector<8x8xf32>
    %515 = arith.mulf %513, %514 : vector<8x8xf32>
    %cst_249 = arith.constant dense<0xFF800000> : vector<8xf32>
    %516 = vector.multi_reduction <maximumf>, %515, %cst_249 [1] : vector<8x8xf32> to vector<8xf32>
    %517 = vector.shape_cast %516 : vector<8xf32> to vector<8x1xf32>
    %518 = vector.broadcast %517 : vector<8x1xf32> to vector<8x8xf32>
    %519 = arith.subf %515, %518 : vector<8x8xf32>
    %520 = math.exp %519 : vector<8x8xf32>
    %cst_250 = arith.constant dense<0.000000e+00> : vector<8xf32>
    %521 = vector.multi_reduction <add>, %520, %cst_250 [1] : vector<8x8xf32> to vector<8xf32>
    %522 = vector.shape_cast %521 : vector<8xf32> to vector<8x1xf32>
    %523 = tpu.reciprocal %522 {approx = true} : vector<8x1xf32> -> vector<8x1xf32>
    %524 = vector.broadcast %523 : vector<8x1xf32> to vector<8x8xf32>
    %525 = arith.mulf %520, %524 : vector<8x8xf32>
    %526 = arith.truncf %525 : vector<8x8xf32> to vector<8x8xbf16>
    %527 = vector.extract_strided_slice %487 {offsets = [8, 0], sizes = [8, 4], strides = [1, 1]} : vector<16x4xf32> to vector<8x4xf32>
    %528 = arith.truncf %527 : vector<8x4xf32> to vector<8x4xbf16>
    %cst_251 = arith.constant dense<0.000000e+00> : vector<8x4xf32>
    %529 = tpu.matmul %526, %528, %cst_251 {dimension_numbers = #tpu.dot_dimension_numbers<[1], [0], [0], [1], [0, 0, 1, 1], [], []>} : vector<8x8xbf16>, vector<8x4xbf16>, vector<8x4xf32> -> vector<8x4xf32>
    %530 = tpu.concatenate %508, %529 in 0 : vector<8x4xf32>, vector<8x4xf32> -> vector<16x4xf32>
    %c0_252 = arith.constant 0 : index
    %c3_253 = arith.constant 3 : index
    %c0_254 = arith.constant 0 : index
    %c0_255 = arith.constant 0 : index
    %531 = vector.load %arg27[%c0_252, %c3_253, %c0_254, %c0_255] : memref<3x4x4x16xbf16, #tpu.memory_space<vmem>>, vector<1x1x4x16xbf16>
    %532 = vector.shape_cast %531 : vector<1x1x4x16xbf16> to vector<4x16xbf16>
    %533 = arith.truncf %530 : vector<16x4xf32> to vector<16x4xbf16>
    %cst_256 = arith.constant dense<0.000000e+00> : vector<16x16xf32>
    %534 = tpu.matmul %533, %532, %cst_256 {dimension_numbers = #tpu.dot_dimension_numbers<[1], [0], [0], [1], [0, 0, 1, 1], [], []>} : vector<16x4xbf16>, vector<4x16xbf16>, vector<16x16xf32> -> vector<16x16xf32>
    %535 = arith.addf %463, %534 : vector<16x16xf32>
    %536 = arith.addf %242, %535 : vector<16x16xf32>
    %c0_257 = arith.constant 0 : index
    %c0_258 = arith.constant 0 : index
    %c0_259 = arith.constant 0 : index
    %537 = vector.load %arg29[%c0_257, %c0_258, %c0_259] : memref<3x1x16xf32, #tpu.memory_space<vmem>>, vector<1x1x16xf32>
    %538 = vector.shape_cast %537 : vector<1x1x16xf32> to vector<1x16xf32>
    %c0_260 = arith.constant 0 : index
    %c0_261 = arith.constant 0 : index
    %c0_262 = arith.constant 0 : index
    %539 = vector.load %arg30[%c0_260, %c0_261, %c0_262] : memref<3x1x16xf32, #tpu.memory_space<vmem>>, vector<1x1x16xf32>
    %540 = vector.shape_cast %539 : vector<1x1x16xf32> to vector<1x16xf32>
    %cst_263 = arith.constant dense<0.000000e+00> : vector<16xf32>
    %541 = vector.multi_reduction <add>, %536, %cst_263 [1] : vector<16x16xf32> to vector<16xf32>
    %542 = vector.shape_cast %541 : vector<16xf32> to vector<16x1xf32>
    %cst_264 = arith.constant 1.600000e+01 : f32
    %543 = vector.broadcast %cst_264 : f32 to vector<16x1xf32>
    %544 = arith.divf %542, %543 : vector<16x1xf32>
    %545 = vector.broadcast %544 : vector<16x1xf32> to vector<16x16xf32>
    %546 = arith.subf %536, %545 : vector<16x16xf32>
    %547 = arith.mulf %546, %546 : vector<16x16xf32>
    %cst_265 = arith.constant dense<0.000000e+00> : vector<16xf32>
    %548 = vector.multi_reduction <add>, %547, %cst_265 [1] : vector<16x16xf32> to vector<16xf32>
    %549 = vector.shape_cast %548 : vector<16xf32> to vector<16x1xf32>
    %cst_266 = arith.constant 1.600000e+01 : f32
    %550 = vector.broadcast %cst_266 : f32 to vector<16x1xf32>
    %551 = arith.divf %549, %550 : vector<16x1xf32>
    %552 = vector.broadcast %544 : vector<16x1xf32> to vector<16x16xf32>
    %553 = arith.subf %536, %552 : vector<16x16xf32>
    %cst_267 = arith.constant 9.99999974E-6 : f32
    %554 = vector.broadcast %cst_267 : f32 to vector<16x1xf32>
    %555 = arith.addf %551, %554 : vector<16x1xf32>
    %556 = math.rsqrt %555 : vector<16x1xf32>
    %557 = vector.broadcast %556 : vector<16x1xf32> to vector<16x16xf32>
    %558 = arith.mulf %553, %557 : vector<16x16xf32>
    %559 = vector.broadcast %538 : vector<1x16xf32> to vector<16x16xf32>
    %560 = arith.mulf %558, %559 : vector<16x16xf32>
    %561 = vector.broadcast %540 : vector<1x16xf32> to vector<16x16xf32>
    %562 = arith.addf %560, %561 : vector<16x16xf32>
    %c0_268 = arith.constant 0 : index
    %c0_269 = arith.constant 0 : index
    %c0_270 = arith.constant 0 : index
    %563 = vector.load %arg31[%c0_268, %c0_269, %c0_270] : memref<3x16x64xbf16, #tpu.memory_space<vmem>>, vector<1x16x64xbf16>
    %564 = vector.shape_cast %563 : vector<1x16x64xbf16> to vector<16x64xbf16>
    %565 = arith.truncf %562 : vector<16x16xf32> to vector<16x16xbf16>
    %cst_271 = arith.constant dense<0.000000e+00> : vector<16x64xf32>
    %566 = tpu.matmul %565, %564, %cst_271 {dimension_numbers = #tpu.dot_dimension_numbers<[1], [0], [0], [1], [0, 0, 1, 1], [], []>} : vector<16x16xbf16>, vector<16x64xbf16>, vector<16x64xf32> -> vector<16x64xf32>
    %c0_272 = arith.constant 0 : index
    %c0_273 = arith.constant 0 : index
    %c0_274 = arith.constant 0 : index
    %567 = vector.load %arg32[%c0_272, %c0_273, %c0_274] : memref<3x1x64xf32, #tpu.memory_space<vmem>>, vector<1x1x64xf32>
    %568 = vector.shape_cast %567 : vector<1x1x64xf32> to vector<1x64xf32>
    %569 = vector.broadcast %568 : vector<1x64xf32> to vector<16x64xf32>
    %570 = arith.addf %566, %569 : vector<16x64xf32>
    %cst_275 = arith.constant 0.000000e+00 : f32
    %571 = vector.broadcast %cst_275 : f32 to vector<16x64xf32>
    %572 = arith.maximumf %570, %571 : vector<16x64xf32>
    %c0_276 = arith.constant 0 : index
    %c0_277 = arith.constant 0 : index
    %c0_278 = arith.constant 0 : index
    %573 = vector.load %arg33[%c0_276, %c0_277, %c0_278] : memref<3x64x16xbf16, #tpu.memory_space<vmem>>, vector<1x64x16xbf16>
    %574 = vector.shape_cast %573 : vector<1x64x16xbf16> to vector<64x16xbf16>
    %575 = arith.truncf %572 : vector<16x64xf32> to vector<16x64xbf16>
    %cst_279 = arith.constant dense<0.000000e+00> : vector<16x16xf32>
    %576 = tpu.matmul %575, %574, %cst_279 {dimension_numbers = #tpu.dot_dimension_numbers<[1], [0], [0], [1], [0, 0, 1, 1], [], []>} : vector<16x64xbf16>, vector<64x16xbf16>, vector<16x16xf32> -> vector<16x16xf32>
    %c0_280 = arith.constant 0 : index
    %c0_281 = arith.constant 0 : index
    %c0_282 = arith.constant 0 : index
    %577 = vector.load %arg34[%c0_280, %c0_281, %c0_282] : memref<3x1x16xf32, #tpu.memory_space<vmem>>, vector<1x1x16xf32>
    %578 = vector.shape_cast %577 : vector<1x1x16xf32> to vector<1x16xf32>
    %579 = vector.broadcast %578 : vector<1x16xf32> to vector<16x16xf32>
    %580 = arith.addf %576, %579 : vector<16x16xf32>
    %581 = arith.addf %562, %580 : vector<16x16xf32>
    %c0_283 = arith.constant 0 : index
    %c0_284 = arith.constant 0 : index
    %c0_285 = arith.constant 0 : index
    %582 = vector.load %arg35[%c0_283, %c0_284, %c0_285] : memref<3x1x16xf32, #tpu.memory_space<vmem>>, vector<1x1x16xf32>
    %583 = vector.shape_cast %582 : vector<1x1x16xf32> to vector<1x16xf32>
    %c0_286 = arith.constant 0 : index
    %c0_287 = arith.constant 0 : index
    %c0_288 = arith.constant 0 : index
    %584 = vector.load %arg36[%c0_286, %c0_287, %c0_288] : memref<3x1x16xf32, #tpu.memory_space<vmem>>, vector<1x1x16xf32>
    %585 = vector.shape_cast %584 : vector<1x1x16xf32> to vector<1x16xf32>
    %cst_289 = arith.constant dense<0.000000e+00> : vector<16xf32>
    %586 = vector.multi_reduction <add>, %581, %cst_289 [1] : vector<16x16xf32> to vector<16xf32>
    %587 = vector.shape_cast %586 : vector<16xf32> to vector<16x1xf32>
    %cst_290 = arith.constant 1.600000e+01 : f32
    %588 = vector.broadcast %cst_290 : f32 to vector<16x1xf32>
    %589 = arith.divf %587, %588 : vector<16x1xf32>
    %590 = vector.broadcast %589 : vector<16x1xf32> to vector<16x16xf32>
    %591 = arith.subf %581, %590 : vector<16x16xf32>
    %592 = arith.mulf %591, %591 : vector<16x16xf32>
    %cst_291 = arith.constant dense<0.000000e+00> : vector<16xf32>
    %593 = vector.multi_reduction <add>, %592, %cst_291 [1] : vector<16x16xf32> to vector<16xf32>
    %594 = vector.shape_cast %593 : vector<16xf32> to vector<16x1xf32>
    %cst_292 = arith.constant 1.600000e+01 : f32
    %595 = vector.broadcast %cst_292 : f32 to vector<16x1xf32>
    %596 = arith.divf %594, %595 : vector<16x1xf32>
    %597 = vector.broadcast %589 : vector<16x1xf32> to vector<16x16xf32>
    %598 = arith.subf %581, %597 : vector<16x16xf32>
    %cst_293 = arith.constant 9.99999974E-6 : f32
    %599 = vector.broadcast %cst_293 : f32 to vector<16x1xf32>
    %600 = arith.addf %596, %599 : vector<16x1xf32>
    %601 = math.rsqrt %600 : vector<16x1xf32>
    %602 = vector.broadcast %601 : vector<16x1xf32> to vector<16x16xf32>
    %603 = arith.mulf %598, %602 : vector<16x16xf32>
    %604 = vector.broadcast %583 : vector<1x16xf32> to vector<16x16xf32>
    %605 = arith.mulf %603, %604 : vector<16x16xf32>
    %606 = vector.broadcast %585 : vector<1x16xf32> to vector<16x16xf32>
    %607 = arith.addf %605, %606 : vector<16x16xf32>
    %cst_294 = arith.constant 0.000000e+00 : f32
    %608 = vector.broadcast %cst_294 : f32 to vector<16x16xf32>
    %c1_295 = arith.constant 1 : index
    %c0_296 = arith.constant 0 : index
    %c0_297 = arith.constant 0 : index
    %609 = vector.load %arg28[%c1_295, %c0_296, %c0_297] : memref<3x1x16xf32, #tpu.memory_space<vmem>>, vector<1x1x16xf32>
    %610 = vector.shape_cast %609 : vector<1x1x16xf32> to vector<1x16xf32>
    %611 = vector.broadcast %610 : vector<1x16xf32> to vector<16x16xf32>
    %612 = arith.addf %608, %611 : vector<16x16xf32>
    %c1_298 = arith.constant 1 : index
    %c0_299 = arith.constant 0 : index
    %c0_300 = arith.constant 0 : index
    %c0_301 = arith.constant 0 : index
    %613 = vector.load %arg21[%c1_298, %c0_299, %c0_300, %c0_301] : memref<3x4x16x4xbf16, #tpu.memory_space<vmem>>, vector<1x1x16x4xbf16>
    %614 = vector.shape_cast %613 : vector<1x1x16x4xbf16> to vector<16x4xbf16>
    %615 = arith.truncf %607 : vector<16x16xf32> to vector<16x16xbf16>
    %cst_302 = arith.constant dense<0.000000e+00> : vector<16x4xf32>
    %616 = tpu.matmul %615, %614, %cst_302 {dimension_numbers = #tpu.dot_dimension_numbers<[1], [0], [0], [1], [0, 0, 1, 1], [], []>} : vector<16x16xbf16>, vector<16x4xbf16>, vector<16x4xf32> -> vector<16x4xf32>
    %c1_303 = arith.constant 1 : index
    %c0_304 = arith.constant 0 : index
    %c0_305 = arith.constant 0 : index
    %c0_306 = arith.constant 0 : index
    %617 = vector.load %arg24[%c1_303, %c0_304, %c0_305, %c0_306] : memref<3x4x1x4xf32, #tpu.memory_space<vmem>>, vector<1x1x1x4xf32>
    %618 = vector.shape_cast %617 : vector<1x1x1x4xf32> to vector<1x4xf32>
    %619 = vector.broadcast %618 : vector<1x4xf32> to vector<16x4xf32>
    %620 = arith.addf %616, %619 : vector<16x4xf32>
    %c1_307 = arith.constant 1 : index
    %c0_308 = arith.constant 0 : index
    %c0_309 = arith.constant 0 : index
    %c0_310 = arith.constant 0 : index
    %621 = vector.load %arg22[%c1_307, %c0_308, %c0_309, %c0_310] : memref<3x4x16x4xbf16, #tpu.memory_space<vmem>>, vector<1x1x16x4xbf16>
    %622 = vector.shape_cast %621 : vector<1x1x16x4xbf16> to vector<16x4xbf16>
    %623 = arith.truncf %607 : vector<16x16xf32> to vector<16x16xbf16>
    %cst_311 = arith.constant dense<0.000000e+00> : vector<16x4xf32>
    %624 = tpu.matmul %623, %622, %cst_311 {dimension_numbers = #tpu.dot_dimension_numbers<[1], [0], [0], [1], [0, 0, 1, 1], [], []>} : vector<16x16xbf16>, vector<16x4xbf16>, vector<16x4xf32> -> vector<16x4xf32>
    %c1_312 = arith.constant 1 : index
    %c0_313 = arith.constant 0 : index
    %c0_314 = arith.constant 0 : index
    %c0_315 = arith.constant 0 : index
    %625 = vector.load %arg25[%c1_312, %c0_313, %c0_314, %c0_315] : memref<3x4x1x4xf32, #tpu.memory_space<vmem>>, vector<1x1x1x4xf32>
    %626 = vector.shape_cast %625 : vector<1x1x1x4xf32> to vector<1x4xf32>
    %627 = vector.broadcast %626 : vector<1x4xf32> to vector<16x4xf32>
    %628 = arith.addf %624, %627 : vector<16x4xf32>
    %c1_316 = arith.constant 1 : index
    %c0_317 = arith.constant 0 : index
    %c0_318 = arith.constant 0 : index
    %c0_319 = arith.constant 0 : index
    %629 = vector.load %arg23[%c1_316, %c0_317, %c0_318, %c0_319] : memref<3x4x16x4xbf16, #tpu.memory_space<vmem>>, vector<1x1x16x4xbf16>
    %630 = vector.shape_cast %629 : vector<1x1x16x4xbf16> to vector<16x4xbf16>
    %631 = arith.truncf %607 : vector<16x16xf32> to vector<16x16xbf16>
    %cst_320 = arith.constant dense<0.000000e+00> : vector<16x4xf32>
    %632 = tpu.matmul %631, %630, %cst_320 {dimension_numbers = #tpu.dot_dimension_numbers<[1], [0], [0], [1], [0, 0, 1, 1], [], []>} : vector<16x16xbf16>, vector<16x4xbf16>, vector<16x4xf32> -> vector<16x4xf32>
    %c1_321 = arith.constant 1 : index
    %c0_322 = arith.constant 0 : index
    %c0_323 = arith.constant 0 : index
    %c0_324 = arith.constant 0 : index
    %633 = vector.load %arg26[%c1_321, %c0_322, %c0_323, %c0_324] : memref<3x4x1x4xf32, #tpu.memory_space<vmem>>, vector<1x1x1x4xf32>
    %634 = vector.shape_cast %633 : vector<1x1x1x4xf32> to vector<1x4xf32>
    %635 = vector.broadcast %634 : vector<1x4xf32> to vector<16x4xf32>
    %636 = arith.addf %632, %635 : vector<16x4xf32>
    %637 = vector.extract_strided_slice %620 {offsets = [0, 0], sizes = [8, 4], strides = [1, 1]} : vector<16x4xf32> to vector<8x4xf32>
    %638 = vector.extract_strided_slice %628 {offsets = [0, 0], sizes = [8, 4], strides = [1, 1]} : vector<16x4xf32> to vector<8x4xf32>
    %639 = arith.truncf %637 : vector<8x4xf32> to vector<8x4xbf16>
    %640 = arith.truncf %638 : vector<8x4xf32> to vector<8x4xbf16>
    "tpu.trace_start"() <{level = 10 : i32, message = "qd,kd->qk"}> : () -> ()
    %cst_325 = arith.constant dense<0.000000e+00> : vector<8x8xf32>
    %641 = tpu.matmul %639, %640, %cst_325 {dimension_numbers = #tpu.dot_dimension_numbers<[1], [1], [0], [0], [0, 0, 1, 0], [], []>} : vector<8x4xbf16>, vector<8x4xbf16>, vector<8x8xf32> -> vector<8x8xf32>
    "tpu.trace_stop"() : () -> ()
    %cst_326 = arith.constant 5.000000e-01 : f32
    %642 = vector.broadcast %cst_326 : f32 to vector<8x8xf32>
    %643 = arith.mulf %641, %642 : vector<8x8xf32>
    %cst_327 = arith.constant dense<0xFF800000> : vector<8xf32>
    %644 = vector.multi_reduction <maximumf>, %643, %cst_327 [1] : vector<8x8xf32> to vector<8xf32>
    %645 = vector.shape_cast %644 : vector<8xf32> to vector<8x1xf32>
    %646 = vector.broadcast %645 : vector<8x1xf32> to vector<8x8xf32>
    %647 = arith.subf %643, %646 : vector<8x8xf32>
    %648 = math.exp %647 : vector<8x8xf32>
    %cst_328 = arith.constant dense<0.000000e+00> : vector<8xf32>
    %649 = vector.multi_reduction <add>, %648, %cst_328 [1] : vector<8x8xf32> to vector<8xf32>
    %650 = vector.shape_cast %649 : vector<8xf32> to vector<8x1xf32>
    %651 = tpu.reciprocal %650 {approx = true} : vector<8x1xf32> -> vector<8x1xf32>
    %652 = vector.broadcast %651 : vector<8x1xf32> to vector<8x8xf32>
    %653 = arith.mulf %648, %652 : vector<8x8xf32>
    %654 = arith.truncf %653 : vector<8x8xf32> to vector<8x8xbf16>
    %655 = vector.extract_strided_slice %636 {offsets = [0, 0], sizes = [8, 4], strides = [1, 1]} : vector<16x4xf32> to vector<8x4xf32>
    %656 = arith.truncf %655 : vector<8x4xf32> to vector<8x4xbf16>
    %cst_329 = arith.constant dense<0.000000e+00> : vector<8x4xf32>
    %657 = tpu.matmul %654, %656, %cst_329 {dimension_numbers = #tpu.dot_dimension_numbers<[1], [0], [0], [1], [0, 0, 1, 1], [], []>} : vector<8x8xbf16>, vector<8x4xbf16>, vector<8x4xf32> -> vector<8x4xf32>
    %658 = vector.extract_strided_slice %620 {offsets = [8, 0], sizes = [8, 4], strides = [1, 1]} : vector<16x4xf32> to vector<8x4xf32>
    %659 = vector.extract_strided_slice %628 {offsets = [8, 0], sizes = [8, 4], strides = [1, 1]} : vector<16x4xf32> to vector<8x4xf32>
    %660 = arith.truncf %658 : vector<8x4xf32> to vector<8x4xbf16>
    %661 = arith.truncf %659 : vector<8x4xf32> to vector<8x4xbf16>
    "tpu.trace_start"() <{level = 10 : i32, message = "qd,kd->qk"}> : () -> ()
    %cst_330 = arith.constant dense<0.000000e+00> : vector<8x8xf32>
    %662 = tpu.matmul %660, %661, %cst_330 {dimension_numbers = #tpu.dot_dimension_numbers<[1], [1], [0], [0], [0, 0, 1, 0], [], []>} : vector<8x4xbf16>, vector<8x4xbf16>, vector<8x8xf32> -> vector<8x8xf32>
    "tpu.trace_stop"() : () -> ()
    %cst_331 = arith.constant 5.000000e-01 : f32
    %663 = vector.broadcast %cst_331 : f32 to vector<8x8xf32>
    %664 = arith.mulf %662, %663 : vector<8x8xf32>
    %cst_332 = arith.constant dense<0xFF800000> : vector<8xf32>
    %665 = vector.multi_reduction <maximumf>, %664, %cst_332 [1] : vector<8x8xf32> to vector<8xf32>
    %666 = vector.shape_cast %665 : vector<8xf32> to vector<8x1xf32>
    %667 = vector.broadcast %666 : vector<8x1xf32> to vector<8x8xf32>
    %668 = arith.subf %664, %667 : vector<8x8xf32>
    %669 = math.exp %668 : vector<8x8xf32>
    %cst_333 = arith.constant dense<0.000000e+00> : vector<8xf32>
    %670 = vector.multi_reduction <add>, %669, %cst_333 [1] : vector<8x8xf32> to vector<8xf32>
    %671 = vector.shape_cast %670 : vector<8xf32> to vector<8x1xf32>
    %672 = tpu.reciprocal %671 {approx = true} : vector<8x1xf32> -> vector<8x1xf32>
    %673 = vector.broadcast %672 : vector<8x1xf32> to vector<8x8xf32>
    %674 = arith.mulf %669, %673 : vector<8x8xf32>
    %675 = arith.truncf %674 : vector<8x8xf32> to vector<8x8xbf16>
    %676 = vector.extract_strided_slice %636 {offsets = [8, 0], sizes = [8, 4], strides = [1, 1]} : vector<16x4xf32> to vector<8x4xf32>
    %677 = arith.truncf %676 : vector<8x4xf32> to vector<8x4xbf16>
    %cst_334 = arith.constant dense<0.000000e+00> : vector<8x4xf32>
    %678 = tpu.matmul %675, %677, %cst_334 {dimension_numbers = #tpu.dot_dimension_numbers<[1], [0], [0], [1], [0, 0, 1, 1], [], []>} : vector<8x8xbf16>, vector<8x4xbf16>, vector<8x4xf32> -> vector<8x4xf32>
    %679 = tpu.concatenate %657, %678 in 0 : vector<8x4xf32>, vector<8x4xf32> -> vector<16x4xf32>
    %c1_335 = arith.constant 1 : index
    %c0_336 = arith.constant 0 : index
    %c0_337 = arith.constant 0 : index
    %c0_338 = arith.constant 0 : index
    %680 = vector.load %arg27[%c1_335, %c0_336, %c0_337, %c0_338] : memref<3x4x4x16xbf16, #tpu.memory_space<vmem>>, vector<1x1x4x16xbf16>
    %681 = vector.shape_cast %680 : vector<1x1x4x16xbf16> to vector<4x16xbf16>
    %682 = arith.truncf %679 : vector<16x4xf32> to vector<16x4xbf16>
    %cst_339 = arith.constant dense<0.000000e+00> : vector<16x16xf32>
    %683 = tpu.matmul %682, %681, %cst_339 {dimension_numbers = #tpu.dot_dimension_numbers<[1], [0], [0], [1], [0, 0, 1, 1], [], []>} : vector<16x4xbf16>, vector<4x16xbf16>, vector<16x16xf32> -> vector<16x16xf32>
    %684 = arith.addf %612, %683 : vector<16x16xf32>
    %c1_340 = arith.constant 1 : index
    %c1_341 = arith.constant 1 : index
    %c0_342 = arith.constant 0 : index
    %c0_343 = arith.constant 0 : index
    %685 = vector.load %arg21[%c1_340, %c1_341, %c0_342, %c0_343] : memref<3x4x16x4xbf16, #tpu.memory_space<vmem>>, vector<1x1x16x4xbf16>
    %686 = vector.shape_cast %685 : vector<1x1x16x4xbf16> to vector<16x4xbf16>
    %687 = arith.truncf %607 : vector<16x16xf32> to vector<16x16xbf16>
    %cst_344 = arith.constant dense<0.000000e+00> : vector<16x4xf32>
    %688 = tpu.matmul %687, %686, %cst_344 {dimension_numbers = #tpu.dot_dimension_numbers<[1], [0], [0], [1], [0, 0, 1, 1], [], []>} : vector<16x16xbf16>, vector<16x4xbf16>, vector<16x4xf32> -> vector<16x4xf32>
    %c1_345 = arith.constant 1 : index
    %c1_346 = arith.constant 1 : index
    %c0_347 = arith.constant 0 : index
    %c0_348 = arith.constant 0 : index
    %689 = vector.load %arg24[%c1_345, %c1_346, %c0_347, %c0_348] : memref<3x4x1x4xf32, #tpu.memory_space<vmem>>, vector<1x1x1x4xf32>
    %690 = vector.shape_cast %689 : vector<1x1x1x4xf32> to vector<1x4xf32>
    %691 = vector.broadcast %690 : vector<1x4xf32> to vector<16x4xf32>
    %692 = arith.addf %688, %691 : vector<16x4xf32>
    %c1_349 = arith.constant 1 : index
    %c1_350 = arith.constant 1 : index
    %c0_351 = arith.constant 0 : index
    %c0_352 = arith.constant 0 : index
    %693 = vector.load %arg22[%c1_349, %c1_350, %c0_351, %c0_352] : memref<3x4x16x4xbf16, #tpu.memory_space<vmem>>, vector<1x1x16x4xbf16>
    %694 = vector.shape_cast %693 : vector<1x1x16x4xbf16> to vector<16x4xbf16>
    %695 = arith.truncf %607 : vector<16x16xf32> to vector<16x16xbf16>
    %cst_353 = arith.constant dense<0.000000e+00> : vector<16x4xf32>
    %696 = tpu.matmul %695, %694, %cst_353 {dimension_numbers = #tpu.dot_dimension_numbers<[1], [0], [0], [1], [0, 0, 1, 1], [], []>} : vector<16x16xbf16>, vector<16x4xbf16>, vector<16x4xf32> -> vector<16x4xf32>
    %c1_354 = arith.constant 1 : index
    %c1_355 = arith.constant 1 : index
    %c0_356 = arith.constant 0 : index
    %c0_357 = arith.constant 0 : index
    %697 = vector.load %arg25[%c1_354, %c1_355, %c0_356, %c0_357] : memref<3x4x1x4xf32, #tpu.memory_space<vmem>>, vector<1x1x1x4xf32>
    %698 = vector.shape_cast %697 : vector<1x1x1x4xf32> to vector<1x4xf32>
    %699 = vector.broadcast %698 : vector<1x4xf32> to vector<16x4xf32>
    %700 = arith.addf %696, %699 : vector<16x4xf32>
    %c1_358 = arith.constant 1 : index
    %c1_359 = arith.constant 1 : index
    %c0_360 = arith.constant 0 : index
    %c0_361 = arith.constant 0 : index
    %701 = vector.load %arg23[%c1_358, %c1_359, %c0_360, %c0_361] : memref<3x4x16x4xbf16, #tpu.memory_space<vmem>>, vector<1x1x16x4xbf16>
    %702 = vector.shape_cast %701 : vector<1x1x16x4xbf16> to vector<16x4xbf16>
    %703 = arith.truncf %607 : vector<16x16xf32> to vector<16x16xbf16>
    %cst_362 = arith.constant dense<0.000000e+00> : vector<16x4xf32>
    %704 = tpu.matmul %703, %702, %cst_362 {dimension_numbers = #tpu.dot_dimension_numbers<[1], [0], [0], [1], [0, 0, 1, 1], [], []>} : vector<16x16xbf16>, vector<16x4xbf16>, vector<16x4xf32> -> vector<16x4xf32>
    %c1_363 = arith.constant 1 : index
    %c1_364 = arith.constant 1 : index
    %c0_365 = arith.constant 0 : index
    %c0_366 = arith.constant 0 : index
    %705 = vector.load %arg26[%c1_363, %c1_364, %c0_365, %c0_366] : memref<3x4x1x4xf32, #tpu.memory_space<vmem>>, vector<1x1x1x4xf32>
    %706 = vector.shape_cast %705 : vector<1x1x1x4xf32> to vector<1x4xf32>
    %707 = vector.broadcast %706 : vector<1x4xf32> to vector<16x4xf32>
    %708 = arith.addf %704, %707 : vector<16x4xf32>
    %709 = vector.extract_strided_slice %692 {offsets = [0, 0], sizes = [8, 4], strides = [1, 1]} : vector<16x4xf32> to vector<8x4xf32>
    %710 = vector.extract_strided_slice %700 {offsets = [0, 0], sizes = [8, 4], strides = [1, 1]} : vector<16x4xf32> to vector<8x4xf32>
    %711 = arith.truncf %709 : vector<8x4xf32> to vector<8x4xbf16>
    %712 = arith.truncf %710 : vector<8x4xf32> to vector<8x4xbf16>
    "tpu.trace_start"() <{level = 10 : i32, message = "qd,kd->qk"}> : () -> ()
    %cst_367 = arith.constant dense<0.000000e+00> : vector<8x8xf32>
    %713 = tpu.matmul %711, %712, %cst_367 {dimension_numbers = #tpu.dot_dimension_numbers<[1], [1], [0], [0], [0, 0, 1, 0], [], []>} : vector<8x4xbf16>, vector<8x4xbf16>, vector<8x8xf32> -> vector<8x8xf32>
    "tpu.trace_stop"() : () -> ()
    %cst_368 = arith.constant 5.000000e-01 : f32
    %714 = vector.broadcast %cst_368 : f32 to vector<8x8xf32>
    %715 = arith.mulf %713, %714 : vector<8x8xf32>
    %cst_369 = arith.constant dense<0xFF800000> : vector<8xf32>
    %716 = vector.multi_reduction <maximumf>, %715, %cst_369 [1] : vector<8x8xf32> to vector<8xf32>
    %717 = vector.shape_cast %716 : vector<8xf32> to vector<8x1xf32>
    %718 = vector.broadcast %717 : vector<8x1xf32> to vector<8x8xf32>
    %719 = arith.subf %715, %718 : vector<8x8xf32>
    %720 = math.exp %719 : vector<8x8xf32>
    %cst_370 = arith.constant dense<0.000000e+00> : vector<8xf32>
    %721 = vector.multi_reduction <add>, %720, %cst_370 [1] : vector<8x8xf32> to vector<8xf32>
    %722 = vector.shape_cast %721 : vector<8xf32> to vector<8x1xf32>
    %723 = tpu.reciprocal %722 {approx = true} : vector<8x1xf32> -> vector<8x1xf32>
    %724 = vector.broadcast %723 : vector<8x1xf32> to vector<8x8xf32>
    %725 = arith.mulf %720, %724 : vector<8x8xf32>
    %726 = arith.truncf %725 : vector<8x8xf32> to vector<8x8xbf16>
    %727 = vector.extract_strided_slice %708 {offsets = [0, 0], sizes = [8, 4], strides = [1, 1]} : vector<16x4xf32> to vector<8x4xf32>
    %728 = arith.truncf %727 : vector<8x4xf32> to vector<8x4xbf16>
    %cst_371 = arith.constant dense<0.000000e+00> : vector<8x4xf32>
    %729 = tpu.matmul %726, %728, %cst_371 {dimension_numbers = #tpu.dot_dimension_numbers<[1], [0], [0], [1], [0, 0, 1, 1], [], []>} : vector<8x8xbf16>, vector<8x4xbf16>, vector<8x4xf32> -> vector<8x4xf32>
    %730 = vector.extract_strided_slice %692 {offsets = [8, 0], sizes = [8, 4], strides = [1, 1]} : vector<16x4xf32> to vector<8x4xf32>
    %731 = vector.extract_strided_slice %700 {offsets = [8, 0], sizes = [8, 4], strides = [1, 1]} : vector<16x4xf32> to vector<8x4xf32>
    %732 = arith.truncf %730 : vector<8x4xf32> to vector<8x4xbf16>
    %733 = arith.truncf %731 : vector<8x4xf32> to vector<8x4xbf16>
    "tpu.trace_start"() <{level = 10 : i32, message = "qd,kd->qk"}> : () -> ()
    %cst_372 = arith.constant dense<0.000000e+00> : vector<8x8xf32>
    %734 = tpu.matmul %732, %733, %cst_372 {dimension_numbers = #tpu.dot_dimension_numbers<[1], [1], [0], [0], [0, 0, 1, 0], [], []>} : vector<8x4xbf16>, vector<8x4xbf16>, vector<8x8xf32> -> vector<8x8xf32>
    "tpu.trace_stop"() : () -> ()
    %cst_373 = arith.constant 5.000000e-01 : f32
    %735 = vector.broadcast %cst_373 : f32 to vector<8x8xf32>
    %736 = arith.mulf %734, %735 : vector<8x8xf32>
    %cst_374 = arith.constant dense<0xFF800000> : vector<8xf32>
    %737 = vector.multi_reduction <maximumf>, %736, %cst_374 [1] : vector<8x8xf32> to vector<8xf32>
    %738 = vector.shape_cast %737 : vector<8xf32> to vector<8x1xf32>
    %739 = vector.broadcast %738 : vector<8x1xf32> to vector<8x8xf32>
    %740 = arith.subf %736, %739 : vector<8x8xf32>
    %741 = math.exp %740 : vector<8x8xf32>
    %cst_375 = arith.constant dense<0.000000e+00> : vector<8xf32>
    %742 = vector.multi_reduction <add>, %741, %cst_375 [1] : vector<8x8xf32> to vector<8xf32>
    %743 = vector.shape_cast %742 : vector<8xf32> to vector<8x1xf32>
    %744 = tpu.reciprocal %743 {approx = true} : vector<8x1xf32> -> vector<8x1xf32>
    %745 = vector.broadcast %744 : vector<8x1xf32> to vector<8x8xf32>
    %746 = arith.mulf %741, %745 : vector<8x8xf32>
    %747 = arith.truncf %746 : vector<8x8xf32> to vector<8x8xbf16>
    %748 = vector.extract_strided_slice %708 {offsets = [8, 0], sizes = [8, 4], strides = [1, 1]} : vector<16x4xf32> to vector<8x4xf32>
    %749 = arith.truncf %748 : vector<8x4xf32> to vector<8x4xbf16>
    %cst_376 = arith.constant dense<0.000000e+00> : vector<8x4xf32>
    %750 = tpu.matmul %747, %749, %cst_376 {dimension_numbers = #tpu.dot_dimension_numbers<[1], [0], [0], [1], [0, 0, 1, 1], [], []>} : vector<8x8xbf16>, vector<8x4xbf16>, vector<8x4xf32> -> vector<8x4xf32>
    %751 = tpu.concatenate %729, %750 in 0 : vector<8x4xf32>, vector<8x4xf32> -> vector<16x4xf32>
    %c1_377 = arith.constant 1 : index
    %c1_378 = arith.constant 1 : index
    %c0_379 = arith.constant 0 : index
    %c0_380 = arith.constant 0 : index
    %752 = vector.load %arg27[%c1_377, %c1_378, %c0_379, %c0_380] : memref<3x4x4x16xbf16, #tpu.memory_space<vmem>>, vector<1x1x4x16xbf16>
    %753 = vector.shape_cast %752 : vector<1x1x4x16xbf16> to vector<4x16xbf16>
    %754 = arith.truncf %751 : vector<16x4xf32> to vector<16x4xbf16>
    %cst_381 = arith.constant dense<0.000000e+00> : vector<16x16xf32>
    %755 = tpu.matmul %754, %753, %cst_381 {dimension_numbers = #tpu.dot_dimension_numbers<[1], [0], [0], [1], [0, 0, 1, 1], [], []>} : vector<16x4xbf16>, vector<4x16xbf16>, vector<16x16xf32> -> vector<16x16xf32>
    %756 = arith.addf %684, %755 : vector<16x16xf32>
    %c1_382 = arith.constant 1 : index
    %c2_383 = arith.constant 2 : index
    %c0_384 = arith.constant 0 : index
    %c0_385 = arith.constant 0 : index
    %757 = vector.load %arg21[%c1_382, %c2_383, %c0_384, %c0_385] : memref<3x4x16x4xbf16, #tpu.memory_space<vmem>>, vector<1x1x16x4xbf16>
    %758 = vector.shape_cast %757 : vector<1x1x16x4xbf16> to vector<16x4xbf16>
    %759 = arith.truncf %607 : vector<16x16xf32> to vector<16x16xbf16>
    %cst_386 = arith.constant dense<0.000000e+00> : vector<16x4xf32>
    %760 = tpu.matmul %759, %758, %cst_386 {dimension_numbers = #tpu.dot_dimension_numbers<[1], [0], [0], [1], [0, 0, 1, 1], [], []>} : vector<16x16xbf16>, vector<16x4xbf16>, vector<16x4xf32> -> vector<16x4xf32>
    %c1_387 = arith.constant 1 : index
    %c2_388 = arith.constant 2 : index
    %c0_389 = arith.constant 0 : index
    %c0_390 = arith.constant 0 : index
    %761 = vector.load %arg24[%c1_387, %c2_388, %c0_389, %c0_390] : memref<3x4x1x4xf32, #tpu.memory_space<vmem>>, vector<1x1x1x4xf32>
    %762 = vector.shape_cast %761 : vector<1x1x1x4xf32> to vector<1x4xf32>
    %763 = vector.broadcast %762 : vector<1x4xf32> to vector<16x4xf32>
    %764 = arith.addf %760, %763 : vector<16x4xf32>
    %c1_391 = arith.constant 1 : index
    %c2_392 = arith.constant 2 : index
    %c0_393 = arith.constant 0 : index
    %c0_394 = arith.constant 0 : index
    %765 = vector.load %arg22[%c1_391, %c2_392, %c0_393, %c0_394] : memref<3x4x16x4xbf16, #tpu.memory_space<vmem>>, vector<1x1x16x4xbf16>
    %766 = vector.shape_cast %765 : vector<1x1x16x4xbf16> to vector<16x4xbf16>
    %767 = arith.truncf %607 : vector<16x16xf32> to vector<16x16xbf16>
    %cst_395 = arith.constant dense<0.000000e+00> : vector<16x4xf32>
    %768 = tpu.matmul %767, %766, %cst_395 {dimension_numbers = #tpu.dot_dimension_numbers<[1], [0], [0], [1], [0, 0, 1, 1], [], []>} : vector<16x16xbf16>, vector<16x4xbf16>, vector<16x4xf32> -> vector<16x4xf32>
    %c1_396 = arith.constant 1 : index
    %c2_397 = arith.constant 2 : index
    %c0_398 = arith.constant 0 : index
    %c0_399 = arith.constant 0 : index
    %769 = vector.load %arg25[%c1_396, %c2_397, %c0_398, %c0_399] : memref<3x4x1x4xf32, #tpu.memory_space<vmem>>, vector<1x1x1x4xf32>
    %770 = vector.shape_cast %769 : vector<1x1x1x4xf32> to vector<1x4xf32>
    %771 = vector.broadcast %770 : vector<1x4xf32> to vector<16x4xf32>
    %772 = arith.addf %768, %771 : vector<16x4xf32>
    %c1_400 = arith.constant 1 : index
    %c2_401 = arith.constant 2 : index
    %c0_402 = arith.constant 0 : index
    %c0_403 = arith.constant 0 : index
    %773 = vector.load %arg23[%c1_400, %c2_401, %c0_402, %c0_403] : memref<3x4x16x4xbf16, #tpu.memory_space<vmem>>, vector<1x1x16x4xbf16>
    %774 = vector.shape_cast %773 : vector<1x1x16x4xbf16> to vector<16x4xbf16>
    %775 = arith.truncf %607 : vector<16x16xf32> to vector<16x16xbf16>
    %cst_404 = arith.constant dense<0.000000e+00> : vector<16x4xf32>
    %776 = tpu.matmul %775, %774, %cst_404 {dimension_numbers = #tpu.dot_dimension_numbers<[1], [0], [0], [1], [0, 0, 1, 1], [], []>} : vector<16x16xbf16>, vector<16x4xbf16>, vector<16x4xf32> -> vector<16x4xf32>
    %c1_405 = arith.constant 1 : index
    %c2_406 = arith.constant 2 : index
    %c0_407 = arith.constant 0 : index
    %c0_408 = arith.constant 0 : index
    %777 = vector.load %arg26[%c1_405, %c2_406, %c0_407, %c0_408] : memref<3x4x1x4xf32, #tpu.memory_space<vmem>>, vector<1x1x1x4xf32>
    %778 = vector.shape_cast %777 : vector<1x1x1x4xf32> to vector<1x4xf32>
    %779 = vector.broadcast %778 : vector<1x4xf32> to vector<16x4xf32>
    %780 = arith.addf %776, %779 : vector<16x4xf32>
    %781 = vector.extract_strided_slice %764 {offsets = [0, 0], sizes = [8, 4], strides = [1, 1]} : vector<16x4xf32> to vector<8x4xf32>
    %782 = vector.extract_strided_slice %772 {offsets = [0, 0], sizes = [8, 4], strides = [1, 1]} : vector<16x4xf32> to vector<8x4xf32>
    %783 = arith.truncf %781 : vector<8x4xf32> to vector<8x4xbf16>
    %784 = arith.truncf %782 : vector<8x4xf32> to vector<8x4xbf16>
    "tpu.trace_start"() <{level = 10 : i32, message = "qd,kd->qk"}> : () -> ()
    %cst_409 = arith.constant dense<0.000000e+00> : vector<8x8xf32>
    %785 = tpu.matmul %783, %784, %cst_409 {dimension_numbers = #tpu.dot_dimension_numbers<[1], [1], [0], [0], [0, 0, 1, 0], [], []>} : vector<8x4xbf16>, vector<8x4xbf16>, vector<8x8xf32> -> vector<8x8xf32>
    "tpu.trace_stop"() : () -> ()
    %cst_410 = arith.constant 5.000000e-01 : f32
    %786 = vector.broadcast %cst_410 : f32 to vector<8x8xf32>
    %787 = arith.mulf %785, %786 : vector<8x8xf32>
    %cst_411 = arith.constant dense<0xFF800000> : vector<8xf32>
    %788 = vector.multi_reduction <maximumf>, %787, %cst_411 [1] : vector<8x8xf32> to vector<8xf32>
    %789 = vector.shape_cast %788 : vector<8xf32> to vector<8x1xf32>
    %790 = vector.broadcast %789 : vector<8x1xf32> to vector<8x8xf32>
    %791 = arith.subf %787, %790 : vector<8x8xf32>
    %792 = math.exp %791 : vector<8x8xf32>
    %cst_412 = arith.constant dense<0.000000e+00> : vector<8xf32>
    %793 = vector.multi_reduction <add>, %792, %cst_412 [1] : vector<8x8xf32> to vector<8xf32>
    %794 = vector.shape_cast %793 : vector<8xf32> to vector<8x1xf32>
    %795 = tpu.reciprocal %794 {approx = true} : vector<8x1xf32> -> vector<8x1xf32>
    %796 = vector.broadcast %795 : vector<8x1xf32> to vector<8x8xf32>
    %797 = arith.mulf %792, %796 : vector<8x8xf32>
    %798 = arith.truncf %797 : vector<8x8xf32> to vector<8x8xbf16>
    %799 = vector.extract_strided_slice %780 {offsets = [0, 0], sizes = [8, 4], strides = [1, 1]} : vector<16x4xf32> to vector<8x4xf32>
    %800 = arith.truncf %799 : vector<8x4xf32> to vector<8x4xbf16>
    %cst_413 = arith.constant dense<0.000000e+00> : vector<8x4xf32>
    %801 = tpu.matmul %798, %800, %cst_413 {dimension_numbers = #tpu.dot_dimension_numbers<[1], [0], [0], [1], [0, 0, 1, 1], [], []>} : vector<8x8xbf16>, vector<8x4xbf16>, vector<8x4xf32> -> vector<8x4xf32>
    %802 = vector.extract_strided_slice %764 {offsets = [8, 0], sizes = [8, 4], strides = [1, 1]} : vector<16x4xf32> to vector<8x4xf32>
    %803 = vector.extract_strided_slice %772 {offsets = [8, 0], sizes = [8, 4], strides = [1, 1]} : vector<16x4xf32> to vector<8x4xf32>
    %804 = arith.truncf %802 : vector<8x4xf32> to vector<8x4xbf16>
    %805 = arith.truncf %803 : vector<8x4xf32> to vector<8x4xbf16>
    "tpu.trace_start"() <{level = 10 : i32, message = "qd,kd->qk"}> : () -> ()
    %cst_414 = arith.constant dense<0.000000e+00> : vector<8x8xf32>
    %806 = tpu.matmul %804, %805, %cst_414 {dimension_numbers = #tpu.dot_dimension_numbers<[1], [1], [0], [0], [0, 0, 1, 0], [], []>} : vector<8x4xbf16>, vector<8x4xbf16>, vector<8x8xf32> -> vector<8x8xf32>
    "tpu.trace_stop"() : () -> ()
    %cst_415 = arith.constant 5.000000e-01 : f32
    %807 = vector.broadcast %cst_415 : f32 to vector<8x8xf32>
    %808 = arith.mulf %806, %807 : vector<8x8xf32>
    %cst_416 = arith.constant dense<0xFF800000> : vector<8xf32>
    %809 = vector.multi_reduction <maximumf>, %808, %cst_416 [1] : vector<8x8xf32> to vector<8xf32>
    %810 = vector.shape_cast %809 : vector<8xf32> to vector<8x1xf32>
    %811 = vector.broadcast %810 : vector<8x1xf32> to vector<8x8xf32>
    %812 = arith.subf %808, %811 : vector<8x8xf32>
    %813 = math.exp %812 : vector<8x8xf32>
    %cst_417 = arith.constant dense<0.000000e+00> : vector<8xf32>
    %814 = vector.multi_reduction <add>, %813, %cst_417 [1] : vector<8x8xf32> to vector<8xf32>
    %815 = vector.shape_cast %814 : vector<8xf32> to vector<8x1xf32>
    %816 = tpu.reciprocal %815 {approx = true} : vector<8x1xf32> -> vector<8x1xf32>
    %817 = vector.broadcast %816 : vector<8x1xf32> to vector<8x8xf32>
    %818 = arith.mulf %813, %817 : vector<8x8xf32>
    %819 = arith.truncf %818 : vector<8x8xf32> to vector<8x8xbf16>
    %820 = vector.extract_strided_slice %780 {offsets = [8, 0], sizes = [8, 4], strides = [1, 1]} : vector<16x4xf32> to vector<8x4xf32>
    %821 = arith.truncf %820 : vector<8x4xf32> to vector<8x4xbf16>
    %cst_418 = arith.constant dense<0.000000e+00> : vector<8x4xf32>
    %822 = tpu.matmul %819, %821, %cst_418 {dimension_numbers = #tpu.dot_dimension_numbers<[1], [0], [0], [1], [0, 0, 1, 1], [], []>} : vector<8x8xbf16>, vector<8x4xbf16>, vector<8x4xf32> -> vector<8x4xf32>
    %823 = tpu.concatenate %801, %822 in 0 : vector<8x4xf32>, vector<8x4xf32> -> vector<16x4xf32>
    %c1_419 = arith.constant 1 : index
    %c2_420 = arith.constant 2 : index
    %c0_421 = arith.constant 0 : index
    %c0_422 = arith.constant 0 : index
    %824 = vector.load %arg27[%c1_419, %c2_420, %c0_421, %c0_422] : memref<3x4x4x16xbf16, #tpu.memory_space<vmem>>, vector<1x1x4x16xbf16>
    %825 = vector.shape_cast %824 : vector<1x1x4x16xbf16> to vector<4x16xbf16>
    %826 = arith.truncf %823 : vector<16x4xf32> to vector<16x4xbf16>
    %cst_423 = arith.constant dense<0.000000e+00> : vector<16x16xf32>
    %827 = tpu.matmul %826, %825, %cst_423 {dimension_numbers = #tpu.dot_dimension_numbers<[1], [0], [0], [1], [0, 0, 1, 1], [], []>} : vector<16x4xbf16>, vector<4x16xbf16>, vector<16x16xf32> -> vector<16x16xf32>
    %828 = arith.addf %756, %827 : vector<16x16xf32>
    %c1_424 = arith.constant 1 : index
    %c3_425 = arith.constant 3 : index
    %c0_426 = arith.constant 0 : index
    %c0_427 = arith.constant 0 : index
    %829 = vector.load %arg21[%c1_424, %c3_425, %c0_426, %c0_427] : memref<3x4x16x4xbf16, #tpu.memory_space<vmem>>, vector<1x1x16x4xbf16>
    %830 = vector.shape_cast %829 : vector<1x1x16x4xbf16> to vector<16x4xbf16>
    %831 = arith.truncf %607 : vector<16x16xf32> to vector<16x16xbf16>
    %cst_428 = arith.constant dense<0.000000e+00> : vector<16x4xf32>
    %832 = tpu.matmul %831, %830, %cst_428 {dimension_numbers = #tpu.dot_dimension_numbers<[1], [0], [0], [1], [0, 0, 1, 1], [], []>} : vector<16x16xbf16>, vector<16x4xbf16>, vector<16x4xf32> -> vector<16x4xf32>
    %c1_429 = arith.constant 1 : index
    %c3_430 = arith.constant 3 : index
    %c0_431 = arith.constant 0 : index
    %c0_432 = arith.constant 0 : index
    %833 = vector.load %arg24[%c1_429, %c3_430, %c0_431, %c0_432] : memref<3x4x1x4xf32, #tpu.memory_space<vmem>>, vector<1x1x1x4xf32>
    %834 = vector.shape_cast %833 : vector<1x1x1x4xf32> to vector<1x4xf32>
    %835 = vector.broadcast %834 : vector<1x4xf32> to vector<16x4xf32>
    %836 = arith.addf %832, %835 : vector<16x4xf32>
    %c1_433 = arith.constant 1 : index
    %c3_434 = arith.constant 3 : index
    %c0_435 = arith.constant 0 : index
    %c0_436 = arith.constant 0 : index
    %837 = vector.load %arg22[%c1_433, %c3_434, %c0_435, %c0_436] : memref<3x4x16x4xbf16, #tpu.memory_space<vmem>>, vector<1x1x16x4xbf16>
    %838 = vector.shape_cast %837 : vector<1x1x16x4xbf16> to vector<16x4xbf16>
    %839 = arith.truncf %607 : vector<16x16xf32> to vector<16x16xbf16>
    %cst_437 = arith.constant dense<0.000000e+00> : vector<16x4xf32>
    %840 = tpu.matmul %839, %838, %cst_437 {dimension_numbers = #tpu.dot_dimension_numbers<[1], [0], [0], [1], [0, 0, 1, 1], [], []>} : vector<16x16xbf16>, vector<16x4xbf16>, vector<16x4xf32> -> vector<16x4xf32>
    %c1_438 = arith.constant 1 : index
    %c3_439 = arith.constant 3 : index
    %c0_440 = arith.constant 0 : index
    %c0_441 = arith.constant 0 : index
    %841 = vector.load %arg25[%c1_438, %c3_439, %c0_440, %c0_441] : memref<3x4x1x4xf32, #tpu.memory_space<vmem>>, vector<1x1x1x4xf32>
    %842 = vector.shape_cast %841 : vector<1x1x1x4xf32> to vector<1x4xf32>
    %843 = vector.broadcast %842 : vector<1x4xf32> to vector<16x4xf32>
    %844 = arith.addf %840, %843 : vector<16x4xf32>
    %c1_442 = arith.constant 1 : index
    %c3_443 = arith.constant 3 : index
    %c0_444 = arith.constant 0 : index
    %c0_445 = arith.constant 0 : index
    %845 = vector.load %arg23[%c1_442, %c3_443, %c0_444, %c0_445] : memref<3x4x16x4xbf16, #tpu.memory_space<vmem>>, vector<1x1x16x4xbf16>
    %846 = vector.shape_cast %845 : vector<1x1x16x4xbf16> to vector<16x4xbf16>
    %847 = arith.truncf %607 : vector<16x16xf32> to vector<16x16xbf16>
    %cst_446 = arith.constant dense<0.000000e+00> : vector<16x4xf32>
    %848 = tpu.matmul %847, %846, %cst_446 {dimension_numbers = #tpu.dot_dimension_numbers<[1], [0], [0], [1], [0, 0, 1, 1], [], []>} : vector<16x16xbf16>, vector<16x4xbf16>, vector<16x4xf32> -> vector<16x4xf32>
    %c1_447 = arith.constant 1 : index
    %c3_448 = arith.constant 3 : index
    %c0_449 = arith.constant 0 : index
    %c0_450 = arith.constant 0 : index
    %849 = vector.load %arg26[%c1_447, %c3_448, %c0_449, %c0_450] : memref<3x4x1x4xf32, #tpu.memory_space<vmem>>, vector<1x1x1x4xf32>
    %850 = vector.shape_cast %849 : vector<1x1x1x4xf32> to vector<1x4xf32>
    %851 = vector.broadcast %850 : vector<1x4xf32> to vector<16x4xf32>
    %852 = arith.addf %848, %851 : vector<16x4xf32>
    %853 = vector.extract_strided_slice %836 {offsets = [0, 0], sizes = [8, 4], strides = [1, 1]} : vector<16x4xf32> to vector<8x4xf32>
    %854 = vector.extract_strided_slice %844 {offsets = [0, 0], sizes = [8, 4], strides = [1, 1]} : vector<16x4xf32> to vector<8x4xf32>
    %855 = arith.truncf %853 : vector<8x4xf32> to vector<8x4xbf16>
    %856 = arith.truncf %854 : vector<8x4xf32> to vector<8x4xbf16>
    "tpu.trace_start"() <{level = 10 : i32, message = "qd,kd->qk"}> : () -> ()
    %cst_451 = arith.constant dense<0.000000e+00> : vector<8x8xf32>
    %857 = tpu.matmul %855, %856, %cst_451 {dimension_numbers = #tpu.dot_dimension_numbers<[1], [1], [0], [0], [0, 0, 1, 0], [], []>} : vector<8x4xbf16>, vector<8x4xbf16>, vector<8x8xf32> -> vector<8x8xf32>
    "tpu.trace_stop"() : () -> ()
    %cst_452 = arith.constant 5.000000e-01 : f32
    %858 = vector.broadcast %cst_452 : f32 to vector<8x8xf32>
    %859 = arith.mulf %857, %858 : vector<8x8xf32>
    %cst_453 = arith.constant dense<0xFF800000> : vector<8xf32>
    %860 = vector.multi_reduction <maximumf>, %859, %cst_453 [1] : vector<8x8xf32> to vector<8xf32>
    %861 = vector.shape_cast %860 : vector<8xf32> to vector<8x1xf32>
    %862 = vector.broadcast %861 : vector<8x1xf32> to vector<8x8xf32>
    %863 = arith.subf %859, %862 : vector<8x8xf32>
    %864 = math.exp %863 : vector<8x8xf32>
    %cst_454 = arith.constant dense<0.000000e+00> : vector<8xf32>
    %865 = vector.multi_reduction <add>, %864, %cst_454 [1] : vector<8x8xf32> to vector<8xf32>
    %866 = vector.shape_cast %865 : vector<8xf32> to vector<8x1xf32>
    %867 = tpu.reciprocal %866 {approx = true} : vector<8x1xf32> -> vector<8x1xf32>
    %868 = vector.broadcast %867 : vector<8x1xf32> to vector<8x8xf32>
    %869 = arith.mulf %864, %868 : vector<8x8xf32>
    %870 = arith.truncf %869 : vector<8x8xf32> to vector<8x8xbf16>
    %871 = vector.extract_strided_slice %852 {offsets = [0, 0], sizes = [8, 4], strides = [1, 1]} : vector<16x4xf32> to vector<8x4xf32>
    %872 = arith.truncf %871 : vector<8x4xf32> to vector<8x4xbf16>
    %cst_455 = arith.constant dense<0.000000e+00> : vector<8x4xf32>
    %873 = tpu.matmul %870, %872, %cst_455 {dimension_numbers = #tpu.dot_dimension_numbers<[1], [0], [0], [1], [0, 0, 1, 1], [], []>} : vector<8x8xbf16>, vector<8x4xbf16>, vector<8x4xf32> -> vector<8x4xf32>
    %874 = vector.extract_strided_slice %836 {offsets = [8, 0], sizes = [8, 4], strides = [1, 1]} : vector<16x4xf32> to vector<8x4xf32>
    %875 = vector.extract_strided_slice %844 {offsets = [8, 0], sizes = [8, 4], strides = [1, 1]} : vector<16x4xf32> to vector<8x4xf32>
    %876 = arith.truncf %874 : vector<8x4xf32> to vector<8x4xbf16>
    %877 = arith.truncf %875 : vector<8x4xf32> to vector<8x4xbf16>
    "tpu.trace_start"() <{level = 10 : i32, message = "qd,kd->qk"}> : () -> ()
    %cst_456 = arith.constant dense<0.000000e+00> : vector<8x8xf32>
    %878 = tpu.matmul %876, %877, %cst_456 {dimension_numbers = #tpu.dot_dimension_numbers<[1], [1], [0], [0], [0, 0, 1, 0], [], []>} : vector<8x4xbf16>, vector<8x4xbf16>, vector<8x8xf32> -> vector<8x8xf32>
    "tpu.trace_stop"() : () -> ()
    %cst_457 = arith.constant 5.000000e-01 : f32
    %879 = vector.broadcast %cst_457 : f32 to vector<8x8xf32>
    %880 = arith.mulf %878, %879 : vector<8x8xf32>
    %cst_458 = arith.constant dense<0xFF800000> : vector<8xf32>
    %881 = vector.multi_reduction <maximumf>, %880, %cst_458 [1] : vector<8x8xf32> to vector<8xf32>
    %882 = vector.shape_cast %881 : vector<8xf32> to vector<8x1xf32>
    %883 = vector.broadcast %882 : vector<8x1xf32> to vector<8x8xf32>
    %884 = arith.subf %880, %883 : vector<8x8xf32>
    %885 = math.exp %884 : vector<8x8xf32>
    %cst_459 = arith.constant dense<0.000000e+00> : vector<8xf32>
    %886 = vector.multi_reduction <add>, %885, %cst_459 [1] : vector<8x8xf32> to vector<8xf32>
    %887 = vector.shape_cast %886 : vector<8xf32> to vector<8x1xf32>
    %888 = tpu.reciprocal %887 {approx = true} : vector<8x1xf32> -> vector<8x1xf32>
    %889 = vector.broadcast %888 : vector<8x1xf32> to vector<8x8xf32>
    %890 = arith.mulf %885, %889 : vector<8x8xf32>
    %891 = arith.truncf %890 : vector<8x8xf32> to vector<8x8xbf16>
    %892 = vector.extract_strided_slice %852 {offsets = [8, 0], sizes = [8, 4], strides = [1, 1]} : vector<16x4xf32> to vector<8x4xf32>
    %893 = arith.truncf %892 : vector<8x4xf32> to vector<8x4xbf16>
    %cst_460 = arith.constant dense<0.000000e+00> : vector<8x4xf32>
    %894 = tpu.matmul %891, %893, %cst_460 {dimension_numbers = #tpu.dot_dimension_numbers<[1], [0], [0], [1], [0, 0, 1, 1], [], []>} : vector<8x8xbf16>, vector<8x4xbf16>, vector<8x4xf32> -> vector<8x4xf32>
    %895 = tpu.concatenate %873, %894 in 0 : vector<8x4xf32>, vector<8x4xf32> -> vector<16x4xf32>
    %c1_461 = arith.constant 1 : index
    %c3_462 = arith.constant 3 : index
    %c0_463 = arith.constant 0 : index
    %c0_464 = arith.constant 0 : index
    %896 = vector.load %arg27[%c1_461, %c3_462, %c0_463, %c0_464] : memref<3x4x4x16xbf16, #tpu.memory_space<vmem>>, vector<1x1x4x16xbf16>
    %897 = vector.shape_cast %896 : vector<1x1x4x16xbf16> to vector<4x16xbf16>
    %898 = arith.truncf %895 : vector<16x4xf32> to vector<16x4xbf16>
    %cst_465 = arith.constant dense<0.000000e+00> : vector<16x16xf32>
    %899 = tpu.matmul %898, %897, %cst_465 {dimension_numbers = #tpu.dot_dimension_numbers<[1], [0], [0], [1], [0, 0, 1, 1], [], []>} : vector<16x4xbf16>, vector<4x16xbf16>, vector<16x16xf32> -> vector<16x16xf32>
    %900 = arith.addf %828, %899 : vector<16x16xf32>
    %901 = arith.addf %607, %900 : vector<16x16xf32>
    %c1_466 = arith.constant 1 : index
    %c0_467 = arith.constant 0 : index
    %c0_468 = arith.constant 0 : index
    %902 = vector.load %arg29[%c1_466, %c0_467, %c0_468] : memref<3x1x16xf32, #tpu.memory_space<vmem>>, vector<1x1x16xf32>
    %903 = vector.shape_cast %902 : vector<1x1x16xf32> to vector<1x16xf32>
    %c1_469 = arith.constant 1 : index
    %c0_470 = arith.constant 0 : index
    %c0_471 = arith.constant 0 : index
    %904 = vector.load %arg30[%c1_469, %c0_470, %c0_471] : memref<3x1x16xf32, #tpu.memory_space<vmem>>, vector<1x1x16xf32>
    %905 = vector.shape_cast %904 : vector<1x1x16xf32> to vector<1x16xf32>
    %cst_472 = arith.constant dense<0.000000e+00> : vector<16xf32>
    %906 = vector.multi_reduction <add>, %901, %cst_472 [1] : vector<16x16xf32> to vector<16xf32>
    %907 = vector.shape_cast %906 : vector<16xf32> to vector<16x1xf32>
    %cst_473 = arith.constant 1.600000e+01 : f32
    %908 = vector.broadcast %cst_473 : f32 to vector<16x1xf32>
    %909 = arith.divf %907, %908 : vector<16x1xf32>
    %910 = vector.broadcast %909 : vector<16x1xf32> to vector<16x16xf32>
    %911 = arith.subf %901, %910 : vector<16x16xf32>
    %912 = arith.mulf %911, %911 : vector<16x16xf32>
    %cst_474 = arith.constant dense<0.000000e+00> : vector<16xf32>
    %913 = vector.multi_reduction <add>, %912, %cst_474 [1] : vector<16x16xf32> to vector<16xf32>
    %914 = vector.shape_cast %913 : vector<16xf32> to vector<16x1xf32>
    %cst_475 = arith.constant 1.600000e+01 : f32
    %915 = vector.broadcast %cst_475 : f32 to vector<16x1xf32>
    %916 = arith.divf %914, %915 : vector<16x1xf32>
    %917 = vector.broadcast %909 : vector<16x1xf32> to vector<16x16xf32>
    %918 = arith.subf %901, %917 : vector<16x16xf32>
    %cst_476 = arith.constant 9.99999974E-6 : f32
    %919 = vector.broadcast %cst_476 : f32 to vector<16x1xf32>
    %920 = arith.addf %916, %919 : vector<16x1xf32>
    %921 = math.rsqrt %920 : vector<16x1xf32>
    %922 = vector.broadcast %921 : vector<16x1xf32> to vector<16x16xf32>
    %923 = arith.mulf %918, %922 : vector<16x16xf32>
    %924 = vector.broadcast %903 : vector<1x16xf32> to vector<16x16xf32>
    %925 = arith.mulf %923, %924 : vector<16x16xf32>
    %926 = vector.broadcast %905 : vector<1x16xf32> to vector<16x16xf32>
    %927 = arith.addf %925, %926 : vector<16x16xf32>
    %c1_477 = arith.constant 1 : index
    %c0_478 = arith.constant 0 : index
    %c0_479 = arith.constant 0 : index
    %928 = vector.load %arg31[%c1_477, %c0_478, %c0_479] : memref<3x16x64xbf16, #tpu.memory_space<vmem>>, vector<1x16x64xbf16>
    %929 = vector.shape_cast %928 : vector<1x16x64xbf16> to vector<16x64xbf16>
    %930 = arith.truncf %927 : vector<16x16xf32> to vector<16x16xbf16>
    %cst_480 = arith.constant dense<0.000000e+00> : vector<16x64xf32>
    %931 = tpu.matmul %930, %929, %cst_480 {dimension_numbers = #tpu.dot_dimension_numbers<[1], [0], [0], [1], [0, 0, 1, 1], [], []>} : vector<16x16xbf16>, vector<16x64xbf16>, vector<16x64xf32> -> vector<16x64xf32>
    %c1_481 = arith.constant 1 : index
    %c0_482 = arith.constant 0 : index
    %c0_483 = arith.constant 0 : index
    %932 = vector.load %arg32[%c1_481, %c0_482, %c0_483] : memref<3x1x64xf32, #tpu.memory_space<vmem>>, vector<1x1x64xf32>
    %933 = vector.shape_cast %932 : vector<1x1x64xf32> to vector<1x64xf32>
    %934 = vector.broadcast %933 : vector<1x64xf32> to vector<16x64xf32>
    %935 = arith.addf %931, %934 : vector<16x64xf32>
    %cst_484 = arith.constant 0.000000e+00 : f32
    %936 = vector.broadcast %cst_484 : f32 to vector<16x64xf32>
    %937 = arith.maximumf %935, %936 : vector<16x64xf32>
    %c1_485 = arith.constant 1 : index
    %c0_486 = arith.constant 0 : index
    %c0_487 = arith.constant 0 : index
    %938 = vector.load %arg33[%c1_485, %c0_486, %c0_487] : memref<3x64x16xbf16, #tpu.memory_space<vmem>>, vector<1x64x16xbf16>
    %939 = vector.shape_cast %938 : vector<1x64x16xbf16> to vector<64x16xbf16>
    %940 = arith.truncf %937 : vector<16x64xf32> to vector<16x64xbf16>
    %cst_488 = arith.constant dense<0.000000e+00> : vector<16x16xf32>
    %941 = tpu.matmul %940, %939, %cst_488 {dimension_numbers = #tpu.dot_dimension_numbers<[1], [0], [0], [1], [0, 0, 1, 1], [], []>} : vector<16x64xbf16>, vector<64x16xbf16>, vector<16x16xf32> -> vector<16x16xf32>
    %c1_489 = arith.constant 1 : index
    %c0_490 = arith.constant 0 : index
    %c0_491 = arith.constant 0 : index
    %942 = vector.load %arg34[%c1_489, %c0_490, %c0_491] : memref<3x1x16xf32, #tpu.memory_space<vmem>>, vector<1x1x16xf32>
    %943 = vector.shape_cast %942 : vector<1x1x16xf32> to vector<1x16xf32>
    %944 = vector.broadcast %943 : vector<1x16xf32> to vector<16x16xf32>
    %945 = arith.addf %941, %944 : vector<16x16xf32>
    %946 = arith.addf %927, %945 : vector<16x16xf32>
    %c1_492 = arith.constant 1 : index
    %c0_493 = arith.constant 0 : index
    %c0_494 = arith.constant 0 : index
    %947 = vector.load %arg35[%c1_492, %c0_493, %c0_494] : memref<3x1x16xf32, #tpu.memory_space<vmem>>, vector<1x1x16xf32>
    %948 = vector.shape_cast %947 : vector<1x1x16xf32> to vector<1x16xf32>
    %c1_495 = arith.constant 1 : index
    %c0_496 = arith.constant 0 : index
    %c0_497 = arith.constant 0 : index
    %949 = vector.load %arg36[%c1_495, %c0_496, %c0_497] : memref<3x1x16xf32, #tpu.memory_space<vmem>>, vector<1x1x16xf32>
    %950 = vector.shape_cast %949 : vector<1x1x16xf32> to vector<1x16xf32>
    %cst_498 = arith.constant dense<0.000000e+00> : vector<16xf32>
    %951 = vector.multi_reduction <add>, %946, %cst_498 [1] : vector<16x16xf32> to vector<16xf32>
    %952 = vector.shape_cast %951 : vector<16xf32> to vector<16x1xf32>
    %cst_499 = arith.constant 1.600000e+01 : f32
    %953 = vector.broadcast %cst_499 : f32 to vector<16x1xf32>
    %954 = arith.divf %952, %953 : vector<16x1xf32>
    %955 = vector.broadcast %954 : vector<16x1xf32> to vector<16x16xf32>
    %956 = arith.subf %946, %955 : vector<16x16xf32>
    %957 = arith.mulf %956, %956 : vector<16x16xf32>
    %cst_500 = arith.constant dense<0.000000e+00> : vector<16xf32>
    %958 = vector.multi_reduction <add>, %957, %cst_500 [1] : vector<16x16xf32> to vector<16xf32>
    %959 = vector.shape_cast %958 : vector<16xf32> to vector<16x1xf32>
    %cst_501 = arith.constant 1.600000e+01 : f32
    %960 = vector.broadcast %cst_501 : f32 to vector<16x1xf32>
    %961 = arith.divf %959, %960 : vector<16x1xf32>
    %962 = vector.broadcast %954 : vector<16x1xf32> to vector<16x16xf32>
    %963 = arith.subf %946, %962 : vector<16x16xf32>
    %cst_502 = arith.constant 9.99999974E-6 : f32
    %964 = vector.broadcast %cst_502 : f32 to vector<16x1xf32>
    %965 = arith.addf %961, %964 : vector<16x1xf32>
    %966 = math.rsqrt %965 : vector<16x1xf32>
    %967 = vector.broadcast %966 : vector<16x1xf32> to vector<16x16xf32>
    %968 = arith.mulf %963, %967 : vector<16x16xf32>
    %969 = vector.broadcast %948 : vector<1x16xf32> to vector<16x16xf32>
    %970 = arith.mulf %968, %969 : vector<16x16xf32>
    %971 = vector.broadcast %950 : vector<1x16xf32> to vector<16x16xf32>
    %972 = arith.addf %970, %971 : vector<16x16xf32>
    %cst_503 = arith.constant 0.000000e+00 : f32
    %973 = vector.broadcast %cst_503 : f32 to vector<16x16xf32>
    %c2_504 = arith.constant 2 : index
    %c0_505 = arith.constant 0 : index
    %c0_506 = arith.constant 0 : index
    %974 = vector.load %arg28[%c2_504, %c0_505, %c0_506] : memref<3x1x16xf32, #tpu.memory_space<vmem>>, vector<1x1x16xf32>
    %975 = vector.shape_cast %974 : vector<1x1x16xf32> to vector<1x16xf32>
    %976 = vector.broadcast %975 : vector<1x16xf32> to vector<16x16xf32>
    %977 = arith.addf %973, %976 : vector<16x16xf32>
    %c2_507 = arith.constant 2 : index
    %c0_508 = arith.constant 0 : index
    %c0_509 = arith.constant 0 : index
    %c0_510 = arith.constant 0 : index
    %978 = vector.load %arg21[%c2_507, %c0_508, %c0_509, %c0_510] : memref<3x4x16x4xbf16, #tpu.memory_space<vmem>>, vector<1x1x16x4xbf16>
    %979 = vector.shape_cast %978 : vector<1x1x16x4xbf16> to vector<16x4xbf16>
    %980 = arith.truncf %972 : vector<16x16xf32> to vector<16x16xbf16>
    %cst_511 = arith.constant dense<0.000000e+00> : vector<16x4xf32>
    %981 = tpu.matmul %980, %979, %cst_511 {dimension_numbers = #tpu.dot_dimension_numbers<[1], [0], [0], [1], [0, 0, 1, 1], [], []>} : vector<16x16xbf16>, vector<16x4xbf16>, vector<16x4xf32> -> vector<16x4xf32>
    %c2_512 = arith.constant 2 : index
    %c0_513 = arith.constant 0 : index
    %c0_514 = arith.constant 0 : index
    %c0_515 = arith.constant 0 : index
    %982 = vector.load %arg24[%c2_512, %c0_513, %c0_514, %c0_515] : memref<3x4x1x4xf32, #tpu.memory_space<vmem>>, vector<1x1x1x4xf32>
    %983 = vector.shape_cast %982 : vector<1x1x1x4xf32> to vector<1x4xf32>
    %984 = vector.broadcast %983 : vector<1x4xf32> to vector<16x4xf32>
    %985 = arith.addf %981, %984 : vector<16x4xf32>
    %c2_516 = arith.constant 2 : index
    %c0_517 = arith.constant 0 : index
    %c0_518 = arith.constant 0 : index
    %c0_519 = arith.constant 0 : index
    %986 = vector.load %arg22[%c2_516, %c0_517, %c0_518, %c0_519] : memref<3x4x16x4xbf16, #tpu.memory_space<vmem>>, vector<1x1x16x4xbf16>
    %987 = vector.shape_cast %986 : vector<1x1x16x4xbf16> to vector<16x4xbf16>
    %988 = arith.truncf %972 : vector<16x16xf32> to vector<16x16xbf16>
    %cst_520 = arith.constant dense<0.000000e+00> : vector<16x4xf32>
    %989 = tpu.matmul %988, %987, %cst_520 {dimension_numbers = #tpu.dot_dimension_numbers<[1], [0], [0], [1], [0, 0, 1, 1], [], []>} : vector<16x16xbf16>, vector<16x4xbf16>, vector<16x4xf32> -> vector<16x4xf32>
    %c2_521 = arith.constant 2 : index
    %c0_522 = arith.constant 0 : index
    %c0_523 = arith.constant 0 : index
    %c0_524 = arith.constant 0 : index
    %990 = vector.load %arg25[%c2_521, %c0_522, %c0_523, %c0_524] : memref<3x4x1x4xf32, #tpu.memory_space<vmem>>, vector<1x1x1x4xf32>
    %991 = vector.shape_cast %990 : vector<1x1x1x4xf32> to vector<1x4xf32>
    %992 = vector.broadcast %991 : vector<1x4xf32> to vector<16x4xf32>
    %993 = arith.addf %989, %992 : vector<16x4xf32>
    %c2_525 = arith.constant 2 : index
    %c0_526 = arith.constant 0 : index
    %c0_527 = arith.constant 0 : index
    %c0_528 = arith.constant 0 : index
    %994 = vector.load %arg23[%c2_525, %c0_526, %c0_527, %c0_528] : memref<3x4x16x4xbf16, #tpu.memory_space<vmem>>, vector<1x1x16x4xbf16>
    %995 = vector.shape_cast %994 : vector<1x1x16x4xbf16> to vector<16x4xbf16>
    %996 = arith.truncf %972 : vector<16x16xf32> to vector<16x16xbf16>
    %cst_529 = arith.constant dense<0.000000e+00> : vector<16x4xf32>
    %997 = tpu.matmul %996, %995, %cst_529 {dimension_numbers = #tpu.dot_dimension_numbers<[1], [0], [0], [1], [0, 0, 1, 1], [], []>} : vector<16x16xbf16>, vector<16x4xbf16>, vector<16x4xf32> -> vector<16x4xf32>
    %c2_530 = arith.constant 2 : index
    %c0_531 = arith.constant 0 : index
    %c0_532 = arith.constant 0 : index
    %c0_533 = arith.constant 0 : index
    %998 = vector.load %arg26[%c2_530, %c0_531, %c0_532, %c0_533] : memref<3x4x1x4xf32, #tpu.memory_space<vmem>>, vector<1x1x1x4xf32>
    %999 = vector.shape_cast %998 : vector<1x1x1x4xf32> to vector<1x4xf32>
    %1000 = vector.broadcast %999 : vector<1x4xf32> to vector<16x4xf32>
    %1001 = arith.addf %997, %1000 : vector<16x4xf32>
    %1002 = vector.extract_strided_slice %985 {offsets = [0, 0], sizes = [8, 4], strides = [1, 1]} : vector<16x4xf32> to vector<8x4xf32>
    %1003 = vector.extract_strided_slice %993 {offsets = [0, 0], sizes = [8, 4], strides = [1, 1]} : vector<16x4xf32> to vector<8x4xf32>
    %1004 = arith.truncf %1002 : vector<8x4xf32> to vector<8x4xbf16>
    %1005 = arith.truncf %1003 : vector<8x4xf32> to vector<8x4xbf16>
    "tpu.trace_start"() <{level = 10 : i32, message = "qd,kd->qk"}> : () -> ()
    %cst_534 = arith.constant dense<0.000000e+00> : vector<8x8xf32>
    %1006 = tpu.matmul %1004, %1005, %cst_534 {dimension_numbers = #tpu.dot_dimension_numbers<[1], [1], [0], [0], [0, 0, 1, 0], [], []>} : vector<8x4xbf16>, vector<8x4xbf16>, vector<8x8xf32> -> vector<8x8xf32>
    "tpu.trace_stop"() : () -> ()
    %cst_535 = arith.constant 5.000000e-01 : f32
    %1007 = vector.broadcast %cst_535 : f32 to vector<8x8xf32>
    %1008 = arith.mulf %1006, %1007 : vector<8x8xf32>
    %cst_536 = arith.constant dense<0xFF800000> : vector<8xf32>
    %1009 = vector.multi_reduction <maximumf>, %1008, %cst_536 [1] : vector<8x8xf32> to vector<8xf32>
    %1010 = vector.shape_cast %1009 : vector<8xf32> to vector<8x1xf32>
    %1011 = vector.broadcast %1010 : vector<8x1xf32> to vector<8x8xf32>
    %1012 = arith.subf %1008, %1011 : vector<8x8xf32>
    %1013 = math.exp %1012 : vector<8x8xf32>
    %cst_537 = arith.constant dense<0.000000e+00> : vector<8xf32>
    %1014 = vector.multi_reduction <add>, %1013, %cst_537 [1] : vector<8x8xf32> to vector<8xf32>
    %1015 = vector.shape_cast %1014 : vector<8xf32> to vector<8x1xf32>
    %1016 = tpu.reciprocal %1015 {approx = true} : vector<8x1xf32> -> vector<8x1xf32>
    %1017 = vector.broadcast %1016 : vector<8x1xf32> to vector<8x8xf32>
    %1018 = arith.mulf %1013, %1017 : vector<8x8xf32>
    %1019 = arith.truncf %1018 : vector<8x8xf32> to vector<8x8xbf16>
    %1020 = vector.extract_strided_slice %1001 {offsets = [0, 0], sizes = [8, 4], strides = [1, 1]} : vector<16x4xf32> to vector<8x4xf32>
    %1021 = arith.truncf %1020 : vector<8x4xf32> to vector<8x4xbf16>
    %cst_538 = arith.constant dense<0.000000e+00> : vector<8x4xf32>
    %1022 = tpu.matmul %1019, %1021, %cst_538 {dimension_numbers = #tpu.dot_dimension_numbers<[1], [0], [0], [1], [0, 0, 1, 1], [], []>} : vector<8x8xbf16>, vector<8x4xbf16>, vector<8x4xf32> -> vector<8x4xf32>
    %1023 = vector.extract_strided_slice %985 {offsets = [8, 0], sizes = [8, 4], strides = [1, 1]} : vector<16x4xf32> to vector<8x4xf32>
    %1024 = vector.extract_strided_slice %993 {offsets = [8, 0], sizes = [8, 4], strides = [1, 1]} : vector<16x4xf32> to vector<8x4xf32>
    %1025 = arith.truncf %1023 : vector<8x4xf32> to vector<8x4xbf16>
    %1026 = arith.truncf %1024 : vector<8x4xf32> to vector<8x4xbf16>
    "tpu.trace_start"() <{level = 10 : i32, message = "qd,kd->qk"}> : () -> ()
    %cst_539 = arith.constant dense<0.000000e+00> : vector<8x8xf32>
    %1027 = tpu.matmul %1025, %1026, %cst_539 {dimension_numbers = #tpu.dot_dimension_numbers<[1], [1], [0], [0], [0, 0, 1, 0], [], []>} : vector<8x4xbf16>, vector<8x4xbf16>, vector<8x8xf32> -> vector<8x8xf32>
    "tpu.trace_stop"() : () -> ()
    %cst_540 = arith.constant 5.000000e-01 : f32
    %1028 = vector.broadcast %cst_540 : f32 to vector<8x8xf32>
    %1029 = arith.mulf %1027, %1028 : vector<8x8xf32>
    %cst_541 = arith.constant dense<0xFF800000> : vector<8xf32>
    %1030 = vector.multi_reduction <maximumf>, %1029, %cst_541 [1] : vector<8x8xf32> to vector<8xf32>
    %1031 = vector.shape_cast %1030 : vector<8xf32> to vector<8x1xf32>
    %1032 = vector.broadcast %1031 : vector<8x1xf32> to vector<8x8xf32>
    %1033 = arith.subf %1029, %1032 : vector<8x8xf32>
    %1034 = math.exp %1033 : vector<8x8xf32>
    %cst_542 = arith.constant dense<0.000000e+00> : vector<8xf32>
    %1035 = vector.multi_reduction <add>, %1034, %cst_542 [1] : vector<8x8xf32> to vector<8xf32>
    %1036 = vector.shape_cast %1035 : vector<8xf32> to vector<8x1xf32>
    %1037 = tpu.reciprocal %1036 {approx = true} : vector<8x1xf32> -> vector<8x1xf32>
    %1038 = vector.broadcast %1037 : vector<8x1xf32> to vector<8x8xf32>
    %1039 = arith.mulf %1034, %1038 : vector<8x8xf32>
    %1040 = arith.truncf %1039 : vector<8x8xf32> to vector<8x8xbf16>
    %1041 = vector.extract_strided_slice %1001 {offsets = [8, 0], sizes = [8, 4], strides = [1, 1]} : vector<16x4xf32> to vector<8x4xf32>
    %1042 = arith.truncf %1041 : vector<8x4xf32> to vector<8x4xbf16>
    %cst_543 = arith.constant dense<0.000000e+00> : vector<8x4xf32>
    %1043 = tpu.matmul %1040, %1042, %cst_543 {dimension_numbers = #tpu.dot_dimension_numbers<[1], [0], [0], [1], [0, 0, 1, 1], [], []>} : vector<8x8xbf16>, vector<8x4xbf16>, vector<8x4xf32> -> vector<8x4xf32>
    %1044 = tpu.concatenate %1022, %1043 in 0 : vector<8x4xf32>, vector<8x4xf32> -> vector<16x4xf32>
    %c2_544 = arith.constant 2 : index
    %c0_545 = arith.constant 0 : index
    %c0_546 = arith.constant 0 : index
    %c0_547 = arith.constant 0 : index
    %1045 = vector.load %arg27[%c2_544, %c0_545, %c0_546, %c0_547] : memref<3x4x4x16xbf16, #tpu.memory_space<vmem>>, vector<1x1x4x16xbf16>
    %1046 = vector.shape_cast %1045 : vector<1x1x4x16xbf16> to vector<4x16xbf16>
    %1047 = arith.truncf %1044 : vector<16x4xf32> to vector<16x4xbf16>
    %cst_548 = arith.constant dense<0.000000e+00> : vector<16x16xf32>
    %1048 = tpu.matmul %1047, %1046, %cst_548 {dimension_numbers = #tpu.dot_dimension_numbers<[1], [0], [0], [1], [0, 0, 1, 1], [], []>} : vector<16x4xbf16>, vector<4x16xbf16>, vector<16x16xf32> -> vector<16x16xf32>
    %1049 = arith.addf %977, %1048 : vector<16x16xf32>
    %c2_549 = arith.constant 2 : index
    %c1_550 = arith.constant 1 : index
    %c0_551 = arith.constant 0 : index
    %c0_552 = arith.constant 0 : index
    %1050 = vector.load %arg21[%c2_549, %c1_550, %c0_551, %c0_552] : memref<3x4x16x4xbf16, #tpu.memory_space<vmem>>, vector<1x1x16x4xbf16>
    %1051 = vector.shape_cast %1050 : vector<1x1x16x4xbf16> to vector<16x4xbf16>
    %1052 = arith.truncf %972 : vector<16x16xf32> to vector<16x16xbf16>
    %cst_553 = arith.constant dense<0.000000e+00> : vector<16x4xf32>
    %1053 = tpu.matmul %1052, %1051, %cst_553 {dimension_numbers = #tpu.dot_dimension_numbers<[1], [0], [0], [1], [0, 0, 1, 1], [], []>} : vector<16x16xbf16>, vector<16x4xbf16>, vector<16x4xf32> -> vector<16x4xf32>
    %c2_554 = arith.constant 2 : index
    %c1_555 = arith.constant 1 : index
    %c0_556 = arith.constant 0 : index
    %c0_557 = arith.constant 0 : index
    %1054 = vector.load %arg24[%c2_554, %c1_555, %c0_556, %c0_557] : memref<3x4x1x4xf32, #tpu.memory_space<vmem>>, vector<1x1x1x4xf32>
    %1055 = vector.shape_cast %1054 : vector<1x1x1x4xf32> to vector<1x4xf32>
    %1056 = vector.broadcast %1055 : vector<1x4xf32> to vector<16x4xf32>
    %1057 = arith.addf %1053, %1056 : vector<16x4xf32>
    %c2_558 = arith.constant 2 : index
    %c1_559 = arith.constant 1 : index
    %c0_560 = arith.constant 0 : index
    %c0_561 = arith.constant 0 : index
    %1058 = vector.load %arg22[%c2_558, %c1_559, %c0_560, %c0_561] : memref<3x4x16x4xbf16, #tpu.memory_space<vmem>>, vector<1x1x16x4xbf16>
    %1059 = vector.shape_cast %1058 : vector<1x1x16x4xbf16> to vector<16x4xbf16>
    %1060 = arith.truncf %972 : vector<16x16xf32> to vector<16x16xbf16>
    %cst_562 = arith.constant dense<0.000000e+00> : vector<16x4xf32>
    %1061 = tpu.matmul %1060, %1059, %cst_562 {dimension_numbers = #tpu.dot_dimension_numbers<[1], [0], [0], [1], [0, 0, 1, 1], [], []>} : vector<16x16xbf16>, vector<16x4xbf16>, vector<16x4xf32> -> vector<16x4xf32>
    %c2_563 = arith.constant 2 : index
    %c1_564 = arith.constant 1 : index
    %c0_565 = arith.constant 0 : index
    %c0_566 = arith.constant 0 : index
    %1062 = vector.load %arg25[%c2_563, %c1_564, %c0_565, %c0_566] : memref<3x4x1x4xf32, #tpu.memory_space<vmem>>, vector<1x1x1x4xf32>
    %1063 = vector.shape_cast %1062 : vector<1x1x1x4xf32> to vector<1x4xf32>
    %1064 = vector.broadcast %1063 : vector<1x4xf32> to vector<16x4xf32>
    %1065 = arith.addf %1061, %1064 : vector<16x4xf32>
    %c2_567 = arith.constant 2 : index
    %c1_568 = arith.constant 1 : index
    %c0_569 = arith.constant 0 : index
    %c0_570 = arith.constant 0 : index
    %1066 = vector.load %arg23[%c2_567, %c1_568, %c0_569, %c0_570] : memref<3x4x16x4xbf16, #tpu.memory_space<vmem>>, vector<1x1x16x4xbf16>
    %1067 = vector.shape_cast %1066 : vector<1x1x16x4xbf16> to vector<16x4xbf16>
    %1068 = arith.truncf %972 : vector<16x16xf32> to vector<16x16xbf16>
    %cst_571 = arith.constant dense<0.000000e+00> : vector<16x4xf32>
    %1069 = tpu.matmul %1068, %1067, %cst_571 {dimension_numbers = #tpu.dot_dimension_numbers<[1], [0], [0], [1], [0, 0, 1, 1], [], []>} : vector<16x16xbf16>, vector<16x4xbf16>, vector<16x4xf32> -> vector<16x4xf32>
    %c2_572 = arith.constant 2 : index
    %c1_573 = arith.constant 1 : index
    %c0_574 = arith.constant 0 : index
    %c0_575 = arith.constant 0 : index
    %1070 = vector.load %arg26[%c2_572, %c1_573, %c0_574, %c0_575] : memref<3x4x1x4xf32, #tpu.memory_space<vmem>>, vector<1x1x1x4xf32>
    %1071 = vector.shape_cast %1070 : vector<1x1x1x4xf32> to vector<1x4xf32>
    %1072 = vector.broadcast %1071 : vector<1x4xf32> to vector<16x4xf32>
    %1073 = arith.addf %1069, %1072 : vector<16x4xf32>
    %1074 = vector.extract_strided_slice %1057 {offsets = [0, 0], sizes = [8, 4], strides = [1, 1]} : vector<16x4xf32> to vector<8x4xf32>
    %1075 = vector.extract_strided_slice %1065 {offsets = [0, 0], sizes = [8, 4], strides = [1, 1]} : vector<16x4xf32> to vector<8x4xf32>
    %1076 = arith.truncf %1074 : vector<8x4xf32> to vector<8x4xbf16>
    %1077 = arith.truncf %1075 : vector<8x4xf32> to vector<8x4xbf16>
    "tpu.trace_start"() <{level = 10 : i32, message = "qd,kd->qk"}> : () -> ()
    %cst_576 = arith.constant dense<0.000000e+00> : vector<8x8xf32>
    %1078 = tpu.matmul %1076, %1077, %cst_576 {dimension_numbers = #tpu.dot_dimension_numbers<[1], [1], [0], [0], [0, 0, 1, 0], [], []>} : vector<8x4xbf16>, vector<8x4xbf16>, vector<8x8xf32> -> vector<8x8xf32>
    "tpu.trace_stop"() : () -> ()
    %cst_577 = arith.constant 5.000000e-01 : f32
    %1079 = vector.broadcast %cst_577 : f32 to vector<8x8xf32>
    %1080 = arith.mulf %1078, %1079 : vector<8x8xf32>
    %cst_578 = arith.constant dense<0xFF800000> : vector<8xf32>
    %1081 = vector.multi_reduction <maximumf>, %1080, %cst_578 [1] : vector<8x8xf32> to vector<8xf32>
    %1082 = vector.shape_cast %1081 : vector<8xf32> to vector<8x1xf32>
    %1083 = vector.broadcast %1082 : vector<8x1xf32> to vector<8x8xf32>
    %1084 = arith.subf %1080, %1083 : vector<8x8xf32>
    %1085 = math.exp %1084 : vector<8x8xf32>
    %cst_579 = arith.constant dense<0.000000e+00> : vector<8xf32>
    %1086 = vector.multi_reduction <add>, %1085, %cst_579 [1] : vector<8x8xf32> to vector<8xf32>
    %1087 = vector.shape_cast %1086 : vector<8xf32> to vector<8x1xf32>
    %1088 = tpu.reciprocal %1087 {approx = true} : vector<8x1xf32> -> vector<8x1xf32>
    %1089 = vector.broadcast %1088 : vector<8x1xf32> to vector<8x8xf32>
    %1090 = arith.mulf %1085, %1089 : vector<8x8xf32>
    %1091 = arith.truncf %1090 : vector<8x8xf32> to vector<8x8xbf16>
    %1092 = vector.extract_strided_slice %1073 {offsets = [0, 0], sizes = [8, 4], strides = [1, 1]} : vector<16x4xf32> to vector<8x4xf32>
    %1093 = arith.truncf %1092 : vector<8x4xf32> to vector<8x4xbf16>
    %cst_580 = arith.constant dense<0.000000e+00> : vector<8x4xf32>
    %1094 = tpu.matmul %1091, %1093, %cst_580 {dimension_numbers = #tpu.dot_dimension_numbers<[1], [0], [0], [1], [0, 0, 1, 1], [], []>} : vector<8x8xbf16>, vector<8x4xbf16>, vector<8x4xf32> -> vector<8x4xf32>
    %1095 = vector.extract_strided_slice %1057 {offsets = [8, 0], sizes = [8, 4], strides = [1, 1]} : vector<16x4xf32> to vector<8x4xf32>
    %1096 = vector.extract_strided_slice %1065 {offsets = [8, 0], sizes = [8, 4], strides = [1, 1]} : vector<16x4xf32> to vector<8x4xf32>
    %1097 = arith.truncf %1095 : vector<8x4xf32> to vector<8x4xbf16>
    %1098 = arith.truncf %1096 : vector<8x4xf32> to vector<8x4xbf16>
    "tpu.trace_start"() <{level = 10 : i32, message = "qd,kd->qk"}> : () -> ()
    %cst_581 = arith.constant dense<0.000000e+00> : vector<8x8xf32>
    %1099 = tpu.matmul %1097, %1098, %cst_581 {dimension_numbers = #tpu.dot_dimension_numbers<[1], [1], [0], [0], [0, 0, 1, 0], [], []>} : vector<8x4xbf16>, vector<8x4xbf16>, vector<8x8xf32> -> vector<8x8xf32>
    "tpu.trace_stop"() : () -> ()
    %cst_582 = arith.constant 5.000000e-01 : f32
    %1100 = vector.broadcast %cst_582 : f32 to vector<8x8xf32>
    %1101 = arith.mulf %1099, %1100 : vector<8x8xf32>
    %cst_583 = arith.constant dense<0xFF800000> : vector<8xf32>
    %1102 = vector.multi_reduction <maximumf>, %1101, %cst_583 [1] : vector<8x8xf32> to vector<8xf32>
    %1103 = vector.shape_cast %1102 : vector<8xf32> to vector<8x1xf32>
    %1104 = vector.broadcast %1103 : vector<8x1xf32> to vector<8x8xf32>
    %1105 = arith.subf %1101, %1104 : vector<8x8xf32>
    %1106 = math.exp %1105 : vector<8x8xf32>
    %cst_584 = arith.constant dense<0.000000e+00> : vector<8xf32>
    %1107 = vector.multi_reduction <add>, %1106, %cst_584 [1] : vector<8x8xf32> to vector<8xf32>
    %1108 = vector.shape_cast %1107 : vector<8xf32> to vector<8x1xf32>
    %1109 = tpu.reciprocal %1108 {approx = true} : vector<8x1xf32> -> vector<8x1xf32>
    %1110 = vector.broadcast %1109 : vector<8x1xf32> to vector<8x8xf32>
    %1111 = arith.mulf %1106, %1110 : vector<8x8xf32>
    %1112 = arith.truncf %1111 : vector<8x8xf32> to vector<8x8xbf16>
    %1113 = vector.extract_strided_slice %1073 {offsets = [8, 0], sizes = [8, 4], strides = [1, 1]} : vector<16x4xf32> to vector<8x4xf32>
    %1114 = arith.truncf %1113 : vector<8x4xf32> to vector<8x4xbf16>
    %cst_585 = arith.constant dense<0.000000e+00> : vector<8x4xf32>
    %1115 = tpu.matmul %1112, %1114, %cst_585 {dimension_numbers = #tpu.dot_dimension_numbers<[1], [0], [0], [1], [0, 0, 1, 1], [], []>} : vector<8x8xbf16>, vector<8x4xbf16>, vector<8x4xf32> -> vector<8x4xf32>
    %1116 = tpu.concatenate %1094, %1115 in 0 : vector<8x4xf32>, vector<8x4xf32> -> vector<16x4xf32>
    %c2_586 = arith.constant 2 : index
    %c1_587 = arith.constant 1 : index
    %c0_588 = arith.constant 0 : index
    %c0_589 = arith.constant 0 : index
    %1117 = vector.load %arg27[%c2_586, %c1_587, %c0_588, %c0_589] : memref<3x4x4x16xbf16, #tpu.memory_space<vmem>>, vector<1x1x4x16xbf16>
    %1118 = vector.shape_cast %1117 : vector<1x1x4x16xbf16> to vector<4x16xbf16>
    %1119 = arith.truncf %1116 : vector<16x4xf32> to vector<16x4xbf16>
    %cst_590 = arith.constant dense<0.000000e+00> : vector<16x16xf32>
    %1120 = tpu.matmul %1119, %1118, %cst_590 {dimension_numbers = #tpu.dot_dimension_numbers<[1], [0], [0], [1], [0, 0, 1, 1], [], []>} : vector<16x4xbf16>, vector<4x16xbf16>, vector<16x16xf32> -> vector<16x16xf32>
    %1121 = arith.addf %1049, %1120 : vector<16x16xf32>
    %c2_591 = arith.constant 2 : index
    %c2_592 = arith.constant 2 : index
    %c0_593 = arith.constant 0 : index
    %c0_594 = arith.constant 0 : index
    %1122 = vector.load %arg21[%c2_591, %c2_592, %c0_593, %c0_594] : memref<3x4x16x4xbf16, #tpu.memory_space<vmem>>, vector<1x1x16x4xbf16>
    %1123 = vector.shape_cast %1122 : vector<1x1x16x4xbf16> to vector<16x4xbf16>
    %1124 = arith.truncf %972 : vector<16x16xf32> to vector<16x16xbf16>
    %cst_595 = arith.constant dense<0.000000e+00> : vector<16x4xf32>
    %1125 = tpu.matmul %1124, %1123, %cst_595 {dimension_numbers = #tpu.dot_dimension_numbers<[1], [0], [0], [1], [0, 0, 1, 1], [], []>} : vector<16x16xbf16>, vector<16x4xbf16>, vector<16x4xf32> -> vector<16x4xf32>
    %c2_596 = arith.constant 2 : index
    %c2_597 = arith.constant 2 : index
    %c0_598 = arith.constant 0 : index
    %c0_599 = arith.constant 0 : index
    %1126 = vector.load %arg24[%c2_596, %c2_597, %c0_598, %c0_599] : memref<3x4x1x4xf32, #tpu.memory_space<vmem>>, vector<1x1x1x4xf32>
    %1127 = vector.shape_cast %1126 : vector<1x1x1x4xf32> to vector<1x4xf32>
    %1128 = vector.broadcast %1127 : vector<1x4xf32> to vector<16x4xf32>
    %1129 = arith.addf %1125, %1128 : vector<16x4xf32>
    %c2_600 = arith.constant 2 : index
    %c2_601 = arith.constant 2 : index
    %c0_602 = arith.constant 0 : index
    %c0_603 = arith.constant 0 : index
    %1130 = vector.load %arg22[%c2_600, %c2_601, %c0_602, %c0_603] : memref<3x4x16x4xbf16, #tpu.memory_space<vmem>>, vector<1x1x16x4xbf16>
    %1131 = vector.shape_cast %1130 : vector<1x1x16x4xbf16> to vector<16x4xbf16>
    %1132 = arith.truncf %972 : vector<16x16xf32> to vector<16x16xbf16>
    %cst_604 = arith.constant dense<0.000000e+00> : vector<16x4xf32>
    %1133 = tpu.matmul %1132, %1131, %cst_604 {dimension_numbers = #tpu.dot_dimension_numbers<[1], [0], [0], [1], [0, 0, 1, 1], [], []>} : vector<16x16xbf16>, vector<16x4xbf16>, vector<16x4xf32> -> vector<16x4xf32>
    %c2_605 = arith.constant 2 : index
    %c2_606 = arith.constant 2 : index
    %c0_607 = arith.constant 0 : index
    %c0_608 = arith.constant 0 : index
    %1134 = vector.load %arg25[%c2_605, %c2_606, %c0_607, %c0_608] : memref<3x4x1x4xf32, #tpu.memory_space<vmem>>, vector<1x1x1x4xf32>
    %1135 = vector.shape_cast %1134 : vector<1x1x1x4xf32> to vector<1x4xf32>
    %1136 = vector.broadcast %1135 : vector<1x4xf32> to vector<16x4xf32>
    %1137 = arith.addf %1133, %1136 : vector<16x4xf32>
    %c2_609 = arith.constant 2 : index
    %c2_610 = arith.constant 2 : index
    %c0_611 = arith.constant 0 : index
    %c0_612 = arith.constant 0 : index
    %1138 = vector.load %arg23[%c2_609, %c2_610, %c0_611, %c0_612] : memref<3x4x16x4xbf16, #tpu.memory_space<vmem>>, vector<1x1x16x4xbf16>
    %1139 = vector.shape_cast %1138 : vector<1x1x16x4xbf16> to vector<16x4xbf16>
    %1140 = arith.truncf %972 : vector<16x16xf32> to vector<16x16xbf16>
    %cst_613 = arith.constant dense<0.000000e+00> : vector<16x4xf32>
    %1141 = tpu.matmul %1140, %1139, %cst_613 {dimension_numbers = #tpu.dot_dimension_numbers<[1], [0], [0], [1], [0, 0, 1, 1], [], []>} : vector<16x16xbf16>, vector<16x4xbf16>, vector<16x4xf32> -> vector<16x4xf32>
    %c2_614 = arith.constant 2 : index
    %c2_615 = arith.constant 2 : index
    %c0_616 = arith.constant 0 : index
    %c0_617 = arith.constant 0 : index
    %1142 = vector.load %arg26[%c2_614, %c2_615, %c0_616, %c0_617] : memref<3x4x1x4xf32, #tpu.memory_space<vmem>>, vector<1x1x1x4xf32>
    %1143 = vector.shape_cast %1142 : vector<1x1x1x4xf32> to vector<1x4xf32>
    %1144 = vector.broadcast %1143 : vector<1x4xf32> to vector<16x4xf32>
    %1145 = arith.addf %1141, %1144 : vector<16x4xf32>
    %1146 = vector.extract_strided_slice %1129 {offsets = [0, 0], sizes = [8, 4], strides = [1, 1]} : vector<16x4xf32> to vector<8x4xf32>
    %1147 = vector.extract_strided_slice %1137 {offsets = [0, 0], sizes = [8, 4], strides = [1, 1]} : vector<16x4xf32> to vector<8x4xf32>
    %1148 = arith.truncf %1146 : vector<8x4xf32> to vector<8x4xbf16>
    %1149 = arith.truncf %1147 : vector<8x4xf32> to vector<8x4xbf16>
    "tpu.trace_start"() <{level = 10 : i32, message = "qd,kd->qk"}> : () -> ()
    %cst_618 = arith.constant dense<0.000000e+00> : vector<8x8xf32>
    %1150 = tpu.matmul %1148, %1149, %cst_618 {dimension_numbers = #tpu.dot_dimension_numbers<[1], [1], [0], [0], [0, 0, 1, 0], [], []>} : vector<8x4xbf16>, vector<8x4xbf16>, vector<8x8xf32> -> vector<8x8xf32>
    "tpu.trace_stop"() : () -> ()
    %cst_619 = arith.constant 5.000000e-01 : f32
    %1151 = vector.broadcast %cst_619 : f32 to vector<8x8xf32>
    %1152 = arith.mulf %1150, %1151 : vector<8x8xf32>
    %cst_620 = arith.constant dense<0xFF800000> : vector<8xf32>
    %1153 = vector.multi_reduction <maximumf>, %1152, %cst_620 [1] : vector<8x8xf32> to vector<8xf32>
    %1154 = vector.shape_cast %1153 : vector<8xf32> to vector<8x1xf32>
    %1155 = vector.broadcast %1154 : vector<8x1xf32> to vector<8x8xf32>
    %1156 = arith.subf %1152, %1155 : vector<8x8xf32>
    %1157 = math.exp %1156 : vector<8x8xf32>
    %cst_621 = arith.constant dense<0.000000e+00> : vector<8xf32>
    %1158 = vector.multi_reduction <add>, %1157, %cst_621 [1] : vector<8x8xf32> to vector<8xf32>
    %1159 = vector.shape_cast %1158 : vector<8xf32> to vector<8x1xf32>
    %1160 = tpu.reciprocal %1159 {approx = true} : vector<8x1xf32> -> vector<8x1xf32>
    %1161 = vector.broadcast %1160 : vector<8x1xf32> to vector<8x8xf32>
    %1162 = arith.mulf %1157, %1161 : vector<8x8xf32>
    %1163 = arith.truncf %1162 : vector<8x8xf32> to vector<8x8xbf16>
    %1164 = vector.extract_strided_slice %1145 {offsets = [0, 0], sizes = [8, 4], strides = [1, 1]} : vector<16x4xf32> to vector<8x4xf32>
    %1165 = arith.truncf %1164 : vector<8x4xf32> to vector<8x4xbf16>
    %cst_622 = arith.constant dense<0.000000e+00> : vector<8x4xf32>
    %1166 = tpu.matmul %1163, %1165, %cst_622 {dimension_numbers = #tpu.dot_dimension_numbers<[1], [0], [0], [1], [0, 0, 1, 1], [], []>} : vector<8x8xbf16>, vector<8x4xbf16>, vector<8x4xf32> -> vector<8x4xf32>
    %1167 = vector.extract_strided_slice %1129 {offsets = [8, 0], sizes = [8, 4], strides = [1, 1]} : vector<16x4xf32> to vector<8x4xf32>
    %1168 = vector.extract_strided_slice %1137 {offsets = [8, 0], sizes = [8, 4], strides = [1, 1]} : vector<16x4xf32> to vector<8x4xf32>
    %1169 = arith.truncf %1167 : vector<8x4xf32> to vector<8x4xbf16>
    %1170 = arith.truncf %1168 : vector<8x4xf32> to vector<8x4xbf16>
    "tpu.trace_start"() <{level = 10 : i32, message = "qd,kd->qk"}> : () -> ()
    %cst_623 = arith.constant dense<0.000000e+00> : vector<8x8xf32>
    %1171 = tpu.matmul %1169, %1170, %cst_623 {dimension_numbers = #tpu.dot_dimension_numbers<[1], [1], [0], [0], [0, 0, 1, 0], [], []>} : vector<8x4xbf16>, vector<8x4xbf16>, vector<8x8xf32> -> vector<8x8xf32>
    "tpu.trace_stop"() : () -> ()
    %cst_624 = arith.constant 5.000000e-01 : f32
    %1172 = vector.broadcast %cst_624 : f32 to vector<8x8xf32>
    %1173 = arith.mulf %1171, %1172 : vector<8x8xf32>
    %cst_625 = arith.constant dense<0xFF800000> : vector<8xf32>
    %1174 = vector.multi_reduction <maximumf>, %1173, %cst_625 [1] : vector<8x8xf32> to vector<8xf32>
    %1175 = vector.shape_cast %1174 : vector<8xf32> to vector<8x1xf32>
    %1176 = vector.broadcast %1175 : vector<8x1xf32> to vector<8x8xf32>
    %1177 = arith.subf %1173, %1176 : vector<8x8xf32>
    %1178 = math.exp %1177 : vector<8x8xf32>
    %cst_626 = arith.constant dense<0.000000e+00> : vector<8xf32>
    %1179 = vector.multi_reduction <add>, %1178, %cst_626 [1] : vector<8x8xf32> to vector<8xf32>
    %1180 = vector.shape_cast %1179 : vector<8xf32> to vector<8x1xf32>
    %1181 = tpu.reciprocal %1180 {approx = true} : vector<8x1xf32> -> vector<8x1xf32>
    %1182 = vector.broadcast %1181 : vector<8x1xf32> to vector<8x8xf32>
    %1183 = arith.mulf %1178, %1182 : vector<8x8xf32>
    %1184 = arith.truncf %1183 : vector<8x8xf32> to vector<8x8xbf16>
    %1185 = vector.extract_strided_slice %1145 {offsets = [8, 0], sizes = [8, 4], strides = [1, 1]} : vector<16x4xf32> to vector<8x4xf32>
    %1186 = arith.truncf %1185 : vector<8x4xf32> to vector<8x4xbf16>
    %cst_627 = arith.constant dense<0.000000e+00> : vector<8x4xf32>
    %1187 = tpu.matmul %1184, %1186, %cst_627 {dimension_numbers = #tpu.dot_dimension_numbers<[1], [0], [0], [1], [0, 0, 1, 1], [], []>} : vector<8x8xbf16>, vector<8x4xbf16>, vector<8x4xf32> -> vector<8x4xf32>
    %1188 = tpu.concatenate %1166, %1187 in 0 : vector<8x4xf32>, vector<8x4xf32> -> vector<16x4xf32>
    %c2_628 = arith.constant 2 : index
    %c2_629 = arith.constant 2 : index
    %c0_630 = arith.constant 0 : index
    %c0_631 = arith.constant 0 : index
    %1189 = vector.load %arg27[%c2_628, %c2_629, %c0_630, %c0_631] : memref<3x4x4x16xbf16, #tpu.memory_space<vmem>>, vector<1x1x4x16xbf16>
    %1190 = vector.shape_cast %1189 : vector<1x1x4x16xbf16> to vector<4x16xbf16>
    %1191 = arith.truncf %1188 : vector<16x4xf32> to vector<16x4xbf16>
    %cst_632 = arith.constant dense<0.000000e+00> : vector<16x16xf32>
    %1192 = tpu.matmul %1191, %1190, %cst_632 {dimension_numbers = #tpu.dot_dimension_numbers<[1], [0], [0], [1], [0, 0, 1, 1], [], []>} : vector<16x4xbf16>, vector<4x16xbf16>, vector<16x16xf32> -> vector<16x16xf32>
    %1193 = arith.addf %1121, %1192 : vector<16x16xf32>
    %c2_633 = arith.constant 2 : index
    %c3_634 = arith.constant 3 : index
    %c0_635 = arith.constant 0 : index
    %c0_636 = arith.constant 0 : index
    %1194 = vector.load %arg21[%c2_633, %c3_634, %c0_635, %c0_636] : memref<3x4x16x4xbf16, #tpu.memory_space<vmem>>, vector<1x1x16x4xbf16>
    %1195 = vector.shape_cast %1194 : vector<1x1x16x4xbf16> to vector<16x4xbf16>
    %1196 = arith.truncf %972 : vector<16x16xf32> to vector<16x16xbf16>
    %cst_637 = arith.constant dense<0.000000e+00> : vector<16x4xf32>
    %1197 = tpu.matmul %1196, %1195, %cst_637 {dimension_numbers = #tpu.dot_dimension_numbers<[1], [0], [0], [1], [0, 0, 1, 1], [], []>} : vector<16x16xbf16>, vector<16x4xbf16>, vector<16x4xf32> -> vector<16x4xf32>
    %c2_638 = arith.constant 2 : index
    %c3_639 = arith.constant 3 : index
    %c0_640 = arith.constant 0 : index
    %c0_641 = arith.constant 0 : index
    %1198 = vector.load %arg24[%c2_638, %c3_639, %c0_640, %c0_641] : memref<3x4x1x4xf32, #tpu.memory_space<vmem>>, vector<1x1x1x4xf32>
    %1199 = vector.shape_cast %1198 : vector<1x1x1x4xf32> to vector<1x4xf32>
    %1200 = vector.broadcast %1199 : vector<1x4xf32> to vector<16x4xf32>
    %1201 = arith.addf %1197, %1200 : vector<16x4xf32>
    %c2_642 = arith.constant 2 : index
    %c3_643 = arith.constant 3 : index
    %c0_644 = arith.constant 0 : index
    %c0_645 = arith.constant 0 : index
    %1202 = vector.load %arg22[%c2_642, %c3_643, %c0_644, %c0_645] : memref<3x4x16x4xbf16, #tpu.memory_space<vmem>>, vector<1x1x16x4xbf16>
    %1203 = vector.shape_cast %1202 : vector<1x1x16x4xbf16> to vector<16x4xbf16>
    %1204 = arith.truncf %972 : vector<16x16xf32> to vector<16x16xbf16>
    %cst_646 = arith.constant dense<0.000000e+00> : vector<16x4xf32>
    %1205 = tpu.matmul %1204, %1203, %cst_646 {dimension_numbers = #tpu.dot_dimension_numbers<[1], [0], [0], [1], [0, 0, 1, 1], [], []>} : vector<16x16xbf16>, vector<16x4xbf16>, vector<16x4xf32> -> vector<16x4xf32>
    %c2_647 = arith.constant 2 : index
    %c3_648 = arith.constant 3 : index
    %c0_649 = arith.constant 0 : index
    %c0_650 = arith.constant 0 : index
    %1206 = vector.load %arg25[%c2_647, %c3_648, %c0_649, %c0_650] : memref<3x4x1x4xf32, #tpu.memory_space<vmem>>, vector<1x1x1x4xf32>
    %1207 = vector.shape_cast %1206 : vector<1x1x1x4xf32> to vector<1x4xf32>
    %1208 = vector.broadcast %1207 : vector<1x4xf32> to vector<16x4xf32>
    %1209 = arith.addf %1205, %1208 : vector<16x4xf32>
    %c2_651 = arith.constant 2 : index
    %c3_652 = arith.constant 3 : index
    %c0_653 = arith.constant 0 : index
    %c0_654 = arith.constant 0 : index
    %1210 = vector.load %arg23[%c2_651, %c3_652, %c0_653, %c0_654] : memref<3x4x16x4xbf16, #tpu.memory_space<vmem>>, vector<1x1x16x4xbf16>
    %1211 = vector.shape_cast %1210 : vector<1x1x16x4xbf16> to vector<16x4xbf16>
    %1212 = arith.truncf %972 : vector<16x16xf32> to vector<16x16xbf16>
    %cst_655 = arith.constant dense<0.000000e+00> : vector<16x4xf32>
    %1213 = tpu.matmul %1212, %1211, %cst_655 {dimension_numbers = #tpu.dot_dimension_numbers<[1], [0], [0], [1], [0, 0, 1, 1], [], []>} : vector<16x16xbf16>, vector<16x4xbf16>, vector<16x4xf32> -> vector<16x4xf32>
    %c2_656 = arith.constant 2 : index
    %c3_657 = arith.constant 3 : index
    %c0_658 = arith.constant 0 : index
    %c0_659 = arith.constant 0 : index
    %1214 = vector.load %arg26[%c2_656, %c3_657, %c0_658, %c0_659] : memref<3x4x1x4xf32, #tpu.memory_space<vmem>>, vector<1x1x1x4xf32>
    %1215 = vector.shape_cast %1214 : vector<1x1x1x4xf32> to vector<1x4xf32>
    %1216 = vector.broadcast %1215 : vector<1x4xf32> to vector<16x4xf32>
    %1217 = arith.addf %1213, %1216 : vector<16x4xf32>
    %1218 = vector.extract_strided_slice %1201 {offsets = [0, 0], sizes = [8, 4], strides = [1, 1]} : vector<16x4xf32> to vector<8x4xf32>
    %1219 = vector.extract_strided_slice %1209 {offsets = [0, 0], sizes = [8, 4], strides = [1, 1]} : vector<16x4xf32> to vector<8x4xf32>
    %1220 = arith.truncf %1218 : vector<8x4xf32> to vector<8x4xbf16>
    %1221 = arith.truncf %1219 : vector<8x4xf32> to vector<8x4xbf16>
    "tpu.trace_start"() <{level = 10 : i32, message = "qd,kd->qk"}> : () -> ()
    %cst_660 = arith.constant dense<0.000000e+00> : vector<8x8xf32>
    %1222 = tpu.matmul %1220, %1221, %cst_660 {dimension_numbers = #tpu.dot_dimension_numbers<[1], [1], [0], [0], [0, 0, 1, 0], [], []>} : vector<8x4xbf16>, vector<8x4xbf16>, vector<8x8xf32> -> vector<8x8xf32>
    "tpu.trace_stop"() : () -> ()
    %cst_661 = arith.constant 5.000000e-01 : f32
    %1223 = vector.broadcast %cst_661 : f32 to vector<8x8xf32>
    %1224 = arith.mulf %1222, %1223 : vector<8x8xf32>
    %cst_662 = arith.constant dense<0xFF800000> : vector<8xf32>
    %1225 = vector.multi_reduction <maximumf>, %1224, %cst_662 [1] : vector<8x8xf32> to vector<8xf32>
    %1226 = vector.shape_cast %1225 : vector<8xf32> to vector<8x1xf32>
    %1227 = vector.broadcast %1226 : vector<8x1xf32> to vector<8x8xf32>
    %1228 = arith.subf %1224, %1227 : vector<8x8xf32>
    %1229 = math.exp %1228 : vector<8x8xf32>
    %cst_663 = arith.constant dense<0.000000e+00> : vector<8xf32>
    %1230 = vector.multi_reduction <add>, %1229, %cst_663 [1] : vector<8x8xf32> to vector<8xf32>
    %1231 = vector.shape_cast %1230 : vector<8xf32> to vector<8x1xf32>
    %1232 = tpu.reciprocal %1231 {approx = true} : vector<8x1xf32> -> vector<8x1xf32>
    %1233 = vector.broadcast %1232 : vector<8x1xf32> to vector<8x8xf32>
    %1234 = arith.mulf %1229, %1233 : vector<8x8xf32>
    %1235 = arith.truncf %1234 : vector<8x8xf32> to vector<8x8xbf16>
    %1236 = vector.extract_strided_slice %1217 {offsets = [0, 0], sizes = [8, 4], strides = [1, 1]} : vector<16x4xf32> to vector<8x4xf32>
    %1237 = arith.truncf %1236 : vector<8x4xf32> to vector<8x4xbf16>
    %cst_664 = arith.constant dense<0.000000e+00> : vector<8x4xf32>
    %1238 = tpu.matmul %1235, %1237, %cst_664 {dimension_numbers = #tpu.dot_dimension_numbers<[1], [0], [0], [1], [0, 0, 1, 1], [], []>} : vector<8x8xbf16>, vector<8x4xbf16>, vector<8x4xf32> -> vector<8x4xf32>
    %1239 = vector.extract_strided_slice %1201 {offsets = [8, 0], sizes = [8, 4], strides = [1, 1]} : vector<16x4xf32> to vector<8x4xf32>
    %1240 = vector.extract_strided_slice %1209 {offsets = [8, 0], sizes = [8, 4], strides = [1, 1]} : vector<16x4xf32> to vector<8x4xf32>
    %1241 = arith.truncf %1239 : vector<8x4xf32> to vector<8x4xbf16>
    %1242 = arith.truncf %1240 : vector<8x4xf32> to vector<8x4xbf16>
    "tpu.trace_start"() <{level = 10 : i32, message = "qd,kd->qk"}> : () -> ()
    %cst_665 = arith.constant dense<0.000000e+00> : vector<8x8xf32>
    %1243 = tpu.matmul %1241, %1242, %cst_665 {dimension_numbers = #tpu.dot_dimension_numbers<[1], [1], [0], [0], [0, 0, 1, 0], [], []>} : vector<8x4xbf16>, vector<8x4xbf16>, vector<8x8xf32> -> vector<8x8xf32>
    "tpu.trace_stop"() : () -> ()
    %cst_666 = arith.constant 5.000000e-01 : f32
    %1244 = vector.broadcast %cst_666 : f32 to vector<8x8xf32>
    %1245 = arith.mulf %1243, %1244 : vector<8x8xf32>
    %cst_667 = arith.constant dense<0xFF800000> : vector<8xf32>
    %1246 = vector.multi_reduction <maximumf>, %1245, %cst_667 [1] : vector<8x8xf32> to vector<8xf32>
    %1247 = vector.shape_cast %1246 : vector<8xf32> to vector<8x1xf32>
    %1248 = vector.broadcast %1247 : vector<8x1xf32> to vector<8x8xf32>
    %1249 = arith.subf %1245, %1248 : vector<8x8xf32>
    %1250 = math.exp %1249 : vector<8x8xf32>
    %cst_668 = arith.constant dense<0.000000e+00> : vector<8xf32>
    %1251 = vector.multi_reduction <add>, %1250, %cst_668 [1] : vector<8x8xf32> to vector<8xf32>
    %1252 = vector.shape_cast %1251 : vector<8xf32> to vector<8x1xf32>
    %1253 = tpu.reciprocal %1252 {approx = true} : vector<8x1xf32> -> vector<8x1xf32>
    %1254 = vector.broadcast %1253 : vector<8x1xf32> to vector<8x8xf32>
    %1255 = arith.mulf %1250, %1254 : vector<8x8xf32>
    %1256 = arith.truncf %1255 : vector<8x8xf32> to vector<8x8xbf16>
    %1257 = vector.extract_strided_slice %1217 {offsets = [8, 0], sizes = [8, 4], strides = [1, 1]} : vector<16x4xf32> to vector<8x4xf32>
    %1258 = arith.truncf %1257 : vector<8x4xf32> to vector<8x4xbf16>
    %cst_669 = arith.constant dense<0.000000e+00> : vector<8x4xf32>
    %1259 = tpu.matmul %1256, %1258, %cst_669 {dimension_numbers = #tpu.dot_dimension_numbers<[1], [0], [0], [1], [0, 0, 1, 1], [], []>} : vector<8x8xbf16>, vector<8x4xbf16>, vector<8x4xf32> -> vector<8x4xf32>
    %1260 = tpu.concatenate %1238, %1259 in 0 : vector<8x4xf32>, vector<8x4xf32> -> vector<16x4xf32>
    %c2_670 = arith.constant 2 : index
    %c3_671 = arith.constant 3 : index
    %c0_672 = arith.constant 0 : index
    %c0_673 = arith.constant 0 : index
    %1261 = vector.load %arg27[%c2_670, %c3_671, %c0_672, %c0_673] : memref<3x4x4x16xbf16, #tpu.memory_space<vmem>>, vector<1x1x4x16xbf16>
    %1262 = vector.shape_cast %1261 : vector<1x1x4x16xbf16> to vector<4x16xbf16>
    %1263 = arith.truncf %1260 : vector<16x4xf32> to vector<16x4xbf16>
    %cst_674 = arith.constant dense<0.000000e+00> : vector<16x16xf32>
    %1264 = tpu.matmul %1263, %1262, %cst_674 {dimension_numbers = #tpu.dot_dimension_numbers<[1], [0], [0], [1], [0, 0, 1, 1], [], []>} : vector<16x4xbf16>, vector<4x16xbf16>, vector<16x16xf32> -> vector<16x16xf32>
    %1265 = arith.addf %1193, %1264 : vector<16x16xf32>
    %1266 = arith.addf %972, %1265 : vector<16x16xf32>
    %c2_675 = arith.constant 2 : index
    %c0_676 = arith.constant 0 : index
    %c0_677 = arith.constant 0 : index
    %1267 = vector.load %arg29[%c2_675, %c0_676, %c0_677] : memref<3x1x16xf32, #tpu.memory_space<vmem>>, vector<1x1x16xf32>
    %1268 = vector.shape_cast %1267 : vector<1x1x16xf32> to vector<1x16xf32>
    %c2_678 = arith.constant 2 : index
    %c0_679 = arith.constant 0 : index
    %c0_680 = arith.constant 0 : index
    %1269 = vector.load %arg30[%c2_678, %c0_679, %c0_680] : memref<3x1x16xf32, #tpu.memory_space<vmem>>, vector<1x1x16xf32>
    %1270 = vector.shape_cast %1269 : vector<1x1x16xf32> to vector<1x16xf32>
    %cst_681 = arith.constant dense<0.000000e+00> : vector<16xf32>
    %1271 = vector.multi_reduction <add>, %1266, %cst_681 [1] : vector<16x16xf32> to vector<16xf32>
    %1272 = vector.shape_cast %1271 : vector<16xf32> to vector<16x1xf32>
    %cst_682 = arith.constant 1.600000e+01 : f32
    %1273 = vector.broadcast %cst_682 : f32 to vector<16x1xf32>
    %1274 = arith.divf %1272, %1273 : vector<16x1xf32>
    %1275 = vector.broadcast %1274 : vector<16x1xf32> to vector<16x16xf32>
    %1276 = arith.subf %1266, %1275 : vector<16x16xf32>
    %1277 = arith.mulf %1276, %1276 : vector<16x16xf32>
    %cst_683 = arith.constant dense<0.000000e+00> : vector<16xf32>
    %1278 = vector.multi_reduction <add>, %1277, %cst_683 [1] : vector<16x16xf32> to vector<16xf32>
    %1279 = vector.shape_cast %1278 : vector<16xf32> to vector<16x1xf32>
    %cst_684 = arith.constant 1.600000e+01 : f32
    %1280 = vector.broadcast %cst_684 : f32 to vector<16x1xf32>
    %1281 = arith.divf %1279, %1280 : vector<16x1xf32>
    %1282 = vector.broadcast %1274 : vector<16x1xf32> to vector<16x16xf32>
    %1283 = arith.subf %1266, %1282 : vector<16x16xf32>
    %cst_685 = arith.constant 9.99999974E-6 : f32
    %1284 = vector.broadcast %cst_685 : f32 to vector<16x1xf32>
    %1285 = arith.addf %1281, %1284 : vector<16x1xf32>
    %1286 = math.rsqrt %1285 : vector<16x1xf32>
    %1287 = vector.broadcast %1286 : vector<16x1xf32> to vector<16x16xf32>
    %1288 = arith.mulf %1283, %1287 : vector<16x16xf32>
    %1289 = vector.broadcast %1268 : vector<1x16xf32> to vector<16x16xf32>
    %1290 = arith.mulf %1288, %1289 : vector<16x16xf32>
    %1291 = vector.broadcast %1270 : vector<1x16xf32> to vector<16x16xf32>
    %1292 = arith.addf %1290, %1291 : vector<16x16xf32>
    %c2_686 = arith.constant 2 : index
    %c0_687 = arith.constant 0 : index
    %c0_688 = arith.constant 0 : index
    %1293 = vector.load %arg31[%c2_686, %c0_687, %c0_688] : memref<3x16x64xbf16, #tpu.memory_space<vmem>>, vector<1x16x64xbf16>
    %1294 = vector.shape_cast %1293 : vector<1x16x64xbf16> to vector<16x64xbf16>
    %1295 = arith.truncf %1292 : vector<16x16xf32> to vector<16x16xbf16>
    %cst_689 = arith.constant dense<0.000000e+00> : vector<16x64xf32>
    %1296 = tpu.matmul %1295, %1294, %cst_689 {dimension_numbers = #tpu.dot_dimension_numbers<[1], [0], [0], [1], [0, 0, 1, 1], [], []>} : vector<16x16xbf16>, vector<16x64xbf16>, vector<16x64xf32> -> vector<16x64xf32>
    %c2_690 = arith.constant 2 : index
    %c0_691 = arith.constant 0 : index
    %c0_692 = arith.constant 0 : index
    %1297 = vector.load %arg32[%c2_690, %c0_691, %c0_692] : memref<3x1x64xf32, #tpu.memory_space<vmem>>, vector<1x1x64xf32>
    %1298 = vector.shape_cast %1297 : vector<1x1x64xf32> to vector<1x64xf32>
    %1299 = vector.broadcast %1298 : vector<1x64xf32> to vector<16x64xf32>
    %1300 = arith.addf %1296, %1299 : vector<16x64xf32>
    %cst_693 = arith.constant 0.000000e+00 : f32
    %1301 = vector.broadcast %cst_693 : f32 to vector<16x64xf32>
    %1302 = arith.maximumf %1300, %1301 : vector<16x64xf32>
    %c2_694 = arith.constant 2 : index
    %c0_695 = arith.constant 0 : index
    %c0_696 = arith.constant 0 : index
    %1303 = vector.load %arg33[%c2_694, %c0_695, %c0_696] : memref<3x64x16xbf16, #tpu.memory_space<vmem>>, vector<1x64x16xbf16>
    %1304 = vector.shape_cast %1303 : vector<1x64x16xbf16> to vector<64x16xbf16>
    %1305 = arith.truncf %1302 : vector<16x64xf32> to vector<16x64xbf16>
    %cst_697 = arith.constant dense<0.000000e+00> : vector<16x16xf32>
    %1306 = tpu.matmul %1305, %1304, %cst_697 {dimension_numbers = #tpu.dot_dimension_numbers<[1], [0], [0], [1], [0, 0, 1, 1], [], []>} : vector<16x64xbf16>, vector<64x16xbf16>, vector<16x16xf32> -> vector<16x16xf32>
    %c2_698 = arith.constant 2 : index
    %c0_699 = arith.constant 0 : index
    %c0_700 = arith.constant 0 : index
    %1307 = vector.load %arg34[%c2_698, %c0_699, %c0_700] : memref<3x1x16xf32, #tpu.memory_space<vmem>>, vector<1x1x16xf32>
    %1308 = vector.shape_cast %1307 : vector<1x1x16xf32> to vector<1x16xf32>
    %1309 = vector.broadcast %1308 : vector<1x16xf32> to vector<16x16xf32>
    %1310 = arith.addf %1306, %1309 : vector<16x16xf32>
    %1311 = arith.addf %1292, %1310 : vector<16x16xf32>
    %c2_701 = arith.constant 2 : index
    %c0_702 = arith.constant 0 : index
    %c0_703 = arith.constant 0 : index
    %1312 = vector.load %arg35[%c2_701, %c0_702, %c0_703] : memref<3x1x16xf32, #tpu.memory_space<vmem>>, vector<1x1x16xf32>
    %1313 = vector.shape_cast %1312 : vector<1x1x16xf32> to vector<1x16xf32>
    %c2_704 = arith.constant 2 : index
    %c0_705 = arith.constant 0 : index
    %c0_706 = arith.constant 0 : index
    %1314 = vector.load %arg36[%c2_704, %c0_705, %c0_706] : memref<3x1x16xf32, #tpu.memory_space<vmem>>, vector<1x1x16xf32>
    %1315 = vector.shape_cast %1314 : vector<1x1x16xf32> to vector<1x16xf32>
    %cst_707 = arith.constant dense<0.000000e+00> : vector<16xf32>
    %1316 = vector.multi_reduction <add>, %1311, %cst_707 [1] : vector<16x16xf32> to vector<16xf32>
    %1317 = vector.shape_cast %1316 : vector<16xf32> to vector<16x1xf32>
    %cst_708 = arith.constant 1.600000e+01 : f32
    %1318 = vector.broadcast %cst_708 : f32 to vector<16x1xf32>
    %1319 = arith.divf %1317, %1318 : vector<16x1xf32>
    %1320 = vector.broadcast %1319 : vector<16x1xf32> to vector<16x16xf32>
    %1321 = arith.subf %1311, %1320 : vector<16x16xf32>
    %1322 = arith.mulf %1321, %1321 : vector<16x16xf32>
    %cst_709 = arith.constant dense<0.000000e+00> : vector<16xf32>
    %1323 = vector.multi_reduction <add>, %1322, %cst_709 [1] : vector<16x16xf32> to vector<16xf32>
    %1324 = vector.shape_cast %1323 : vector<16xf32> to vector<16x1xf32>
    %cst_710 = arith.constant 1.600000e+01 : f32
    %1325 = vector.broadcast %cst_710 : f32 to vector<16x1xf32>
    %1326 = arith.divf %1324, %1325 : vector<16x1xf32>
    %1327 = vector.broadcast %1319 : vector<16x1xf32> to vector<16x16xf32>
    %1328 = arith.subf %1311, %1327 : vector<16x16xf32>
    %cst_711 = arith.constant 9.99999974E-6 : f32
    %1329 = vector.broadcast %cst_711 : f32 to vector<16x1xf32>
    %1330 = arith.addf %1326, %1329 : vector<16x1xf32>
    %1331 = math.rsqrt %1330 : vector<16x1xf32>
    %1332 = vector.broadcast %1331 : vector<16x1xf32> to vector<16x16xf32>
    %1333 = arith.mulf %1328, %1332 : vector<16x16xf32>
    %1334 = vector.broadcast %1313 : vector<1x16xf32> to vector<16x16xf32>
    %1335 = arith.mulf %1333, %1334 : vector<16x16xf32>
    %1336 = vector.broadcast %1315 : vector<1x16xf32> to vector<16x16xf32>
    %1337 = arith.addf %1335, %1336 : vector<16x16xf32>
    %c0_712 = arith.constant 0 : index
    %c0_713 = arith.constant 0 : index
    %1338 = vector.load %arg37[%c0_712, %c0_713] : memref<16x16xf32, #tpu.memory_space<vmem>>, vector<16x16xf32>
    %1339 = arith.mulf %1337, %1338 : vector<16x16xf32>
    %cst_714 = arith.constant dense<0.000000e+00> : vector<16xf32>
    %1340 = vector.multi_reduction <add>, %1339, %cst_714 [1] : vector<16x16xf32> to vector<16xf32>
    %1341 = vector.shape_cast %1340 : vector<16xf32> to vector<16x1xf32>
    %1342 = vector.extract_strided_slice %1341 {offsets = [0, 0], sizes = [8, 1], strides = [1, 1]} : vector<16x1xf32> to vector<8x1xf32>
    %cst_715 = arith.constant dense<0.000000e+00> : vector<1xf32>
    %1343 = vector.multi_reduction <add>, %1342, %cst_715 [0] : vector<8x1xf32> to vector<1xf32>
    %1344 = vector.shape_cast %1343 : vector<1xf32> to vector<1x1xf32>
    %1345 = vector.extract_strided_slice %1341 {offsets = [8, 0], sizes = [8, 1], strides = [1, 1]} : vector<16x1xf32> to vector<8x1xf32>
    %cst_716 = arith.constant dense<0.000000e+00> : vector<1xf32>
    %1346 = vector.multi_reduction <add>, %1345, %cst_716 [0] : vector<8x1xf32> to vector<1xf32>
    %1347 = vector.shape_cast %1346 : vector<1xf32> to vector<1x1xf32>
    %1348 = tpu.concatenate %1344, %1347 in 0 : vector<1x1xf32>, vector<1x1xf32> -> vector<2x1xf32>
    %c0_717 = arith.constant 0 : index
    %c0_718 = arith.constant 0 : index
    %1349 = vector.load %arg38[%c0_717, %c0_718] : memref<1x1xf32, #tpu.memory_space<vmem>>, vector<1x1xf32>
    %1350 = vector.broadcast %1349 : vector<1x1xf32> to vector<2x1xf32>
    %1351 = arith.addf %1348, %1350 : vector<2x1xf32>
    %c0_719 = arith.constant 0 : index
    %c0_720 = arith.constant 0 : index
    %1352 = vector.load %arg39[%c0_719, %c0_720] : memref<2x1xf32, #tpu.memory_space<vmem>>, vector<2x1xf32>
    tpu.vector_store %arg39[%c0_719, %c0_720], %1351 {strides = array<i32>} : memref<2x1xf32, #tpu.memory_space<vmem>>, vector<2x1xf32>,
    return
  }
}

</mosaic_0001>

<llo_original>
// kernel: local_global_forward.1
$region0: #{local_global_forward.1}
  #allocation0 [shape = 'u32[]', space=smem, size = 0x4, offset = 0x4, fixed_abs, tag = 'smem constant byte address 0x4 - core index']
  #allocation1 [shape = 'u32[72,128]{1,0:T(1,128)}', space=vmem, size = 0x9000, scoped, tag = 'internal scratch']
  #allocation2 [shape = 'f32[1,1]{1,0:T(1,128)S(1)}', space=vmem, size = 0x200, scoped, tag = 'scoped memory for local_global_forward.1']
  %s0 = inlined_call_operand.smem [shape: u32[40], index: -1, kind: input, shape index: {}]
  %s1 = sld [smem:[%s0]]
  %s2 = scalar_lea.smem %s0, 1
  %s3 = sld [smem:[%s2]]
  %s4 = scalar_lea.smem %s0, 2
  %s5 = sld [smem:[%s4]]
  %s6 = scalar_lea.smem %s0, 3
  %s7 = sld [smem:[%s6]]
  %s8 = scalar_lea.smem %s0, 4
  %s9 = sld [smem:[%s8]]
  %s10 = scalar_lea.smem %s0, 5
  %s11 = sld [smem:[%s10]]
  %s12 = scalar_lea.smem %s0, 6
  %s13 = sld [smem:[%s12]]
  %s14 = scalar_lea.smem %s0, 7
  %s15 = sld [smem:[%s14]]
  %s16 = scalar_lea.smem %s0, 8
  %s17 = sld [smem:[%s16]]
  %s18 = scalar_lea.smem %s0, 9
  %s19 = sld [smem:[%s18]]
  %s20 = scalar_lea.smem %s0, 10
  %s21 = sld [smem:[%s20]]
  %s22 = scalar_lea.smem %s0, 11
  %s23 = sld [smem:[%s22]]
  %s24 = scalar_lea.smem %s0, 12
  %s25 = sld [smem:[%s24]]
  %s26 = scalar_lea.smem %s0, 13
  %s27 = sld [smem:[%s26]]
  %s28 = scalar_lea.smem %s0, 14
  %s29 = sld [smem:[%s28]]
  %s30 = scalar_lea.smem %s0, 15
  %s31 = sld [smem:[%s30]]
  %s32 = scalar_lea.smem %s0, 16
  %s33 = sld [smem:[%s32]]
  %s34 = scalar_lea.smem %s0, 17
  %s35 = sld [smem:[%s34]]
  %s36 = scalar_lea.smem %s0, 18
  %s37 = sld [smem:[%s36]]
  %s38 = scalar_lea.smem %s0, 19
  %s39 = sld [smem:[%s38]]
  %s40 = scalar_lea.smem %s0, 20
  %s41 = sld [smem:[%s40]]
  %s42 = scalar_lea.smem %s0, 21
  %s43 = sld [smem:[%s42]]
  %s44 = scalar_lea.smem %s0, 22
  %s45 = sld [smem:[%s44]]
  %s46 = scalar_lea.smem %s0, 23
  %s47 = sld [smem:[%s46]]
  %s48 = scalar_lea.smem %s0, 24
  %s49 = sld [smem:[%s48]]
  %s50 = scalar_lea.smem %s0, 25
  %s51 = sld [smem:[%s50]]
  %s52 = scalar_lea.smem %s0, 26
  %s53 = sld [smem:[%s52]]
  %s54 = scalar_lea.smem %s0, 27
  %s55 = sld [smem:[%s54]]
  %s56 = scalar_lea.smem %s0, 28
  %s57 = sld [smem:[%s56]]
  %s58 = scalar_lea.smem %s0, 29
  %s59 = sld [smem:[%s58]]
  %s60 = scalar_lea.smem %s0, 30
  %s61 = sld [smem:[%s60]]
  %s62 = scalar_lea.smem %s0, 31
  %s63 = sld [smem:[%s62]]
  %s64 = scalar_lea.smem %s0, 32
  %s65 = sld [smem:[%s64]]
  %s66 = scalar_lea.smem %s0, 33
  %s67 = sld [smem:[%s66]]
  %s68 = scalar_lea.smem %s0, 34
  %s69 = sld [smem:[%s68]]
  %s70 = scalar_lea.smem %s0, 35
  %s71 = sld [smem:[%s70]]
  %s72 = scalar_lea.smem %s0, 36
  %s73 = sld [smem:[%s72]]
  %s74 = scalar_lea.smem %s0, 37
  %s75 = sld [smem:[%s74]]
  %s76 = scalar_lea.smem %s0, 38
  %s77 = sld [smem:[%s76]]
  %s78 = scalar_lea.smem %s0, 39
  %s79 = sld [smem:[%s78]]
  %s80 = sld [smem:[#allocation0]]
  $region166: #{local_global_forward.1} parent=0
    _
  %s82 = ssub.s32 1, %s80
  %s83 = scalar_select 0, %s82, %s80
  %v84 = vstv %s77
  %85 = vst [vmem:[#allocation2] sm:$0x1] %v84
  // Predicated region
  $region2: #{local_global_forward.1} parent=0 // pred_check
    _
  $region3: #{local_global_forward.1} parent=0 // pred_check_branch
    %87 = sbr.rel (0) target = $region5
  $region4: #{local_global_forward.1} parent=0 // pred_region
    _
  $region5: #{local_global_forward.1} parent=0 // pred_fallthru
    _
  // Predicated region
  $region6: #{local_global_forward.1} parent=0 // pred_check
    _
  $region7: #{local_global_forward.1} parent=0 // pred_check_branch
    %89 = sbr.rel (0) target = $region9
  $region8: #{local_global_forward.1} parent=0 // pred_region
    _
  $region9: #{local_global_forward.1} parent=0 // pred_fallthru
    _
  // Predicated region
  $region10: #{local_global_forward.1} parent=0 // pred_check
    _
  $region11: #{local_global_forward.1} parent=0 // pred_check_branch
    %91 = sbr.rel (0) target = $region13
  $region12: #{local_global_forward.1} parent=0 // pred_region
    _
  $region13: #{local_global_forward.1} parent=0 // pred_fallthru
    _
  // Predicated region
  $region14: #{local_global_forward.1} parent=0 // pred_check
    _
  $region15: #{local_global_forward.1} parent=0 // pred_check_branch
    %93 = sbr.rel (0) target = $region17
  $region16: #{local_global_forward.1} parent=0 // pred_region
    _
  $region17: #{local_global_forward.1} parent=0 // pred_fallthru
    _
  // Predicated region
  $region18: #{local_global_forward.1} parent=0 // pred_check
    _
  $region19: #{local_global_forward.1} parent=0 // pred_check_branch
    %95 = sbr.rel (0) target = $region21
  $region20: #{local_global_forward.1} parent=0 // pred_region
    _
  $region21: #{local_global_forward.1} parent=0 // pred_fallthru
    _
  // Predicated region
  $region22: #{local_global_forward.1} parent=0 // pred_check
    _
  $region23: #{local_global_forward.1} parent=0 // pred_check_branch
    %97 = sbr.rel (0) target = $region25
  $region24: #{local_global_forward.1} parent=0 // pred_region
    _
  $region25: #{local_global_forward.1} parent=0 // pred_fallthru
    _
  // Predicated region
  $region26: #{local_global_forward.1} parent=0 // pred_check
    _
  $region27: #{local_global_forward.1} parent=0 // pred_check_branch
    %99 = sbr.rel (0) target = $region29
  $region28: #{local_global_forward.1} parent=0 // pred_region
    _
  $region29: #{local_global_forward.1} parent=0 // pred_fallthru
    _
  // Predicated region
  $region30: #{local_global_forward.1} parent=0 // pred_check
    _
  $region31: #{local_global_forward.1} parent=0 // pred_check_branch
    %101 = sbr.rel (0) target = $region33
  $region32: #{local_global_forward.1} parent=0 // pred_region
    _
  $region33: #{local_global_forward.1} parent=0 // pred_fallthru
    _
  // Predicated region
  $region34: #{local_global_forward.1} parent=0 // pred_check
    _
  $region35: #{local_global_forward.1} parent=0 // pred_check_branch
    %103 = sbr.rel (0) target = $region37
  $region36: #{local_global_forward.1} parent=0 // pred_region
    _
  $region37: #{local_global_forward.1} parent=0 // pred_fallthru
    _
  // Predicated region
  $region38: #{local_global_forward.1} parent=0 // pred_check
    _
  $region39: #{local_global_forward.1} parent=0 // pred_check_branch
    %105 = sbr.rel (0) target = $region41
  $region40: #{local_global_forward.1} parent=0 // pred_region
    _
  $region41: #{local_global_forward.1} parent=0 // pred_fallthru
    _
  // Predicated region
  $region42: #{local_global_forward.1} parent=0 // pred_check
    _
  $region43: #{local_global_forward.1} parent=0 // pred_check_branch
    %107 = sbr.rel (0) target = $region45
  $region44: #{local_global_forward.1} parent=0 // pred_region
    _
  $region45: #{local_global_forward.1} parent=0 // pred_fallthru
    _
  // Predicated region
  $region46: #{local_global_forward.1} parent=0 // pred_check
    _
  $region47: #{local_global_forward.1} parent=0 // pred_check_branch
    %109 = sbr.rel (0) target = $region49
  $region48: #{local_global_forward.1} parent=0 // pred_region
    _
  $region49: #{local_global_forward.1} parent=0 // pred_fallthru
    _
  // Predicated region
  $region50: #{local_global_forward.1} parent=0 // pred_check
    _
  $region51: #{local_global_forward.1} parent=0 // pred_check_branch
    %111 = sbr.rel (0) target = $region53
  $region52: #{local_global_forward.1} parent=0 // pred_region
    _
  $region53: #{local_global_forward.1} parent=0 // pred_fallthru
    _
  // Predicated region
  $region54: #{local_global_forward.1} parent=0 // pred_check
    _
  $region55: #{local_global_forward.1} parent=0 // pred_check_branch
    %113 = sbr.rel (0) target = $region57
  $region56: #{local_global_forward.1} parent=0 // pred_region
    _
  $region57: #{local_global_forward.1} parent=0 // pred_fallthru
    _
  // Predicated region
  $region58: #{local_global_forward.1} parent=0 // pred_check
    _
  $region59: #{local_global_forward.1} parent=0 // pred_check_branch
    %115 = sbr.rel (0) target = $region61
  $region60: #{local_global_forward.1} parent=0 // pred_region
    _
  $region61: #{local_global_forward.1} parent=0 // pred_fallthru
    _
  // Predicated region
  $region62: #{local_global_forward.1} parent=0 // pred_check
    _
  $region63: #{local_global_forward.1} parent=0 // pred_check_branch
    %117 = sbr.rel (0) target = $region65
  $region64: #{local_global_forward.1} parent=0 // pred_region
    _
  $region65: #{local_global_forward.1} parent=0 // pred_fallthru
    _
  // Predicated region
  $region66: #{local_global_forward.1} parent=0 // pred_check
    _
  $region67: #{local_global_forward.1} parent=0 // pred_check_branch
    %119 = sbr.rel (0) target = $region69
  $region68: #{local_global_forward.1} parent=0 // pred_region
    _
  $region69: #{local_global_forward.1} parent=0 // pred_fallthru
    _
  // Predicated region
  $region70: #{local_global_forward.1} parent=0 // pred_check
    _
  $region71: #{local_global_forward.1} parent=0 // pred_check_branch
    %121 = sbr.rel (0) target = $region73
  $region72: #{local_global_forward.1} parent=0 // pred_region
    _
  $region73: #{local_global_forward.1} parent=0 // pred_fallthru
    _
  // Predicated region
  $region74: #{local_global_forward.1} parent=0 // pred_check
    _
  $region75: #{local_global_forward.1} parent=0 // pred_check_branch
    %123 = sbr.rel (0) target = $region77
  $region76: #{local_global_forward.1} parent=0 // pred_region
    _
  $region77: #{local_global_forward.1} parent=0 // pred_fallthru
    _
  // Predicated region
  $region78: #{local_global_forward.1} parent=0 // pred_check
    _
  $region79: #{local_global_forward.1} parent=0 // pred_check_branch
    %125 = sbr.rel (0) target = $region81
  $region80: #{local_global_forward.1} parent=0 // pred_region
    _
  $region81: #{local_global_forward.1} parent=0 // pred_fallthru
    _
  // Predicated region
  $region82: #{local_global_forward.1} parent=0 // pred_check
    _
  $region83: #{local_global_forward.1} parent=0 // pred_check_branch
    %127 = sbr.rel (0) target = $region85
  $region84: #{local_global_forward.1} parent=0 // pred_region
    _
  $region85: #{local_global_forward.1} parent=0 // pred_fallthru
    _
  // Predicated region
  $region86: #{local_global_forward.1} parent=0 // pred_check
    _
  $region87: #{local_global_forward.1} parent=0 // pred_check_branch
    %129 = sbr.rel (0) target = $region89
  $region88: #{local_global_forward.1} parent=0 // pred_region
    _
  $region89: #{local_global_forward.1} parent=0 // pred_fallthru
    _
  // Predicated region
  $region90: #{local_global_forward.1} parent=0 // pred_check
    _
  $region91: #{local_global_forward.1} parent=0 // pred_check_branch
    %131 = sbr.rel (0) target = $region93
  $region92: #{local_global_forward.1} parent=0 // pred_region
    _
  $region93: #{local_global_forward.1} parent=0 // pred_fallthru
    _
  // Predicated region
  $region94: #{local_global_forward.1} parent=0 // pred_check
    _
  $region95: #{local_global_forward.1} parent=0 // pred_check_branch
    %133 = sbr.rel (0) target = $region97
  $region96: #{local_global_forward.1} parent=0 // pred_region
    _
  $region97: #{local_global_forward.1} parent=0 // pred_fallthru
    _
  // Predicated region
  $region98: #{local_global_forward.1} parent=0 // pred_check
    _
  $region99: #{local_global_forward.1} parent=0 // pred_check_branch
    %135 = sbr.rel (0) target = $region101
  $region100: #{local_global_forward.1} parent=0 // pred_region
    _
  $region101: #{local_global_forward.1} parent=0 // pred_fallthru
    _
  // Predicated region
  $region102: #{local_global_forward.1} parent=0 // pred_check
    _
  $region103: #{local_global_forward.1} parent=0 // pred_check_branch
    %137 = sbr.rel (0) target = $region105
  $region104: #{local_global_forward.1} parent=0 // pred_region
    _
  $region105: #{local_global_forward.1} parent=0 // pred_fallthru
    _
  // Predicated region
  $region106: #{local_global_forward.1} parent=0 // pred_check
    _
  $region107: #{local_global_forward.1} parent=0 // pred_check_branch
    %139 = sbr.rel (0) target = $region109
  $region108: #{local_global_forward.1} parent=0 // pred_region
    _
  $region109: #{local_global_forward.1} parent=0 // pred_fallthru
    _
  // Predicated region
  $region110: #{local_global_forward.1} parent=0 // pred_check
    _
  $region111: #{local_global_forward.1} parent=0 // pred_check_branch
    %141 = sbr.rel (0) target = $region113
  $region112: #{local_global_forward.1} parent=0 // pred_region
    _
  $region113: #{local_global_forward.1} parent=0 // pred_fallthru
    _
  // Predicated region
  $region114: #{local_global_forward.1} parent=0 // pred_check
    _
  $region115: #{local_global_forward.1} parent=0 // pred_check_branch
    %143 = sbr.rel (0) target = $region117
  $region116: #{local_global_forward.1} parent=0 // pred_region
    _
  $region117: #{local_global_forward.1} parent=0 // pred_fallthru
    _
  // Predicated region
  $region118: #{local_global_forward.1} parent=0 // pred_check
    _
  $region119: #{local_global_forward.1} parent=0 // pred_check_branch
    %145 = sbr.rel (0) target = $region121
  $region120: #{local_global_forward.1} parent=0 // pred_region
    _
  $region121: #{local_global_forward.1} parent=0 // pred_fallthru
    _
  // Predicated region
  $region122: #{local_global_forward.1} parent=0 // pred_check
    _
  $region123: #{local_global_forward.1} parent=0 // pred_check_branch
    %147 = sbr.rel (0) target = $region125
  $region124: #{local_global_forward.1} parent=0 // pred_region
    _
  $region125: #{local_global_forward.1} parent=0 // pred_fallthru
    _
  // Predicated region
  $region126: #{local_global_forward.1} parent=0 // pred_check
    _
  $region127: #{local_global_forward.1} parent=0 // pred_check_branch
    %149 = sbr.rel (0) target = $region129
  $region128: #{local_global_forward.1} parent=0 // pred_region
    _
  $region129: #{local_global_forward.1} parent=0 // pred_fallthru
    _
  // Predicated region
  $region130: #{local_global_forward.1} parent=0 // pred_check
    _
  $region131: #{local_global_forward.1} parent=0 // pred_check_branch
    %151 = sbr.rel (0) target = $region133
  $region132: #{local_global_forward.1} parent=0 // pred_region
    _
  $region133: #{local_global_forward.1} parent=0 // pred_fallthru
    _
  // Predicated region
  $region134: #{local_global_forward.1} parent=0 // pred_check
    _
  $region135: #{local_global_forward.1} parent=0 // pred_check_branch
    %153 = sbr.rel (0) target = $region137
  $region136: #{local_global_forward.1} parent=0 // pred_region
    _
  $region137: #{local_global_forward.1} parent=0 // pred_fallthru
    _
  // Predicated region
  $region138: #{local_global_forward.1} parent=0 // pred_check
    _
  $region139: #{local_global_forward.1} parent=0 // pred_check_branch
    %155 = sbr.rel (0) target = $region141
  $region140: #{local_global_forward.1} parent=0 // pred_region
    _
  $region141: #{local_global_forward.1} parent=0 // pred_fallthru
    _
  // Predicated region
  $region142: #{local_global_forward.1} parent=0 // pred_check
    _
  $region143: #{local_global_forward.1} parent=0 // pred_check_branch
    %157 = sbr.rel (0) target = $region145
  $region144: #{local_global_forward.1} parent=0 // pred_region
    _
  $region145: #{local_global_forward.1} parent=0 // pred_fallthru
    _
  // Predicated region
  $region146: #{local_global_forward.1} parent=0 // pred_check
    _
  $region147: #{local_global_forward.1} parent=0 // pred_check_branch
    %159 = sbr.rel (0) target = $region149
  $region148: #{local_global_forward.1} parent=0 // pred_region
    _
  $region149: #{local_global_forward.1} parent=0 // pred_fallthru
    _
  // Predicated region
  $region150: #{local_global_forward.1} parent=0 // pred_check
    _
  $region151: #{local_global_forward.1} parent=0 // pred_check_branch
    %161 = sbr.rel (0) target = $region153
  $region152: #{local_global_forward.1} parent=0 // pred_region
    _
  $region153: #{local_global_forward.1} parent=0 // pred_fallthru
    _
  // Predicated region
  $region154: #{local_global_forward.1} parent=0 // pred_check
    _
  $region155: #{local_global_forward.1} parent=0 // pred_check_branch
    %163 = sbr.rel (0) target = $region157
  $region156: #{local_global_forward.1} parent=0 // pred_region
    _
  $region157: #{local_global_forward.1} parent=0 // pred_fallthru
    _
  %v165 = vld [vmem:[%s3] sm:$0xf]
  %v166 = vld [vmem:[%s3 + $0x4] sm:$0x1]
  %v167 = vld [vmem:[%s1] sm:$0xff]
  %v168 = vld [vmem:[%s1 + $0x8] sm:$0x3]
  %v169 = vld [vmem:[%s1 + $0x10] sm:$0xff]
  %v170 = vld [vmem:[%s1 + $0x18] sm:$0x3]
  %v171 = vld [vmem:[%s1 + $0x20] sm:$0xff]
  %v172 = vld [vmem:[%s1 + $0x28] sm:$0x3]
  %v173 = vld [vmem:[%s5] sm:$0x3]
  %v174 = vpack.c.bf16 %v167, %v167
  %v175 = vpack.c.bf16 %v168, %v168
  %v176 = vpack.c.bf16 %v169, %v169
  %v177 = vpack.c.bf16 %v170, %v170
  %v178 = vpack.c.bf16 %v171, %v171
  %v179 = vpack.c.bf16 %v172, %v172
  %v186 = vrot.slane %v174, 3
  %v187 = vrot.slane %v175, 3
  %v188 = vrot.slane %v176, 3
  %v189 = vrot.slane %v177, 3
  %v190 = vrot.slane %v178, 3
  %v191 = vrot.slane %v179, 3
  %vm192 = vcmask 1040384
  %v195 = vsel %vm192, %v174, %v186
  %vm196 = vcmask 1041409
  %v197 = vsel %vm196, %v174, %v186
  %v199 = vrot.slane %v197, 1
  %vm200 = vcmask 1042434
  %v201 = vsel %vm200, %v174, %v186
  %v203 = vrot.slane %v201, 2
  %vm204 = vcmask 1043459
  %v205 = vsel %vm204, %v174, %v186
  %v207 = vrot.slane %v205, 3
  %v210 = vsel %vm192, %v175, %v187
  %v213 = vsel %vm192, %v176, %v188
  %v214 = vsel %vm196, %v176, %v188
  %v216 = vrot.slane %v214, 1
  %v217 = vsel %vm200, %v176, %v188
  %v219 = vrot.slane %v217, 2
  %v220 = vsel %vm204, %v176, %v188
  %v222 = vrot.slane %v220, 3
  %v225 = vsel %vm192, %v177, %v189
  %v228 = vsel %vm192, %v178, %v190
  %v229 = vsel %vm196, %v178, %v190
  %v231 = vrot.slane %v229, 1
  %v232 = vsel %vm200, %v178, %v190
  %v234 = vrot.slane %v232, 2
  %v235 = vsel %vm204, %v178, %v190
  %v237 = vrot.slane %v235, 3
  %v240 = vsel %vm192, %v179, %v191
  %241 = vst [vmem:[#allocation1] ss:$9 sm:$0xff] %v195
  %s243 = scalar_lea.vmem [#allocation1], 1
  %244 = vst [vmem:[%s243] ss:$9 sm:$0xff] %v199
  %s246 = scalar_lea.vmem [#allocation1], 2
  %247 = vst [vmem:[%s246] ss:$9 sm:$0xff] %v203
  %s249 = scalar_lea.vmem [#allocation1], 3
  %250 = vst [vmem:[%s249] ss:$9 sm:$0xff] %v207
  %s251 = scalar_lea.vmem [#allocation1], 4
  %252 = vst [vmem:[%s251] ss:$9 sm:$0xff] %v210
  %s253 = scalar_lea.vmem [#allocation1], 5
  %254 = vst [vmem:[%s253] ss:$9 sm:$0xff] %v213
  %s256 = scalar_lea.vmem [#allocation1], 6
  %257 = vst [vmem:[%s256] ss:$9 sm:$0xff] %v216
  %s259 = scalar_lea.vmem [#allocation1], 7
  %260 = vst [vmem:[%s259] ss:$9 sm:$0xff] %v219
  %v261 = vld [vmem:[#allocation1] sm:$0xff]
  %263 = vst [vmem:[#allocation1] ss:$9 sm:$0xff] %v222
  %264 = vst [vmem:[%s243] ss:$9 sm:$0xff] %v225
  %265 = vst [vmem:[%s246] ss:$9 sm:$0xff] %v228
  %267 = vst [vmem:[%s249] ss:$9 sm:$0xff] %v231
  %269 = vst [vmem:[%s251] ss:$9 sm:$0xff] %v234
  %271 = vst [vmem:[%s253] ss:$9 sm:$0xff] %v237
  %272 = vst [vmem:[%s256] ss:$9 sm:$0xff] %v240
  %v273 = vld [vmem:[#allocation1] sm:$0xff]
  %vm274 = vcmask 31744
  %v275 = vsel %vm274, %v261, 0
  %v277 = vsel %vm274, %v273, 0
  %vm279 = vcmask 1041408
  %v281 = vsel %vm279, %v173, 0
  %283 = vmatpush.bf16.msra.mxu0 0
  %284 = vmatpush.bf16.msra.mxu0 0
  %285 = vmatpush.bf16.msra.mxu0 0
  %286 = vmatpush.bf16.msra.mxu0 0
  %287 = vmatpush.bf16.msra.mxu0 0
  %288 = vmatpush.bf16.msra.mxu0 0
  %289 = vmatpush.bf16.msra.mxu0 0
  %290 = vmatpush.bf16.msra.mxu0 %v281
  %291 = vmatmul.bf16.gmra.mxu0 %v275
  %v292 = vpop.f32.mrf.mxu0
  %v293 = vadd.f32 0.0, %v292
  %v294 = vpop.f32.mrf.mxu0
  %v295 = vadd.f32 0.0, %v294
  %296 = vmatmul.bf16.gmra.mxu0 %v277
  %v297 = vpop.f32.mrf.mxu0
  %v298 = vadd.f32 0.0, %v297
  %v299 = vpop.f32.mrf.mxu0
  %v300 = vadd.f32 0.0, %v299
  %301 = vdwg.mxu0
  %v306 = vrot.slane %v293, 2
  %v307 = vrot.slane %v293, 4
  %v308 = vrot.slane %v293, 6
  %v309 = vrot.slane %v295, 2
  %v310 = vrot.slane %v295, 4
  %v311 = vrot.slane %v295, 6
  %v312 = vrot.slane %v298, 2
  %v313 = vrot.slane %v298, 4
  %v314 = vrot.slane %v298, 6
  %v315 = vrot.slane %v300, 2
  %v316 = vrot.slane %v300, 4
  %v317 = vld [vmem:[%s7] sm:$0x1]
  %v318 = vld [vmem:[%s9] sm:$0xf]
  %v319 = vld [vmem:[%s9 + $0x4] sm:$0xf]
  %v320 = vld [vmem:[%s9 + $0x8] sm:$0xf]
  %v321 = vld [vmem:[%s9 + $0xc] sm:$0xf]
  %v322 = vld [vmem:[%s9 + $0x10] sm:$0xf]
  %v323 = vld [vmem:[%s9 + $0x14] sm:$0xf]
  %v324 = vld [vmem:[%s11] sm:$0xf]
  %v325 = vld [vmem:[%s11 + $0x4] sm:$0xf]
  %v326 = vld [vmem:[%s13] sm:$0x1]
  %v327 = vld [vmem:[%s15] sm:$0xf]
  %v328 = vld [vmem:[%s15 + $0x4] sm:$0xf]
  %v329 = vld [vmem:[%s17] sm:$0xf]
  %v330 = vld [vmem:[%s17 + $0x4] sm:$0xf]
  %v331 = vld [vmem:[%s19] sm:$0x1]
  %332 = vst [vmem:[#allocation1] ss:$4 sm:$0xff] %v293
  %s333 = scalar_lea.vmem [#allocation1], 1
  %334 = vst [vmem:[%s333] ss:$4 sm:$0xff] %v306
  %s335 = scalar_lea.vmem [#allocation1], 2
  %336 = vst [vmem:[%s335] ss:$4 sm:$0xff] %v307
  %s337 = scalar_lea.vmem [#allocation1], 3
  %338 = vst [vmem:[%s337] ss:$4 sm:$0xff] %v308
  %s339 = scalar_lea.vmem [#allocation1], 32
  %340 = vst [vmem:[%s339] ss:$4 sm:$0xff] %v295
  %v341 = vld.sshfl [vmem:[#allocation1] sm:$0xff pattern:$0x73625140]
  %v342 = vld.sshfl [vmem:[#allocation1 + $0x20] sm:$0xff pattern:$0x73625140]
  %v345 = vpack.c.bf16 %v342, %v341
  %v347 = vperm.slane %v317, 0
  %v351 = vunpack.c.l.b16 %v165
  %v352 = vunpack.c.l.b16 %v166
  %v353 = vpack.c.b16 %v352, %v351
  %vm354 = vcmask 80896
  %v356 = vsel %vm354, %v353, 0
  %vm358 = vcmask 1044480
  %v360 = vsel %vm358, %v345, 0
  %362 = vmatpush.bf16.msra.mxu0 0
  %363 = vmatpush.bf16.msra.mxu0 0
  %364 = vmatpush.bf16.msra.mxu0 0
  %365 = vmatpush.bf16.msra.mxu0 0
  %366 = vmatpush.bf16.msra.mxu0 0
  %367 = vmatpush.bf16.msra.mxu0 0
  %368 = vmatpush.bf16.msra.mxu0 0
  %369 = vmatpush.bf16.msra.mxu0 %v360
  %370 = vmatmul.bf16.gmra.mxu0 %v356
  %v371 = vpop.f32.mrf.mxu0
  %v372 = vadd.f32 %v347, %v371
  %v373 = vpop.f32.mrf.mxu0
  %v374 = vadd.f32 %v347, %v373
  %375 = vdwg.mxu0
  %v376 = vpack.c.bf16 %v374, %v372
  %v378 = vperm.slane %v326, 0
  %v386 = vunpack.c.l.b16 %v318
  %v387 = vunpack.c.l.b16 %v319
  %v388 = vunpack.c.l.b16 %v320
  %v389 = vunpack.c.l.b16 %v321
  %v390 = vunpack.c.l.b16 %v322
  %v391 = vunpack.c.l.b16 %v323
  %v392 = vpack.c.b16 %v387, %v386
  %v393 = vpack.c.b16 %v389, %v388
  %v394 = vpack.c.b16 %v391, %v390
  %vm398 = vcmask 392192
  %v400 = vsel %vm398, %v376, 0
  %402 = vmatpush.bf16.msra.mxu0 0
  %403 = vmatpush.bf16.msra.mxu0 0
  %404 = vmatpush.bf16.msra.mxu0 0
  %405 = vmatpush.bf16.msra.mxu0 0
  %406 = vmatpush.bf16.msra.mxu0 0
  %407 = vmatpush.bf16.msra.mxu0 %v394
  %408 = vmatpush.bf16.msra.mxu0 %v393
  %409 = vmatpush.bf16.msra.mxu0 %v392
  %410 = vmatmul.bf16.gmra.mxu0 %v400
  %v411 = vpop.f32.mrf.mxu0
  %v412 = vadd.f32 %v378, %v411
  %v413 = vpop.f32.mrf.mxu0
  %v414 = vadd.f32 %v378, %v413
  %415 = vdwg.mxu0
  %v417 = vperm.slane %v331, 0
  %420 = vrot.lane.b32.xlu0 %v376, 96
  %v421 = vpop.permute.xlu0 %420
  %v424 = vunpack.c.l.b16 %v327
  %v425 = vunpack.c.l.b16 %v328
  %v426 = vpack.c.b16 %v425, %v424
  %vm428 = vcmask 130048
  %v430 = vsel %vm428, %v421, 0
  %432 = vmatpush.bf16.msra.mxu0 0
  %433 = vmatpush.bf16.msra.mxu0 0
  %434 = vmatpush.bf16.msra.mxu0 0
  %435 = vmatpush.bf16.msra.mxu0 0
  %436 = vmatpush.bf16.msra.mxu0 0
  %437 = vmatpush.bf16.msra.mxu0 0
  %438 = vmatpush.bf16.msra.mxu0 0
  %439 = vmatpush.bf16.msra.mxu0 %v426
  %440 = vmatmul.bf16.gmra.mxu0 %v430
  %v441 = vpop.f32.mrf.mxu0
  %v442 = vadd.f32 %v417, %v441
  %v443 = vpop.f32.mrf.mxu0
  %v444 = vadd.f32 %v417, %v443
  %445 = vdwg.mxu0
  %446 = vst [vmem:[#allocation1] ss:$4 sm:$0xff] %v309
  %s447 = scalar_lea.vmem [#allocation1], 1
  %448 = vst [vmem:[%s447] ss:$4 sm:$0xff] %v310
  %s449 = scalar_lea.vmem [#allocation1], 2
  %450 = vst [vmem:[%s449] ss:$4 sm:$0xff] %v311
  %s451 = scalar_lea.vmem [#allocation1], 3
  %452 = vst [vmem:[%s451] ss:$4 sm:$0xff] %v298
  %s453 = scalar_lea.vmem [#allocation1], 32
  %454 = vst [vmem:[%s453] ss:$4 sm:$0xff] %v312
  %v455 = vld.sshfl [vmem:[#allocation1] sm:$0xff pattern:$0x73625140]
  %v456 = vld.sshfl [vmem:[#allocation1 + $0x20] sm:$0xff pattern:$0x73625140]
  %v459 = vpack.c.bf16 %v456, %v455
  %v461 = vsel %vm358, %v459, 0
  %463 = vmatpush.bf16.msra.mxu0 0
  %464 = vmatpush.bf16.msra.mxu0 0
  %465 = vmatpush.bf16.msra.mxu0 0
  %466 = vmatpush.bf16.msra.mxu0 0
  %467 = vmatpush.bf16.msra.mxu0 0
  %468 = vmatpush.bf16.msra.mxu0 0
  %469 = vmatpush.bf16.msra.mxu0 0
  %470 = vmatpush.bf16.msra.mxu0 %v461
  %471 = vmatmul.bf16.gmra.mxu0 %v356
  %v472 = vpop.f32.mrf.mxu0
  %v473 = vadd.f32 %v347, %v472
  %v474 = vpop.f32.mrf.mxu0
  %v475 = vadd.f32 %v347, %v474
  %476 = vdwg.mxu0
  %v477 = vpack.c.bf16 %v475, %v473
  %v479 = vsel %vm398, %v477, 0
  %481 = vmatpush.bf16.msra.mxu0 0
  %482 = vmatpush.bf16.msra.mxu0 0
  %483 = vmatpush.bf16.msra.mxu0 0
  %484 = vmatpush.bf16.msra.mxu0 0
  %485 = vmatpush.bf16.msra.mxu0 0
  %486 = vmatpush.bf16.msra.mxu0 %v394
  %487 = vmatpush.bf16.msra.mxu0 %v393
  %488 = vmatpush.bf16.msra.mxu0 %v392
  %489 = vmatmul.bf16.gmra.mxu0 %v479
  %v490 = vpop.f32.mrf.mxu0
  %v491 = vadd.f32 %v378, %v490
  %v492 = vpop.f32.mrf.mxu0
  %v493 = vadd.f32 %v378, %v492
  %494 = vdwg.mxu0
  %496 = vrot.lane.b32.xlu0 %v477, 96
  %v497 = vpop.permute.xlu0 %496
  %v499 = vsel %vm428, %v497, 0
  %501 = vmatpush.bf16.msra.mxu0 0
  %502 = vmatpush.bf16.msra.mxu0 0
  %503 = vmatpush.bf16.msra.mxu0 0
  %504 = vmatpush.bf16.msra.mxu0 0
  %505 = vmatpush.bf16.msra.mxu0 0
  %506 = vmatpush.bf16.msra.mxu0 0
  %507 = vmatpush.bf16.msra.mxu0 0
  %508 = vmatpush.bf16.msra.mxu0 %v426
  %509 = vmatmul.bf16.gmra.mxu0 %v499
  %v510 = vpop.f32.mrf.mxu0
  %v511 = vadd.f32 %v417, %v510
  %v512 = vpop.f32.mrf.mxu0
  %v513 = vadd.f32 %v417, %v512
  %514 = vdwg.mxu0
  %515 = vst [vmem:[#allocation1] ss:$4 sm:$0xff] %v313
  %s516 = scalar_lea.vmem [#allocation1], 1
  %517 = vst [vmem:[%s516] ss:$4 sm:$0xff] %v314
  %s518 = scalar_lea.vmem [#allocation1], 2
  %519 = vst [vmem:[%s518] ss:$4 sm:$0xff] %v300
  %s520 = scalar_lea.vmem [#allocation1], 3
  %521 = vst [vmem:[%s520] ss:$4 sm:$0xff] %v315
  %s522 = scalar_lea.vmem [#allocation1], 32
  %523 = vst [vmem:[%s522] ss:$4 sm:$0xff] %v316
  %v524 = vld.sshfl [vmem:[#allocation1] sm:$0xff pattern:$0x73625140]
  %v525 = vld.sshfl [vmem:[#allocation1 + $0x20] sm:$0xff pattern:$0x73625140]
  %v528 = vpack.c.bf16 %v525, %v524
  %v530 = vsel %vm358, %v528, 0
  %532 = vmatpush.bf16.msra.mxu0 0
  %533 = vmatpush.bf16.msra.mxu0 0
  %534 = vmatpush.bf16.msra.mxu0 0
  %535 = vmatpush.bf16.msra.mxu0 0
  %536 = vmatpush.bf16.msra.mxu0 0
  %537 = vmatpush.bf16.msra.mxu0 0
  %538 = vmatpush.bf16.msra.mxu0 0
  %539 = vmatpush.bf16.msra.mxu0 %v530
  %540 = vmatmul.bf16.gmra.mxu0 %v356
  %v541 = vpop.f32.mrf.mxu0
  %v542 = vadd.f32 %v347, %v541
  %v543 = vpop.f32.mrf.mxu0
  %v544 = vadd.f32 %v347, %v543
  %545 = vdwg.mxu0
  %v546 = vpack.c.bf16 %v544, %v542
  %v548 = vsel %vm398, %v546, 0
  %550 = vmatpush.bf16.msra.mxu0 0
  %551 = vmatpush.bf16.msra.mxu0 0
  %552 = vmatpush.bf16.msra.mxu0 0
  %553 = vmatpush.bf16.msra.mxu0 0
  %554 = vmatpush.bf16.msra.mxu0 0
  %555 = vmatpush.bf16.msra.mxu0 %v394
  %556 = vmatpush.bf16.msra.mxu0 %v393
  %557 = vmatpush.bf16.msra.mxu0 %v392
  %558 = vmatmul.bf16.gmra.mxu0 %v548
  %v559 = vpop.f32.mrf.mxu0
  %v560 = vadd.f32 %v378, %v559
  %v561 = vpop.f32.mrf.mxu0
  %v562 = vadd.f32 %v378, %v561
  %563 = vdwg.mxu0
  %565 = vrot.lane.b32.xlu0 %v546, 96
  %v566 = vpop.permute.xlu0 %565
  %v568 = vsel %vm428, %v566, 0
  %570 = vmatpush.bf16.msra.mxu0 0
  %571 = vmatpush.bf16.msra.mxu0 0
  %572 = vmatpush.bf16.msra.mxu0 0
  %573 = vmatpush.bf16.msra.mxu0 0
  %574 = vmatpush.bf16.msra.mxu0 0
  %575 = vmatpush.bf16.msra.mxu0 0
  %576 = vmatpush.bf16.msra.mxu0 0
  %577 = vmatpush.bf16.msra.mxu0 %v426
  %578 = vmatmul.bf16.gmra.mxu0 %v568
  %v579 = vpop.f32.mrf.mxu0
  %v580 = vadd.f32 %v417, %v579
  %v581 = vpop.f32.mrf.mxu0
  %v582 = vadd.f32 %v417, %v581
  %583 = vdwg.mxu0
  %v586 = vunpack.c.l.b16 %v324
  %v587 = vunpack.c.l.b16 %v325
  %v588 = vpack.c.b16 %v587, %v586
  %v591 = vsel %vm428, 0, 0
  %593 = vmatpush.bf16.msra.mxu0 0
  %594 = vmatpush.bf16.msra.mxu0 0
  %595 = vmatpush.bf16.msra.mxu0 0
  %596 = vmatpush.bf16.msra.mxu0 0
  %597 = vmatpush.bf16.msra.mxu0 0
  %598 = vmatpush.bf16.msra.mxu0 0
  %599 = vmatpush.bf16.msra.mxu0 0
  %600 = vmatpush.bf16.msra.mxu0 %v588
  %601 = vmatmul.bf16.gmra.mxu0 %v591
  %v602 = vpop.f32.mrf.mxu0
  %v603 = vadd.f32 0.0, %v602
  %v604 = vpop.f32.mrf.mxu0
  %v605 = vadd.f32 0.0, %v604
  %606 = vdwg.mxu0
  %v607 = vadd.f32 %v412, %v603
  %v608 = vadd.f32 %v414, %v605
  %v609 = vxor.u32 %v607, 2147483648
  %v610 = vxor.u32 %v608, 2147483648
  %v611 = vmul.f32 %v609, 1.442695
  %v612 = vpow.pop %v611
  %v613 = vmul.f32 %v610, 1.442695
  %v614 = vpow.pop %v613
  %v615 = vadd.f32 %v612, 1.0
  %v616 = vadd.f32 %v614, 1.0
  %v617 = vrcp.pop %v615
  %v618 = vmul.f32 %v615, %v617
  %v619 = vsub.f32 1.0, %v618
  %v620 = vmul.f32 %v617, %v619
  %v621 = vadd.f32 %v617, %v620
  %vm622 = vweird.f32 %v615
  %vm623 = vweird.f32 %v617
  %vm624 = vmor %vm622, %vm623
  %v625 = vsel %vm624, %v617, %v621
  %v626 = vand.u32 2147483647, %v615
  %vm627 = vcmp.eq.f32.partialorder %v626, 8.507059e+37
  %v628 = vand.u32 %v615, 2147483648
  %v629 = vor.u32 1.1754944e-38, %v628
  %v630 = vsel %vm627, %v629, %v625
  %v631 = vmul.f32 1.0, %v630
  %v632 = vrcp.pop %v616
  %v633 = vmul.f32 %v616, %v632
  %v634 = vsub.f32 1.0, %v633
  %v635 = vmul.f32 %v632, %v634
  %v636 = vadd.f32 %v632, %v635
  %vm637 = vweird.f32 %v616
  %vm638 = vweird.f32 %v632
  %vm639 = vmor %vm637, %vm638
  %v640 = vsel %vm639, %v632, %v636
  %v641 = vand.u32 2147483647, %v616
  %vm642 = vcmp.eq.f32.partialorder %v641, 8.507059e+37
  %v643 = vand.u32 %v616, 2147483648
  %v644 = vor.u32 1.1754944e-38, %v643
  %v645 = vsel %vm642, %v644, %v640
  %v646 = vmul.f32 1.0, %v645
  %v647 = vmul.f32 %v631, 0.0
  %v648 = vmul.f32 %v646, 0.0
  %v649 = vpack.c.bf16 %v648, %v647
  %651 = vrot.lane.b32.xlu0 %v649, 112
  %v652 = vpop.permute.xlu0 %651
  %v655 = vunpack.c.l.b16 %v329
  %v656 = vunpack.c.l.b16 %v330
  %v657 = vpack.c.b16 %v656, %v655
  %v660 = vsel %vm428, %v652, 0
  %662 = vmatpush.bf16.msra.mxu0 0
  %663 = vmatpush.bf16.msra.mxu0 0
  %664 = vmatpush.bf16.msra.mxu0 0
  %665 = vmatpush.bf16.msra.mxu0 0
  %666 = vmatpush.bf16.msra.mxu0 0
  %667 = vmatpush.bf16.msra.mxu0 0
  %668 = vmatpush.bf16.msra.mxu0 0
  %669 = vmatpush.bf16.msra.mxu0 %v657
  %670 = vmatmul.bf16.gmra.mxu0 %v660
  %v671 = vpop.f32.mrf.mxu0
  %v672 = vadd.f32 0.0, %v671
  %v673 = vpop.f32.mrf.mxu0
  %v674 = vadd.f32 0.0, %v673
  %675 = vdwg.mxu0
  %v676 = vadd.f32 %v442, %v672
  %v677 = vadd.f32 %v444, %v674
  %v678 = vtanh.pop %v676
  %v679 = vtanh.pop %v677
  %v680 = vsub.f32 1.0, %v631
  %v681 = vsub.f32 1.0, %v646
  %v682 = vmul.f32 %v680, %v678
  %v683 = vmul.f32 %v681, %v679
  %v684 = vadd.f32 %v647, %v682
  %v685 = vadd.f32 %v648, %v683
  %v686 = vpack.c.bf16 %v685, %v684
  %v688 = vsel %vm428, %v686, 0
  %690 = vmatpush.bf16.msra.mxu0 0
  %691 = vmatpush.bf16.msra.mxu0 0
  %692 = vmatpush.bf16.msra.mxu0 0
  %693 = vmatpush.bf16.msra.mxu0 0
  %694 = vmatpush.bf16.msra.mxu0 0
  %695 = vmatpush.bf16.msra.mxu0 0
  %696 = vmatpush.bf16.msra.mxu0 0
  %697 = vmatpush.bf16.msra.mxu0 %v588
  %698 = vmatmul.bf16.gmra.mxu0 %v688
  %v699 = vpop.f32.mrf.mxu0
  %v700 = vadd.f32 0.0, %v699
  %v701 = vpop.f32.mrf.mxu0
  %v702 = vadd.f32 0.0, %v701
  %703 = vdwg.mxu0
  %v704 = vadd.f32 %v491, %v700
  %v705 = vadd.f32 %v493, %v702
  %v706 = vxor.u32 %v704, 2147483648
  %v707 = vxor.u32 %v705, 2147483648
  %v708 = vmul.f32 %v706, 1.442695
  %v709 = vpow.pop %v708
  %v710 = vmul.f32 %v707, 1.442695
  %v711 = vpow.pop %v710
  %v712 = vadd.f32 %v709, 1.0
  %v713 = vadd.f32 %v711, 1.0
  %v714 = vrcp.pop %v712
  %v715 = vmul.f32 %v712, %v714
  %v716 = vsub.f32 1.0, %v715
  %v717 = vmul.f32 %v714, %v716
  %v718 = vadd.f32 %v714, %v717
  %vm719 = vweird.f32 %v712
  %vm720 = vweird.f32 %v714
  %vm721 = vmor %vm719, %vm720
  %v722 = vsel %vm721, %v714, %v718
  %v723 = vand.u32 2147483647, %v712
  %vm724 = vcmp.eq.f32.partialorder %v723, 8.507059e+37
  %v725 = vand.u32 %v712, 2147483648
  %v726 = vor.u32 1.1754944e-38, %v725
  %v727 = vsel %vm724, %v726, %v722
  %v728 = vmul.f32 1.0, %v727
  %v729 = vrcp.pop %v713
  %v730 = vmul.f32 %v713, %v729
  %v731 = vsub.f32 1.0, %v730
  %v732 = vmul.f32 %v729, %v731
  %v733 = vadd.f32 %v729, %v732
  %vm734 = vweird.f32 %v713
  %vm735 = vweird.f32 %v729
  %vm736 = vmor %vm734, %vm735
  %v737 = vsel %vm736, %v729, %v733
  %v738 = vand.u32 2147483647, %v713
  %vm739 = vcmp.eq.f32.partialorder %v738, 8.507059e+37
  %v740 = vand.u32 %v713, 2147483648
  %v741 = vor.u32 1.1754944e-38, %v740
  %v742 = vsel %vm739, %v741, %v737
  %v743 = vmul.f32 1.0, %v742
  %746 = vrot.lane.b32.xlu0 %v728, 112
  %v747 = vpop.permute.xlu0 %746
  %748 = vrot.lane.b32.xlu0 %v743, 112
  %v749 = vpop.permute.xlu0 %748
  %v752 = vmul.f32 %v684, %v747
  %v753 = vmul.f32 %v685, %v749
  %v754 = vpack.c.bf16 %v753, %v752
  %v756 = vsel %vm428, %v754, 0
  %758 = vmatpush.bf16.msra.mxu0 0
  %759 = vmatpush.bf16.msra.mxu0 0
  %760 = vmatpush.bf16.msra.mxu0 0
  %761 = vmatpush.bf16.msra.mxu0 0
  %762 = vmatpush.bf16.msra.mxu0 0
  %763 = vmatpush.bf16.msra.mxu0 0
  %764 = vmatpush.bf16.msra.mxu0 0
  %765 = vmatpush.bf16.msra.mxu0 %v657
  %766 = vmatmul.bf16.gmra.mxu0 %v756
  %v767 = vpop.f32.mrf.mxu0
  %v768 = vadd.f32 0.0, %v767
  %v769 = vpop.f32.mrf.mxu0
  %v770 = vadd.f32 0.0, %v769
  %771 = vdwg.mxu0
  %v772 = vadd.f32 %v511, %v768
  %v773 = vadd.f32 %v513, %v770
  %v774 = vtanh.pop %v772
  %v775 = vtanh.pop %v773
  %v776 = vmul.f32 %v728, %v684
  %v777 = vmul.f32 %v743, %v685
  %v778 = vsub.f32 1.0, %v728
  %v779 = vsub.f32 1.0, %v743
  %v780 = vmul.f32 %v778, %v774
  %v781 = vmul.f32 %v779, %v775
  %v782 = vadd.f32 %v776, %v780
  %v783 = vadd.f32 %v777, %v781
  %v784 = vpack.c.bf16 %v783, %v782
  %v786 = vsel %vm428, %v784, 0
  %788 = vmatpush.bf16.msra.mxu0 0
  %789 = vmatpush.bf16.msra.mxu0 0
  %790 = vmatpush.bf16.msra.mxu0 0
  %791 = vmatpush.bf16.msra.mxu0 0
  %792 = vmatpush.bf16.msra.mxu0 0
  %793 = vmatpush.bf16.msra.mxu0 0
  %794 = vmatpush.bf16.msra.mxu0 0
  %795 = vmatpush.bf16.msra.mxu0 %v588
  %796 = vmatmul.bf16.gmra.mxu0 %v786
  %v797 = vpop.f32.mrf.mxu0
  %v798 = vadd.f32 0.0, %v797
  %v799 = vpop.f32.mrf.mxu0
  %v800 = vadd.f32 0.0, %v799
  %801 = vdwg.mxu0
  %v802 = vadd.f32 %v560, %v798
  %v803 = vadd.f32 %v562, %v800
  %v804 = vxor.u32 %v802, 2147483648
  %v805 = vxor.u32 %v803, 2147483648
  %v806 = vmul.f32 %v804, 1.442695
  %v807 = vpow.pop %v806
  %v808 = vmul.f32 %v805, 1.442695
  %v809 = vpow.pop %v808
  %v810 = vadd.f32 %v807, 1.0
  %v811 = vadd.f32 %v809, 1.0
  %v812 = vrcp.pop %v810
  %v813 = vmul.f32 %v810, %v812
  %v814 = vsub.f32 1.0, %v813
  %v815 = vmul.f32 %v812, %v814
  %v816 = vadd.f32 %v812, %v815
  %vm817 = vweird.f32 %v810
  %vm818 = vweird.f32 %v812
  %vm819 = vmor %vm817, %vm818
  %v820 = vsel %vm819, %v812, %v816
  %v821 = vand.u32 2147483647, %v810
  %vm822 = vcmp.eq.f32.partialorder %v821, 8.507059e+37
  %v823 = vand.u32 %v810, 2147483648
  %v824 = vor.u32 1.1754944e-38, %v823
  %v825 = vsel %vm822, %v824, %v820
  %v826 = vmul.f32 1.0, %v825
  %v827 = vrcp.pop %v811
  %v828 = vmul.f32 %v811, %v827
  %v829 = vsub.f32 1.0, %v828
  %v830 = vmul.f32 %v827, %v829
  %v831 = vadd.f32 %v827, %v830
  %vm832 = vweird.f32 %v811
  %vm833 = vweird.f32 %v827
  %vm834 = vmor %vm832, %vm833
  %v835 = vsel %vm834, %v827, %v831
  %v836 = vand.u32 2147483647, %v811
  %vm837 = vcmp.eq.f32.partialorder %v836, 8.507059e+37
  %v838 = vand.u32 %v811, 2147483648
  %v839 = vor.u32 1.1754944e-38, %v838
  %v840 = vsel %vm837, %v839, %v835
  %v841 = vmul.f32 1.0, %v840
  %844 = vrot.lane.b32.xlu0 %v826, 112
  %v845 = vpop.permute.xlu0 %844
  %846 = vrot.lane.b32.xlu0 %v841, 112
  %v847 = vpop.permute.xlu0 %846
  %v850 = vmul.f32 %v782, %v845
  %v851 = vmul.f32 %v783, %v847
  %v852 = vpack.c.bf16 %v851, %v850
  %v854 = vsel %vm428, %v852, 0
  %856 = vmatpush.bf16.msra.mxu0 0
  %857 = vmatpush.bf16.msra.mxu0 0
  %858 = vmatpush.bf16.msra.mxu0 0
  %859 = vmatpush.bf16.msra.mxu0 0
  %860 = vmatpush.bf16.msra.mxu0 0
  %861 = vmatpush.bf16.msra.mxu0 0
  %862 = vmatpush.bf16.msra.mxu0 0
  %863 = vmatpush.bf16.msra.mxu0 %v657
  %864 = vmatmul.bf16.gmra.mxu0 %v854
  %v865 = vpop.f32.mrf.mxu0
  %v866 = vadd.f32 0.0, %v865
  %v867 = vpop.f32.mrf.mxu0
  %v868 = vadd.f32 0.0, %v867
  %869 = vdwg.mxu0
  %v870 = vadd.f32 %v580, %v866
  %v871 = vadd.f32 %v582, %v868
  %v872 = vtanh.pop %v870
  %v873 = vtanh.pop %v871
  %v874 = vmul.f32 %v826, %v782
  %v875 = vmul.f32 %v841, %v783
  %v876 = vsub.f32 1.0, %v826
  %v877 = vsub.f32 1.0, %v841
  %v878 = vmul.f32 %v876, %v872
  %v879 = vmul.f32 %v877, %v873
  %v880 = vadd.f32 %v874, %v878
  %v881 = vadd.f32 %v875, %v879
  %v882 = vld [vmem:[%s23] sm:$0x7]
  %v883 = vld [vmem:[%s21] sm:$0x3f]
  %v884 = vld [vmem:[%s21 + $0x8] sm:$0x3f]
  %v885 = vld [vmem:[%s21 + $0x10] sm:$0x3f]
  %v886 = vld [vmem:[%s25] sm:$0x3]
  %v887 = vpack.c.bf16 %v883, %v883
  %v888 = vpack.c.bf16 %v884, %v884
  %v889 = vpack.c.bf16 %v885, %v885
  %v893 = vrot.slane %v887, 3
  %v894 = vrot.slane %v888, 3
  %v895 = vrot.slane %v889, 3
  %v898 = vsel %vm192, %v887, %v893
  %v899 = vsel %vm196, %v887, %v893
  %v901 = vrot.slane %v899, 1
  %v902 = vsel %vm200, %v887, %v893
  %v904 = vrot.slane %v902, 2
  %v907 = vsel %vm192, %v888, %v894
  %v908 = vsel %vm196, %v888, %v894
  %v910 = vrot.slane %v908, 1
  %v911 = vsel %vm200, %v888, %v894
  %v913 = vrot.slane %v911, 2
  %v916 = vsel %vm192, %v889, %v895
  %v917 = vsel %vm196, %v889, %v895
  %v919 = vrot.slane %v917, 1
  %v920 = vsel %vm200, %v889, %v895
  %v922 = vrot.slane %v920, 2
  %923 = vst [vmem:[#allocation1] ss:$9 sm:$0xff] %v898
  %s925 = scalar_lea.vmem [#allocation1], 1
  %926 = vst [vmem:[%s925] ss:$9 sm:$0xff] %v901
  %s928 = scalar_lea.vmem [#allocation1], 2
  %929 = vst [vmem:[%s928] ss:$9 sm:$0xff] %v904
  %s930 = scalar_lea.vmem [#allocation1], 3
  %931 = vst [vmem:[%s930] ss:$9 sm:$0xff] %v907
  %s933 = scalar_lea.vmem [#allocation1], 4
  %934 = vst [vmem:[%s933] ss:$9 sm:$0xff] %v910
  %s936 = scalar_lea.vmem [#allocation1], 5
  %937 = vst [vmem:[%s936] ss:$9 sm:$0xff] %v913
  %s938 = scalar_lea.vmem [#allocation1], 6
  %939 = vst [vmem:[%s938] ss:$9 sm:$0xff] %v916
  %s941 = scalar_lea.vmem [#allocation1], 7
  %942 = vst [vmem:[%s941] ss:$9 sm:$0xff] %v919
  %v943 = vld [vmem:[#allocation1] sm:$0xff]
  %945 = vst [vmem:[#allocation1] ss:$9 sm:$0xff] %v922
  %v946 = vld [vmem:[#allocation1] sm:$0xff]
  %v947 = vsel %vm274, %v943, 0
  %v949 = vsel %vm274, %v946, 0
  %v952 = vsel %vm279, %v886, 0
  %954 = vmatpush.bf16.msra.mxu0 0
  %955 = vmatpush.bf16.msra.mxu0 0
  %956 = vmatpush.bf16.msra.mxu0 0
  %957 = vmatpush.bf16.msra.mxu0 0
  %958 = vmatpush.bf16.msra.mxu0 0
  %959 = vmatpush.bf16.msra.mxu0 0
  %960 = vmatpush.bf16.msra.mxu0 0
  %961 = vmatpush.bf16.msra.mxu0 %v952
  %962 = vmatmul.bf16.gmra.mxu0 %v947
  %v963 = vpop.f32.mrf.mxu0
  %v964 = vadd.f32 0.0, %v963
  %v965 = vpop.f32.mrf.mxu0
  %v966 = vadd.f32 0.0, %v965
  %967 = vmatmul.bf16.gmra.mxu0 %v949
  %v968 = vpop.f32.mrf.mxu0
  %v969 = vadd.f32 0.0, %v968
  %v970 = vpop.f32.mrf.mxu0
  %971 = vdwg.mxu0
  %v975 = vrot.slane %v964, 2
  %v976 = vrot.slane %v964, 4
  %v977 = vrot.slane %v964, 6
  %v978 = vrot.slane %v966, 2
  %v979 = vrot.slane %v966, 4
  %v980 = vrot.slane %v966, 6
  %v981 = vld [vmem:[%s27] sm:$0x1]
  %v982 = vld [vmem:[%s29] sm:$0xf]
  %v983 = vld [vmem:[%s29 + $0x4] sm:$0xf]
  %v984 = vld [vmem:[%s29 + $0x8] sm:$0xf]
  %v985 = vld [vmem:[%s29 + $0xc] sm:$0xf]
  %v986 = vld [vmem:[%s29 + $0x10] sm:$0xf]
  %v987 = vld [vmem:[%s29 + $0x14] sm:$0xf]
  %v988 = vld [vmem:[%s31] sm:$0xf]
  %v989 = vld [vmem:[%s31 + $0x4] sm:$0xf]
  %v990 = vld [vmem:[%s33] sm:$0x1]
  %v991 = vld [vmem:[%s35] sm:$0xf]
  %v992 = vld [vmem:[%s35 + $0x4] sm:$0xf]
  %v993 = vld [vmem:[%s37] sm:$0xf]
  %v994 = vld [vmem:[%s37 + $0x4] sm:$0xf]
  %v995 = vld [vmem:[%s39] sm:$0x1]
  %996 = vst [vmem:[#allocation1] ss:$4 sm:$0xff] %v964
  %s997 = scalar_lea.vmem [#allocation1], 1
  %998 = vst [vmem:[%s997] ss:$4 sm:$0xff] %v975
  %s999 = scalar_lea.vmem [#allocation1], 2
  %1000 = vst [vmem:[%s999] ss:$4 sm:$0xff] %v976
  %v1001 = vld.sshfl [vmem:[#allocation1] sm:$0xff pattern:$0x73625140]
  %v1003 = vpack.c.bf16 %v1001, %v1001
  %v1005 = vperm.slane %v981, 0
  %vm1007 = vcmask 48128
  %v1009 = vsel %vm1007, %v882, 0
  %vm1011 = vcmask 1042432
  %v1013 = vsel %vm1011, %v1003, 0
  %1015 = vmatpush.bf16.msra.mxu0 0
  %1016 = vmatpush.bf16.msra.mxu0 0
  %1017 = vmatpush.bf16.msra.mxu0 0
  %1018 = vmatpush.bf16.msra.mxu0 0
  %1019 = vmatpush.bf16.msra.mxu0 0
  %1020 = vmatpush.bf16.msra.mxu0 0
  %1021 = vmatpush.bf16.msra.mxu0 0
  %1022 = vmatpush.bf16.msra.mxu0 %v1013
  %1023 = vmatmul.bf16.gmra.mxu0 %v1009
  %v1024 = vpop.f32.mrf.mxu0
  %v1025 = vadd.f32 %v1005, %v1024
  %v1026 = vpop.f32.mrf.mxu0
  %1027 = vdwg.mxu0
  %v1028 = vpack.c.bf16 %v1025, %v1025
  %v1030 = vperm.slane %v990, 0
  %v1038 = vunpack.c.l.b16 %v982
  %v1039 = vunpack.c.l.b16 %v983
  %v1040 = vunpack.c.l.b16 %v984
  %v1041 = vunpack.c.l.b16 %v985
  %v1042 = vunpack.c.l.b16 %v986
  %v1043 = vunpack.c.l.b16 %v987
  %v1044 = vpack.c.b16 %v1039, %v1038
  %v1045 = vpack.c.b16 %v1041, %v1040
  %v1046 = vpack.c.b16 %v1043, %v1042
  %v1051 = vsel %vm398, %v1028, 0
  %1053 = vmatpush.bf16.msra.mxu0 0
  %1054 = vmatpush.bf16.msra.mxu0 0
  %1055 = vmatpush.bf16.msra.mxu0 0
  %1056 = vmatpush.bf16.msra.mxu0 0
  %1057 = vmatpush.bf16.msra.mxu0 0
  %1058 = vmatpush.bf16.msra.mxu0 %v1046
  %1059 = vmatpush.bf16.msra.mxu0 %v1045
  %1060 = vmatpush.bf16.msra.mxu0 %v1044
  %1061 = vmatmul.bf16.gmra.mxu0 %v1051
  %v1062 = vpop.f32.mrf.mxu0
  %v1063 = vadd.f32 %v1030, %v1062
  %v1064 = vpop.f32.mrf.mxu0
  %1065 = vdwg.mxu0
  %v1067 = vperm.slane %v995, 0
  %1070 = vrot.lane.b32.xlu0 %v1028, 96
  %v1071 = vpop.permute.xlu0 %1070
  %v1074 = vunpack.c.l.b16 %v991
  %v1075 = vunpack.c.l.b16 %v992
  %v1076 = vpack.c.b16 %v1075, %v1074
  %v1079 = vsel %vm428, %v1071, 0
  %1081 = vmatpush.bf16.msra.mxu0 0
  %1082 = vmatpush.bf16.msra.mxu0 0
  %1083 = vmatpush.bf16.msra.mxu0 0
  %1084 = vmatpush.bf16.msra.mxu0 0
  %1085 = vmatpush.bf16.msra.mxu0 0
  %1086 = vmatpush.bf16.msra.mxu0 0
  %1087 = vmatpush.bf16.msra.mxu0 0
  %1088 = vmatpush.bf16.msra.mxu0 %v1076
  %1089 = vmatmul.bf16.gmra.mxu0 %v1079
  %v1090 = vpop.f32.mrf.mxu0
  %v1091 = vadd.f32 %v1067, %v1090
  %v1092 = vpop.f32.mrf.mxu0
  %1093 = vdwg.mxu0
  %1094 = vst [vmem:[#allocation1] ss:$4 sm:$0xff] %v977
  %s1095 = scalar_lea.vmem [#allocation1], 1
  %1096 = vst [vmem:[%s1095] ss:$4 sm:$0xff] %v966
  %s1097 = scalar_lea.vmem [#allocation1], 2
  %1098 = vst [vmem:[%s1097] ss:$4 sm:$0xff] %v978
  %v1099 = vld.sshfl [vmem:[#allocation1] sm:$0xff pattern:$0x73625140]
  %v1101 = vpack.c.bf16 %v1099, %v1099
  %v1103 = vsel %vm1011, %v1101, 0
  %1105 = vmatpush.bf16.msra.mxu0 0
  %1106 = vmatpush.bf16.msra.mxu0 0
  %1107 = vmatpush.bf16.msra.mxu0 0
  %1108 = vmatpush.bf16.msra.mxu0 0
  %1109 = vmatpush.bf16.msra.mxu0 0
  %1110 = vmatpush.bf16.msra.mxu0 0
  %1111 = vmatpush.bf16.msra.mxu0 0
  %1112 = vmatpush.bf16.msra.mxu0 %v1103
  %1113 = vmatmul.bf16.gmra.mxu0 %v1009
  %v1114 = vpop.f32.mrf.mxu0
  %v1115 = vadd.f32 %v1005, %v1114
  %v1116 = vpop.f32.mrf.mxu0
  %1117 = vdwg.mxu0
  %v1118 = vpack.c.bf16 %v1115, %v1115
  %v1120 = vsel %vm398, %v1118, 0
  %1122 = vmatpush.bf16.msra.mxu0 0
  %1123 = vmatpush.bf16.msra.mxu0 0
  %1124 = vmatpush.bf16.msra.mxu0 0
  %1125 = vmatpush.bf16.msra.mxu0 0
  %1126 = vmatpush.bf16.msra.mxu0 0
  %1127 = vmatpush.bf16.msra.mxu0 %v1046
  %1128 = vmatpush.bf16.msra.mxu0 %v1045
  %1129 = vmatpush.bf16.msra.mxu0 %v1044
  %1130 = vmatmul.bf16.gmra.mxu0 %v1120
  %v1131 = vpop.f32.mrf.mxu0
  %v1132 = vadd.f32 %v1030, %v1131
  %v1133 = vpop.f32.mrf.mxu0
  %1134 = vdwg.mxu0
  %1136 = vrot.lane.b32.xlu0 %v1118, 96
  %v1137 = vpop.permute.xlu0 %1136
  %v1139 = vsel %vm428, %v1137, 0
  %1141 = vmatpush.bf16.msra.mxu0 0
  %1142 = vmatpush.bf16.msra.mxu0 0
  %1143 = vmatpush.bf16.msra.mxu0 0
  %1144 = vmatpush.bf16.msra.mxu0 0
  %1145 = vmatpush.bf16.msra.mxu0 0
  %1146 = vmatpush.bf16.msra.mxu0 0
  %1147 = vmatpush.bf16.msra.mxu0 0
  %1148 = vmatpush.bf16.msra.mxu0 %v1076
  %1149 = vmatmul.bf16.gmra.mxu0 %v1139
  %v1150 = vpop.f32.mrf.mxu0
  %v1151 = vadd.f32 %v1067, %v1150
  %v1152 = vpop.f32.mrf.mxu0
  %1153 = vdwg.mxu0
  %1154 = vst [vmem:[#allocation1] ss:$4 sm:$0xff] %v979
  %s1155 = scalar_lea.vmem [#allocation1], 1
  %1156 = vst [vmem:[%s1155] ss:$4 sm:$0xff] %v980
  %s1157 = scalar_lea.vmem [#allocation1], 2
  %1158 = vst [vmem:[%s1157] ss:$4 sm:$0xff] %v969
  %v1159 = vld.sshfl [vmem:[#allocation1] sm:$0xff pattern:$0x73625140]
  %v1161 = vpack.c.bf16 %v1159, %v1159
  %v1163 = vsel %vm1011, %v1161, 0
  %1165 = vmatpush.bf16.msra.mxu0 0
  %1166 = vmatpush.bf16.msra.mxu0 0
  %1167 = vmatpush.bf16.msra.mxu0 0
  %1168 = vmatpush.bf16.msra.mxu0 0
  %1169 = vmatpush.bf16.msra.mxu0 0
  %1170 = vmatpush.bf16.msra.mxu0 0
  %1171 = vmatpush.bf16.msra.mxu0 0
  %1172 = vmatpush.bf16.msra.mxu0 %v1163
  %1173 = vmatmul.bf16.gmra.mxu0 %v1009
  %v1174 = vpop.f32.mrf.mxu0
  %v1175 = vadd.f32 %v1005, %v1174
  %v1176 = vpop.f32.mrf.mxu0
  %1177 = vdwg.mxu0
  %v1178 = vpack.c.bf16 %v1175, %v1175
  %v1180 = vsel %vm398, %v1178, 0
  %1182 = vmatpush.bf16.msra.mxu0 0
  %1183 = vmatpush.bf16.msra.mxu0 0
  %1184 = vmatpush.bf16.msra.mxu0 0
  %1185 = vmatpush.bf16.msra.mxu0 0
  %1186 = vmatpush.bf16.msra.mxu0 0
  %1187 = vmatpush.bf16.msra.mxu0 %v1046
  %1188 = vmatpush.bf16.msra.mxu0 %v1045
  %1189 = vmatpush.bf16.msra.mxu0 %v1044
  %1190 = vmatmul.bf16.gmra.mxu0 %v1180
  %v1191 = vpop.f32.mrf.mxu0
  %v1192 = vadd.f32 %v1030, %v1191
  %v1193 = vpop.f32.mrf.mxu0
  %1194 = vdwg.mxu0
  %1196 = vrot.lane.b32.xlu0 %v1178, 96
  %v1197 = vpop.permute.xlu0 %1196
  %v1199 = vsel %vm428, %v1197, 0
  %1201 = vmatpush.bf16.msra.mxu0 0
  %1202 = vmatpush.bf16.msra.mxu0 0
  %1203 = vmatpush.bf16.msra.mxu0 0
  %1204 = vmatpush.bf16.msra.mxu0 0
  %1205 = vmatpush.bf16.msra.mxu0 0
  %1206 = vmatpush.bf16.msra.mxu0 0
  %1207 = vmatpush.bf16.msra.mxu0 0
  %1208 = vmatpush.bf16.msra.mxu0 %v1076
  %1209 = vmatmul.bf16.gmra.mxu0 %v1199
  %v1210 = vpop.f32.mrf.mxu0
  %v1211 = vadd.f32 %v1067, %v1210
  %v1212 = vpop.f32.mrf.mxu0
  %1213 = vdwg.mxu0
  %v1216 = vunpack.c.l.b16 %v988
  %v1217 = vunpack.c.l.b16 %v989
  %v1218 = vpack.c.b16 %v1217, %v1216
  %1220 = vmatpush.bf16.msra.mxu0 0
  %1221 = vmatpush.bf16.msra.mxu0 0
  %1222 = vmatpush.bf16.msra.mxu0 0
  %1223 = vmatpush.bf16.msra.mxu0 0
  %1224 = vmatpush.bf16.msra.mxu0 0
  %1225 = vmatpush.bf16.msra.mxu0 0
  %1226 = vmatpush.bf16.msra.mxu0 0
  %1227 = vmatpush.bf16.msra.mxu0 %v1218
  %1228 = vmatmul.bf16.gmra.mxu0 %v591
  %v1229 = vpop.f32.mrf.mxu0
  %v1230 = vadd.f32 0.0, %v1229
  %v1231 = vpop.f32.mrf.mxu0
  %1232 = vdwg.mxu0
  %v1233 = vadd.f32 %v1063, %v1230
  %v1234 = vxor.u32 %v1233, 2147483648
  %v1235 = vmul.f32 %v1234, 1.442695
  %v1236 = vpow.pop %v1235
  %v1237 = vadd.f32 %v1236, 1.0
  %v1238 = vrcp.pop %v1237
  %v1239 = vmul.f32 %v1237, %v1238
  %v1240 = vsub.f32 1.0, %v1239
  %v1241 = vmul.f32 %v1238, %v1240
  %v1242 = vadd.f32 %v1238, %v1241
  %vm1243 = vweird.f32 %v1237
  %vm1244 = vweird.f32 %v1238
  %vm1245 = vmor %vm1243, %vm1244
  %v1246 = vsel %vm1245, %v1238, %v1242
  %v1247 = vand.u32 2147483647, %v1237
  %vm1248 = vcmp.eq.f32.partialorder %v1247, 8.507059e+37
  %v1249 = vand.u32 %v1237, 2147483648
  %v1250 = vor.u32 1.1754944e-38, %v1249
  %v1251 = vsel %vm1248, %v1250, %v1246
  %v1252 = vmul.f32 1.0, %v1251
  %v1253 = vmul.f32 %v1252, 0.0
  %v1254 = vpack.c.bf16 %v1253, %v1253
  %1256 = vrot.lane.b32.xlu0 %v1254, 112
  %v1257 = vpop.permute.xlu0 %1256
  %v1260 = vunpack.c.l.b16 %v993
  %v1261 = vunpack.c.l.b16 %v994
  %v1262 = vpack.c.b16 %v1261, %v1260
  %v1265 = vsel %vm428, %v1257, 0
  %1267 = vmatpush.bf16.msra.mxu0 0
  %1268 = vmatpush.bf16.msra.mxu0 0
  %1269 = vmatpush.bf16.msra.mxu0 0
  %1270 = vmatpush.bf16.msra.mxu0 0
  %1271 = vmatpush.bf16.msra.mxu0 0
  %1272 = vmatpush.bf16.msra.mxu0 0
  %1273 = vmatpush.bf16.msra.mxu0 0
  %1274 = vmatpush.bf16.msra.mxu0 %v1262
  %1275 = vmatmul.bf16.gmra.mxu0 %v1265
  %v1276 = vpop.f32.mrf.mxu0
  %v1277 = vadd.f32 0.0, %v1276
  %v1278 = vpop.f32.mrf.mxu0
  %1279 = vdwg.mxu0
  %v1280 = vadd.f32 %v1091, %v1277
  %v1281 = vtanh.pop %v1280
  %v1282 = vsub.f32 1.0, %v1252
  %v1283 = vmul.f32 %v1282, %v1281
  %v1284 = vadd.f32 %v1253, %v1283
  %v1285 = vpack.c.bf16 %v1284, %v1284
  %v1287 = vsel %vm428, %v1285, 0
  %1289 = vmatpush.bf16.msra.mxu0 0
  %1290 = vmatpush.bf16.msra.mxu0 0
  %1291 = vmatpush.bf16.msra.mxu0 0
  %1292 = vmatpush.bf16.msra.mxu0 0
  %1293 = vmatpush.bf16.msra.mxu0 0
  %1294 = vmatpush.bf16.msra.mxu0 0
  %1295 = vmatpush.bf16.msra.mxu0 0
  %1296 = vmatpush.bf16.msra.mxu0 %v1218
  %1297 = vmatmul.bf16.gmra.mxu0 %v1287
  %v1298 = vpop.f32.mrf.mxu0
  %v1299 = vadd.f32 0.0, %v1298
  %v1300 = vpop.f32.mrf.mxu0
  %1301 = vdwg.mxu0
  %v1302 = vadd.f32 %v1132, %v1299
  %v1303 = vxor.u32 %v1302, 2147483648
  %v1304 = vmul.f32 %v1303, 1.442695
  %v1305 = vpow.pop %v1304
  %v1306 = vadd.f32 %v1305, 1.0
  %v1307 = vrcp.pop %v1306
  %v1308 = vmul.f32 %v1306, %v1307
  %v1309 = vsub.f32 1.0, %v1308
  %v1310 = vmul.f32 %v1307, %v1309
  %v1311 = vadd.f32 %v1307, %v1310
  %vm1312 = vweird.f32 %v1306
  %vm1313 = vweird.f32 %v1307
  %vm1314 = vmor %vm1312, %vm1313
  %v1315 = vsel %vm1314, %v1307, %v1311
  %v1316 = vand.u32 2147483647, %v1306
  %vm1317 = vcmp.eq.f32.partialorder %v1316, 8.507059e+37
  %v1318 = vand.u32 %v1306, 2147483648
  %v1319 = vor.u32 1.1754944e-38, %v1318
  %v1320 = vsel %vm1317, %v1319, %v1315
  %v1321 = vmul.f32 1.0, %v1320
  %1323 = vrot.lane.b32.xlu0 %v1321, 112
  %v1324 = vpop.permute.xlu0 %1323
  %v1326 = vmul.f32 %v1284, %v1324
  %v1327 = vpack.c.bf16 %v1326, %v1326
  %v1329 = vsel %vm428, %v1327, 0
  %1331 = vmatpush.bf16.msra.mxu0 0
  %1332 = vmatpush.bf16.msra.mxu0 0
  %1333 = vmatpush.bf16.msra.mxu0 0
  %1334 = vmatpush.bf16.msra.mxu0 0
  %1335 = vmatpush.bf16.msra.mxu0 0
  %1336 = vmatpush.bf16.msra.mxu0 0
  %1337 = vmatpush.bf16.msra.mxu0 0
  %1338 = vmatpush.bf16.msra.mxu0 %v1262
  %1339 = vmatmul.bf16.gmra.mxu0 %v1329
  %v1340 = vpop.f32.mrf.mxu0
  %v1341 = vadd.f32 0.0, %v1340
  %v1342 = vpop.f32.mrf.mxu0
  %1343 = vdwg.mxu0
  %v1344 = vadd.f32 %v1151, %v1341
  %v1345 = vtanh.pop %v1344
  %v1346 = vmul.f32 %v1321, %v1284
  %v1347 = vsub.f32 1.0, %v1321
  %v1348 = vmul.f32 %v1347, %v1345
  %v1349 = vadd.f32 %v1346, %v1348
  %v1350 = vpack.c.bf16 %v1349, %v1349
  %v1352 = vsel %vm428, %v1350, 0
  %1354 = vmatpush.bf16.msra.mxu0 0
  %1355 = vmatpush.bf16.msra.mxu0 0
  %1356 = vmatpush.bf16.msra.mxu0 0
  %1357 = vmatpush.bf16.msra.mxu0 0
  %1358 = vmatpush.bf16.msra.mxu0 0
  %1359 = vmatpush.bf16.msra.mxu0 0
  %1360 = vmatpush.bf16.msra.mxu0 0
  %1361 = vmatpush.bf16.msra.mxu0 %v1218
  %1362 = vmatmul.bf16.gmra.mxu0 %v1352
  %v1363 = vpop.f32.mrf.mxu0
  %v1364 = vadd.f32 0.0, %v1363
  %v1365 = vpop.f32.mrf.mxu0
  %1366 = vdwg.mxu0
  %v1367 = vadd.f32 %v1192, %v1364
  %v1368 = vxor.u32 %v1367, 2147483648
  %v1369 = vmul.f32 %v1368, 1.442695
  %v1370 = vpow.pop %v1369
  %v1371 = vadd.f32 %v1370, 1.0
  %v1372 = vrcp.pop %v1371
  %v1373 = vmul.f32 %v1371, %v1372
  %v1374 = vsub.f32 1.0, %v1373
  %v1375 = vmul.f32 %v1372, %v1374
  %v1376 = vadd.f32 %v1372, %v1375
  %vm1377 = vweird.f32 %v1371
  %vm1378 = vweird.f32 %v1372
  %vm1379 = vmor %vm1377, %vm1378
  %v1380 = vsel %vm1379, %v1372, %v1376
  %v1381 = vand.u32 2147483647, %v1371
  %vm1382 = vcmp.eq.f32.partialorder %v1381, 8.507059e+37
  %v1383 = vand.u32 %v1371, 2147483648
  %v1384 = vor.u32 1.1754944e-38, %v1383
  %v1385 = vsel %vm1382, %v1384, %v1380
  %v1386 = vmul.f32 1.0, %v1385
  %1388 = vrot.lane.b32.xlu0 %v1386, 112
  %v1389 = vpop.permute.xlu0 %1388
  %v1391 = vmul.f32 %v1349, %v1389
  %v1392 = vpack.c.bf16 %v1391, %v1391
  %v1394 = vsel %vm428, %v1392, 0
  %1396 = vmatpush.bf16.msra.mxu0 0
  %1397 = vmatpush.bf16.msra.mxu0 0
  %1398 = vmatpush.bf16.msra.mxu0 0
  %1399 = vmatpush.bf16.msra.mxu0 0
  %1400 = vmatpush.bf16.msra.mxu0 0
  %1401 = vmatpush.bf16.msra.mxu0 0
  %1402 = vmatpush.bf16.msra.mxu0 0
  %1403 = vmatpush.bf16.msra.mxu0 %v1262
  %1404 = vmatmul.bf16.gmra.mxu0 %v1394
  %v1405 = vpop.f32.mrf.mxu0
  %v1406 = vadd.f32 0.0, %v1405
  %v1407 = vpop.f32.mrf.mxu0
  %1408 = vdwg.mxu0
  %v1409 = vadd.f32 %v1211, %v1406
  %v1410 = vtanh.pop %v1409
  %v1411 = vmul.f32 %v1386, %v1349
  %v1412 = vsub.f32 1.0, %v1386
  %v1413 = vmul.f32 %v1412, %v1410
  %v1414 = vadd.f32 %v1411, %v1413
  %v1416 = vrot.slane %v1414, 3
  %v1420 = vrot.slane %v880, 5
  %v1421 = vrot.slane %v881, 5
  %v1422 = vsel %vm1011, %v1420, %v1421
  %v1424 = vrot.slane %v1414, 6
  %v1426 = vsel %vm358, %v880, %v1416
  %v1427 = vsel %vm358, %v1422, %v1424
  %v1428 = vld [vmem:[%s41] sm:$0xff]
  %v1429 = vld [vmem:[%s41 + $0x8] sm:$0xff]
  %v1430 = vadd.f32 %v1426, %v1428
  %v1431 = vadd.f32 %v1427, %v1429
  %v1432 = vld [vmem:[%s57] sm:$0x1]
  %v1434 = vperm.slane %v1432, 0
  %v1436 = vadd.f32 %v1434, 0.0
  %v1437 = vld [vmem:[%s43] sm:$0xf]
  %v1438 = vld [vmem:[%s43 + $0x4] sm:$0xf]
  %v1439 = vpack.c.bf16 %v1431, %v1430
  %v1440 = vld [vmem:[%s49] sm:$0x1]
  %v1442 = vperm.slane %v1440, 0
  %v1446 = vunpack.c.l.b16 %v1437
  %v1447 = vunpack.c.l.b16 %v1438
  %v1448 = vpack.c.b16 %v1447, %v1446
  %v1451 = vsel %vm428, %v1439, 0
  %1453 = vmatpush.bf16.msra.mxu0 0
  %1454 = vmatpush.bf16.msra.mxu0 0
  %1455 = vmatpush.bf16.msra.mxu0 0
  %1456 = vmatpush.bf16.msra.mxu0 0
  %1457 = vmatpush.bf16.msra.mxu0 0
  %1458 = vmatpush.bf16.msra.mxu0 0
  %1459 = vmatpush.bf16.msra.mxu0 0
  %1460 = vmatpush.bf16.msra.mxu0 %v1448
  %1461 = vmatmul.bf16.gmra.mxu0 %v1451
  %v1462 = vpop.f32.mrf.mxu0
  %v1463 = vadd.f32 %v1442, %v1462
  %v1464 = vpop.f32.mrf.mxu0
  %v1465 = vadd.f32 %v1442, %v1464
  %1466 = vdwg.mxu0
  %v1467 = vld [vmem:[%s45] sm:$0xf]
  %v1468 = vld [vmem:[%s45 + $0x4] sm:$0xf]
  %v1469 = vld [vmem:[%s51] sm:$0x1]
  %v1471 = vperm.slane %v1469, 0
  %v1475 = vunpack.c.l.b16 %v1467
  %v1476 = vunpack.c.l.b16 %v1468
  %v1477 = vpack.c.b16 %v1476, %v1475
  %1479 = vmatpush.bf16.msra.mxu0 0
  %1480 = vmatpush.bf16.msra.mxu0 0
  %1481 = vmatpush.bf16.msra.mxu0 0
  %1482 = vmatpush.bf16.msra.mxu0 0
  %1483 = vmatpush.bf16.msra.mxu0 0
  %1484 = vmatpush.bf16.msra.mxu0 0
  %1485 = vmatpush.bf16.msra.mxu0 0
  %1486 = vmatpush.bf16.msra.mxu0 %v1477
  %1487 = vmatmul.bf16.gmra.mxu0 %v1451
  %v1488 = vpop.f32.mrf.mxu0
  %v1489 = vadd.f32 %v1471, %v1488
  %v1490 = vpop.f32.mrf.mxu0
  %v1491 = vadd.f32 %v1471, %v1490
  %1492 = vdwg.mxu0
  %v1493 = vld [vmem:[%s47] sm:$0xf]
  %v1494 = vld [vmem:[%s47 + $0x4] sm:$0xf]
  %v1495 = vld [vmem:[%s53] sm:$0x1]
  %v1497 = vperm.slane %v1495, 0
  %v1501 = vunpack.c.l.b16 %v1493
  %v1502 = vunpack.c.l.b16 %v1494
  %v1503 = vpack.c.b16 %v1502, %v1501
  %1505 = vmatpush.bf16.msra.mxu0 0
  %1506 = vmatpush.bf16.msra.mxu0 0
  %1507 = vmatpush.bf16.msra.mxu0 0
  %1508 = vmatpush.bf16.msra.mxu0 0
  %1509 = vmatpush.bf16.msra.mxu0 0
  %1510 = vmatpush.bf16.msra.mxu0 0
  %1511 = vmatpush.bf16.msra.mxu0 0
  %1512 = vmatpush.bf16.msra.mxu0 %v1503
  %1513 = vmatmul.bf16.gmra.mxu0 %v1451
  %v1514 = vpop.f32.mrf.mxu0
  %v1515 = vadd.f32 %v1497, %v1514
  %v1516 = vpop.f32.mrf.mxu0
  %v1517 = vadd.f32 %v1497, %v1516
  %1518 = vdwg.mxu0
  %v1519 = vpack.c.bf16 %v1463, %v1463
  %v1520 = vpack.c.bf16 %v1489, %v1489
  %v1522 = vsel %vm274, %v1519, 0
  %v1525 = vsel %vm274, %v1520, 0
  %1527 = vmatpush.bf16.xpose.msra.mxu0 0
  %1528 = vmatpush.bf16.xpose.msra.mxu0 0
  %1529 = vmatpush.bf16.xpose.msra.mxu0 0
  %1530 = vmatpush.bf16.xpose.msra.mxu0 0
  %1531 = vmatpush.bf16.xpose.msra.mxu0 0
  %1532 = vmatpush.bf16.xpose.msra.mxu0 0
  %1533 = vmatpush.bf16.xpose.msra.mxu0 0
  %1534 = vmatpush.bf16.xpose.msra.mxu0 %v1525
  %1535 = vmatmul.bf16.gmra.mxu0 %v1522
  %v1536 = vpop.f32.mrf.mxu0
  %v1537 = vadd.f32 0.0, %v1536
  %v1538 = vpop.f32.mrf.mxu0
  %1539 = vdwg.mxu0
  %v1540 = vmul.f32 %v1537, 0.5
  %vm1541 = vcmask 64512
  %v1542 = vsel %vm1541, %v1540, -inf
  %1543 = vmax.xlane.f32.xlu0 %v1542
  %v1544 = vpop.xlane.xlu0 %1543
  %v1545 = vsub.f32 %v1540, %v1544
  %v1546 = vmul.f32 %v1545, 1.442695
  %v1547 = vpow.pop %v1546
  %v1548 = vsel %vm1541, %v1547, 0.0
  %1549 = vadd.xlane.f32.xlu0 %v1548
  %v1550 = vpop.xlane.xlu0 %1549
  %v1551 = vrcp.pop %v1550
  %v1552 = vmul.f32 %v1547, %v1551
  %v1553 = vpack.c.bf16 %v1552, %v1552
  %v1554 = vpack.c.bf16 %v1515, %v1515
  %v1556 = vsel %vm1541, %v1553, 0
  %vm1558 = vcmask 1043456
  %v1560 = vsel %vm1558, %v1554, 0
  %1562 = vmatpush.bf16.msra.mxu0 0
  %1563 = vmatpush.bf16.msra.mxu0 0
  %1564 = vmatpush.bf16.msra.mxu0 0
  %1565 = vmatpush.bf16.msra.mxu0 0
  %1566 = vmatpush.bf16.msra.mxu0 0
  %1567 = vmatpush.bf16.msra.mxu0 0
  %1568 = vmatpush.bf16.msra.mxu0 0
  %1569 = vmatpush.bf16.msra.mxu0 %v1560
  %1570 = vmatmul.bf16.gmra.mxu0 %v1556
  %v1571 = vpop.f32.mrf.mxu0
  %v1572 = vadd.f32 0.0, %v1571
  %v1573 = vpop.f32.mrf.mxu0
  %1574 = vdwg.mxu0
  %v1575 = vpack.c.bf16 %v1465, %v1465
  %v1576 = vpack.c.bf16 %v1491, %v1491
  %v1578 = vsel %vm274, %v1575, 0
  %v1581 = vsel %vm274, %v1576, 0
  %1583 = vmatpush.bf16.xpose.msra.mxu0 0
  %1584 = vmatpush.bf16.xpose.msra.mxu0 0
  %1585 = vmatpush.bf16.xpose.msra.mxu0 0
  %1586 = vmatpush.bf16.xpose.msra.mxu0 0
  %1587 = vmatpush.bf16.xpose.msra.mxu0 0
  %1588 = vmatpush.bf16.xpose.msra.mxu0 0
  %1589 = vmatpush.bf16.xpose.msra.mxu0 0
  %1590 = vmatpush.bf16.xpose.msra.mxu0 %v1581
  %1591 = vmatmul.bf16.gmra.mxu0 %v1578
  %v1592 = vpop.f32.mrf.mxu0
  %v1593 = vadd.f32 0.0, %v1592
  %v1594 = vpop.f32.mrf.mxu0
  %1595 = vdwg.mxu0
  %v1596 = vmul.f32 %v1593, 0.5
  %v1597 = vsel %vm1541, %v1596, -inf
  %1598 = vmax.xlane.f32.xlu0 %v1597
  %v1599 = vpop.xlane.xlu0 %1598
  %v1600 = vsub.f32 %v1596, %v1599
  %v1601 = vmul.f32 %v1600, 1.442695
  %v1602 = vpow.pop %v1601
  %v1603 = vsel %vm1541, %v1602, 0.0
  %1604 = vadd.xlane.f32.xlu0 %v1603
  %v1605 = vpop.xlane.xlu0 %1604
  %v1606 = vrcp.pop %v1605
  %v1607 = vmul.f32 %v1602, %v1606
  %v1608 = vpack.c.bf16 %v1607, %v1607
  %v1609 = vpack.c.bf16 %v1517, %v1517
  %v1611 = vsel %vm1541, %v1608, 0
  %v1614 = vsel %vm1558, %v1609, 0
  %1616 = vmatpush.bf16.msra.mxu0 0
  %1617 = vmatpush.bf16.msra.mxu0 0
  %1618 = vmatpush.bf16.msra.mxu0 0
  %1619 = vmatpush.bf16.msra.mxu0 0
  %1620 = vmatpush.bf16.msra.mxu0 0
  %1621 = vmatpush.bf16.msra.mxu0 0
  %1622 = vmatpush.bf16.msra.mxu0 0
  %1623 = vmatpush.bf16.msra.mxu0 %v1614
  %1624 = vmatmul.bf16.gmra.mxu0 %v1611
  %v1625 = vpop.f32.mrf.mxu0
  %v1626 = vadd.f32 0.0, %v1625
  %v1627 = vpop.f32.mrf.mxu0
  %1628 = vdwg.mxu0
  %v1629 = vld [vmem:[%s55] sm:$0x3]
  %v1630 = vpack.c.bf16 %v1626, %v1572
  %v1632 = vsel %vm274, %v1630, 0
  %v1635 = vsel %vm279, %v1629, 0
  %1637 = vmatpush.bf16.msra.mxu0 0
  %1638 = vmatpush.bf16.msra.mxu0 0
  %1639 = vmatpush.bf16.msra.mxu0 0
  %1640 = vmatpush.bf16.msra.mxu0 0
  %1641 = vmatpush.bf16.msra.mxu0 0
  %1642 = vmatpush.bf16.msra.mxu0 0
  %1643 = vmatpush.bf16.msra.mxu0 0
  %1644 = vmatpush.bf16.msra.mxu0 %v1635
  %1645 = vmatmul.bf16.gmra.mxu0 %v1632
  %v1646 = vpop.f32.mrf.mxu0
  %v1647 = vadd.f32 0.0, %v1646
  %v1648 = vpop.f32.mrf.mxu0
  %v1649 = vadd.f32 0.0, %v1648
  %1650 = vdwg.mxu0
  %v1651 = vadd.f32 %v1436, %v1647
  %v1652 = vadd.f32 %v1436, %v1649
  %s1653 = scalar_lea.vmem %s43, 8
  %v1654 = vld [vmem:[%s1653] sm:$0xf]
  %v1655 = vld [vmem:[%s1653 + $0x4] sm:$0xf]
  %s1656 = scalar_lea.vmem %s49, 1
  %v1657 = vld [vmem:[%s1656] sm:$0x1]
  %v1659 = vperm.slane %v1657, 0
  %v1663 = vunpack.c.l.b16 %v1654
  %v1664 = vunpack.c.l.b16 %v1655
  %v1665 = vpack.c.b16 %v1664, %v1663
  %1667 = vmatpush.bf16.msra.mxu0 0
  %1668 = vmatpush.bf16.msra.mxu0 0
  %1669 = vmatpush.bf16.msra.mxu0 0
  %1670 = vmatpush.bf16.msra.mxu0 0
  %1671 = vmatpush.bf16.msra.mxu0 0
  %1672 = vmatpush.bf16.msra.mxu0 0
  %1673 = vmatpush.bf16.msra.mxu0 0
  %1674 = vmatpush.bf16.msra.mxu0 %v1665
  %1675 = vmatmul.bf16.gmra.mxu0 %v1451
  %v1676 = vpop.f32.mrf.mxu0
  %v1677 = vadd.f32 %v1659, %v1676
  %v1678 = vpop.f32.mrf.mxu0
  %v1679 = vadd.f32 %v1659, %v1678
  %1680 = vdwg.mxu0
  %s1681 = scalar_lea.vmem %s45, 8
  %v1682 = vld [vmem:[%s1681] sm:$0xf]
  %v1683 = vld [vmem:[%s1681 + $0x4] sm:$0xf]
  %s1684 = scalar_lea.vmem %s51, 1
  %v1685 = vld [vmem:[%s1684] sm:$0x1]
  %v1687 = vperm.slane %v1685, 0
  %v1691 = vunpack.c.l.b16 %v1682
  %v1692 = vunpack.c.l.b16 %v1683
  %v1693 = vpack.c.b16 %v1692, %v1691
  %1695 = vmatpush.bf16.msra.mxu0 0
  %1696 = vmatpush.bf16.msra.mxu0 0
  %1697 = vmatpush.bf16.msra.mxu0 0
  %1698 = vmatpush.bf16.msra.mxu0 0
  %1699 = vmatpush.bf16.msra.mxu0 0
  %1700 = vmatpush.bf16.msra.mxu0 0
  %1701 = vmatpush.bf16.msra.mxu0 0
  %1702 = vmatpush.bf16.msra.mxu0 %v1693
  %1703 = vmatmul.bf16.gmra.mxu0 %v1451
  %v1704 = vpop.f32.mrf.mxu0
  %v1705 = vadd.f32 %v1687, %v1704
  %v1706 = vpop.f32.mrf.mxu0
  %v1707 = vadd.f32 %v1687, %v1706
  %1708 = vdwg.mxu0
  %s1709 = scalar_lea.vmem %s47, 8
  %v1710 = vld [vmem:[%s1709] sm:$0xf]
  %v1711 = vld [vmem:[%s1709 + $0x4] sm:$0xf]
  %s1712 = scalar_lea.vmem %s53, 1
  %v1713 = vld [vmem:[%s1712] sm:$0x1]
  %v1715 = vperm.slane %v1713, 0
  %v1719 = vunpack.c.l.b16 %v1710
  %v1720 = vunpack.c.l.b16 %v1711
  %v1721 = vpack.c.b16 %v1720, %v1719
  %1723 = vmatpush.bf16.msra.mxu0 0
  %1724 = vmatpush.bf16.msra.mxu0 0
  %1725 = vmatpush.bf16.msra.mxu0 0
  %1726 = vmatpush.bf16.msra.mxu0 0
  %1727 = vmatpush.bf16.msra.mxu0 0
  %1728 = vmatpush.bf16.msra.mxu0 0
  %1729 = vmatpush.bf16.msra.mxu0 0
  %1730 = vmatpush.bf16.msra.mxu0 %v1721
  %1731 = vmatmul.bf16.gmra.mxu0 %v1451
  %v1732 = vpop.f32.mrf.mxu0
  %v1733 = vadd.f32 %v1715, %v1732
  %v1734 = vpop.f32.mrf.mxu0
  %v1735 = vadd.f32 %v1715, %v1734
  %1736 = vdwg.mxu0
  %v1737 = vpack.c.bf16 %v1677, %v1677
  %v1738 = vpack.c.bf16 %v1705, %v1705
  %v1740 = vsel %vm274, %v1737, 0
  %v1743 = vsel %vm274, %v1738, 0
  %1745 = vmatpush.bf16.xpose.msra.mxu0 0
  %1746 = vmatpush.bf16.xpose.msra.mxu0 0
  %1747 = vmatpush.bf16.xpose.msra.mxu0 0
  %1748 = vmatpush.bf16.xpose.msra.mxu0 0
  %1749 = vmatpush.bf16.xpose.msra.mxu0 0
  %1750 = vmatpush.bf16.xpose.msra.mxu0 0
  %1751 = vmatpush.bf16.xpose.msra.mxu0 0
  %1752 = vmatpush.bf16.xpose.msra.mxu0 %v1743
  %1753 = vmatmul.bf16.gmra.mxu0 %v1740
  %v1754 = vpop.f32.mrf.mxu0
  %v1755 = vadd.f32 0.0, %v1754
  %v1756 = vpop.f32.mrf.mxu0
  %1757 = vdwg.mxu0
  %v1758 = vmul.f32 %v1755, 0.5
  %v1759 = vsel %vm1541, %v1758, -inf
  %1760 = vmax.xlane.f32.xlu0 %v1759
  %v1761 = vpop.xlane.xlu0 %1760
  %v1762 = vsub.f32 %v1758, %v1761
  %v1763 = vmul.f32 %v1762, 1.442695
  %v1764 = vpow.pop %v1763
  %v1765 = vsel %vm1541, %v1764, 0.0
  %1766 = vadd.xlane.f32.xlu0 %v1765
  %v1767 = vpop.xlane.xlu0 %1766
  %v1768 = vrcp.pop %v1767
  %v1769 = vmul.f32 %v1764, %v1768
  %v1770 = vpack.c.bf16 %v1769, %v1769
  %v1771 = vpack.c.bf16 %v1733, %v1733
  %v1773 = vsel %vm1541, %v1770, 0
  %v1776 = vsel %vm1558, %v1771, 0
  %1778 = vmatpush.bf16.msra.mxu0 0
  %1779 = vmatpush.bf16.msra.mxu0 0
  %1780 = vmatpush.bf16.msra.mxu0 0
  %1781 = vmatpush.bf16.msra.mxu0 0
  %1782 = vmatpush.bf16.msra.mxu0 0
  %1783 = vmatpush.bf16.msra.mxu0 0
  %1784 = vmatpush.bf16.msra.mxu0 0
  %1785 = vmatpush.bf16.msra.mxu0 %v1776
  %1786 = vmatmul.bf16.gmra.mxu0 %v1773
  %v1787 = vpop.f32.mrf.mxu0
  %v1788 = vadd.f32 0.0, %v1787
  %v1789 = vpop.f32.mrf.mxu0
  %1790 = vdwg.mxu0
  %v1791 = vpack.c.bf16 %v1679, %v1679
  %v1792 = vpack.c.bf16 %v1707, %v1707
  %v1794 = vsel %vm274, %v1791, 0
  %v1797 = vsel %vm274, %v1792, 0
  %1799 = vmatpush.bf16.xpose.msra.mxu0 0
  %1800 = vmatpush.bf16.xpose.msra.mxu0 0
  %1801 = vmatpush.bf16.xpose.msra.mxu0 0
  %1802 = vmatpush.bf16.xpose.msra.mxu0 0
  %1803 = vmatpush.bf16.xpose.msra.mxu0 0
  %1804 = vmatpush.bf16.xpose.msra.mxu0 0
  %1805 = vmatpush.bf16.xpose.msra.mxu0 0
  %1806 = vmatpush.bf16.xpose.msra.mxu0 %v1797
  %1807 = vmatmul.bf16.gmra.mxu0 %v1794
  %v1808 = vpop.f32.mrf.mxu0
  %v1809 = vadd.f32 0.0, %v1808
  %v1810 = vpop.f32.mrf.mxu0
  %1811 = vdwg.mxu0
  %v1812 = vmul.f32 %v1809, 0.5
  %v1813 = vsel %vm1541, %v1812, -inf
  %1814 = vmax.xlane.f32.xlu0 %v1813
  %v1815 = vpop.xlane.xlu0 %1814
  %v1816 = vsub.f32 %v1812, %v1815
  %v1817 = vmul.f32 %v1816, 1.442695
  %v1818 = vpow.pop %v1817
  %v1819 = vsel %vm1541, %v1818, 0.0
  %1820 = vadd.xlane.f32.xlu0 %v1819
  %v1821 = vpop.xlane.xlu0 %1820
  %v1822 = vrcp.pop %v1821
  %v1823 = vmul.f32 %v1818, %v1822
  %v1824 = vpack.c.bf16 %v1823, %v1823
  %v1825 = vpack.c.bf16 %v1735, %v1735
  %v1827 = vsel %vm1541, %v1824, 0
  %v1830 = vsel %vm1558, %v1825, 0
  %1832 = vmatpush.bf16.msra.mxu0 0
  %1833 = vmatpush.bf16.msra.mxu0 0
  %1834 = vmatpush.bf16.msra.mxu0 0
  %1835 = vmatpush.bf16.msra.mxu0 0
  %1836 = vmatpush.bf16.msra.mxu0 0
  %1837 = vmatpush.bf16.msra.mxu0 0
  %1838 = vmatpush.bf16.msra.mxu0 0
  %1839 = vmatpush.bf16.msra.mxu0 %v1830
  %1840 = vmatmul.bf16.gmra.mxu0 %v1827
  %v1841 = vpop.f32.mrf.mxu0
  %v1842 = vadd.f32 0.0, %v1841
  %v1843 = vpop.f32.mrf.mxu0
  %1844 = vdwg.mxu0
  %s1845 = scalar_lea.vmem %s55, 2
  %v1846 = vld [vmem:[%s1845] sm:$0x3]
  %v1847 = vpack.c.bf16 %v1842, %v1788
  %v1849 = vsel %vm274, %v1847, 0
  %v1852 = vsel %vm279, %v1846, 0
  %1854 = vmatpush.bf16.msra.mxu0 0
  %1855 = vmatpush.bf16.msra.mxu0 0
  %1856 = vmatpush.bf16.msra.mxu0 0
  %1857 = vmatpush.bf16.msra.mxu0 0
  %1858 = vmatpush.bf16.msra.mxu0 0
  %1859 = vmatpush.bf16.msra.mxu0 0
  %1860 = vmatpush.bf16.msra.mxu0 0
  %1861 = vmatpush.bf16.msra.mxu0 %v1852
  %1862 = vmatmul.bf16.gmra.mxu0 %v1849
  %v1863 = vpop.f32.mrf.mxu0
  %v1864 = vadd.f32 0.0, %v1863
  %v1865 = vpop.f32.mrf.mxu0
  %v1866 = vadd.f32 0.0, %v1865
  %1867 = vdwg.mxu0
  %v1868 = vadd.f32 %v1651, %v1864
  %v1869 = vadd.f32 %v1652, %v1866
  %s1870 = scalar_lea.vmem %s43, 16
  %v1871 = vld [vmem:[%s1870] sm:$0xf]
  %v1872 = vld [vmem:[%s1870 + $0x4] sm:$0xf]
  %s1873 = scalar_lea.vmem %s49, 2
  %v1874 = vld [vmem:[%s1873] sm:$0x1]
  %v1876 = vperm.slane %v1874, 0
  %v1880 = vunpack.c.l.b16 %v1871
  %v1881 = vunpack.c.l.b16 %v1872
  %v1882 = vpack.c.b16 %v1881, %v1880
  %1884 = vmatpush.bf16.msra.mxu0 0
  %1885 = vmatpush.bf16.msra.mxu0 0
  %1886 = vmatpush.bf16.msra.mxu0 0
  %1887 = vmatpush.bf16.msra.mxu0 0
  %1888 = vmatpush.bf16.msra.mxu0 0
  %1889 = vmatpush.bf16.msra.mxu0 0
  %1890 = vmatpush.bf16.msra.mxu0 0
  %1891 = vmatpush.bf16.msra.mxu0 %v1882
  %1892 = vmatmul.bf16.gmra.mxu0 %v1451
  %v1893 = vpop.f32.mrf.mxu0
  %v1894 = vadd.f32 %v1876, %v1893
  %v1895 = vpop.f32.mrf.mxu0
  %v1896 = vadd.f32 %v1876, %v1895
  %1897 = vdwg.mxu0
  %s1898 = scalar_lea.vmem %s45, 16
  %v1899 = vld [vmem:[%s1898] sm:$0xf]
  %v1900 = vld [vmem:[%s1898 + $0x4] sm:$0xf]
  %s1901 = scalar_lea.vmem %s51, 2
  %v1902 = vld [vmem:[%s1901] sm:$0x1]
  %v1904 = vperm.slane %v1902, 0
  %v1908 = vunpack.c.l.b16 %v1899
  %v1909 = vunpack.c.l.b16 %v1900
  %v1910 = vpack.c.b16 %v1909, %v1908
  %1912 = vmatpush.bf16.msra.mxu0 0
  %1913 = vmatpush.bf16.msra.mxu0 0
  %1914 = vmatpush.bf16.msra.mxu0 0
  %1915 = vmatpush.bf16.msra.mxu0 0
  %1916 = vmatpush.bf16.msra.mxu0 0
  %1917 = vmatpush.bf16.msra.mxu0 0
  %1918 = vmatpush.bf16.msra.mxu0 0
  %1919 = vmatpush.bf16.msra.mxu0 %v1910
  %1920 = vmatmul.bf16.gmra.mxu0 %v1451
  %v1921 = vpop.f32.mrf.mxu0
  %v1922 = vadd.f32 %v1904, %v1921
  %v1923 = vpop.f32.mrf.mxu0
  %v1924 = vadd.f32 %v1904, %v1923
  %1925 = vdwg.mxu0
  %s1926 = scalar_lea.vmem %s47, 16
  %v1927 = vld [vmem:[%s1926] sm:$0xf]
  %v1928 = vld [vmem:[%s1926 + $0x4] sm:$0xf]
  %s1929 = scalar_lea.vmem %s53, 2
  %v1930 = vld [vmem:[%s1929] sm:$0x1]
  %v1932 = vperm.slane %v1930, 0
  %v1936 = vunpack.c.l.b16 %v1927
  %v1937 = vunpack.c.l.b16 %v1928
  %v1938 = vpack.c.b16 %v1937, %v1936
  %1940 = vmatpush.bf16.msra.mxu0 0
  %1941 = vmatpush.bf16.msra.mxu0 0
  %1942 = vmatpush.bf16.msra.mxu0 0
  %1943 = vmatpush.bf16.msra.mxu0 0
  %1944 = vmatpush.bf16.msra.mxu0 0
  %1945 = vmatpush.bf16.msra.mxu0 0
  %1946 = vmatpush.bf16.msra.mxu0 0
  %1947 = vmatpush.bf16.msra.mxu0 %v1938
  %1948 = vmatmul.bf16.gmra.mxu0 %v1451
  %v1949 = vpop.f32.mrf.mxu0
  %v1950 = vadd.f32 %v1932, %v1949
  %v1951 = vpop.f32.mrf.mxu0
  %v1952 = vadd.f32 %v1932, %v1951
  %1953 = vdwg.mxu0
  %v1954 = vpack.c.bf16 %v1894, %v1894
  %v1955 = vpack.c.bf16 %v1922, %v1922
  %v1957 = vsel %vm274, %v1954, 0
  %v1960 = vsel %vm274, %v1955, 0
  %1962 = vmatpush.bf16.xpose.msra.mxu0 0
  %1963 = vmatpush.bf16.xpose.msra.mxu0 0
  %1964 = vmatpush.bf16.xpose.msra.mxu0 0
  %1965 = vmatpush.bf16.xpose.msra.mxu0 0
  %1966 = vmatpush.bf16.xpose.msra.mxu0 0
  %1967 = vmatpush.bf16.xpose.msra.mxu0 0
  %1968 = vmatpush.bf16.xpose.msra.mxu0 0
  %1969 = vmatpush.bf16.xpose.msra.mxu0 %v1960
  %1970 = vmatmul.bf16.gmra.mxu0 %v1957
  %v1971 = vpop.f32.mrf.mxu0
  %v1972 = vadd.f32 0.0, %v1971
  %v1973 = vpop.f32.mrf.mxu0
  %1974 = vdwg.mxu0
  %v1975 = vmul.f32 %v1972, 0.5
  %v1976 = vsel %vm1541, %v1975, -inf
  %1977 = vmax.xlane.f32.xlu0 %v1976
  %v1978 = vpop.xlane.xlu0 %1977
  %v1979 = vsub.f32 %v1975, %v1978
  %v1980 = vmul.f32 %v1979, 1.442695
  %v1981 = vpow.pop %v1980
  %v1982 = vsel %vm1541, %v1981, 0.0
  %1983 = vadd.xlane.f32.xlu0 %v1982
  %v1984 = vpop.xlane.xlu0 %1983
  %v1985 = vrcp.pop %v1984
  %v1986 = vmul.f32 %v1981, %v1985
  %v1987 = vpack.c.bf16 %v1986, %v1986
  %v1988 = vpack.c.bf16 %v1950, %v1950
  %v1990 = vsel %vm1541, %v1987, 0
  %v1993 = vsel %vm1558, %v1988, 0
  %1995 = vmatpush.bf16.msra.mxu0 0
  %1996 = vmatpush.bf16.msra.mxu0 0
  %1997 = vmatpush.bf16.msra.mxu0 0
  %1998 = vmatpush.bf16.msra.mxu0 0
  %1999 = vmatpush.bf16.msra.mxu0 0
  %2000 = vmatpush.bf16.msra.mxu0 0
  %2001 = vmatpush.bf16.msra.mxu0 0
  %2002 = vmatpush.bf16.msra.mxu0 %v1993
  %2003 = vmatmul.bf16.gmra.mxu0 %v1990
  %v2004 = vpop.f32.mrf.mxu0
  %v2005 = vadd.f32 0.0, %v2004
  %v2006 = vpop.f32.mrf.mxu0
  %2007 = vdwg.mxu0
  %v2008 = vpack.c.bf16 %v1896, %v1896
  %v2009 = vpack.c.bf16 %v1924, %v1924
  %v2011 = vsel %vm274, %v2008, 0
  %v2014 = vsel %vm274, %v2009, 0
  %2016 = vmatpush.bf16.xpose.msra.mxu0 0
  %2017 = vmatpush.bf16.xpose.msra.mxu0 0
  %2018 = vmatpush.bf16.xpose.msra.mxu0 0
  %2019 = vmatpush.bf16.xpose.msra.mxu0 0
  %2020 = vmatpush.bf16.xpose.msra.mxu0 0
  %2021 = vmatpush.bf16.xpose.msra.mxu0 0
  %2022 = vmatpush.bf16.xpose.msra.mxu0 0
  %2023 = vmatpush.bf16.xpose.msra.mxu0 %v2014
  %2024 = vmatmul.bf16.gmra.mxu0 %v2011
  %v2025 = vpop.f32.mrf.mxu0
  %v2026 = vadd.f32 0.0, %v2025
  %v2027 = vpop.f32.mrf.mxu0
  %2028 = vdwg.mxu0
  %v2029 = vmul.f32 %v2026, 0.5
  %v2030 = vsel %vm1541, %v2029, -inf
  %2031 = vmax.xlane.f32.xlu0 %v2030
  %v2032 = vpop.xlane.xlu0 %2031
  %v2033 = vsub.f32 %v2029, %v2032
  %v2034 = vmul.f32 %v2033, 1.442695
  %v2035 = vpow.pop %v2034
  %v2036 = vsel %vm1541, %v2035, 0.0
  %2037 = vadd.xlane.f32.xlu0 %v2036
  %v2038 = vpop.xlane.xlu0 %2037
  %v2039 = vrcp.pop %v2038
  %v2040 = vmul.f32 %v2035, %v2039
  %v2041 = vpack.c.bf16 %v2040, %v2040
  %v2042 = vpack.c.bf16 %v1952, %v1952
  %v2044 = vsel %vm1541, %v2041, 0
  %v2047 = vsel %vm1558, %v2042, 0
  %2049 = vmatpush.bf16.msra.mxu0 0
  %2050 = vmatpush.bf16.msra.mxu0 0
  %2051 = vmatpush.bf16.msra.mxu0 0
  %2052 = vmatpush.bf16.msra.mxu0 0
  %2053 = vmatpush.bf16.msra.mxu0 0
  %2054 = vmatpush.bf16.msra.mxu0 0
  %2055 = vmatpush.bf16.msra.mxu0 0
  %2056 = vmatpush.bf16.msra.mxu0 %v2047
  %2057 = vmatmul.bf16.gmra.mxu0 %v2044
  %v2058 = vpop.f32.mrf.mxu0
  %v2059 = vadd.f32 0.0, %v2058
  %v2060 = vpop.f32.mrf.mxu0
  %2061 = vdwg.mxu0
  %s2062 = scalar_lea.vmem %s55, 4
  %v2063 = vld [vmem:[%s2062] sm:$0x3]
  %v2064 = vpack.c.bf16 %v2059, %v2005
  %v2066 = vsel %vm274, %v2064, 0
  %v2069 = vsel %vm279, %v2063, 0
  %2071 = vmatpush.bf16.msra.mxu0 0
  %2072 = vmatpush.bf16.msra.mxu0 0
  %2073 = vmatpush.bf16.msra.mxu0 0
  %2074 = vmatpush.bf16.msra.mxu0 0
  %2075 = vmatpush.bf16.msra.mxu0 0
  %2076 = vmatpush.bf16.msra.mxu0 0
  %2077 = vmatpush.bf16.msra.mxu0 0
  %2078 = vmatpush.bf16.msra.mxu0 %v2069
  %2079 = vmatmul.bf16.gmra.mxu0 %v2066
  %v2080 = vpop.f32.mrf.mxu0
  %v2081 = vadd.f32 0.0, %v2080
  %v2082 = vpop.f32.mrf.mxu0
  %v2083 = vadd.f32 0.0, %v2082
  %2084 = vdwg.mxu0
  %v2085 = vadd.f32 %v1868, %v2081
  %v2086 = vadd.f32 %v1869, %v2083
  %s2087 = scalar_lea.vmem %s43, 24
  %v2088 = vld [vmem:[%s2087] sm:$0xf]
  %v2089 = vld [vmem:[%s2087 + $0x4] sm:$0xf]
  %s2090 = scalar_lea.vmem %s49, 3
  %v2091 = vld [vmem:[%s2090] sm:$0x1]
  %v2093 = vperm.slane %v2091, 0
  %v2097 = vunpack.c.l.b16 %v2088
  %v2098 = vunpack.c.l.b16 %v2089
  %v2099 = vpack.c.b16 %v2098, %v2097
  %2101 = vmatpush.bf16.msra.mxu0 0
  %2102 = vmatpush.bf16.msra.mxu0 0
  %2103 = vmatpush.bf16.msra.mxu0 0
  %2104 = vmatpush.bf16.msra.mxu0 0
  %2105 = vmatpush.bf16.msra.mxu0 0
  %2106 = vmatpush.bf16.msra.mxu0 0
  %2107 = vmatpush.bf16.msra.mxu0 0
  %2108 = vmatpush.bf16.msra.mxu0 %v2099
  %2109 = vmatmul.bf16.gmra.mxu0 %v1451
  %v2110 = vpop.f32.mrf.mxu0
  %v2111 = vadd.f32 %v2093, %v2110
  %v2112 = vpop.f32.mrf.mxu0
  %v2113 = vadd.f32 %v2093, %v2112
  %2114 = vdwg.mxu0
  %s2115 = scalar_lea.vmem %s45, 24
  %v2116 = vld [vmem:[%s2115] sm:$0xf]
  %v2117 = vld [vmem:[%s2115 + $0x4] sm:$0xf]
  %s2118 = scalar_lea.vmem %s51, 3
  %v2119 = vld [vmem:[%s2118] sm:$0x1]
  %v2121 = vperm.slane %v2119, 0
  %v2125 = vunpack.c.l.b16 %v2116
  %v2126 = vunpack.c.l.b16 %v2117
  %v2127 = vpack.c.b16 %v2126, %v2125
  %2129 = vmatpush.bf16.msra.mxu0 0
  %2130 = vmatpush.bf16.msra.mxu0 0
  %2131 = vmatpush.bf16.msra.mxu0 0
  %2132 = vmatpush.bf16.msra.mxu0 0
  %2133 = vmatpush.bf16.msra.mxu0 0
  %2134 = vmatpush.bf16.msra.mxu0 0
  %2135 = vmatpush.bf16.msra.mxu0 0
  %2136 = vmatpush.bf16.msra.mxu0 %v2127
  %2137 = vmatmul.bf16.gmra.mxu0 %v1451
  %v2138 = vpop.f32.mrf.mxu0
  %v2139 = vadd.f32 %v2121, %v2138
  %v2140 = vpop.f32.mrf.mxu0
  %v2141 = vadd.f32 %v2121, %v2140
  %2142 = vdwg.mxu0
  %s2143 = scalar_lea.vmem %s47, 24
  %v2144 = vld [vmem:[%s2143] sm:$0xf]
  %v2145 = vld [vmem:[%s2143 + $0x4] sm:$0xf]
  %s2146 = scalar_lea.vmem %s53, 3
  %v2147 = vld [vmem:[%s2146] sm:$0x1]
  %v2149 = vperm.slane %v2147, 0
  %v2153 = vunpack.c.l.b16 %v2144
  %v2154 = vunpack.c.l.b16 %v2145
  %v2155 = vpack.c.b16 %v2154, %v2153
  %2157 = vmatpush.bf16.msra.mxu0 0
  %2158 = vmatpush.bf16.msra.mxu0 0
  %2159 = vmatpush.bf16.msra.mxu0 0
  %2160 = vmatpush.bf16.msra.mxu0 0
  %2161 = vmatpush.bf16.msra.mxu0 0
  %2162 = vmatpush.bf16.msra.mxu0 0
  %2163 = vmatpush.bf16.msra.mxu0 0
  %2164 = vmatpush.bf16.msra.mxu0 %v2155
  %2165 = vmatmul.bf16.gmra.mxu0 %v1451
  %v2166 = vpop.f32.mrf.mxu0
  %v2167 = vadd.f32 %v2149, %v2166
  %v2168 = vpop.f32.mrf.mxu0
  %v2169 = vadd.f32 %v2149, %v2168
  %2170 = vdwg.mxu0
  %v2171 = vpack.c.bf16 %v2111, %v2111
  %v2172 = vpack.c.bf16 %v2139, %v2139
  %v2174 = vsel %vm274, %v2171, 0
  %v2177 = vsel %vm274, %v2172, 0
  %2179 = vmatpush.bf16.xpose.msra.mxu0 0
  %2180 = vmatpush.bf16.xpose.msra.mxu0 0
  %2181 = vmatpush.bf16.xpose.msra.mxu0 0
  %2182 = vmatpush.bf16.xpose.msra.mxu0 0
  %2183 = vmatpush.bf16.xpose.msra.mxu0 0
  %2184 = vmatpush.bf16.xpose.msra.mxu0 0
  %2185 = vmatpush.bf16.xpose.msra.mxu0 0
  %2186 = vmatpush.bf16.xpose.msra.mxu0 %v2177
  %2187 = vmatmul.bf16.gmra.mxu0 %v2174
  %v2188 = vpop.f32.mrf.mxu0
  %v2189 = vadd.f32 0.0, %v2188
  %v2190 = vpop.f32.mrf.mxu0
  %2191 = vdwg.mxu0
  %v2192 = vmul.f32 %v2189, 0.5
  %v2193 = vsel %vm1541, %v2192, -inf
  %2194 = vmax.xlane.f32.xlu0 %v2193
  %v2195 = vpop.xlane.xlu0 %2194
  %v2196 = vsub.f32 %v2192, %v2195
  %v2197 = vmul.f32 %v2196, 1.442695
  %v2198 = vpow.pop %v2197
  %v2199 = vsel %vm1541, %v2198, 0.0
  %2200 = vadd.xlane.f32.xlu0 %v2199
  %v2201 = vpop.xlane.xlu0 %2200
  %v2202 = vrcp.pop %v2201
  %v2203 = vmul.f32 %v2198, %v2202
  %v2204 = vpack.c.bf16 %v2203, %v2203
  %v2205 = vpack.c.bf16 %v2167, %v2167
  %v2207 = vsel %vm1541, %v2204, 0
  %v2210 = vsel %vm1558, %v2205, 0
  %2212 = vmatpush.bf16.msra.mxu0 0
  %2213 = vmatpush.bf16.msra.mxu0 0
  %2214 = vmatpush.bf16.msra.mxu0 0
  %2215 = vmatpush.bf16.msra.mxu0 0
  %2216 = vmatpush.bf16.msra.mxu0 0
  %2217 = vmatpush.bf16.msra.mxu0 0
  %2218 = vmatpush.bf16.msra.mxu0 0
  %2219 = vmatpush.bf16.msra.mxu0 %v2210
  %2220 = vmatmul.bf16.gmra.mxu0 %v2207
  %v2221 = vpop.f32.mrf.mxu0
  %v2222 = vadd.f32 0.0, %v2221
  %v2223 = vpop.f32.mrf.mxu0
  %2224 = vdwg.mxu0
  %v2225 = vpack.c.bf16 %v2113, %v2113
  %v2226 = vpack.c.bf16 %v2141, %v2141
  %v2228 = vsel %vm274, %v2225, 0
  %v2231 = vsel %vm274, %v2226, 0
  %2233 = vmatpush.bf16.xpose.msra.mxu0 0
  %2234 = vmatpush.bf16.xpose.msra.mxu0 0
  %2235 = vmatpush.bf16.xpose.msra.mxu0 0
  %2236 = vmatpush.bf16.xpose.msra.mxu0 0
  %2237 = vmatpush.bf16.xpose.msra.mxu0 0
  %2238 = vmatpush.bf16.xpose.msra.mxu0 0
  %2239 = vmatpush.bf16.xpose.msra.mxu0 0
  %2240 = vmatpush.bf16.xpose.msra.mxu0 %v2231
  %2241 = vmatmul.bf16.gmra.mxu0 %v2228
  %v2242 = vpop.f32.mrf.mxu0
  %v2243 = vadd.f32 0.0, %v2242
  %v2244 = vpop.f32.mrf.mxu0
  %2245 = vdwg.mxu0
  %v2246 = vmul.f32 %v2243, 0.5
  %v2247 = vsel %vm1541, %v2246, -inf
  %2248 = vmax.xlane.f32.xlu0 %v2247
  %v2249 = vpop.xlane.xlu0 %2248
  %v2250 = vsub.f32 %v2246, %v2249
  %v2251 = vmul.f32 %v2250, 1.442695
  %v2252 = vpow.pop %v2251
  %v2253 = vsel %vm1541, %v2252, 0.0
  %2254 = vadd.xlane.f32.xlu0 %v2253
  %v2255 = vpop.xlane.xlu0 %2254
  %v2256 = vrcp.pop %v2255
  %v2257 = vmul.f32 %v2252, %v2256
  %v2258 = vpack.c.bf16 %v2257, %v2257
  %v2259 = vpack.c.bf16 %v2169, %v2169
  %v2261 = vsel %vm1541, %v2258, 0
  %v2264 = vsel %vm1558, %v2259, 0
  %2266 = vmatpush.bf16.msra.mxu0 0
  %2267 = vmatpush.bf16.msra.mxu0 0
  %2268 = vmatpush.bf16.msra.mxu0 0
  %2269 = vmatpush.bf16.msra.mxu0 0
  %2270 = vmatpush.bf16.msra.mxu0 0
  %2271 = vmatpush.bf16.msra.mxu0 0
  %2272 = vmatpush.bf16.msra.mxu0 0
  %2273 = vmatpush.bf16.msra.mxu0 %v2264
  %2274 = vmatmul.bf16.gmra.mxu0 %v2261
  %v2275 = vpop.f32.mrf.mxu0
  %v2276 = vadd.f32 0.0, %v2275
  %v2277 = vpop.f32.mrf.mxu0
  %2278 = vdwg.mxu0
  %s2279 = scalar_lea.vmem %s55, 6
  %v2280 = vld [vmem:[%s2279] sm:$0x3]
  %v2281 = vpack.c.bf16 %v2276, %v2222
  %v2283 = vsel %vm274, %v2281, 0
  %v2286 = vsel %vm279, %v2280, 0
  %2288 = vmatpush.bf16.msra.mxu0 0
  %2289 = vmatpush.bf16.msra.mxu0 0
  %2290 = vmatpush.bf16.msra.mxu0 0
  %2291 = vmatpush.bf16.msra.mxu0 0
  %2292 = vmatpush.bf16.msra.mxu0 0
  %2293 = vmatpush.bf16.msra.mxu0 0
  %2294 = vmatpush.bf16.msra.mxu0 0
  %2295 = vmatpush.bf16.msra.mxu0 %v2286
  %2296 = vmatmul.bf16.gmra.mxu0 %v2283
  %v2297 = vpop.f32.mrf.mxu0
  %v2298 = vadd.f32 0.0, %v2297
  %v2299 = vpop.f32.mrf.mxu0
  %v2300 = vadd.f32 0.0, %v2299
  %2301 = vdwg.mxu0
  %v2302 = vadd.f32 %v2085, %v2298
  %v2303 = vadd.f32 %v2086, %v2300
  %v2304 = vadd.f32 %v1430, %v2302
  %v2305 = vadd.f32 %v1431, %v2303
  %v2306 = vld [vmem:[%s59] sm:$0x1]
  %v2307 = vld [vmem:[%s61] sm:$0x1]
  %v2308 = vsel %vm428, %v2304, 0.0
  %2309 = vadd.xlane.f32.xlu0 %v2308
  %v2310 = vpop.xlane.xlu0 %2309
  %v2311 = vsel %vm428, %v2305, 0.0
  %2312 = vadd.xlane.f32.xlu0 %v2311
  %v2313 = vpop.xlane.xlu0 %2312
  %v2314 = vrcp.pop 16.0
  %v2315 = vmul.f32 16.0, %v2314
  %v2316 = vsub.f32 1.0, %v2315
  %v2317 = vmul.f32 %v2314, %v2316
  %v2318 = vadd.f32 %v2314, %v2317
  %vm2319 = vweird.f32 %v2314
  %v2320 = vsel %vm2319, %v2314, %v2318
  %v2321 = vmul.f32 %v2310, %v2320
  %v2322 = vmul.f32 %v2313, %v2320
  %v2323 = vsub.f32 %v2304, %v2321
  %v2324 = vsub.f32 %v2305, %v2322
  %v2325 = vmul.f32 %v2323, %v2323
  %v2326 = vmul.f32 %v2324, %v2324
  %v2327 = vsel %vm428, %v2325, 0.0
  %2328 = vadd.xlane.f32.xlu0 %v2327
  %v2329 = vpop.xlane.xlu0 %2328
  %v2330 = vsel %vm428, %v2326, 0.0
  %2331 = vadd.xlane.f32.xlu0 %v2330
  %v2332 = vpop.xlane.xlu0 %2331
  %v2333 = vmul.f32 %v2329, %v2320
  %v2334 = vmul.f32 %v2332, %v2320
  %v2335 = vadd.f32 %v2333, 1e-05
  %v2336 = vadd.f32 %v2334, 1e-05
  %v2337 = vrsqrt.pop %v2335
  %v2338 = vmul.f32 %v2337, %v2335
  %v2339 = vmul.f32 %v2338, %v2337
  %v2340 = vmul.f32 0.5, %v2339
  %v2341 = vsub.f32 1.5, %v2340
  %v2342 = vmul.f32 %v2337, %v2341
  %vm2343 = vweird.f32 %v2335
  %vm2344 = vweird.f32 %v2337
  %vm2345 = vmor %vm2343, %vm2344
  %v2346 = vsel %vm2345, %v2337, %v2342
  %v2347 = vrsqrt.pop %v2336
  %v2348 = vmul.f32 %v2347, %v2336
  %v2349 = vmul.f32 %v2348, %v2347
  %v2350 = vmul.f32 0.5, %v2349
  %v2351 = vsub.f32 1.5, %v2350
  %v2352 = vmul.f32 %v2347, %v2351
  %vm2353 = vweird.f32 %v2336
  %vm2354 = vweird.f32 %v2347
  %vm2355 = vmor %vm2353, %vm2354
  %v2356 = vsel %vm2355, %v2347, %v2352
  %v2357 = vmul.f32 %v2323, %v2346
  %v2358 = vmul.f32 %v2324, %v2356
  %v2360 = vperm.slane %v2306, 0
  %v2362 = vmul.f32 %v2357, %v2360
  %v2363 = vmul.f32 %v2358, %v2360
  %v2365 = vperm.slane %v2307, 0
  %v2367 = vadd.f32 %v2362, %v2365
  %v2368 = vadd.f32 %v2363, %v2365
  %v2369 = vld [vmem:[%s63] sm:$0xf]
  %v2370 = vld [vmem:[%s63 + $0x4] sm:$0xf]
  %v2371 = vpack.c.bf16 %v2368, %v2367
  %v2372 = vld [vmem:[%s65] sm:$0x1]
  %v2374 = vperm.slane %v2372, 0
  %v2378 = vunpack.c.l.b16 %v2369
  %v2379 = vunpack.c.l.b16 %v2370
  %v2380 = vpack.c.b16 %v2379, %v2378
  %v2383 = vsel %vm428, %v2371, 0
  %2385 = vmatpush.bf16.msra.mxu0 0
  %2386 = vmatpush.bf16.msra.mxu0 0
  %2387 = vmatpush.bf16.msra.mxu0 0
  %2388 = vmatpush.bf16.msra.mxu0 0
  %2389 = vmatpush.bf16.msra.mxu0 0
  %2390 = vmatpush.bf16.msra.mxu0 0
  %2391 = vmatpush.bf16.msra.mxu0 0
  %2392 = vmatpush.bf16.msra.mxu0 %v2380
  %2393 = vmatmul.bf16.gmra.mxu0 %v2383
  %v2394 = vpop.f32.mrf.mxu0
  %v2395 = vadd.f32 %v2374, %v2394
  %v2396 = vpop.f32.mrf.mxu0
  %v2397 = vadd.f32 %v2374, %v2396
  %2398 = vdwg.mxu0
  %v2399 = vmax.f32 %v2395, 0.0
  %v2400 = vmax.f32 %v2397, 0.0
  %v2401 = vld [vmem:[%s67] sm:$0xf]
  %v2402 = vld [vmem:[%s67 + $0x4] sm:$0xf]
  %v2403 = vld [vmem:[%s67 + $0x8] sm:$0xf]
  %v2404 = vld [vmem:[%s67 + $0xc] sm:$0xf]
  %v2405 = vld [vmem:[%s67 + $0x10] sm:$0xf]
  %v2406 = vld [vmem:[%s67 + $0x14] sm:$0xf]
  %v2407 = vld [vmem:[%s67 + $0x18] sm:$0xf]
  %v2408 = vld [vmem:[%s67 + $0x1c] sm:$0xf]
  %v2409 = vpack.c.bf16 %v2400, %v2399
  %v2410 = vld [vmem:[%s69] sm:$0x1]
  %v2412 = vperm.slane %v2410, 0
  %v2422 = vunpack.c.l.b16 %v2401
  %v2423 = vunpack.c.l.b16 %v2402
  %v2424 = vunpack.c.l.b16 %v2403
  %v2425 = vunpack.c.l.b16 %v2404
  %v2426 = vunpack.c.l.b16 %v2405
  %v2427 = vunpack.c.l.b16 %v2406
  %v2428 = vunpack.c.l.b16 %v2407
  %v2429 = vunpack.c.l.b16 %v2408
  %v2430 = vpack.c.b16 %v2423, %v2422
  %v2431 = vpack.c.b16 %v2425, %v2424
  %v2432 = vpack.c.b16 %v2427, %v2426
  %v2433 = vpack.c.b16 %v2429, %v2428
  %vm2438 = vcmask 523264
  %v2440 = vsel %vm2438, %v2409, 0
  %2442 = vmatpush.bf16.msra.mxu0 0
  %2443 = vmatpush.bf16.msra.mxu0 0
  %2444 = vmatpush.bf16.msra.mxu0 0
  %2445 = vmatpush.bf16.msra.mxu0 0
  %2446 = vmatpush.bf16.msra.mxu0 %v2433
  %2447 = vmatpush.bf16.msra.mxu0 %v2432
  %2448 = vmatpush.bf16.msra.mxu0 %v2431
  %2449 = vmatpush.bf16.msra.mxu0 %v2430
  %2450 = vmatmul.bf16.gmra.mxu0 %v2440
  %v2451 = vpop.f32.mrf.mxu0
  %v2452 = vadd.f32 %v2412, %v2451
  %v2453 = vpop.f32.mrf.mxu0
  %v2454 = vadd.f32 %v2412, %v2453
  %2455 = vdwg.mxu0
  %v2456 = vadd.f32 %v2367, %v2452
  %v2457 = vadd.f32 %v2368, %v2454
  %v2458 = vld [vmem:[%s71] sm:$0x1]
  %v2459 = vld [vmem:[%s73] sm:$0x1]
  %v2460 = vsel %vm428, %v2456, 0.0
  %2461 = vadd.xlane.f32.xlu0 %v2460
  %v2462 = vpop.xlane.xlu0 %2461
  %v2463 = vsel %vm428, %v2457, 0.0
  %2464 = vadd.xlane.f32.xlu0 %v2463
  %v2465 = vpop.xlane.xlu0 %2464
  %v2466 = vmul.f32 %v2462, %v2320
  %v2467 = vmul.f32 %v2465, %v2320
  %v2468 = vsub.f32 %v2456, %v2466
  %v2469 = vsub.f32 %v2457, %v2467
  %v2470 = vmul.f32 %v2468, %v2468
  %v2471 = vmul.f32 %v2469, %v2469
  %v2472 = vsel %vm428, %v2470, 0.0
  %2473 = vadd.xlane.f32.xlu0 %v2472
  %v2474 = vpop.xlane.xlu0 %2473
  %v2475 = vsel %vm428, %v2471, 0.0
  %2476 = vadd.xlane.f32.xlu0 %v2475
  %v2477 = vpop.xlane.xlu0 %2476
  %v2478 = vmul.f32 %v2474, %v2320
  %v2479 = vmul.f32 %v2477, %v2320
  %v2480 = vadd.f32 %v2478, 1e-05
  %v2481 = vadd.f32 %v2479, 1e-05
  %v2482 = vrsqrt.pop %v2480
  %v2483 = vmul.f32 %v2482, %v2480
  %v2484 = vmul.f32 %v2483, %v2482
  %v2485 = vmul.f32 0.5, %v2484
  %v2486 = vsub.f32 1.5, %v2485
  %v2487 = vmul.f32 %v2482, %v2486
  %vm2488 = vweird.f32 %v2480
  %vm2489 = vweird.f32 %v2482
  %vm2490 = vmor %vm2488, %vm2489
  %v2491 = vsel %vm2490, %v2482, %v2487
  %v2492 = vrsqrt.pop %v2481
  %v2493 = vmul.f32 %v2492, %v2481
  %v2494 = vmul.f32 %v2493, %v2492
  %v2495 = vmul.f32 0.5, %v2494
  %v2496 = vsub.f32 1.5, %v2495
  %v2497 = vmul.f32 %v2492, %v2496
  %vm2498 = vweird.f32 %v2481
  %vm2499 = vweird.f32 %v2492
  %vm2500 = vmor %vm2498, %vm2499
  %v2501 = vsel %vm2500, %v2492, %v2497
  %v2502 = vmul.f32 %v2468, %v2491
  %v2503 = vmul.f32 %v2469, %v2501
  %v2505 = vperm.slane %v2458, 0
  %v2507 = vmul.f32 %v2502, %v2505
  %v2508 = vmul.f32 %v2503, %v2505
  %v2510 = vperm.slane %v2459, 0
  %v2512 = vadd.f32 %v2507, %v2510
  %v2513 = vadd.f32 %v2508, %v2510
  %s2514 = scalar_lea.vmem %s57, 1
  %v2515 = vld [vmem:[%s2514] sm:$0x1]
  %v2517 = vperm.slane %v2515, 0
  %v2519 = vadd.f32 %v2517, 0.0
  %s2520 = scalar_lea.vmem %s43, 32
  %v2521 = vld [vmem:[%s2520] sm:$0xf]
  %v2522 = vld [vmem:[%s2520 + $0x4] sm:$0xf]
  %v2523 = vpack.c.bf16 %v2513, %v2512
  %s2524 = scalar_lea.vmem %s49, 4
  %v2525 = vld [vmem:[%s2524] sm:$0x1]
  %v2527 = vperm.slane %v2525, 0
  %v2531 = vunpack.c.l.b16 %v2521
  %v2532 = vunpack.c.l.b16 %v2522
  %v2533 = vpack.c.b16 %v2532, %v2531
  %v2536 = vsel %vm428, %v2523, 0
  %2538 = vmatpush.bf16.msra.mxu0 0
  %2539 = vmatpush.bf16.msra.mxu0 0
  %2540 = vmatpush.bf16.msra.mxu0 0
  %2541 = vmatpush.bf16.msra.mxu0 0
  %2542 = vmatpush.bf16.msra.mxu0 0
  %2543 = vmatpush.bf16.msra.mxu0 0
  %2544 = vmatpush.bf16.msra.mxu0 0
  %2545 = vmatpush.bf16.msra.mxu0 %v2533
  %2546 = vmatmul.bf16.gmra.mxu0 %v2536
  %v2547 = vpop.f32.mrf.mxu0
  %v2548 = vadd.f32 %v2527, %v2547
  %v2549 = vpop.f32.mrf.mxu0
  %v2550 = vadd.f32 %v2527, %v2549
  %2551 = vdwg.mxu0
  %s2552 = scalar_lea.vmem %s45, 32
  %v2553 = vld [vmem:[%s2552] sm:$0xf]
  %v2554 = vld [vmem:[%s2552 + $0x4] sm:$0xf]
  %s2555 = scalar_lea.vmem %s51, 4
  %v2556 = vld [vmem:[%s2555] sm:$0x1]
  %v2558 = vperm.slane %v2556, 0
  %v2562 = vunpack.c.l.b16 %v2553
  %v2563 = vunpack.c.l.b16 %v2554
  %v2564 = vpack.c.b16 %v2563, %v2562
  %2566 = vmatpush.bf16.msra.mxu0 0
  %2567 = vmatpush.bf16.msra.mxu0 0
  %2568 = vmatpush.bf16.msra.mxu0 0
  %2569 = vmatpush.bf16.msra.mxu0 0
  %2570 = vmatpush.bf16.msra.mxu0 0
  %2571 = vmatpush.bf16.msra.mxu0 0
  %2572 = vmatpush.bf16.msra.mxu0 0
  %2573 = vmatpush.bf16.msra.mxu0 %v2564
  %2574 = vmatmul.bf16.gmra.mxu0 %v2536
  %v2575 = vpop.f32.mrf.mxu0
  %v2576 = vadd.f32 %v2558, %v2575
  %v2577 = vpop.f32.mrf.mxu0
  %v2578 = vadd.f32 %v2558, %v2577
  %2579 = vdwg.mxu0
  %s2580 = scalar_lea.vmem %s47, 32
  %v2581 = vld [vmem:[%s2580] sm:$0xf]
  %v2582 = vld [vmem:[%s2580 + $0x4] sm:$0xf]
  %s2583 = scalar_lea.vmem %s53, 4
  %v2584 = vld [vmem:[%s2583] sm:$0x1]
  %v2586 = vperm.slane %v2584, 0
  %v2590 = vunpack.c.l.b16 %v2581
  %v2591 = vunpack.c.l.b16 %v2582
  %v2592 = vpack.c.b16 %v2591, %v2590
  %2594 = vmatpush.bf16.msra.mxu0 0
  %2595 = vmatpush.bf16.msra.mxu0 0
  %2596 = vmatpush.bf16.msra.mxu0 0
  %2597 = vmatpush.bf16.msra.mxu0 0
  %2598 = vmatpush.bf16.msra.mxu0 0
  %2599 = vmatpush.bf16.msra.mxu0 0
  %2600 = vmatpush.bf16.msra.mxu0 0
  %2601 = vmatpush.bf16.msra.mxu0 %v2592
  %2602 = vmatmul.bf16.gmra.mxu0 %v2536
  %v2603 = vpop.f32.mrf.mxu0
  %v2604 = vadd.f32 %v2586, %v2603
  %v2605 = vpop.f32.mrf.mxu0
  %v2606 = vadd.f32 %v2586, %v2605
  %2607 = vdwg.mxu0
  %v2608 = vpack.c.bf16 %v2548, %v2548
  %v2609 = vpack.c.bf16 %v2576, %v2576
  %v2611 = vsel %vm274, %v2608, 0
  %v2614 = vsel %vm274, %v2609, 0
  %2616 = vmatpush.bf16.xpose.msra.mxu0 0
  %2617 = vmatpush.bf16.xpose.msra.mxu0 0
  %2618 = vmatpush.bf16.xpose.msra.mxu0 0
  %2619 = vmatpush.bf16.xpose.msra.mxu0 0
  %2620 = vmatpush.bf16.xpose.msra.mxu0 0
  %2621 = vmatpush.bf16.xpose.msra.mxu0 0
  %2622 = vmatpush.bf16.xpose.msra.mxu0 0
  %2623 = vmatpush.bf16.xpose.msra.mxu0 %v2614
  %2624 = vmatmul.bf16.gmra.mxu0 %v2611
  %v2625 = vpop.f32.mrf.mxu0
  %v2626 = vadd.f32 0.0, %v2625
  %v2627 = vpop.f32.mrf.mxu0
  %2628 = vdwg.mxu0
  %v2629 = vmul.f32 %v2626, 0.5
  %v2630 = vsel %vm1541, %v2629, -inf
  %2631 = vmax.xlane.f32.xlu0 %v2630
  %v2632 = vpop.xlane.xlu0 %2631
  %v2633 = vsub.f32 %v2629, %v2632
  %v2634 = vmul.f32 %v2633, 1.442695
  %v2635 = vpow.pop %v2634
  %v2636 = vsel %vm1541, %v2635, 0.0
  %2637 = vadd.xlane.f32.xlu0 %v2636
  %v2638 = vpop.xlane.xlu0 %2637
  %v2639 = vrcp.pop %v2638
  %v2640 = vmul.f32 %v2635, %v2639
  %v2641 = vpack.c.bf16 %v2640, %v2640
  %v2642 = vpack.c.bf16 %v2604, %v2604
  %v2644 = vsel %vm1541, %v2641, 0
  %v2647 = vsel %vm1558, %v2642, 0
  %2649 = vmatpush.bf16.msra.mxu0 0
  %2650 = vmatpush.bf16.msra.mxu0 0
  %2651 = vmatpush.bf16.msra.mxu0 0
  %2652 = vmatpush.bf16.msra.mxu0 0
  %2653 = vmatpush.bf16.msra.mxu0 0
  %2654 = vmatpush.bf16.msra.mxu0 0
  %2655 = vmatpush.bf16.msra.mxu0 0
  %2656 = vmatpush.bf16.msra.mxu0 %v2647
  %2657 = vmatmul.bf16.gmra.mxu0 %v2644
  %v2658 = vpop.f32.mrf.mxu0
  %v2659 = vadd.f32 0.0, %v2658
  %v2660 = vpop.f32.mrf.mxu0
  %2661 = vdwg.mxu0
  %v2662 = vpack.c.bf16 %v2550, %v2550
  %v2663 = vpack.c.bf16 %v2578, %v2578
  %v2665 = vsel %vm274, %v2662, 0
  %v2668 = vsel %vm274, %v2663, 0
  %2670 = vmatpush.bf16.xpose.msra.mxu0 0
  %2671 = vmatpush.bf16.xpose.msra.mxu0 0
  %2672 = vmatpush.bf16.xpose.msra.mxu0 0
  %2673 = vmatpush.bf16.xpose.msra.mxu0 0
  %2674 = vmatpush.bf16.xpose.msra.mxu0 0
  %2675 = vmatpush.bf16.xpose.msra.mxu0 0
  %2676 = vmatpush.bf16.xpose.msra.mxu0 0
  %2677 = vmatpush.bf16.xpose.msra.mxu0 %v2668
  %2678 = vmatmul.bf16.gmra.mxu0 %v2665
  %v2679 = vpop.f32.mrf.mxu0
  %v2680 = vadd.f32 0.0, %v2679
  %v2681 = vpop.f32.mrf.mxu0
  %2682 = vdwg.mxu0
  %v2683 = vmul.f32 %v2680, 0.5
  %v2684 = vsel %vm1541, %v2683, -inf
  %2685 = vmax.xlane.f32.xlu0 %v2684
  %v2686 = vpop.xlane.xlu0 %2685
  %v2687 = vsub.f32 %v2683, %v2686
  %v2688 = vmul.f32 %v2687, 1.442695
  %v2689 = vpow.pop %v2688
  %v2690 = vsel %vm1541, %v2689, 0.0
  %2691 = vadd.xlane.f32.xlu0 %v2690
  %v2692 = vpop.xlane.xlu0 %2691
  %v2693 = vrcp.pop %v2692
  %v2694 = vmul.f32 %v2689, %v2693
  %v2695 = vpack.c.bf16 %v2694, %v2694
  %v2696 = vpack.c.bf16 %v2606, %v2606
  %v2698 = vsel %vm1541, %v2695, 0
  %v2701 = vsel %vm1558, %v2696, 0
  %2703 = vmatpush.bf16.msra.mxu0 0
  %2704 = vmatpush.bf16.msra.mxu0 0
  %2705 = vmatpush.bf16.msra.mxu0 0
  %2706 = vmatpush.bf16.msra.mxu0 0
  %2707 = vmatpush.bf16.msra.mxu0 0
  %2708 = vmatpush.bf16.msra.mxu0 0
  %2709 = vmatpush.bf16.msra.mxu0 0
  %2710 = vmatpush.bf16.msra.mxu0 %v2701
  %2711 = vmatmul.bf16.gmra.mxu0 %v2698
  %v2712 = vpop.f32.mrf.mxu0
  %v2713 = vadd.f32 0.0, %v2712
  %v2714 = vpop.f32.mrf.mxu0
  %2715 = vdwg.mxu0
  %s2716 = scalar_lea.vmem %s55, 8
  %v2717 = vld [vmem:[%s2716] sm:$0x3]
  %v2718 = vpack.c.bf16 %v2713, %v2659
  %v2720 = vsel %vm274, %v2718, 0
  %v2723 = vsel %vm279, %v2717, 0
  %2725 = vmatpush.bf16.msra.mxu0 0
  %2726 = vmatpush.bf16.msra.mxu0 0
  %2727 = vmatpush.bf16.msra.mxu0 0
  %2728 = vmatpush.bf16.msra.mxu0 0
  %2729 = vmatpush.bf16.msra.mxu0 0
  %2730 = vmatpush.bf16.msra.mxu0 0
  %2731 = vmatpush.bf16.msra.mxu0 0
  %2732 = vmatpush.bf16.msra.mxu0 %v2723
  %2733 = vmatmul.bf16.gmra.mxu0 %v2720
  %v2734 = vpop.f32.mrf.mxu0
  %v2735 = vadd.f32 0.0, %v2734
  %v2736 = vpop.f32.mrf.mxu0
  %v2737 = vadd.f32 0.0, %v2736
  %2738 = vdwg.mxu0
  %v2739 = vadd.f32 %v2519, %v2735
  %v2740 = vadd.f32 %v2519, %v2737
  %s2741 = scalar_lea.vmem %s43, 40
  %v2742 = vld [vmem:[%s2741] sm:$0xf]
  %v2743 = vld [vmem:[%s2741 + $0x4] sm:$0xf]
  %s2744 = scalar_lea.vmem %s49, 5
  %v2745 = vld [vmem:[%s2744] sm:$0x1]
  %v2747 = vperm.slane %v2745, 0
  %v2751 = vunpack.c.l.b16 %v2742
  %v2752 = vunpack.c.l.b16 %v2743
  %v2753 = vpack.c.b16 %v2752, %v2751
  %2755 = vmatpush.bf16.msra.mxu0 0
  %2756 = vmatpush.bf16.msra.mxu0 0
  %2757 = vmatpush.bf16.msra.mxu0 0
  %2758 = vmatpush.bf16.msra.mxu0 0
  %2759 = vmatpush.bf16.msra.mxu0 0
  %2760 = vmatpush.bf16.msra.mxu0 0
  %2761 = vmatpush.bf16.msra.mxu0 0
  %2762 = vmatpush.bf16.msra.mxu0 %v2753
  %2763 = vmatmul.bf16.gmra.mxu0 %v2536
  %v2764 = vpop.f32.mrf.mxu0
  %v2765 = vadd.f32 %v2747, %v2764
  %v2766 = vpop.f32.mrf.mxu0
  %v2767 = vadd.f32 %v2747, %v2766
  %2768 = vdwg.mxu0
  %s2769 = scalar_lea.vmem %s45, 40
  %v2770 = vld [vmem:[%s2769] sm:$0xf]
  %v2771 = vld [vmem:[%s2769 + $0x4] sm:$0xf]
  %s2772 = scalar_lea.vmem %s51, 5
  %v2773 = vld [vmem:[%s2772] sm:$0x1]
  %v2775 = vperm.slane %v2773, 0
  %v2779 = vunpack.c.l.b16 %v2770
  %v2780 = vunpack.c.l.b16 %v2771
  %v2781 = vpack.c.b16 %v2780, %v2779
  %2783 = vmatpush.bf16.msra.mxu0 0
  %2784 = vmatpush.bf16.msra.mxu0 0
  %2785 = vmatpush.bf16.msra.mxu0 0
  %2786 = vmatpush.bf16.msra.mxu0 0
  %2787 = vmatpush.bf16.msra.mxu0 0
  %2788 = vmatpush.bf16.msra.mxu0 0
  %2789 = vmatpush.bf16.msra.mxu0 0
  %2790 = vmatpush.bf16.msra.mxu0 %v2781
  %2791 = vmatmul.bf16.gmra.mxu0 %v2536
  %v2792 = vpop.f32.mrf.mxu0
  %v2793 = vadd.f32 %v2775, %v2792
  %v2794 = vpop.f32.mrf.mxu0
  %v2795 = vadd.f32 %v2775, %v2794
  %2796 = vdwg.mxu0
  %s2797 = scalar_lea.vmem %s47, 40
  %v2798 = vld [vmem:[%s2797] sm:$0xf]
  %v2799 = vld [vmem:[%s2797 + $0x4] sm:$0xf]
  %s2800 = scalar_lea.vmem %s53, 5
  %v2801 = vld [vmem:[%s2800] sm:$0x1]
  %v2803 = vperm.slane %v2801, 0
  %v2807 = vunpack.c.l.b16 %v2798
  %v2808 = vunpack.c.l.b16 %v2799
  %v2809 = vpack.c.b16 %v2808, %v2807
  %2811 = vmatpush.bf16.msra.mxu0 0
  %2812 = vmatpush.bf16.msra.mxu0 0
  %2813 = vmatpush.bf16.msra.mxu0 0
  %2814 = vmatpush.bf16.msra.mxu0 0
  %2815 = vmatpush.bf16.msra.mxu0 0
  %2816 = vmatpush.bf16.msra.mxu0 0
  %2817 = vmatpush.bf16.msra.mxu0 0
  %2818 = vmatpush.bf16.msra.mxu0 %v2809
  %2819 = vmatmul.bf16.gmra.mxu0 %v2536
  %v2820 = vpop.f32.mrf.mxu0
  %v2821 = vadd.f32 %v2803, %v2820
  %v2822 = vpop.f32.mrf.mxu0
  %v2823 = vadd.f32 %v2803, %v2822
  %2824 = vdwg.mxu0
  %v2825 = vpack.c.bf16 %v2765, %v2765
  %v2826 = vpack.c.bf16 %v2793, %v2793
  %v2828 = vsel %vm274, %v2825, 0
  %v2831 = vsel %vm274, %v2826, 0
  %2833 = vmatpush.bf16.xpose.msra.mxu0 0
  %2834 = vmatpush.bf16.xpose.msra.mxu0 0
  %2835 = vmatpush.bf16.xpose.msra.mxu0 0
  %2836 = vmatpush.bf16.xpose.msra.mxu0 0
  %2837 = vmatpush.bf16.xpose.msra.mxu0 0
  %2838 = vmatpush.bf16.xpose.msra.mxu0 0
  %2839 = vmatpush.bf16.xpose.msra.mxu0 0
  %2840 = vmatpush.bf16.xpose.msra.mxu0 %v2831
  %2841 = vmatmul.bf16.gmra.mxu0 %v2828
  %v2842 = vpop.f32.mrf.mxu0
  %v2843 = vadd.f32 0.0, %v2842
  %v2844 = vpop.f32.mrf.mxu0
  %2845 = vdwg.mxu0
  %v2846 = vmul.f32 %v2843, 0.5
  %v2847 = vsel %vm1541, %v2846, -inf
  %2848 = vmax.xlane.f32.xlu0 %v2847
  %v2849 = vpop.xlane.xlu0 %2848
  %v2850 = vsub.f32 %v2846, %v2849
  %v2851 = vmul.f32 %v2850, 1.442695
  %v2852 = vpow.pop %v2851
  %v2853 = vsel %vm1541, %v2852, 0.0
  %2854 = vadd.xlane.f32.xlu0 %v2853
  %v2855 = vpop.xlane.xlu0 %2854
  %v2856 = vrcp.pop %v2855
  %v2857 = vmul.f32 %v2852, %v2856
  %v2858 = vpack.c.bf16 %v2857, %v2857
  %v2859 = vpack.c.bf16 %v2821, %v2821
  %v2861 = vsel %vm1541, %v2858, 0
  %v2864 = vsel %vm1558, %v2859, 0
  %2866 = vmatpush.bf16.msra.mxu0 0
  %2867 = vmatpush.bf16.msra.mxu0 0
  %2868 = vmatpush.bf16.msra.mxu0 0
  %2869 = vmatpush.bf16.msra.mxu0 0
  %2870 = vmatpush.bf16.msra.mxu0 0
  %2871 = vmatpush.bf16.msra.mxu0 0
  %2872 = vmatpush.bf16.msra.mxu0 0
  %2873 = vmatpush.bf16.msra.mxu0 %v2864
  %2874 = vmatmul.bf16.gmra.mxu0 %v2861
  %v2875 = vpop.f32.mrf.mxu0
  %v2876 = vadd.f32 0.0, %v2875
  %v2877 = vpop.f32.mrf.mxu0
  %2878 = vdwg.mxu0
  %v2879 = vpack.c.bf16 %v2767, %v2767
  %v2880 = vpack.c.bf16 %v2795, %v2795
  %v2882 = vsel %vm274, %v2879, 0
  %v2885 = vsel %vm274, %v2880, 0
  %2887 = vmatpush.bf16.xpose.msra.mxu0 0
  %2888 = vmatpush.bf16.xpose.msra.mxu0 0
  %2889 = vmatpush.bf16.xpose.msra.mxu0 0
  %2890 = vmatpush.bf16.xpose.msra.mxu0 0
  %2891 = vmatpush.bf16.xpose.msra.mxu0 0
  %2892 = vmatpush.bf16.xpose.msra.mxu0 0
  %2893 = vmatpush.bf16.xpose.msra.mxu0 0
  %2894 = vmatpush.bf16.xpose.msra.mxu0 %v2885
  %2895 = vmatmul.bf16.gmra.mxu0 %v2882
  %v2896 = vpop.f32.mrf.mxu0
  %v2897 = vadd.f32 0.0, %v2896
  %v2898 = vpop.f32.mrf.mxu0
  %2899 = vdwg.mxu0
  %v2900 = vmul.f32 %v2897, 0.5
  %v2901 = vsel %vm1541, %v2900, -inf
  %2902 = vmax.xlane.f32.xlu0 %v2901
  %v2903 = vpop.xlane.xlu0 %2902
  %v2904 = vsub.f32 %v2900, %v2903
  %v2905 = vmul.f32 %v2904, 1.442695
  %v2906 = vpow.pop %v2905
  %v2907 = vsel %vm1541, %v2906, 0.0
  %2908 = vadd.xlane.f32.xlu0 %v2907
  %v2909 = vpop.xlane.xlu0 %2908
  %v2910 = vrcp.pop %v2909
  %v2911 = vmul.f32 %v2906, %v2910
  %v2912 = vpack.c.bf16 %v2911, %v2911
  %v2913 = vpack.c.bf16 %v2823, %v2823
  %v2915 = vsel %vm1541, %v2912, 0
  %v2918 = vsel %vm1558, %v2913, 0
  %2920 = vmatpush.bf16.msra.mxu0 0
  %2921 = vmatpush.bf16.msra.mxu0 0
  %2922 = vmatpush.bf16.msra.mxu0 0
  %2923 = vmatpush.bf16.msra.mxu0 0
  %2924 = vmatpush.bf16.msra.mxu0 0
  %2925 = vmatpush.bf16.msra.mxu0 0
  %2926 = vmatpush.bf16.msra.mxu0 0
  %2927 = vmatpush.bf16.msra.mxu0 %v2918
  %2928 = vmatmul.bf16.gmra.mxu0 %v2915
  %v2929 = vpop.f32.mrf.mxu0
  %v2930 = vadd.f32 0.0, %v2929
  %v2931 = vpop.f32.mrf.mxu0
  %2932 = vdwg.mxu0
  %s2933 = scalar_lea.vmem %s55, 10
  %v2934 = vld [vmem:[%s2933] sm:$0x3]
  %v2935 = vpack.c.bf16 %v2930, %v2876
  %v2937 = vsel %vm274, %v2935, 0
  %v2940 = vsel %vm279, %v2934, 0
  %2942 = vmatpush.bf16.msra.mxu0 0
  %2943 = vmatpush.bf16.msra.mxu0 0
  %2944 = vmatpush.bf16.msra.mxu0 0
  %2945 = vmatpush.bf16.msra.mxu0 0
  %2946 = vmatpush.bf16.msra.mxu0 0
  %2947 = vmatpush.bf16.msra.mxu0 0
  %2948 = vmatpush.bf16.msra.mxu0 0
  %2949 = vmatpush.bf16.msra.mxu0 %v2940
  %2950 = vmatmul.bf16.gmra.mxu0 %v2937
  %v2951 = vpop.f32.mrf.mxu0
  %v2952 = vadd.f32 0.0, %v2951
  %v2953 = vpop.f32.mrf.mxu0
  %v2954 = vadd.f32 0.0, %v2953
  %2955 = vdwg.mxu0
  %v2956 = vadd.f32 %v2739, %v2952
  %v2957 = vadd.f32 %v2740, %v2954
  %s2958 = scalar_lea.vmem %s43, 48
  %v2959 = vld [vmem:[%s2958] sm:$0xf]
  %v2960 = vld [vmem:[%s2958 + $0x4] sm:$0xf]
  %s2961 = scalar_lea.vmem %s49, 6
  %v2962 = vld [vmem:[%s2961] sm:$0x1]
  %v2964 = vperm.slane %v2962, 0
  %v2968 = vunpack.c.l.b16 %v2959
  %v2969 = vunpack.c.l.b16 %v2960
  %v2970 = vpack.c.b16 %v2969, %v2968
  %2972 = vmatpush.bf16.msra.mxu0 0
  %2973 = vmatpush.bf16.msra.mxu0 0
  %2974 = vmatpush.bf16.msra.mxu0 0
  %2975 = vmatpush.bf16.msra.mxu0 0
  %2976 = vmatpush.bf16.msra.mxu0 0
  %2977 = vmatpush.bf16.msra.mxu0 0
  %2978 = vmatpush.bf16.msra.mxu0 0
  %2979 = vmatpush.bf16.msra.mxu0 %v2970
  %2980 = vmatmul.bf16.gmra.mxu0 %v2536
  %v2981 = vpop.f32.mrf.mxu0
  %v2982 = vadd.f32 %v2964, %v2981
  %v2983 = vpop.f32.mrf.mxu0
  %v2984 = vadd.f32 %v2964, %v2983
  %2985 = vdwg.mxu0
  %s2986 = scalar_lea.vmem %s45, 48
  %v2987 = vld [vmem:[%s2986] sm:$0xf]
  %v2988 = vld [vmem:[%s2986 + $0x4] sm:$0xf]
  %s2989 = scalar_lea.vmem %s51, 6
  %v2990 = vld [vmem:[%s2989] sm:$0x1]
  %v2992 = vperm.slane %v2990, 0
  %v2996 = vunpack.c.l.b16 %v2987
  %v2997 = vunpack.c.l.b16 %v2988
  %v2998 = vpack.c.b16 %v2997, %v2996
  %3000 = vmatpush.bf16.msra.mxu0 0
  %3001 = vmatpush.bf16.msra.mxu0 0
  %3002 = vmatpush.bf16.msra.mxu0 0
  %3003 = vmatpush.bf16.msra.mxu0 0
  %3004 = vmatpush.bf16.msra.mxu0 0
  %3005 = vmatpush.bf16.msra.mxu0 0
  %3006 = vmatpush.bf16.msra.mxu0 0
  %3007 = vmatpush.bf16.msra.mxu0 %v2998
  %3008 = vmatmul.bf16.gmra.mxu0 %v2536
  %v3009 = vpop.f32.mrf.mxu0
  %v3010 = vadd.f32 %v2992, %v3009
  %v3011 = vpop.f32.mrf.mxu0
  %v3012 = vadd.f32 %v2992, %v3011
  %3013 = vdwg.mxu0
  %s3014 = scalar_lea.vmem %s47, 48
  %v3015 = vld [vmem:[%s3014] sm:$0xf]
  %v3016 = vld [vmem:[%s3014 + $0x4] sm:$0xf]
  %s3017 = scalar_lea.vmem %s53, 6
  %v3018 = vld [vmem:[%s3017] sm:$0x1]
  %v3020 = vperm.slane %v3018, 0
  %v3024 = vunpack.c.l.b16 %v3015
  %v3025 = vunpack.c.l.b16 %v3016
  %v3026 = vpack.c.b16 %v3025, %v3024
  %3028 = vmatpush.bf16.msra.mxu0 0
  %3029 = vmatpush.bf16.msra.mxu0 0
  %3030 = vmatpush.bf16.msra.mxu0 0
  %3031 = vmatpush.bf16.msra.mxu0 0
  %3032 = vmatpush.bf16.msra.mxu0 0
  %3033 = vmatpush.bf16.msra.mxu0 0
  %3034 = vmatpush.bf16.msra.mxu0 0
  %3035 = vmatpush.bf16.msra.mxu0 %v3026
  %3036 = vmatmul.bf16.gmra.mxu0 %v2536
  %v3037 = vpop.f32.mrf.mxu0
  %v3038 = vadd.f32 %v3020, %v3037
  %v3039 = vpop.f32.mrf.mxu0
  %v3040 = vadd.f32 %v3020, %v3039
  %3041 = vdwg.mxu0
  %v3042 = vpack.c.bf16 %v2982, %v2982
  %v3043 = vpack.c.bf16 %v3010, %v3010
  %v3045 = vsel %vm274, %v3042, 0
  %v3048 = vsel %vm274, %v3043, 0
  %3050 = vmatpush.bf16.xpose.msra.mxu0 0
  %3051 = vmatpush.bf16.xpose.msra.mxu0 0
  %3052 = vmatpush.bf16.xpose.msra.mxu0 0
  %3053 = vmatpush.bf16.xpose.msra.mxu0 0
  %3054 = vmatpush.bf16.xpose.msra.mxu0 0
  %3055 = vmatpush.bf16.xpose.msra.mxu0 0
  %3056 = vmatpush.bf16.xpose.msra.mxu0 0
  %3057 = vmatpush.bf16.xpose.msra.mxu0 %v3048
  %3058 = vmatmul.bf16.gmra.mxu0 %v3045
  %v3059 = vpop.f32.mrf.mxu0
  %v3060 = vadd.f32 0.0, %v3059
  %v3061 = vpop.f32.mrf.mxu0
  %3062 = vdwg.mxu0
  %v3063 = vmul.f32 %v3060, 0.5
  %v3064 = vsel %vm1541, %v3063, -inf
  %3065 = vmax.xlane.f32.xlu0 %v3064
  %v3066 = vpop.xlane.xlu0 %3065
  %v3067 = vsub.f32 %v3063, %v3066
  %v3068 = vmul.f32 %v3067, 1.442695
  %v3069 = vpow.pop %v3068
  %v3070 = vsel %vm1541, %v3069, 0.0
  %3071 = vadd.xlane.f32.xlu0 %v3070
  %v3072 = vpop.xlane.xlu0 %3071
  %v3073 = vrcp.pop %v3072
  %v3074 = vmul.f32 %v3069, %v3073
  %v3075 = vpack.c.bf16 %v3074, %v3074
  %v3076 = vpack.c.bf16 %v3038, %v3038
  %v3078 = vsel %vm1541, %v3075, 0
  %v3081 = vsel %vm1558, %v3076, 0
  %3083 = vmatpush.bf16.msra.mxu0 0
  %3084 = vmatpush.bf16.msra.mxu0 0
  %3085 = vmatpush.bf16.msra.mxu0 0
  %3086 = vmatpush.bf16.msra.mxu0 0
  %3087 = vmatpush.bf16.msra.mxu0 0
  %3088 = vmatpush.bf16.msra.mxu0 0
  %3089 = vmatpush.bf16.msra.mxu0 0
  %3090 = vmatpush.bf16.msra.mxu0 %v3081
  %3091 = vmatmul.bf16.gmra.mxu0 %v3078
  %v3092 = vpop.f32.mrf.mxu0
  %v3093 = vadd.f32 0.0, %v3092
  %v3094 = vpop.f32.mrf.mxu0
  %3095 = vdwg.mxu0
  %v3096 = vpack.c.bf16 %v2984, %v2984
  %v3097 = vpack.c.bf16 %v3012, %v3012
  %v3099 = vsel %vm274, %v3096, 0
  %v3102 = vsel %vm274, %v3097, 0
  %3104 = vmatpush.bf16.xpose.msra.mxu0 0
  %3105 = vmatpush.bf16.xpose.msra.mxu0 0
  %3106 = vmatpush.bf16.xpose.msra.mxu0 0
  %3107 = vmatpush.bf16.xpose.msra.mxu0 0
  %3108 = vmatpush.bf16.xpose.msra.mxu0 0
  %3109 = vmatpush.bf16.xpose.msra.mxu0 0
  %3110 = vmatpush.bf16.xpose.msra.mxu0 0
  %3111 = vmatpush.bf16.xpose.msra.mxu0 %v3102
  %3112 = vmatmul.bf16.gmra.mxu0 %v3099
  %v3113 = vpop.f32.mrf.mxu0
  %v3114 = vadd.f32 0.0, %v3113
  %v3115 = vpop.f32.mrf.mxu0
  %3116 = vdwg.mxu0
  %v3117 = vmul.f32 %v3114, 0.5
  %v3118 = vsel %vm1541, %v3117, -inf
  %3119 = vmax.xlane.f32.xlu0 %v3118
  %v3120 = vpop.xlane.xlu0 %3119
  %v3121 = vsub.f32 %v3117, %v3120
  %v3122 = vmul.f32 %v3121, 1.442695
  %v3123 = vpow.pop %v3122
  %v3124 = vsel %vm1541, %v3123, 0.0
  %3125 = vadd.xlane.f32.xlu0 %v3124
  %v3126 = vpop.xlane.xlu0 %3125
  %v3127 = vrcp.pop %v3126
  %v3128 = vmul.f32 %v3123, %v3127
  %v3129 = vpack.c.bf16 %v3128, %v3128
  %v3130 = vpack.c.bf16 %v3040, %v3040
  %v3132 = vsel %vm1541, %v3129, 0
  %v3135 = vsel %vm1558, %v3130, 0
  %3137 = vmatpush.bf16.msra.mxu0 0
  %3138 = vmatpush.bf16.msra.mxu0 0
  %3139 = vmatpush.bf16.msra.mxu0 0
  %3140 = vmatpush.bf16.msra.mxu0 0
  %3141 = vmatpush.bf16.msra.mxu0 0
  %3142 = vmatpush.bf16.msra.mxu0 0
  %3143 = vmatpush.bf16.msra.mxu0 0
  %3144 = vmatpush.bf16.msra.mxu0 %v3135
  %3145 = vmatmul.bf16.gmra.mxu0 %v3132
  %v3146 = vpop.f32.mrf.mxu0
  %v3147 = vadd.f32 0.0, %v3146
  %v3148 = vpop.f32.mrf.mxu0
  %3149 = vdwg.mxu0
  %s3150 = scalar_lea.vmem %s55, 12
  %v3151 = vld [vmem:[%s3150] sm:$0x3]
  %v3152 = vpack.c.bf16 %v3147, %v3093
  %v3154 = vsel %vm274, %v3152, 0
  %v3157 = vsel %vm279, %v3151, 0
  %3159 = vmatpush.bf16.msra.mxu0 0
  %3160 = vmatpush.bf16.msra.mxu0 0
  %3161 = vmatpush.bf16.msra.mxu0 0
  %3162 = vmatpush.bf16.msra.mxu0 0
  %3163 = vmatpush.bf16.msra.mxu0 0
  %3164 = vmatpush.bf16.msra.mxu0 0
  %3165 = vmatpush.bf16.msra.mxu0 0
  %3166 = vmatpush.bf16.msra.mxu0 %v3157
  %3167 = vmatmul.bf16.gmra.mxu0 %v3154
  %v3168 = vpop.f32.mrf.mxu0
  %v3169 = vadd.f32 0.0, %v3168
  %v3170 = vpop.f32.mrf.mxu0
  %v3171 = vadd.f32 0.0, %v3170
  %3172 = vdwg.mxu0
  %v3173 = vadd.f32 %v2956, %v3169
  %v3174 = vadd.f32 %v2957, %v3171
  %s3175 = scalar_lea.vmem %s43, 56
  %v3176 = vld [vmem:[%s3175] sm:$0xf]
  %v3177 = vld [vmem:[%s3175 + $0x4] sm:$0xf]
  %s3178 = scalar_lea.vmem %s49, 7
  %v3179 = vld [vmem:[%s3178] sm:$0x1]
  %v3181 = vperm.slane %v3179, 0
  %v3185 = vunpack.c.l.b16 %v3176
  %v3186 = vunpack.c.l.b16 %v3177
  %v3187 = vpack.c.b16 %v3186, %v3185
  %3189 = vmatpush.bf16.msra.mxu0 0
  %3190 = vmatpush.bf16.msra.mxu0 0
  %3191 = vmatpush.bf16.msra.mxu0 0
  %3192 = vmatpush.bf16.msra.mxu0 0
  %3193 = vmatpush.bf16.msra.mxu0 0
  %3194 = vmatpush.bf16.msra.mxu0 0
  %3195 = vmatpush.bf16.msra.mxu0 0
  %3196 = vmatpush.bf16.msra.mxu0 %v3187
  %3197 = vmatmul.bf16.gmra.mxu0 %v2536
  %v3198 = vpop.f32.mrf.mxu0
  %v3199 = vadd.f32 %v3181, %v3198
  %v3200 = vpop.f32.mrf.mxu0
  %v3201 = vadd.f32 %v3181, %v3200
  %3202 = vdwg.mxu0
  %s3203 = scalar_lea.vmem %s45, 56
  %v3204 = vld [vmem:[%s3203] sm:$0xf]
  %v3205 = vld [vmem:[%s3203 + $0x4] sm:$0xf]
  %s3206 = scalar_lea.vmem %s51, 7
  %v3207 = vld [vmem:[%s3206] sm:$0x1]
  %v3209 = vperm.slane %v3207, 0
  %v3213 = vunpack.c.l.b16 %v3204
  %v3214 = vunpack.c.l.b16 %v3205
  %v3215 = vpack.c.b16 %v3214, %v3213
  %3217 = vmatpush.bf16.msra.mxu0 0
  %3218 = vmatpush.bf16.msra.mxu0 0
  %3219 = vmatpush.bf16.msra.mxu0 0
  %3220 = vmatpush.bf16.msra.mxu0 0
  %3221 = vmatpush.bf16.msra.mxu0 0
  %3222 = vmatpush.bf16.msra.mxu0 0
  %3223 = vmatpush.bf16.msra.mxu0 0
  %3224 = vmatpush.bf16.msra.mxu0 %v3215
  %3225 = vmatmul.bf16.gmra.mxu0 %v2536
  %v3226 = vpop.f32.mrf.mxu0
  %v3227 = vadd.f32 %v3209, %v3226
  %v3228 = vpop.f32.mrf.mxu0
  %v3229 = vadd.f32 %v3209, %v3228
  %3230 = vdwg.mxu0
  %s3231 = scalar_lea.vmem %s47, 56
  %v3232 = vld [vmem:[%s3231] sm:$0xf]
  %v3233 = vld [vmem:[%s3231 + $0x4] sm:$0xf]
  %s3234 = scalar_lea.vmem %s53, 7
  %v3235 = vld [vmem:[%s3234] sm:$0x1]
  %v3237 = vperm.slane %v3235, 0
  %v3241 = vunpack.c.l.b16 %v3232
  %v3242 = vunpack.c.l.b16 %v3233
  %v3243 = vpack.c.b16 %v3242, %v3241
  %3245 = vmatpush.bf16.msra.mxu0 0
  %3246 = vmatpush.bf16.msra.mxu0 0
  %3247 = vmatpush.bf16.msra.mxu0 0
  %3248 = vmatpush.bf16.msra.mxu0 0
  %3249 = vmatpush.bf16.msra.mxu0 0
  %3250 = vmatpush.bf16.msra.mxu0 0
  %3251 = vmatpush.bf16.msra.mxu0 0
  %3252 = vmatpush.bf16.msra.mxu0 %v3243
  %3253 = vmatmul.bf16.gmra.mxu0 %v2536
  %v3254 = vpop.f32.mrf.mxu0
  %v3255 = vadd.f32 %v3237, %v3254
  %v3256 = vpop.f32.mrf.mxu0
  %v3257 = vadd.f32 %v3237, %v3256
  %3258 = vdwg.mxu0
  %v3259 = vpack.c.bf16 %v3199, %v3199
  %v3260 = vpack.c.bf16 %v3227, %v3227
  %v3262 = vsel %vm274, %v3259, 0
  %v3265 = vsel %vm274, %v3260, 0
  %3267 = vmatpush.bf16.xpose.msra.mxu0 0
  %3268 = vmatpush.bf16.xpose.msra.mxu0 0
  %3269 = vmatpush.bf16.xpose.msra.mxu0 0
  %3270 = vmatpush.bf16.xpose.msra.mxu0 0
  %3271 = vmatpush.bf16.xpose.msra.mxu0 0
  %3272 = vmatpush.bf16.xpose.msra.mxu0 0
  %3273 = vmatpush.bf16.xpose.msra.mxu0 0
  %3274 = vmatpush.bf16.xpose.msra.mxu0 %v3265
  %3275 = vmatmul.bf16.gmra.mxu0 %v3262
  %v3276 = vpop.f32.mrf.mxu0
  %v3277 = vadd.f32 0.0, %v3276
  %v3278 = vpop.f32.mrf.mxu0
  %3279 = vdwg.mxu0
  %v3280 = vmul.f32 %v3277, 0.5
  %v3281 = vsel %vm1541, %v3280, -inf
  %3282 = vmax.xlane.f32.xlu0 %v3281
  %v3283 = vpop.xlane.xlu0 %3282
  %v3284 = vsub.f32 %v3280, %v3283
  %v3285 = vmul.f32 %v3284, 1.442695
  %v3286 = vpow.pop %v3285
  %v3287 = vsel %vm1541, %v3286, 0.0
  %3288 = vadd.xlane.f32.xlu0 %v3287
  %v3289 = vpop.xlane.xlu0 %3288
  %v3290 = vrcp.pop %v3289
  %v3291 = vmul.f32 %v3286, %v3290
  %v3292 = vpack.c.bf16 %v3291, %v3291
  %v3293 = vpack.c.bf16 %v3255, %v3255
  %v3295 = vsel %vm1541, %v3292, 0
  %v3298 = vsel %vm1558, %v3293, 0
  %3300 = vmatpush.bf16.msra.mxu0 0
  %3301 = vmatpush.bf16.msra.mxu0 0
  %3302 = vmatpush.bf16.msra.mxu0 0
  %3303 = vmatpush.bf16.msra.mxu0 0
  %3304 = vmatpush.bf16.msra.mxu0 0
  %3305 = vmatpush.bf16.msra.mxu0 0
  %3306 = vmatpush.bf16.msra.mxu0 0
  %3307 = vmatpush.bf16.msra.mxu0 %v3298
  %3308 = vmatmul.bf16.gmra.mxu0 %v3295
  %v3309 = vpop.f32.mrf.mxu0
  %v3310 = vadd.f32 0.0, %v3309
  %v3311 = vpop.f32.mrf.mxu0
  %3312 = vdwg.mxu0
  %v3313 = vpack.c.bf16 %v3201, %v3201
  %v3314 = vpack.c.bf16 %v3229, %v3229
  %v3316 = vsel %vm274, %v3313, 0
  %v3319 = vsel %vm274, %v3314, 0
  %3321 = vmatpush.bf16.xpose.msra.mxu0 0
  %3322 = vmatpush.bf16.xpose.msra.mxu0 0
  %3323 = vmatpush.bf16.xpose.msra.mxu0 0
  %3324 = vmatpush.bf16.xpose.msra.mxu0 0
  %3325 = vmatpush.bf16.xpose.msra.mxu0 0
  %3326 = vmatpush.bf16.xpose.msra.mxu0 0
  %3327 = vmatpush.bf16.xpose.msra.mxu0 0
  %3328 = vmatpush.bf16.xpose.msra.mxu0 %v3319
  %3329 = vmatmul.bf16.gmra.mxu0 %v3316
  %v3330 = vpop.f32.mrf.mxu0
  %v3331 = vadd.f32 0.0, %v3330
  %v3332 = vpop.f32.mrf.mxu0
  %3333 = vdwg.mxu0
  %v3334 = vmul.f32 %v3331, 0.5
  %v3335 = vsel %vm1541, %v3334, -inf
  %3336 = vmax.xlane.f32.xlu0 %v3335
  %v3337 = vpop.xlane.xlu0 %3336
  %v3338 = vsub.f32 %v3334, %v3337
  %v3339 = vmul.f32 %v3338, 1.442695
  %v3340 = vpow.pop %v3339
  %v3341 = vsel %vm1541, %v3340, 0.0
  %3342 = vadd.xlane.f32.xlu0 %v3341
  %v3343 = vpop.xlane.xlu0 %3342
  %v3344 = vrcp.pop %v3343
  %v3345 = vmul.f32 %v3340, %v3344
  %v3346 = vpack.c.bf16 %v3345, %v3345
  %v3347 = vpack.c.bf16 %v3257, %v3257
  %v3349 = vsel %vm1541, %v3346, 0
  %v3352 = vsel %vm1558, %v3347, 0
  %3354 = vmatpush.bf16.msra.mxu0 0
  %3355 = vmatpush.bf16.msra.mxu0 0
  %3356 = vmatpush.bf16.msra.mxu0 0
  %3357 = vmatpush.bf16.msra.mxu0 0
  %3358 = vmatpush.bf16.msra.mxu0 0
  %3359 = vmatpush.bf16.msra.mxu0 0
  %3360 = vmatpush.bf16.msra.mxu0 0
  %3361 = vmatpush.bf16.msra.mxu0 %v3352
  %3362 = vmatmul.bf16.gmra.mxu0 %v3349
  %v3363 = vpop.f32.mrf.mxu0
  %v3364 = vadd.f32 0.0, %v3363
  %v3365 = vpop.f32.mrf.mxu0
  %3366 = vdwg.mxu0
  %s3367 = scalar_lea.vmem %s55, 14
  %v3368 = vld [vmem:[%s3367] sm:$0x3]
  %v3369 = vpack.c.bf16 %v3364, %v3310
  %v3371 = vsel %vm274, %v3369, 0
  %v3374 = vsel %vm279, %v3368, 0
  %3376 = vmatpush.bf16.msra.mxu0 0
  %3377 = vmatpush.bf16.msra.mxu0 0
  %3378 = vmatpush.bf16.msra.mxu0 0
  %3379 = vmatpush.bf16.msra.mxu0 0
  %3380 = vmatpush.bf16.msra.mxu0 0
  %3381 = vmatpush.bf16.msra.mxu0 0
  %3382 = vmatpush.bf16.msra.mxu0 0
  %3383 = vmatpush.bf16.msra.mxu0 %v3374
  %3384 = vmatmul.bf16.gmra.mxu0 %v3371
  %v3385 = vpop.f32.mrf.mxu0
  %v3386 = vadd.f32 0.0, %v3385
  %v3387 = vpop.f32.mrf.mxu0
  %v3388 = vadd.f32 0.0, %v3387
  %3389 = vdwg.mxu0
  %v3390 = vadd.f32 %v3173, %v3386
  %v3391 = vadd.f32 %v3174, %v3388
  %v3392 = vadd.f32 %v2512, %v3390
  %v3393 = vadd.f32 %v2513, %v3391
  %s3394 = scalar_lea.vmem %s59, 1
  %v3395 = vld [vmem:[%s3394] sm:$0x1]
  %s3396 = scalar_lea.vmem %s61, 1
  %v3397 = vld [vmem:[%s3396] sm:$0x1]
  %v3398 = vsel %vm428, %v3392, 0.0
  %3399 = vadd.xlane.f32.xlu0 %v3398
  %v3400 = vpop.xlane.xlu0 %3399
  %v3401 = vsel %vm428, %v3393, 0.0
  %3402 = vadd.xlane.f32.xlu0 %v3401
  %v3403 = vpop.xlane.xlu0 %3402
  %v3404 = vmul.f32 %v3400, %v2320
  %v3405 = vmul.f32 %v3403, %v2320
  %v3406 = vsub.f32 %v3392, %v3404
  %v3407 = vsub.f32 %v3393, %v3405
  %v3408 = vmul.f32 %v3406, %v3406
  %v3409 = vmul.f32 %v3407, %v3407
  %v3410 = vsel %vm428, %v3408, 0.0
  %3411 = vadd.xlane.f32.xlu0 %v3410
  %v3412 = vpop.xlane.xlu0 %3411
  %v3413 = vsel %vm428, %v3409, 0.0
  %3414 = vadd.xlane.f32.xlu0 %v3413
  %v3415 = vpop.xlane.xlu0 %3414
  %v3416 = vmul.f32 %v3412, %v2320
  %v3417 = vmul.f32 %v3415, %v2320
  %v3418 = vadd.f32 %v3416, 1e-05
  %v3419 = vadd.f32 %v3417, 1e-05
  %v3420 = vrsqrt.pop %v3418
  %v3421 = vmul.f32 %v3420, %v3418
  %v3422 = vmul.f32 %v3421, %v3420
  %v3423 = vmul.f32 0.5, %v3422
  %v3424 = vsub.f32 1.5, %v3423
  %v3425 = vmul.f32 %v3420, %v3424
  %vm3426 = vweird.f32 %v3418
  %vm3427 = vweird.f32 %v3420
  %vm3428 = vmor %vm3426, %vm3427
  %v3429 = vsel %vm3428, %v3420, %v3425
  %v3430 = vrsqrt.pop %v3419
  %v3431 = vmul.f32 %v3430, %v3419
  %v3432 = vmul.f32 %v3431, %v3430
  %v3433 = vmul.f32 0.5, %v3432
  %v3434 = vsub.f32 1.5, %v3433
  %v3435 = vmul.f32 %v3430, %v3434
  %vm3436 = vweird.f32 %v3419
  %vm3437 = vweird.f32 %v3430
  %vm3438 = vmor %vm3436, %vm3437
  %v3439 = vsel %vm3438, %v3430, %v3435
  %v3440 = vmul.f32 %v3406, %v3429
  %v3441 = vmul.f32 %v3407, %v3439
  %v3443 = vperm.slane %v3395, 0
  %v3445 = vmul.f32 %v3440, %v3443
  %v3446 = vmul.f32 %v3441, %v3443
  %v3448 = vperm.slane %v3397, 0
  %v3450 = vadd.f32 %v3445, %v3448
  %v3451 = vadd.f32 %v3446, %v3448
  %s3452 = scalar_lea.vmem %s63, 8
  %v3453 = vld [vmem:[%s3452] sm:$0xf]
  %v3454 = vld [vmem:[%s3452 + $0x4] sm:$0xf]
  %v3455 = vpack.c.bf16 %v3451, %v3450
  %s3456 = scalar_lea.vmem %s65, 1
  %v3457 = vld [vmem:[%s3456] sm:$0x1]
  %v3459 = vperm.slane %v3457, 0
  %v3463 = vunpack.c.l.b16 %v3453
  %v3464 = vunpack.c.l.b16 %v3454
  %v3465 = vpack.c.b16 %v3464, %v3463
  %v3468 = vsel %vm428, %v3455, 0
  %3470 = vmatpush.bf16.msra.mxu0 0
  %3471 = vmatpush.bf16.msra.mxu0 0
  %3472 = vmatpush.bf16.msra.mxu0 0
  %3473 = vmatpush.bf16.msra.mxu0 0
  %3474 = vmatpush.bf16.msra.mxu0 0
  %3475 = vmatpush.bf16.msra.mxu0 0
  %3476 = vmatpush.bf16.msra.mxu0 0
  %3477 = vmatpush.bf16.msra.mxu0 %v3465
  %3478 = vmatmul.bf16.gmra.mxu0 %v3468
  %v3479 = vpop.f32.mrf.mxu0
  %v3480 = vadd.f32 %v3459, %v3479
  %v3481 = vpop.f32.mrf.mxu0
  %v3482 = vadd.f32 %v3459, %v3481
  %3483 = vdwg.mxu0
  %v3484 = vmax.f32 %v3480, 0.0
  %v3485 = vmax.f32 %v3482, 0.0
  %s3486 = scalar_lea.vmem %s67, 32
  %v3487 = vld [vmem:[%s3486] sm:$0xf]
  %v3488 = vld [vmem:[%s3486 + $0x4] sm:$0xf]
  %v3489 = vld [vmem:[%s3486 + $0x8] sm:$0xf]
  %v3490 = vld [vmem:[%s3486 + $0xc] sm:$0xf]
  %v3491 = vld [vmem:[%s3486 + $0x10] sm:$0xf]
  %v3492 = vld [vmem:[%s3486 + $0x14] sm:$0xf]
  %v3493 = vld [vmem:[%s3486 + $0x18] sm:$0xf]
  %v3494 = vld [vmem:[%s3486 + $0x1c] sm:$0xf]
  %v3495 = vpack.c.bf16 %v3485, %v3484
  %s3496 = scalar_lea.vmem %s69, 1
  %v3497 = vld [vmem:[%s3496] sm:$0x1]
  %v3499 = vperm.slane %v3497, 0
  %v3509 = vunpack.c.l.b16 %v3487
  %v3510 = vunpack.c.l.b16 %v3488
  %v3511 = vunpack.c.l.b16 %v3489
  %v3512 = vunpack.c.l.b16 %v3490
  %v3513 = vunpack.c.l.b16 %v3491
  %v3514 = vunpack.c.l.b16 %v3492
  %v3515 = vunpack.c.l.b16 %v3493
  %v3516 = vunpack.c.l.b16 %v3494
  %v3517 = vpack.c.b16 %v3510, %v3509
  %v3518 = vpack.c.b16 %v3512, %v3511
  %v3519 = vpack.c.b16 %v3514, %v3513
  %v3520 = vpack.c.b16 %v3516, %v3515
  %v3526 = vsel %vm2438, %v3495, 0
  %3528 = vmatpush.bf16.msra.mxu0 0
  %3529 = vmatpush.bf16.msra.mxu0 0
  %3530 = vmatpush.bf16.msra.mxu0 0
  %3531 = vmatpush.bf16.msra.mxu0 0
  %3532 = vmatpush.bf16.msra.mxu0 %v3520
  %3533 = vmatpush.bf16.msra.mxu0 %v3519
  %3534 = vmatpush.bf16.msra.mxu0 %v3518
  %3535 = vmatpush.bf16.msra.mxu0 %v3517
  %3536 = vmatmul.bf16.gmra.mxu0 %v3526
  %v3537 = vpop.f32.mrf.mxu0
  %v3538 = vadd.f32 %v3499, %v3537
  %v3539 = vpop.f32.mrf.mxu0
  %v3540 = vadd.f32 %v3499, %v3539
  %3541 = vdwg.mxu0
  %v3542 = vadd.f32 %v3450, %v3538
  %v3543 = vadd.f32 %v3451, %v3540
  %s3544 = scalar_lea.vmem %s71, 1
  %v3545 = vld [vmem:[%s3544] sm:$0x1]
  %s3546 = scalar_lea.vmem %s73, 1
  %v3547 = vld [vmem:[%s3546] sm:$0x1]
  %v3548 = vsel %vm428, %v3542, 0.0
  %3549 = vadd.xlane.f32.xlu0 %v3548
  %v3550 = vpop.xlane.xlu0 %3549
  %v3551 = vsel %vm428, %v3543, 0.0
  %3552 = vadd.xlane.f32.xlu0 %v3551
  %v3553 = vpop.xlane.xlu0 %3552
  %v3554 = vmul.f32 %v3550, %v2320
  %v3555 = vmul.f32 %v3553, %v2320
  %v3556 = vsub.f32 %v3542, %v3554
  %v3557 = vsub.f32 %v3543, %v3555
  %v3558 = vmul.f32 %v3556, %v3556
  %v3559 = vmul.f32 %v3557, %v3557
  %v3560 = vsel %vm428, %v3558, 0.0
  %3561 = vadd.xlane.f32.xlu0 %v3560
  %v3562 = vpop.xlane.xlu0 %3561
  %v3563 = vsel %vm428, %v3559, 0.0
  %3564 = vadd.xlane.f32.xlu0 %v3563
  %v3565 = vpop.xlane.xlu0 %3564
  %v3566 = vmul.f32 %v3562, %v2320
  %v3567 = vmul.f32 %v3565, %v2320
  %v3568 = vadd.f32 %v3566, 1e-05
  %v3569 = vadd.f32 %v3567, 1e-05
  %v3570 = vrsqrt.pop %v3568
  %v3571 = vmul.f32 %v3570, %v3568
  %v3572 = vmul.f32 %v3571, %v3570
  %v3573 = vmul.f32 0.5, %v3572
  %v3574 = vsub.f32 1.5, %v3573
  %v3575 = vmul.f32 %v3570, %v3574
  %vm3576 = vweird.f32 %v3568
  %vm3577 = vweird.f32 %v3570
  %vm3578 = vmor %vm3576, %vm3577
  %v3579 = vsel %vm3578, %v3570, %v3575
  %v3580 = vrsqrt.pop %v3569
  %v3581 = vmul.f32 %v3580, %v3569
  %v3582 = vmul.f32 %v3581, %v3580
  %v3583 = vmul.f32 0.5, %v3582
  %v3584 = vsub.f32 1.5, %v3583
  %v3585 = vmul.f32 %v3580, %v3584
  %vm3586 = vweird.f32 %v3569
  %vm3587 = vweird.f32 %v3580
  %vm3588 = vmor %vm3586, %vm3587
  %v3589 = vsel %vm3588, %v3580, %v3585
  %v3590 = vmul.f32 %v3556, %v3579
  %v3591 = vmul.f32 %v3557, %v3589
  %v3593 = vperm.slane %v3545, 0
  %v3595 = vmul.f32 %v3590, %v3593
  %v3596 = vmul.f32 %v3591, %v3593
  %v3598 = vperm.slane %v3547, 0
  %v3600 = vadd.f32 %v3595, %v3598
  %v3601 = vadd.f32 %v3596, %v3598
  %s3602 = scalar_lea.vmem %s57, 2
  %v3603 = vld [vmem:[%s3602] sm:$0x1]
  %v3605 = vperm.slane %v3603, 0
  %v3607 = vadd.f32 %v3605, 0.0
  %s3608 = scalar_lea.vmem %s43, 64
  %v3609 = vld [vmem:[%s3608] sm:$0xf]
  %v3610 = vld [vmem:[%s3608 + $0x4] sm:$0xf]
  %v3611 = vpack.c.bf16 %v3601, %v3600
  %s3612 = scalar_lea.vmem %s49, 8
  %v3613 = vld [vmem:[%s3612] sm:$0x1]
  %v3615 = vperm.slane %v3613, 0
  %v3619 = vunpack.c.l.b16 %v3609
  %v3620 = vunpack.c.l.b16 %v3610
  %v3621 = vpack.c.b16 %v3620, %v3619
  %v3624 = vsel %vm428, %v3611, 0
  %3626 = vmatpush.bf16.msra.mxu0 0
  %3627 = vmatpush.bf16.msra.mxu0 0
  %3628 = vmatpush.bf16.msra.mxu0 0
  %3629 = vmatpush.bf16.msra.mxu0 0
  %3630 = vmatpush.bf16.msra.mxu0 0
  %3631 = vmatpush.bf16.msra.mxu0 0
  %3632 = vmatpush.bf16.msra.mxu0 0
  %3633 = vmatpush.bf16.msra.mxu0 %v3621
  %3634 = vmatmul.bf16.gmra.mxu0 %v3624
  %v3635 = vpop.f32.mrf.mxu0
  %v3636 = vadd.f32 %v3615, %v3635
  %v3637 = vpop.f32.mrf.mxu0
  %v3638 = vadd.f32 %v3615, %v3637
  %3639 = vdwg.mxu0
  %s3640 = scalar_lea.vmem %s45, 64
  %v3641 = vld [vmem:[%s3640] sm:$0xf]
  %v3642 = vld [vmem:[%s3640 + $0x4] sm:$0xf]
  %s3643 = scalar_lea.vmem %s51, 8
  %v3644 = vld [vmem:[%s3643] sm:$0x1]
  %v3646 = vperm.slane %v3644, 0
  %v3650 = vunpack.c.l.b16 %v3641
  %v3651 = vunpack.c.l.b16 %v3642
  %v3652 = vpack.c.b16 %v3651, %v3650
  %3654 = vmatpush.bf16.msra.mxu0 0
  %3655 = vmatpush.bf16.msra.mxu0 0
  %3656 = vmatpush.bf16.msra.mxu0 0
  %3657 = vmatpush.bf16.msra.mxu0 0
  %3658 = vmatpush.bf16.msra.mxu0 0
  %3659 = vmatpush.bf16.msra.mxu0 0
  %3660 = vmatpush.bf16.msra.mxu0 0
  %3661 = vmatpush.bf16.msra.mxu0 %v3652
  %3662 = vmatmul.bf16.gmra.mxu0 %v3624
  %v3663 = vpop.f32.mrf.mxu0
  %v3664 = vadd.f32 %v3646, %v3663
  %v3665 = vpop.f32.mrf.mxu0
  %v3666 = vadd.f32 %v3646, %v3665
  %3667 = vdwg.mxu0
  %s3668 = scalar_lea.vmem %s47, 64
  %v3669 = vld [vmem:[%s3668] sm:$0xf]
  %v3670 = vld [vmem:[%s3668 + $0x4] sm:$0xf]
  %s3671 = scalar_lea.vmem %s53, 8
  %v3672 = vld [vmem:[%s3671] sm:$0x1]
  %v3674 = vperm.slane %v3672, 0
  %v3678 = vunpack.c.l.b16 %v3669
  %v3679 = vunpack.c.l.b16 %v3670
  %v3680 = vpack.c.b16 %v3679, %v3678
  %3682 = vmatpush.bf16.msra.mxu0 0
  %3683 = vmatpush.bf16.msra.mxu0 0
  %3684 = vmatpush.bf16.msra.mxu0 0
  %3685 = vmatpush.bf16.msra.mxu0 0
  %3686 = vmatpush.bf16.msra.mxu0 0
  %3687 = vmatpush.bf16.msra.mxu0 0
  %3688 = vmatpush.bf16.msra.mxu0 0
  %3689 = vmatpush.bf16.msra.mxu0 %v3680
  %3690 = vmatmul.bf16.gmra.mxu0 %v3624
  %v3691 = vpop.f32.mrf.mxu0
  %v3692 = vadd.f32 %v3674, %v3691
  %v3693 = vpop.f32.mrf.mxu0
  %v3694 = vadd.f32 %v3674, %v3693
  %3695 = vdwg.mxu0
  %v3696 = vpack.c.bf16 %v3636, %v3636
  %v3697 = vpack.c.bf16 %v3664, %v3664
  %v3699 = vsel %vm274, %v3696, 0
  %v3702 = vsel %vm274, %v3697, 0
  %3704 = vmatpush.bf16.xpose.msra.mxu0 0
  %3705 = vmatpush.bf16.xpose.msra.mxu0 0
  %3706 = vmatpush.bf16.xpose.msra.mxu0 0
  %3707 = vmatpush.bf16.xpose.msra.mxu0 0
  %3708 = vmatpush.bf16.xpose.msra.mxu0 0
  %3709 = vmatpush.bf16.xpose.msra.mxu0 0
  %3710 = vmatpush.bf16.xpose.msra.mxu0 0
  %3711 = vmatpush.bf16.xpose.msra.mxu0 %v3702
  %3712 = vmatmul.bf16.gmra.mxu0 %v3699
  %v3713 = vpop.f32.mrf.mxu0
  %v3714 = vadd.f32 0.0, %v3713
  %v3715 = vpop.f32.mrf.mxu0
  %3716 = vdwg.mxu0
  %v3717 = vmul.f32 %v3714, 0.5
  %v3718 = vsel %vm1541, %v3717, -inf
  %3719 = vmax.xlane.f32.xlu0 %v3718
  %v3720 = vpop.xlane.xlu0 %3719
  %v3721 = vsub.f32 %v3717, %v3720
  %v3722 = vmul.f32 %v3721, 1.442695
  %v3723 = vpow.pop %v3722
  %v3724 = vsel %vm1541, %v3723, 0.0
  %3725 = vadd.xlane.f32.xlu0 %v3724
  %v3726 = vpop.xlane.xlu0 %3725
  %v3727 = vrcp.pop %v3726
  %v3728 = vmul.f32 %v3723, %v3727
  %v3729 = vpack.c.bf16 %v3728, %v3728
  %v3730 = vpack.c.bf16 %v3692, %v3692
  %v3732 = vsel %vm1541, %v3729, 0
  %v3735 = vsel %vm1558, %v3730, 0
  %3737 = vmatpush.bf16.msra.mxu0 0
  %3738 = vmatpush.bf16.msra.mxu0 0
  %3739 = vmatpush.bf16.msra.mxu0 0
  %3740 = vmatpush.bf16.msra.mxu0 0
  %3741 = vmatpush.bf16.msra.mxu0 0
  %3742 = vmatpush.bf16.msra.mxu0 0
  %3743 = vmatpush.bf16.msra.mxu0 0
  %3744 = vmatpush.bf16.msra.mxu0 %v3735
  %3745 = vmatmul.bf16.gmra.mxu0 %v3732
  %v3746 = vpop.f32.mrf.mxu0
  %v3747 = vadd.f32 0.0, %v3746
  %v3748 = vpop.f32.mrf.mxu0
  %3749 = vdwg.mxu0
  %v3750 = vpack.c.bf16 %v3638, %v3638
  %v3751 = vpack.c.bf16 %v3666, %v3666
  %v3753 = vsel %vm274, %v3750, 0
  %v3756 = vsel %vm274, %v3751, 0
  %3758 = vmatpush.bf16.xpose.msra.mxu0 0
  %3759 = vmatpush.bf16.xpose.msra.mxu0 0
  %3760 = vmatpush.bf16.xpose.msra.mxu0 0
  %3761 = vmatpush.bf16.xpose.msra.mxu0 0
  %3762 = vmatpush.bf16.xpose.msra.mxu0 0
  %3763 = vmatpush.bf16.xpose.msra.mxu0 0
  %3764 = vmatpush.bf16.xpose.msra.mxu0 0
  %3765 = vmatpush.bf16.xpose.msra.mxu0 %v3756
  %3766 = vmatmul.bf16.gmra.mxu0 %v3753
  %v3767 = vpop.f32.mrf.mxu0
  %v3768 = vadd.f32 0.0, %v3767
  %v3769 = vpop.f32.mrf.mxu0
  %3770 = vdwg.mxu0
  %v3771 = vmul.f32 %v3768, 0.5
  %v3772 = vsel %vm1541, %v3771, -inf
  %3773 = vmax.xlane.f32.xlu0 %v3772
  %v3774 = vpop.xlane.xlu0 %3773
  %v3775 = vsub.f32 %v3771, %v3774
  %v3776 = vmul.f32 %v3775, 1.442695
  %v3777 = vpow.pop %v3776
  %v3778 = vsel %vm1541, %v3777, 0.0
  %3779 = vadd.xlane.f32.xlu0 %v3778
  %v3780 = vpop.xlane.xlu0 %3779
  %v3781 = vrcp.pop %v3780
  %v3782 = vmul.f32 %v3777, %v3781
  %v3783 = vpack.c.bf16 %v3782, %v3782
  %v3784 = vpack.c.bf16 %v3694, %v3694
  %v3786 = vsel %vm1541, %v3783, 0
  %v3789 = vsel %vm1558, %v3784, 0
  %3791 = vmatpush.bf16.msra.mxu0 0
  %3792 = vmatpush.bf16.msra.mxu0 0
  %3793 = vmatpush.bf16.msra.mxu0 0
  %3794 = vmatpush.bf16.msra.mxu0 0
  %3795 = vmatpush.bf16.msra.mxu0 0
  %3796 = vmatpush.bf16.msra.mxu0 0
  %3797 = vmatpush.bf16.msra.mxu0 0
  %3798 = vmatpush.bf16.msra.mxu0 %v3789
  %3799 = vmatmul.bf16.gmra.mxu0 %v3786
  %v3800 = vpop.f32.mrf.mxu0
  %v3801 = vadd.f32 0.0, %v3800
  %v3802 = vpop.f32.mrf.mxu0
  %3803 = vdwg.mxu0
  %s3804 = scalar_lea.vmem %s55, 16
  %v3805 = vld [vmem:[%s3804] sm:$0x3]
  %v3806 = vpack.c.bf16 %v3801, %v3747
  %v3808 = vsel %vm274, %v3806, 0
  %v3811 = vsel %vm279, %v3805, 0
  %3813 = vmatpush.bf16.msra.mxu0 0
  %3814 = vmatpush.bf16.msra.mxu0 0
  %3815 = vmatpush.bf16.msra.mxu0 0
  %3816 = vmatpush.bf16.msra.mxu0 0
  %3817 = vmatpush.bf16.msra.mxu0 0
  %3818 = vmatpush.bf16.msra.mxu0 0
  %3819 = vmatpush.bf16.msra.mxu0 0
  %3820 = vmatpush.bf16.msra.mxu0 %v3811
  %3821 = vmatmul.bf16.gmra.mxu0 %v3808
  %v3822 = vpop.f32.mrf.mxu0
  %v3823 = vadd.f32 0.0, %v3822
  %v3824 = vpop.f32.mrf.mxu0
  %v3825 = vadd.f32 0.0, %v3824
  %3826 = vdwg.mxu0
  %v3827 = vadd.f32 %v3607, %v3823
  %v3828 = vadd.f32 %v3607, %v3825
  %s3829 = scalar_lea.vmem %s43, 72
  %v3830 = vld [vmem:[%s3829] sm:$0xf]
  %v3831 = vld [vmem:[%s3829 + $0x4] sm:$0xf]
  %s3832 = scalar_lea.vmem %s49, 9
  %v3833 = vld [vmem:[%s3832] sm:$0x1]
  %v3835 = vperm.slane %v3833, 0
  %v3839 = vunpack.c.l.b16 %v3830
  %v3840 = vunpack.c.l.b16 %v3831
  %v3841 = vpack.c.b16 %v3840, %v3839
  %3843 = vmatpush.bf16.msra.mxu0 0
  %3844 = vmatpush.bf16.msra.mxu0 0
  %3845 = vmatpush.bf16.msra.mxu0 0
  %3846 = vmatpush.bf16.msra.mxu0 0
  %3847 = vmatpush.bf16.msra.mxu0 0
  %3848 = vmatpush.bf16.msra.mxu0 0
  %3849 = vmatpush.bf16.msra.mxu0 0
  %3850 = vmatpush.bf16.msra.mxu0 %v3841
  %3851 = vmatmul.bf16.gmra.mxu0 %v3624
  %v3852 = vpop.f32.mrf.mxu0
  %v3853 = vadd.f32 %v3835, %v3852
  %v3854 = vpop.f32.mrf.mxu0
  %v3855 = vadd.f32 %v3835, %v3854
  %3856 = vdwg.mxu0
  %s3857 = scalar_lea.vmem %s45, 72
  %v3858 = vld [vmem:[%s3857] sm:$0xf]
  %v3859 = vld [vmem:[%s3857 + $0x4] sm:$0xf]
  %s3860 = scalar_lea.vmem %s51, 9
  %v3861 = vld [vmem:[%s3860] sm:$0x1]
  %v3863 = vperm.slane %v3861, 0
  %v3867 = vunpack.c.l.b16 %v3858
  %v3868 = vunpack.c.l.b16 %v3859
  %v3869 = vpack.c.b16 %v3868, %v3867
  %3871 = vmatpush.bf16.msra.mxu0 0
  %3872 = vmatpush.bf16.msra.mxu0 0
  %3873 = vmatpush.bf16.msra.mxu0 0
  %3874 = vmatpush.bf16.msra.mxu0 0
  %3875 = vmatpush.bf16.msra.mxu0 0
  %3876 = vmatpush.bf16.msra.mxu0 0
  %3877 = vmatpush.bf16.msra.mxu0 0
  %3878 = vmatpush.bf16.msra.mxu0 %v3869
  %3879 = vmatmul.bf16.gmra.mxu0 %v3624
  %v3880 = vpop.f32.mrf.mxu0
  %v3881 = vadd.f32 %v3863, %v3880
  %v3882 = vpop.f32.mrf.mxu0
  %v3883 = vadd.f32 %v3863, %v3882
  %3884 = vdwg.mxu0
  %s3885 = scalar_lea.vmem %s47, 72
  %v3886 = vld [vmem:[%s3885] sm:$0xf]
  %v3887 = vld [vmem:[%s3885 + $0x4] sm:$0xf]
  %s3888 = scalar_lea.vmem %s53, 9
  %v3889 = vld [vmem:[%s3888] sm:$0x1]
  %v3891 = vperm.slane %v3889, 0
  %v3895 = vunpack.c.l.b16 %v3886
  %v3896 = vunpack.c.l.b16 %v3887
  %v3897 = vpack.c.b16 %v3896, %v3895
  %3899 = vmatpush.bf16.msra.mxu0 0
  %3900 = vmatpush.bf16.msra.mxu0 0
  %3901 = vmatpush.bf16.msra.mxu0 0
  %3902 = vmatpush.bf16.msra.mxu0 0
  %3903 = vmatpush.bf16.msra.mxu0 0
  %3904 = vmatpush.bf16.msra.mxu0 0
  %3905 = vmatpush.bf16.msra.mxu0 0
  %3906 = vmatpush.bf16.msra.mxu0 %v3897
  %3907 = vmatmul.bf16.gmra.mxu0 %v3624
  %v3908 = vpop.f32.mrf.mxu0
  %v3909 = vadd.f32 %v3891, %v3908
  %v3910 = vpop.f32.mrf.mxu0
  %v3911 = vadd.f32 %v3891, %v3910
  %3912 = vdwg.mxu0
  %v3913 = vpack.c.bf16 %v3853, %v3853
  %v3914 = vpack.c.bf16 %v3881, %v3881
  %v3916 = vsel %vm274, %v3913, 0
  %v3919 = vsel %vm274, %v3914, 0
  %3921 = vmatpush.bf16.xpose.msra.mxu0 0
  %3922 = vmatpush.bf16.xpose.msra.mxu0 0
  %3923 = vmatpush.bf16.xpose.msra.mxu0 0
  %3924 = vmatpush.bf16.xpose.msra.mxu0 0
  %3925 = vmatpush.bf16.xpose.msra.mxu0 0
  %3926 = vmatpush.bf16.xpose.msra.mxu0 0
  %3927 = vmatpush.bf16.xpose.msra.mxu0 0
  %3928 = vmatpush.bf16.xpose.msra.mxu0 %v3919
  %3929 = vmatmul.bf16.gmra.mxu0 %v3916
  %v3930 = vpop.f32.mrf.mxu0
  %v3931 = vadd.f32 0.0, %v3930
  %v3932 = vpop.f32.mrf.mxu0
  %3933 = vdwg.mxu0
  %v3934 = vmul.f32 %v3931, 0.5
  %v3935 = vsel %vm1541, %v3934, -inf
  %3936 = vmax.xlane.f32.xlu0 %v3935
  %v3937 = vpop.xlane.xlu0 %3936
  %v3938 = vsub.f32 %v3934, %v3937
  %v3939 = vmul.f32 %v3938, 1.442695
  %v3940 = vpow.pop %v3939
  %v3941 = vsel %vm1541, %v3940, 0.0
  %3942 = vadd.xlane.f32.xlu0 %v3941
  %v3943 = vpop.xlane.xlu0 %3942
  %v3944 = vrcp.pop %v3943
  %v3945 = vmul.f32 %v3940, %v3944
  %v3946 = vpack.c.bf16 %v3945, %v3945
  %v3947 = vpack.c.bf16 %v3909, %v3909
  %v3949 = vsel %vm1541, %v3946, 0
  %v3952 = vsel %vm1558, %v3947, 0
  %3954 = vmatpush.bf16.msra.mxu0 0
  %3955 = vmatpush.bf16.msra.mxu0 0
  %3956 = vmatpush.bf16.msra.mxu0 0
  %3957 = vmatpush.bf16.msra.mxu0 0
  %3958 = vmatpush.bf16.msra.mxu0 0
  %3959 = vmatpush.bf16.msra.mxu0 0
  %3960 = vmatpush.bf16.msra.mxu0 0
  %3961 = vmatpush.bf16.msra.mxu0 %v3952
  %3962 = vmatmul.bf16.gmra.mxu0 %v3949
  %v3963 = vpop.f32.mrf.mxu0
  %v3964 = vadd.f32 0.0, %v3963
  %v3965 = vpop.f32.mrf.mxu0
  %3966 = vdwg.mxu0
  %v3967 = vpack.c.bf16 %v3855, %v3855
  %v3968 = vpack.c.bf16 %v3883, %v3883
  %v3970 = vsel %vm274, %v3967, 0
  %v3973 = vsel %vm274, %v3968, 0
  %3975 = vmatpush.bf16.xpose.msra.mxu0 0
  %3976 = vmatpush.bf16.xpose.msra.mxu0 0
  %3977 = vmatpush.bf16.xpose.msra.mxu0 0
  %3978 = vmatpush.bf16.xpose.msra.mxu0 0
  %3979 = vmatpush.bf16.xpose.msra.mxu0 0
  %3980 = vmatpush.bf16.xpose.msra.mxu0 0
  %3981 = vmatpush.bf16.xpose.msra.mxu0 0
  %3982 = vmatpush.bf16.xpose.msra.mxu0 %v3973
  %3983 = vmatmul.bf16.gmra.mxu0 %v3970
  %v3984 = vpop.f32.mrf.mxu0
  %v3985 = vadd.f32 0.0, %v3984
  %v3986 = vpop.f32.mrf.mxu0
  %3987 = vdwg.mxu0
  %v3988 = vmul.f32 %v3985, 0.5
  %v3989 = vsel %vm1541, %v3988, -inf
  %3990 = vmax.xlane.f32.xlu0 %v3989
  %v3991 = vpop.xlane.xlu0 %3990
  %v3992 = vsub.f32 %v3988, %v3991
  %v3993 = vmul.f32 %v3992, 1.442695
  %v3994 = vpow.pop %v3993
  %v3995 = vsel %vm1541, %v3994, 0.0
  %3996 = vadd.xlane.f32.xlu0 %v3995
  %v3997 = vpop.xlane.xlu0 %3996
  %v3998 = vrcp.pop %v3997
  %v3999 = vmul.f32 %v3994, %v3998
  %v4000 = vpack.c.bf16 %v3999, %v3999
  %v4001 = vpack.c.bf16 %v3911, %v3911
  %v4003 = vsel %vm1541, %v4000, 0
  %v4006 = vsel %vm1558, %v4001, 0
  %4008 = vmatpush.bf16.msra.mxu0 0
  %4009 = vmatpush.bf16.msra.mxu0 0
  %4010 = vmatpush.bf16.msra.mxu0 0
  %4011 = vmatpush.bf16.msra.mxu0 0
  %4012 = vmatpush.bf16.msra.mxu0 0
  %4013 = vmatpush.bf16.msra.mxu0 0
  %4014 = vmatpush.bf16.msra.mxu0 0
  %4015 = vmatpush.bf16.msra.mxu0 %v4006
  %4016 = vmatmul.bf16.gmra.mxu0 %v4003
  %v4017 = vpop.f32.mrf.mxu0
  %v4018 = vadd.f32 0.0, %v4017
  %v4019 = vpop.f32.mrf.mxu0
  %4020 = vdwg.mxu0
  %s4021 = scalar_lea.vmem %s55, 18
  %v4022 = vld [vmem:[%s4021] sm:$0x3]
  %v4023 = vpack.c.bf16 %v4018, %v3964
  %v4025 = vsel %vm274, %v4023, 0
  %v4028 = vsel %vm279, %v4022, 0
  %4030 = vmatpush.bf16.msra.mxu0 0
  %4031 = vmatpush.bf16.msra.mxu0 0
  %4032 = vmatpush.bf16.msra.mxu0 0
  %4033 = vmatpush.bf16.msra.mxu0 0
  %4034 = vmatpush.bf16.msra.mxu0 0
  %4035 = vmatpush.bf16.msra.mxu0 0
  %4036 = vmatpush.bf16.msra.mxu0 0
  %4037 = vmatpush.bf16.msra.mxu0 %v4028
  %4038 = vmatmul.bf16.gmra.mxu0 %v4025
  %v4039 = vpop.f32.mrf.mxu0
  %v4040 = vadd.f32 0.0, %v4039
  %v4041 = vpop.f32.mrf.mxu0
  %v4042 = vadd.f32 0.0, %v4041
  %4043 = vdwg.mxu0
  %v4044 = vadd.f32 %v3827, %v4040
  %v4045 = vadd.f32 %v3828, %v4042
  %s4046 = scalar_lea.vmem %s43, 80
  %v4047 = vld [vmem:[%s4046] sm:$0xf]
  %v4048 = vld [vmem:[%s4046 + $0x4] sm:$0xf]
  %s4049 = scalar_lea.vmem %s49, 10
  %v4050 = vld [vmem:[%s4049] sm:$0x1]
  %v4052 = vperm.slane %v4050, 0
  %v4056 = vunpack.c.l.b16 %v4047
  %v4057 = vunpack.c.l.b16 %v4048
  %v4058 = vpack.c.b16 %v4057, %v4056
  %4060 = vmatpush.bf16.msra.mxu0 0
  %4061 = vmatpush.bf16.msra.mxu0 0
  %4062 = vmatpush.bf16.msra.mxu0 0
  %4063 = vmatpush.bf16.msra.mxu0 0
  %4064 = vmatpush.bf16.msra.mxu0 0
  %4065 = vmatpush.bf16.msra.mxu0 0
  %4066 = vmatpush.bf16.msra.mxu0 0
  %4067 = vmatpush.bf16.msra.mxu0 %v4058
  %4068 = vmatmul.bf16.gmra.mxu0 %v3624
  %v4069 = vpop.f32.mrf.mxu0
  %v4070 = vadd.f32 %v4052, %v4069
  %v4071 = vpop.f32.mrf.mxu0
  %v4072 = vadd.f32 %v4052, %v4071
  %4073 = vdwg.mxu0
  %s4074 = scalar_lea.vmem %s45, 80
  %v4075 = vld [vmem:[%s4074] sm:$0xf]
  %v4076 = vld [vmem:[%s4074 + $0x4] sm:$0xf]
  %s4077 = scalar_lea.vmem %s51, 10
  %v4078 = vld [vmem:[%s4077] sm:$0x1]
  %v4080 = vperm.slane %v4078, 0
  %v4084 = vunpack.c.l.b16 %v4075
  %v4085 = vunpack.c.l.b16 %v4076
  %v4086 = vpack.c.b16 %v4085, %v4084
  %4088 = vmatpush.bf16.msra.mxu0 0
  %4089 = vmatpush.bf16.msra.mxu0 0
  %4090 = vmatpush.bf16.msra.mxu0 0
  %4091 = vmatpush.bf16.msra.mxu0 0
  %4092 = vmatpush.bf16.msra.mxu0 0
  %4093 = vmatpush.bf16.msra.mxu0 0
  %4094 = vmatpush.bf16.msra.mxu0 0
  %4095 = vmatpush.bf16.msra.mxu0 %v4086
  %4096 = vmatmul.bf16.gmra.mxu0 %v3624
  %v4097 = vpop.f32.mrf.mxu0
  %v4098 = vadd.f32 %v4080, %v4097
  %v4099 = vpop.f32.mrf.mxu0
  %v4100 = vadd.f32 %v4080, %v4099
  %4101 = vdwg.mxu0
  %s4102 = scalar_lea.vmem %s47, 80
  %v4103 = vld [vmem:[%s4102] sm:$0xf]
  %v4104 = vld [vmem:[%s4102 + $0x4] sm:$0xf]
  %s4105 = scalar_lea.vmem %s53, 10
  %v4106 = vld [vmem:[%s4105] sm:$0x1]
  %v4108 = vperm.slane %v4106, 0
  %v4112 = vunpack.c.l.b16 %v4103
  %v4113 = vunpack.c.l.b16 %v4104
  %v4114 = vpack.c.b16 %v4113, %v4112
  %4116 = vmatpush.bf16.msra.mxu0 0
  %4117 = vmatpush.bf16.msra.mxu0 0
  %4118 = vmatpush.bf16.msra.mxu0 0
  %4119 = vmatpush.bf16.msra.mxu0 0
  %4120 = vmatpush.bf16.msra.mxu0 0
  %4121 = vmatpush.bf16.msra.mxu0 0
  %4122 = vmatpush.bf16.msra.mxu0 0
  %4123 = vmatpush.bf16.msra.mxu0 %v4114
  %4124 = vmatmul.bf16.gmra.mxu0 %v3624
  %v4125 = vpop.f32.mrf.mxu0
  %v4126 = vadd.f32 %v4108, %v4125
  %v4127 = vpop.f32.mrf.mxu0
  %v4128 = vadd.f32 %v4108, %v4127
  %4129 = vdwg.mxu0
  %v4130 = vpack.c.bf16 %v4070, %v4070
  %v4131 = vpack.c.bf16 %v4098, %v4098
  %v4133 = vsel %vm274, %v4130, 0
  %v4136 = vsel %vm274, %v4131, 0
  %4138 = vmatpush.bf16.xpose.msra.mxu0 0
  %4139 = vmatpush.bf16.xpose.msra.mxu0 0
  %4140 = vmatpush.bf16.xpose.msra.mxu0 0
  %4141 = vmatpush.bf16.xpose.msra.mxu0 0
  %4142 = vmatpush.bf16.xpose.msra.mxu0 0
  %4143 = vmatpush.bf16.xpose.msra.mxu0 0
  %4144 = vmatpush.bf16.xpose.msra.mxu0 0
  %4145 = vmatpush.bf16.xpose.msra.mxu0 %v4136
  %4146 = vmatmul.bf16.gmra.mxu0 %v4133
  %v4147 = vpop.f32.mrf.mxu0
  %v4148 = vadd.f32 0.0, %v4147
  %v4149 = vpop.f32.mrf.mxu0
  %4150 = vdwg.mxu0
  %v4151 = vmul.f32 %v4148, 0.5
  %v4152 = vsel %vm1541, %v4151, -inf
  %4153 = vmax.xlane.f32.xlu0 %v4152
  %v4154 = vpop.xlane.xlu0 %4153
  %v4155 = vsub.f32 %v4151, %v4154
  %v4156 = vmul.f32 %v4155, 1.442695
  %v4157 = vpow.pop %v4156
  %v4158 = vsel %vm1541, %v4157, 0.0
  %4159 = vadd.xlane.f32.xlu0 %v4158
  %v4160 = vpop.xlane.xlu0 %4159
  %v4161 = vrcp.pop %v4160
  %v4162 = vmul.f32 %v4157, %v4161
  %v4163 = vpack.c.bf16 %v4162, %v4162
  %v4164 = vpack.c.bf16 %v4126, %v4126
  %v4166 = vsel %vm1541, %v4163, 0
  %v4169 = vsel %vm1558, %v4164, 0
  %4171 = vmatpush.bf16.msra.mxu0 0
  %4172 = vmatpush.bf16.msra.mxu0 0
  %4173 = vmatpush.bf16.msra.mxu0 0
  %4174 = vmatpush.bf16.msra.mxu0 0
  %4175 = vmatpush.bf16.msra.mxu0 0
  %4176 = vmatpush.bf16.msra.mxu0 0
  %4177 = vmatpush.bf16.msra.mxu0 0
  %4178 = vmatpush.bf16.msra.mxu0 %v4169
  %4179 = vmatmul.bf16.gmra.mxu0 %v4166
  %v4180 = vpop.f32.mrf.mxu0
  %v4181 = vadd.f32 0.0, %v4180
  %v4182 = vpop.f32.mrf.mxu0
  %4183 = vdwg.mxu0
  %v4184 = vpack.c.bf16 %v4072, %v4072
  %v4185 = vpack.c.bf16 %v4100, %v4100
  %v4187 = vsel %vm274, %v4184, 0
  %v4190 = vsel %vm274, %v4185, 0
  %4192 = vmatpush.bf16.xpose.msra.mxu0 0
  %4193 = vmatpush.bf16.xpose.msra.mxu0 0
  %4194 = vmatpush.bf16.xpose.msra.mxu0 0
  %4195 = vmatpush.bf16.xpose.msra.mxu0 0
  %4196 = vmatpush.bf16.xpose.msra.mxu0 0
  %4197 = vmatpush.bf16.xpose.msra.mxu0 0
  %4198 = vmatpush.bf16.xpose.msra.mxu0 0
  %4199 = vmatpush.bf16.xpose.msra.mxu0 %v4190
  %4200 = vmatmul.bf16.gmra.mxu0 %v4187
  %v4201 = vpop.f32.mrf.mxu0
  %v4202 = vadd.f32 0.0, %v4201
  %v4203 = vpop.f32.mrf.mxu0
  %4204 = vdwg.mxu0
  %v4205 = vmul.f32 %v4202, 0.5
  %v4206 = vsel %vm1541, %v4205, -inf
  %4207 = vmax.xlane.f32.xlu0 %v4206
  %v4208 = vpop.xlane.xlu0 %4207
  %v4209 = vsub.f32 %v4205, %v4208
  %v4210 = vmul.f32 %v4209, 1.442695
  %v4211 = vpow.pop %v4210
  %v4212 = vsel %vm1541, %v4211, 0.0
  %4213 = vadd.xlane.f32.xlu0 %v4212
  %v4214 = vpop.xlane.xlu0 %4213
  %v4215 = vrcp.pop %v4214
  %v4216 = vmul.f32 %v4211, %v4215
  %v4217 = vpack.c.bf16 %v4216, %v4216
  %v4218 = vpack.c.bf16 %v4128, %v4128
  %v4220 = vsel %vm1541, %v4217, 0
  %v4223 = vsel %vm1558, %v4218, 0
  %4225 = vmatpush.bf16.msra.mxu0 0
  %4226 = vmatpush.bf16.msra.mxu0 0
  %4227 = vmatpush.bf16.msra.mxu0 0
  %4228 = vmatpush.bf16.msra.mxu0 0
  %4229 = vmatpush.bf16.msra.mxu0 0
  %4230 = vmatpush.bf16.msra.mxu0 0
  %4231 = vmatpush.bf16.msra.mxu0 0
  %4232 = vmatpush.bf16.msra.mxu0 %v4223
  %4233 = vmatmul.bf16.gmra.mxu0 %v4220
  %v4234 = vpop.f32.mrf.mxu0
  %v4235 = vadd.f32 0.0, %v4234
  %v4236 = vpop.f32.mrf.mxu0
  %4237 = vdwg.mxu0
  %s4238 = scalar_lea.vmem %s55, 20
  %v4239 = vld [vmem:[%s4238] sm:$0x3]
  %v4240 = vpack.c.bf16 %v4235, %v4181
  %v4242 = vsel %vm274, %v4240, 0
  %v4245 = vsel %vm279, %v4239, 0
  %4247 = vmatpush.bf16.msra.mxu0 0
  %4248 = vmatpush.bf16.msra.mxu0 0
  %4249 = vmatpush.bf16.msra.mxu0 0
  %4250 = vmatpush.bf16.msra.mxu0 0
  %4251 = vmatpush.bf16.msra.mxu0 0
  %4252 = vmatpush.bf16.msra.mxu0 0
  %4253 = vmatpush.bf16.msra.mxu0 0
  %4254 = vmatpush.bf16.msra.mxu0 %v4245
  %4255 = vmatmul.bf16.gmra.mxu0 %v4242
  %v4256 = vpop.f32.mrf.mxu0
  %v4257 = vadd.f32 0.0, %v4256
  %v4258 = vpop.f32.mrf.mxu0
  %v4259 = vadd.f32 0.0, %v4258
  %4260 = vdwg.mxu0
  %v4261 = vadd.f32 %v4044, %v4257
  %v4262 = vadd.f32 %v4045, %v4259
  %s4263 = scalar_lea.vmem %s43, 88
  %v4264 = vld [vmem:[%s4263] sm:$0xf]
  %v4265 = vld [vmem:[%s4263 + $0x4] sm:$0xf]
  %s4266 = scalar_lea.vmem %s49, 11
  %v4267 = vld [vmem:[%s4266] sm:$0x1]
  %v4269 = vperm.slane %v4267, 0
  %v4273 = vunpack.c.l.b16 %v4264
  %v4274 = vunpack.c.l.b16 %v4265
  %v4275 = vpack.c.b16 %v4274, %v4273
  %4277 = vmatpush.bf16.msra.mxu0 0
  %4278 = vmatpush.bf16.msra.mxu0 0
  %4279 = vmatpush.bf16.msra.mxu0 0
  %4280 = vmatpush.bf16.msra.mxu0 0
  %4281 = vmatpush.bf16.msra.mxu0 0
  %4282 = vmatpush.bf16.msra.mxu0 0
  %4283 = vmatpush.bf16.msra.mxu0 0
  %4284 = vmatpush.bf16.msra.mxu0 %v4275
  %4285 = vmatmul.bf16.gmra.mxu0 %v3624
  %v4286 = vpop.f32.mrf.mxu0
  %v4287 = vadd.f32 %v4269, %v4286
  %v4288 = vpop.f32.mrf.mxu0
  %v4289 = vadd.f32 %v4269, %v4288
  %4290 = vdwg.mxu0
  %s4291 = scalar_lea.vmem %s45, 88
  %v4292 = vld [vmem:[%s4291] sm:$0xf]
  %v4293 = vld [vmem:[%s4291 + $0x4] sm:$0xf]
  %s4294 = scalar_lea.vmem %s51, 11
  %v4295 = vld [vmem:[%s4294] sm:$0x1]
  %v4297 = vperm.slane %v4295, 0
  %v4301 = vunpack.c.l.b16 %v4292
  %v4302 = vunpack.c.l.b16 %v4293
  %v4303 = vpack.c.b16 %v4302, %v4301
  %4305 = vmatpush.bf16.msra.mxu0 0
  %4306 = vmatpush.bf16.msra.mxu0 0
  %4307 = vmatpush.bf16.msra.mxu0 0
  %4308 = vmatpush.bf16.msra.mxu0 0
  %4309 = vmatpush.bf16.msra.mxu0 0
  %4310 = vmatpush.bf16.msra.mxu0 0
  %4311 = vmatpush.bf16.msra.mxu0 0
  %4312 = vmatpush.bf16.msra.mxu0 %v4303
  %4313 = vmatmul.bf16.gmra.mxu0 %v3624
  %v4314 = vpop.f32.mrf.mxu0
  %v4315 = vadd.f32 %v4297, %v4314
  %v4316 = vpop.f32.mrf.mxu0
  %v4317 = vadd.f32 %v4297, %v4316
  %4318 = vdwg.mxu0
  %s4319 = scalar_lea.vmem %s47, 88
  %v4320 = vld [vmem:[%s4319] sm:$0xf]
  %v4321 = vld [vmem:[%s4319 + $0x4] sm:$0xf]
  %s4322 = scalar_lea.vmem %s53, 11
  %v4323 = vld [vmem:[%s4322] sm:$0x1]
  %v4325 = vperm.slane %v4323, 0
  %v4329 = vunpack.c.l.b16 %v4320
  %v4330 = vunpack.c.l.b16 %v4321
  %v4331 = vpack.c.b16 %v4330, %v4329
  %4333 = vmatpush.bf16.msra.mxu0 0
  %4334 = vmatpush.bf16.msra.mxu0 0
  %4335 = vmatpush.bf16.msra.mxu0 0
  %4336 = vmatpush.bf16.msra.mxu0 0
  %4337 = vmatpush.bf16.msra.mxu0 0
  %4338 = vmatpush.bf16.msra.mxu0 0
  %4339 = vmatpush.bf16.msra.mxu0 0
  %4340 = vmatpush.bf16.msra.mxu0 %v4331
  %4341 = vmatmul.bf16.gmra.mxu0 %v3624
  %v4342 = vpop.f32.mrf.mxu0
  %v4343 = vadd.f32 %v4325, %v4342
  %v4344 = vpop.f32.mrf.mxu0
  %v4345 = vadd.f32 %v4325, %v4344
  %4346 = vdwg.mxu0
  %v4347 = vpack.c.bf16 %v4287, %v4287
  %v4348 = vpack.c.bf16 %v4315, %v4315
  %v4350 = vsel %vm274, %v4347, 0
  %v4353 = vsel %vm274, %v4348, 0
  %4355 = vmatpush.bf16.xpose.msra.mxu0 0
  %4356 = vmatpush.bf16.xpose.msra.mxu0 0
  %4357 = vmatpush.bf16.xpose.msra.mxu0 0
  %4358 = vmatpush.bf16.xpose.msra.mxu0 0
  %4359 = vmatpush.bf16.xpose.msra.mxu0 0
  %4360 = vmatpush.bf16.xpose.msra.mxu0 0
  %4361 = vmatpush.bf16.xpose.msra.mxu0 0
  %4362 = vmatpush.bf16.xpose.msra.mxu0 %v4353
  %4363 = vmatmul.bf16.gmra.mxu0 %v4350
  %v4364 = vpop.f32.mrf.mxu0
  %v4365 = vadd.f32 0.0, %v4364
  %v4366 = vpop.f32.mrf.mxu0
  %4367 = vdwg.mxu0
  %v4368 = vmul.f32 %v4365, 0.5
  %v4369 = vsel %vm1541, %v4368, -inf
  %4370 = vmax.xlane.f32.xlu0 %v4369
  %v4371 = vpop.xlane.xlu0 %4370
  %v4372 = vsub.f32 %v4368, %v4371
  %v4373 = vmul.f32 %v4372, 1.442695
  %v4374 = vpow.pop %v4373
  %v4375 = vsel %vm1541, %v4374, 0.0
  %4376 = vadd.xlane.f32.xlu0 %v4375
  %v4377 = vpop.xlane.xlu0 %4376
  %v4378 = vrcp.pop %v4377
  %v4379 = vmul.f32 %v4374, %v4378
  %v4380 = vpack.c.bf16 %v4379, %v4379
  %v4381 = vpack.c.bf16 %v4343, %v4343
  %v4383 = vsel %vm1541, %v4380, 0
  %v4386 = vsel %vm1558, %v4381, 0
  %4388 = vmatpush.bf16.msra.mxu0 0
  %4389 = vmatpush.bf16.msra.mxu0 0
  %4390 = vmatpush.bf16.msra.mxu0 0
  %4391 = vmatpush.bf16.msra.mxu0 0
  %4392 = vmatpush.bf16.msra.mxu0 0
  %4393 = vmatpush.bf16.msra.mxu0 0
  %4394 = vmatpush.bf16.msra.mxu0 0
  %4395 = vmatpush.bf16.msra.mxu0 %v4386
  %4396 = vmatmul.bf16.gmra.mxu0 %v4383
  %v4397 = vpop.f32.mrf.mxu0
  %v4398 = vadd.f32 0.0, %v4397
  %v4399 = vpop.f32.mrf.mxu0
  %4400 = vdwg.mxu0
  %v4401 = vpack.c.bf16 %v4289, %v4289
  %v4402 = vpack.c.bf16 %v4317, %v4317
  %v4404 = vsel %vm274, %v4401, 0
  %v4407 = vsel %vm274, %v4402, 0
  %4409 = vmatpush.bf16.xpose.msra.mxu0 0
  %4410 = vmatpush.bf16.xpose.msra.mxu0 0
  %4411 = vmatpush.bf16.xpose.msra.mxu0 0
  %4412 = vmatpush.bf16.xpose.msra.mxu0 0
  %4413 = vmatpush.bf16.xpose.msra.mxu0 0
  %4414 = vmatpush.bf16.xpose.msra.mxu0 0
  %4415 = vmatpush.bf16.xpose.msra.mxu0 0
  %4416 = vmatpush.bf16.xpose.msra.mxu0 %v4407
  %4417 = vmatmul.bf16.gmra.mxu0 %v4404
  %v4418 = vpop.f32.mrf.mxu0
  %v4419 = vadd.f32 0.0, %v4418
  %v4420 = vpop.f32.mrf.mxu0
  %4421 = vdwg.mxu0
  %v4422 = vmul.f32 %v4419, 0.5
  %v4423 = vsel %vm1541, %v4422, -inf
  %4424 = vmax.xlane.f32.xlu0 %v4423
  %v4425 = vpop.xlane.xlu0 %4424
  %v4426 = vsub.f32 %v4422, %v4425
  %v4427 = vmul.f32 %v4426, 1.442695
  %v4428 = vpow.pop %v4427
  %v4429 = vsel %vm1541, %v4428, 0.0
  %4430 = vadd.xlane.f32.xlu0 %v4429
  %v4431 = vpop.xlane.xlu0 %4430
  %v4432 = vrcp.pop %v4431
  %v4433 = vmul.f32 %v4428, %v4432
  %v4434 = vpack.c.bf16 %v4433, %v4433
  %v4435 = vpack.c.bf16 %v4345, %v4345
  %v4437 = vsel %vm1541, %v4434, 0
  %v4440 = vsel %vm1558, %v4435, 0
  %4442 = vmatpush.bf16.msra.mxu0 0
  %4443 = vmatpush.bf16.msra.mxu0 0
  %4444 = vmatpush.bf16.msra.mxu0 0
  %4445 = vmatpush.bf16.msra.mxu0 0
  %4446 = vmatpush.bf16.msra.mxu0 0
  %4447 = vmatpush.bf16.msra.mxu0 0
  %4448 = vmatpush.bf16.msra.mxu0 0
  %4449 = vmatpush.bf16.msra.mxu0 %v4440
  %4450 = vmatmul.bf16.gmra.mxu0 %v4437
  %v4451 = vpop.f32.mrf.mxu0
  %v4452 = vadd.f32 0.0, %v4451
  %v4453 = vpop.f32.mrf.mxu0
  %4454 = vdwg.mxu0
  %s4455 = scalar_lea.vmem %s55, 22
  %v4456 = vld [vmem:[%s4455] sm:$0x3]
  %v4457 = vpack.c.bf16 %v4452, %v4398
  %v4459 = vsel %vm274, %v4457, 0
  %v4462 = vsel %vm279, %v4456, 0
  %4464 = vmatpush.bf16.msra.mxu0 0
  %4465 = vmatpush.bf16.msra.mxu0 0
  %4466 = vmatpush.bf16.msra.mxu0 0
  %4467 = vmatpush.bf16.msra.mxu0 0
  %4468 = vmatpush.bf16.msra.mxu0 0
  %4469 = vmatpush.bf16.msra.mxu0 0
  %4470 = vmatpush.bf16.msra.mxu0 0
  %4471 = vmatpush.bf16.msra.mxu0 %v4462
  %4472 = vmatmul.bf16.gmra.mxu0 %v4459
  %v4473 = vpop.f32.mrf.mxu0
  %v4474 = vadd.f32 0.0, %v4473
  %v4475 = vpop.f32.mrf.mxu0
  %v4476 = vadd.f32 0.0, %v4475
  %4477 = vdwg.mxu0
  %v4478 = vadd.f32 %v4261, %v4474
  %v4479 = vadd.f32 %v4262, %v4476
  %v4480 = vadd.f32 %v3600, %v4478
  %v4481 = vadd.f32 %v3601, %v4479
  %s4482 = scalar_lea.vmem %s59, 2
  %v4483 = vld [vmem:[%s4482] sm:$0x1]
  %s4484 = scalar_lea.vmem %s61, 2
  %v4485 = vld [vmem:[%s4484] sm:$0x1]
  %v4486 = vsel %vm428, %v4480, 0.0
  %4487 = vadd.xlane.f32.xlu0 %v4486
  %v4488 = vpop.xlane.xlu0 %4487
  %v4489 = vsel %vm428, %v4481, 0.0
  %4490 = vadd.xlane.f32.xlu0 %v4489
  %v4491 = vpop.xlane.xlu0 %4490
  %v4492 = vmul.f32 %v4488, %v2320
  %v4493 = vmul.f32 %v4491, %v2320
  %v4494 = vsub.f32 %v4480, %v4492
  %v4495 = vsub.f32 %v4481, %v4493
  %v4496 = vmul.f32 %v4494, %v4494
  %v4497 = vmul.f32 %v4495, %v4495
  %v4498 = vsel %vm428, %v4496, 0.0
  %4499 = vadd.xlane.f32.xlu0 %v4498
  %v4500 = vpop.xlane.xlu0 %4499
  %v4501 = vsel %vm428, %v4497, 0.0
  %4502 = vadd.xlane.f32.xlu0 %v4501
  %v4503 = vpop.xlane.xlu0 %4502
  %v4504 = vmul.f32 %v4500, %v2320
  %v4505 = vmul.f32 %v4503, %v2320
  %v4506 = vadd.f32 %v4504, 1e-05
  %v4507 = vadd.f32 %v4505, 1e-05
  %v4508 = vrsqrt.pop %v4506
  %v4509 = vmul.f32 %v4508, %v4506
  %v4510 = vmul.f32 %v4509, %v4508
  %v4511 = vmul.f32 0.5, %v4510
  %v4512 = vsub.f32 1.5, %v4511
  %v4513 = vmul.f32 %v4508, %v4512
  %vm4514 = vweird.f32 %v4506
  %vm4515 = vweird.f32 %v4508
  %vm4516 = vmor %vm4514, %vm4515
  %v4517 = vsel %vm4516, %v4508, %v4513
  %v4518 = vrsqrt.pop %v4507
  %v4519 = vmul.f32 %v4518, %v4507
  %v4520 = vmul.f32 %v4519, %v4518
  %v4521 = vmul.f32 0.5, %v4520
  %v4522 = vsub.f32 1.5, %v4521
  %v4523 = vmul.f32 %v4518, %v4522
  %vm4524 = vweird.f32 %v4507
  %vm4525 = vweird.f32 %v4518
  %vm4526 = vmor %vm4524, %vm4525
  %v4527 = vsel %vm4526, %v4518, %v4523
  %v4528 = vmul.f32 %v4494, %v4517
  %v4529 = vmul.f32 %v4495, %v4527
  %v4531 = vperm.slane %v4483, 0
  %v4533 = vmul.f32 %v4528, %v4531
  %v4534 = vmul.f32 %v4529, %v4531
  %v4536 = vperm.slane %v4485, 0
  %v4538 = vadd.f32 %v4533, %v4536
  %v4539 = vadd.f32 %v4534, %v4536
  %s4540 = scalar_lea.vmem %s63, 16
  %v4541 = vld [vmem:[%s4540] sm:$0xf]
  %v4542 = vld [vmem:[%s4540 + $0x4] sm:$0xf]
  %v4543 = vpack.c.bf16 %v4539, %v4538
  %s4544 = scalar_lea.vmem %s65, 2
  %v4545 = vld [vmem:[%s4544] sm:$0x1]
  %v4547 = vperm.slane %v4545, 0
  %v4551 = vunpack.c.l.b16 %v4541
  %v4552 = vunpack.c.l.b16 %v4542
  %v4553 = vpack.c.b16 %v4552, %v4551
  %v4556 = vsel %vm428, %v4543, 0
  %4558 = vmatpush.bf16.msra.mxu0 0
  %4559 = vmatpush.bf16.msra.mxu0 0
  %4560 = vmatpush.bf16.msra.mxu0 0
  %4561 = vmatpush.bf16.msra.mxu0 0
  %4562 = vmatpush.bf16.msra.mxu0 0
  %4563 = vmatpush.bf16.msra.mxu0 0
  %4564 = vmatpush.bf16.msra.mxu0 0
  %4565 = vmatpush.bf16.msra.mxu0 %v4553
  %4566 = vmatmul.bf16.gmra.mxu0 %v4556
  %v4567 = vpop.f32.mrf.mxu0
  %v4568 = vadd.f32 %v4547, %v4567
  %v4569 = vpop.f32.mrf.mxu0
  %v4570 = vadd.f32 %v4547, %v4569
  %4571 = vdwg.mxu0
  %v4572 = vmax.f32 %v4568, 0.0
  %v4573 = vmax.f32 %v4570, 0.0
  %s4574 = scalar_lea.vmem %s67, 64
  %v4575 = vld [vmem:[%s4574] sm:$0xf]
  %v4576 = vld [vmem:[%s4574 + $0x4] sm:$0xf]
  %v4577 = vld [vmem:[%s4574 + $0x8] sm:$0xf]
  %v4578 = vld [vmem:[%s4574 + $0xc] sm:$0xf]
  %v4579 = vld [vmem:[%s4574 + $0x10] sm:$0xf]
  %v4580 = vld [vmem:[%s4574 + $0x14] sm:$0xf]
  %v4581 = vld [vmem:[%s4574 + $0x18] sm:$0xf]
  %v4582 = vld [vmem:[%s4574 + $0x1c] sm:$0xf]
  %v4583 = vpack.c.bf16 %v4573, %v4572
  %s4584 = scalar_lea.vmem %s69, 2
  %v4585 = vld [vmem:[%s4584] sm:$0x1]
  %v4587 = vperm.slane %v4585, 0
  %v4597 = vunpack.c.l.b16 %v4575
  %v4598 = vunpack.c.l.b16 %v4576
  %v4599 = vunpack.c.l.b16 %v4577
  %v4600 = vunpack.c.l.b16 %v4578
  %v4601 = vunpack.c.l.b16 %v4579
  %v4602 = vunpack.c.l.b16 %v4580
  %v4603 = vunpack.c.l.b16 %v4581
  %v4604 = vunpack.c.l.b16 %v4582
  %v4605 = vpack.c.b16 %v4598, %v4597
  %v4606 = vpack.c.b16 %v4600, %v4599
  %v4607 = vpack.c.b16 %v4602, %v4601
  %v4608 = vpack.c.b16 %v4604, %v4603
  %v4614 = vsel %vm2438, %v4583, 0
  %4616 = vmatpush.bf16.msra.mxu0 0
  %4617 = vmatpush.bf16.msra.mxu0 0
  %4618 = vmatpush.bf16.msra.mxu0 0
  %4619 = vmatpush.bf16.msra.mxu0 0
  %4620 = vmatpush.bf16.msra.mxu0 %v4608
  %4621 = vmatpush.bf16.msra.mxu0 %v4607
  %4622 = vmatpush.bf16.msra.mxu0 %v4606
  %4623 = vmatpush.bf16.msra.mxu0 %v4605
  %4624 = vmatmul.bf16.gmra.mxu0 %v4614
  %v4625 = vpop.f32.mrf.mxu0
  %v4626 = vadd.f32 %v4587, %v4625
  %v4627 = vpop.f32.mrf.mxu0
  %v4628 = vadd.f32 %v4587, %v4627
  %4629 = vdwg.mxu0
  %v4630 = vadd.f32 %v4538, %v4626
  %v4631 = vadd.f32 %v4539, %v4628
  %s4632 = scalar_lea.vmem %s71, 2
  %v4633 = vld [vmem:[%s4632] sm:$0x1]
  %s4634 = scalar_lea.vmem %s73, 2
  %v4635 = vld [vmem:[%s4634] sm:$0x1]
  %v4636 = vsel %vm428, %v4630, 0.0
  %4637 = vadd.xlane.f32.xlu0 %v4636
  %v4638 = vpop.xlane.xlu0 %4637
  %v4639 = vsel %vm428, %v4631, 0.0
  %4640 = vadd.xlane.f32.xlu0 %v4639
  %v4641 = vpop.xlane.xlu0 %4640
  %v4642 = vmul.f32 %v4638, %v2320
  %v4643 = vmul.f32 %v4641, %v2320
  %v4644 = vsub.f32 %v4630, %v4642
  %v4645 = vsub.f32 %v4631, %v4643
  %v4646 = vmul.f32 %v4644, %v4644
  %v4647 = vmul.f32 %v4645, %v4645
  %v4648 = vsel %vm428, %v4646, 0.0
  %4649 = vadd.xlane.f32.xlu0 %v4648
  %v4650 = vpop.xlane.xlu0 %4649
  %v4651 = vsel %vm428, %v4647, 0.0
  %4652 = vadd.xlane.f32.xlu0 %v4651
  %v4653 = vpop.xlane.xlu0 %4652
  %v4654 = vmul.f32 %v4650, %v2320
  %v4655 = vmul.f32 %v4653, %v2320
  %v4656 = vadd.f32 %v4654, 1e-05
  %v4657 = vadd.f32 %v4655, 1e-05
  %v4658 = vrsqrt.pop %v4656
  %v4659 = vmul.f32 %v4658, %v4656
  %v4660 = vmul.f32 %v4659, %v4658
  %v4661 = vmul.f32 0.5, %v4660
  %v4662 = vsub.f32 1.5, %v4661
  %v4663 = vmul.f32 %v4658, %v4662
  %vm4664 = vweird.f32 %v4656
  %vm4665 = vweird.f32 %v4658
  %vm4666 = vmor %vm4664, %vm4665
  %v4667 = vsel %vm4666, %v4658, %v4663
  %v4668 = vrsqrt.pop %v4657
  %v4669 = vmul.f32 %v4668, %v4657
  %v4670 = vmul.f32 %v4669, %v4668
  %v4671 = vmul.f32 0.5, %v4670
  %v4672 = vsub.f32 1.5, %v4671
  %v4673 = vmul.f32 %v4668, %v4672
  %vm4674 = vweird.f32 %v4657
  %vm4675 = vweird.f32 %v4668
  %vm4676 = vmor %vm4674, %vm4675
  %v4677 = vsel %vm4676, %v4668, %v4673
  %v4678 = vmul.f32 %v4644, %v4667
  %v4679 = vmul.f32 %v4645, %v4677
  %v4681 = vperm.slane %v4633, 0
  %v4683 = vmul.f32 %v4678, %v4681
  %v4684 = vmul.f32 %v4679, %v4681
  %v4686 = vperm.slane %v4635, 0
  %v4688 = vadd.f32 %v4683, %v4686
  %v4689 = vadd.f32 %v4684, %v4686
  %v4690 = vld [vmem:[%s75] sm:$0xff]
  %v4691 = vld [vmem:[%s75 + $0x8] sm:$0xff]
  %v4692 = vmul.f32 %v4688, %v4690
  %v4693 = vmul.f32 %v4689, %v4691
  %v4694 = vsel %vm428, %v4692, 0.0
  %4695 = vadd.xlane.f32.xlu0 %v4694
  %v4696 = vpop.xlane.xlu0 %4695
  %v4697 = vsel %vm428, %v4693, 0.0
  %4698 = vadd.xlane.f32.xlu0 %v4697
  %v4699 = vpop.xlane.xlu0 %4698
  %v4700 = vrot.slane %v4696, 4
  %v4701 = vadd.f32 %v4696, %v4700
  %v4702 = vrot.slane %v4701, 2
  %v4703 = vadd.f32 %v4701, %v4702
  %v4704 = vrot.slane %v4703, 1
  %v4705 = vadd.f32 %v4703, %v4704
  %v4706 = vrot.slane %v4699, 4
  %v4707 = vadd.f32 %v4699, %v4706
  %v4708 = vrot.slane %v4707, 2
  %v4709 = vadd.f32 %v4707, %v4708
  %v4710 = vrot.slane %v4709, 1
  %v4711 = vadd.f32 %v4709, %v4710
  %v4712 = vsel %vm192, %v4705, %v4711
  %v4713 = vld [vmem:[#allocation2] sm:$0x1]
  %v4715 = vperm.slane %v4713, 0
  %v4717 = vadd.f32 %v4712, %v4715
  %vm4718 = vcmask 1024
  %4719 = vst.msk [vmem:[%s79] sm:$0x3] %vm4718, %v4717
  // Predicated region
  $region158: #{local_global_forward.1} parent=0 // pred_check
    _
  $region159: #{local_global_forward.1} parent=0 // pred_check_branch
    %4721 = sbr.rel (0) target = $region161
  $region160: #{local_global_forward.1} parent=0 // pred_region
    _
  $region161: #{local_global_forward.1} parent=0 // pred_fallthru
    _
  // Predicated region
  $region162: #{local_global_forward.1} parent=0 // pred_check
    _
  $region163: #{local_global_forward.1} parent=0 // pred_check_branch
    %4723 = sbr.rel (0) target = $region165
  $region164: #{local_global_forward.1} parent=0 // pred_region
    _
  $region165: #{local_global_forward.1} parent=0 // pred_fallthru
    _

</llo_original>
